<compile_context>
chip_gen: v7x
topology: tpu7x:2x2x1
jax: 0.10.0
libtpu: 0.0.40
codegen_flags: <defaults>
</compile_context>

<pallas_src>
import functools

import numpy as np

import jax
import jax.numpy as jnp
from jax.experimental import pallas as pl
from jax.experimental.pallas import tpu as pltpu

H_IN = 28          # MNIST spatial size
ROW_STRIDE = 32    # per-image row pitch in the in-kernel staging slab (mult. of 8)
MAX_TILE = 8       # max images per grid step


# ------------------------------ Pallas kernel ------------------------------ #

def _fused_kernel(x_ref, m1_ref, b1_ref, m2_ref, b2_ref, s1_ref, s2_ref,
                  w3_ref, b3_ref, w4_ref, b4_ref, o_ref, xbuf, *, tb):
    """Entire MNISTConvNet forward for a tile of `tb` images, fully in VMEM."""
    f32 = jnp.float32
    bf16 = jnp.bfloat16

    # Stage the (tb, 28, 28) f32 input block into a 2-D bf16 slab with one
    # image every ROW_STRIDE rows (aligned stores; pad rows zeroed -> finite).
    xbuf[...] = jnp.zeros(xbuf.shape, bf16)
    for t in range(tb):
        xbuf[t * ROW_STRIDE:t * ROW_STRIDE + H_IN, :] = x_ref[t].astype(bf16)
    xs = xbuf[...]                                     # (tb*32, 28) bf16

    # ---- Conv2d(1, 32, 3) + ReLU + MaxPool2d(2) ---------------------------- #
    r1 = tb * ROW_STRIDE - 2
    c1 = jnp.dot(xs[0:r1, :], m1_ref[0], preferred_element_type=f32)
    c1 = c1 + jnp.dot(xs[1:r1 + 1, :], m1_ref[1], preferred_element_type=f32)
    c1 = c1 + jnp.dot(xs[2:r1 + 2, :], m1_ref[2], preferred_element_type=f32)
    c1 = jnp.maximum(c1 + b1_ref[...], 0.0)            # (r1, 832) f32
    # W-pool: folded weights emit (even-ow | odd-ow) column halves.
    wp1 = jnp.maximum(c1[:, 0:416], c1[:, 416:832])    # (r1, 416)
    # H-pool: adjacent-row max, then one-hot selection matmul (also drops the
    # inter-image / padding rows of the row-folded conv).
    hm1 = jnp.maximum(wp1[0:r1 - 1, :], wp1[1:r1, :]).astype(bf16)
    p1 = jnp.dot(s1_ref[...], hm1, preferred_element_type=f32).astype(bf16)
    # p1: (tb*13, 416), rows (image, ph), cols (pw, cin) -- conv2 canonical.

    # ---- Conv2d(32, 64, 3) + ReLU + MaxPool2d(2) --------------------------- #
    r2 = tb * 13 - 2
    c2 = jnp.dot(p1[0:r2, :], m2_ref[0], preferred_element_type=f32)
    c2 = c2 + jnp.dot(p1[1:r2 + 1, :], m2_ref[1], preferred_element_type=f32)
    c2 = c2 + jnp.dot(p1[2:r2 + 2, :], m2_ref[2], preferred_element_type=f32)
    c2 = jnp.maximum(c2 + b2_ref[...], 0.0)            # (r2, 704) f32
    wp2 = jnp.maximum(c2[:, 0:320], c2[:, 384:704])    # (r2, 320)
    hm2 = jnp.maximum(wp2[0:r2 - 1, :], wp2[1:r2, :]).astype(bf16)
    p2 = jnp.dot(s2_ref[...], hm2, preferred_element_type=f32).astype(bf16)
    # p2: (5*tb, 320), rows (ph, image) -- ph-major so fc1 slices are contiguous.

    # ---- Flatten -> Linear(1600,128)+ReLU -> Linear(128,10) -> LogSoftmax -- #
    h = b3_ref[...]                                    # (1, 128) f32
    for ph in range(5):
        h = h + jnp.dot(p2[ph * tb:(ph + 1) * tb, :], w3_ref[ph],
                        preferred_element_type=f32)
    h = jnp.maximum(h, 0.0).astype(bf16)               # (tb, 128)
    z = jnp.dot(h, w4_ref[...], preferred_element_type=f32) + b4_ref[...]
    zmax = jnp.max(z, axis=-1, keepdims=True)
    lse = jnp.log(jnp.sum(jnp.exp(z - zmax), axis=-1, keepdims=True))
    o_ref[:, 0, :] = (z - zmax - lse).astype(o_ref.dtype)


# ---------------------------- weight preparation ---------------------------- #

def _fold_conv(w, b, w_in):
    """Fold a 3x3 'valid' conv over the W axis into 3 per-height-tap matmul
    slabs of shape (w_in*Cin, Wo*Cout).  Output columns are parity ordered
    (all even-ow blocks first, then all odd-ow blocks, Cout minor) so the 2x2
    W-pool in the kernel is a single pair of contiguous lane slices."""
    w = np.asarray(w, np.float32)                      # (Cout, Cin, 3, 3)
    b = np.asarray(b, np.float32)
    cout, cin, kh, kw = w.shape
    wo = w_in - kw + 1
    n_even = (wo + 1) // 2
    m = np.zeros((kh, w_in * cin, wo * cout), np.float32)
    brow = np.zeros((1, wo * cout), np.float32)
    for ow in range(wo):
        cb = ((ow // 2) * cout) if ow % 2 == 0 else ((n_even + ow // 2) * cout)
        brow[0, cb:cb + cout] = b
        for i in range(kh):
            for j in range(kw):
                wi = ow + j
                m[i, wi * cin:(wi + 1) * cin, cb:cb + cout] = w[:, :, i, j].T
    return m, brow


def _pool_select(tb, row_stride, hm_rows, npool, ph_major):
    """One-hot matrix selecting adjacent-row maxes into pooled rows, compacting
    away inter-image / padding rows in the same (exact) bf16 matmul."""
    s = np.zeros((tb * npool, hm_rows), np.float32)
    for t in range(tb):
        for p in range(npool):
            r = p * tb + t if ph_major else t * npool + p
            s[r, t * row_stride + 2 * p] = 1.0
    return jnp.asarray(s, jnp.bfloat16)


def init_params(key):
    """Deterministic synthetic parameters (PyTorch default-ish uniform init)."""
    ks = jax.random.split(key, 8)

    def u(k, shape, fan_in):
        bound = 1.0 / jnp.sqrt(jnp.float32(fan_in))
        return jax.random.uniform(k, shape, jnp.float32, -bound, bound)

    return dict(
        w1=u(ks[0], (32, 1, 3, 3), 9),      b1=u(ks[1], (32,), 9),
        w2=u(ks[2], (64, 32, 3, 3), 288),   b2=u(ks[3], (64,), 288),
        w3=u(ks[4], (128, 1600), 1600),     b3=u(ks[5], (128,), 1600),
        w4=u(ks[6], (10, 128), 128),        b4=u(ks[7], (10,), 128),
    )


def prepare_params(raw):
    """One-time weight preparation (outside the jitted per-call forward)."""
    m1, b1row = _fold_conv(raw["w1"], raw["b1"], w_in=28)          # (3, 28, 832)
    m2, b2row = _fold_conv(raw["w2"], raw["b2"], w_in=13)          # (3, 416, 704)
    # fc1 rows permuted from PyTorch's NCHW flatten (c*25+ph*5+pw) to the
    # kernel's (ph, pw, c) pooled layout -> (5, 320, 128).
    w3 = np.asarray(raw["w3"], np.float32).reshape(128, 64, 5, 5)  # (n, c, ph, pw)
    w3f = np.transpose(w3, (2, 3, 1, 0)).reshape(5, 5 * 64, 128)
    w4m = np.asarray(raw["w4"], np.float32).T                      # (128, 10)
    return dict(
        m1=jnp.asarray(m1, jnp.bfloat16),
        b1row=jnp.asarray(b1row, jnp.float32),
        m2=jnp.asarray(m2, jnp.bfloat16),
        b2row=jnp.asarray(b2row, jnp.float32),
        w3f=jnp.asarray(w3f, jnp.bfloat16),
        b3row=jnp.asarray(np.asarray(raw["b3"], np.float32).reshape(1, 128)),
        w4m=jnp.asarray(w4m, jnp.bfloat16),
        b4row=jnp.asarray(np.asarray(raw["b4"], np.float32).reshape(1, 10)),
    )


# -------------------------------- forward ---------------------------------- #

def _pick_tile(n):
    """Largest divisor of n that is <= MAX_TILE and leaves >= 2 grid steps
    (so both v7x TensorCores get work); 1 for n == 1."""
    if n < 2:
        return 1
    best = 1
    for t in range(1, min(n, MAX_TILE) + 1):
        if n % t == 0 and n // t >= 2:
            best = t
    return best


def mnist_convnet_forward(params, x_nchw):
    n, cin, hh, ww = x_nchw.shape
    assert (cin, hh, ww) == (1, 28, 28), "MNISTConvNet expects (N, 1, 28, 28)"
    tb = _pick_tile(n)
    grid = (n // tb,)
    x = x_nchw.reshape(n, 28, 28).astype(jnp.float32)   # Cin==1: free reshape

    r1 = tb * ROW_STRIDE - 2
    r2 = tb * 13 - 2
    s1 = _pool_select(tb, ROW_STRIDE, r1 - 1, 13, ph_major=False)
    s2 = _pool_select(tb, 13, r2 - 1, 5, ph_major=True)

    flops = (n // tb) * 2 * (3 * r1 * 28 * 832 + tb * 13 * (r1 - 1) * 416
                             + 3 * r2 * 416 * 704 + tb * 5 * (r2 - 1) * 320
                             + tb * 1600 * 128 + tb * 128 * 10)
    weight_bytes = sum(int(np.prod(v.shape)) * v.dtype.itemsize
                       for v in params.values())
    cost = pl.CostEstimate(flops=int(flops), transcendentals=int(n * 11),
                           bytes_accessed=int(n * 28 * 28 * 4 + n * 10 * 4
                                              + weight_bytes))

    def whole(shape):
        return pl.BlockSpec(shape, lambda i, _nd=len(shape): (0,) * _nd)

    out3 = pl.pallas_call(
        functools.partial(_fused_kernel, tb=tb),
        grid=grid,
        in_specs=[
            pl.BlockSpec((tb, 28, 28), lambda i: (i, 0, 0)),
            whole(params["m1"].shape), whole(params["b1row"].shape),
            whole(params["m2"].shape), whole(params["b2row"].shape),
            whole(s1.shape), whole(s2.shape),
            whole(params["w3f"].shape), whole(params["b3row"].shape),
            whole(params["w4m"].shape), whole(params["b4row"].shape),
        ],
        out_specs=pl.BlockSpec((tb, 1, 10), lambda i: (i, 0, 0)),
        out_shape=jax.ShapeDtypeStruct((n, 1, 10), jnp.float32),
        scratch_shapes=[pltpu.VMEM((tb * ROW_STRIDE, 28), jnp.bfloat16)],
        compiler_params=pltpu.CompilerParams(dimension_semantics=("parallel",)),
        cost_estimate=cost,
    )(x, params["m1"], params["b1row"], params["m2"], params["b2row"],
      s1, s2, params["w3f"], params["b3row"], params["w4m"], params["b4row"])
    return out3.reshape(n, 10)


# ----------------------- pure-JAX f32 reference (test) ---------------------- #

def _reference_forward(raw, x_nchw):
    x = jnp.transpose(x_nchw, (0, 2, 3, 1)).astype(jnp.float32)     # NHWC
    dn = ("NHWC", "HWIO", "NHWC")
    y = jax.lax.conv_general_dilated(x, jnp.transpose(raw["w1"], (2, 3, 1, 0)),
                                     (1, 1), "VALID", dimension_numbers=dn)
    y = jax.nn.relu(y + raw["b1"])
    y = jax.lax.reduce_window(y, -jnp.inf, jax.lax.max,
                              (1, 2, 2, 1), (1, 2, 2, 1), "VALID")
    y = jax.lax.conv_general_dilated(y, jnp.transpose(raw["w2"], (2, 3, 1, 0)),
                                     (1, 1), "VALID", dimension_numbers=dn)
    y = jax.nn.relu(y + raw["b2"])
    y = jax.lax.reduce_window(y, -jnp.inf, jax.lax.max,
                              (1, 2, 2, 1), (1, 2, 2, 1), "VALID")
    flat = jnp.transpose(y, (0, 3, 1, 2)).reshape(x.shape[0], -1)    # NCHW flatten
    h = jax.nn.relu(flat @ raw["w3"].T + raw["b3"])
    z = h @ raw["w4"].T + raw["b4"]
    return jax.nn.log_softmax(z, axis=-1)


if __name__ == "__main__":
    key = jax.random.PRNGKey(0)
    pkey, xkey = jax.random.split(key)
    raw = init_params(pkey)
    params = prepare_params(raw)

    # MNIST-shaped input (batch=2, 1 channel, 28x28) so Flatten yields 1600.
    x = jax.random.normal(xkey, (2, 1, 28, 28), jnp.float32)

    fwd = jax.jit(mnist_convnet_forward)
    out = jax.block_until_ready(fwd(params, x))

    assert out.shape == (2, 10)
    assert bool(jnp.all(jnp.isfinite(out)))
    # log-softmax rows exponentiate-sum to 1
    assert bool(jnp.allclose(jnp.sum(jnp.exp(out), axis=-1), 1.0, atol=1e-4))
    # validate against an f32 JAX reference (bf16 MXU operands -> loose tol)
    ref = _reference_forward(raw, x)
    err = float(jnp.max(jnp.abs(out - ref)))
    assert err < 1e-1, f"max |pallas - reference| = {err}"
    print("KERNEL_OK")
</pallas_src>

<mosaic_0001>
module attributes {stable_mosaic.version = 11 : i64} {
  func.func @_fused_kernel(%arg0: i32, %arg1: memref<1x28x28xf32, #tpu.memory_space<vmem>>, %arg2: memref<3x28x832xbf16, #tpu.memory_space<vmem>>, %arg3: memref<1x832xf32, #tpu.memory_space<vmem>>, %arg4: memref<3x416x704xbf16, #tpu.memory_space<vmem>>, %arg5: memref<1x704xf32, #tpu.memory_space<vmem>>, %arg6: memref<13x29xbf16, #tpu.memory_space<vmem>>, %arg7: memref<5x10xbf16, #tpu.memory_space<vmem>>, %arg8: memref<5x320x128xbf16, #tpu.memory_space<vmem>>, %arg9: memref<1x128xf32, #tpu.memory_space<vmem>>, %arg10: memref<128x10xbf16, #tpu.memory_space<vmem>>, %arg11: memref<1x10xf32, #tpu.memory_space<vmem>>, %arg12: memref<1x1x10xf32, #tpu.memory_space<vmem>>, %arg13: memref<32x28xbf16, #tpu.memory_space<vmem>>) attributes {dimension_semantics = [#tpu.dimension_semantics<parallel>], iteration_bounds = array<i64: 2>, scalar_prefetch = 0 : i64, scratch_operands = 1 : i64, tpu.core_type = #tpu.core_type<tc>, window_params = [{transform_indices = @transform_0, window_bounds = array<i64: 1, 28, 28>}, {pipeline_mode = #tpu.pipeline_mode<synchronous>, transform_indices = @transform_1, window_bounds = array<i64: 3, 28, 832>}, {pipeline_mode = #tpu.pipeline_mode<synchronous>, transform_indices = @transform_2, window_bounds = array<i64: 1, 832>}, {pipeline_mode = #tpu.pipeline_mode<synchronous>, transform_indices = @transform_3, window_bounds = array<i64: 3, 416, 704>}, {pipeline_mode = #tpu.pipeline_mode<synchronous>, transform_indices = @transform_4, window_bounds = array<i64: 1, 704>}, {pipeline_mode = #tpu.pipeline_mode<synchronous>, transform_indices = @transform_5, window_bounds = array<i64: 13, 29>}, {pipeline_mode = #tpu.pipeline_mode<synchronous>, transform_indices = @transform_6, window_bounds = array<i64: 5, 10>}, {pipeline_mode = #tpu.pipeline_mode<synchronous>, transform_indices = @transform_7, window_bounds = array<i64: 5, 320, 128>}, {pipeline_mode = #tpu.pipeline_mode<synchronous>, transform_indices = @transform_8, window_bounds = array<i64: 1, 128>}, {pipeline_mode = #tpu.pipeline_mode<synchronous>, transform_indices = @transform_9, window_bounds = array<i64: 128, 10>}, {pipeline_mode = #tpu.pipeline_mode<synchronous>, transform_indices = @transform_10, window_bounds = array<i64: 1, 10>}, {transform_indices = @transform_11, window_bounds = array<i64: 1, 1, 10>}]} {
    %cst = arith.constant 0.000000e+00 : bf16
    %0 = vector.broadcast %cst : bf16 to vector<32x28xbf16>
    %c0 = arith.constant 0 : index
    %c0_0 = arith.constant 0 : index
    %1 = vector.load %arg13[%c0, %c0_0] : memref<32x28xbf16, #tpu.memory_space<vmem>>, vector<32x28xbf16>
    tpu.vector_store %arg13[%c0, %c0_0], %0 {strides = array<i32>} : memref<32x28xbf16, #tpu.memory_space<vmem>>, vector<32x28xbf16>,
    %c0_1 = arith.constant 0 : index
    %c0_2 = arith.constant 0 : index
    %c0_3 = arith.constant 0 : index
    %2 = vector.load %arg1[%c0_1, %c0_2, %c0_3] : memref<1x28x28xf32, #tpu.memory_space<vmem>>, vector<1x28x28xf32>
    %3 = vector.shape_cast %2 : vector<1x28x28xf32> to vector<28x28xf32>
    %4 = arith.truncf %3 : vector<28x28xf32> to vector<28x28xbf16>
    %c0_4 = arith.constant 0 : index
    %c0_5 = arith.constant 0 : index
    %5 = vector.load %arg13[%c0_4, %c0_5] : memref<32x28xbf16, #tpu.memory_space<vmem>>, vector<28x28xbf16>
    tpu.vector_store %arg13[%c0_4, %c0_5], %4 {strides = array<i32>} : memref<32x28xbf16, #tpu.memory_space<vmem>>, vector<28x28xbf16>,
    %c0_6 = arith.constant 0 : index
    %c0_7 = arith.constant 0 : index
    %6 = vector.load %arg13[%c0_6, %c0_7] : memref<32x28xbf16, #tpu.memory_space<vmem>>, vector<32x28xbf16>
    %7 = vector.extract_strided_slice %6 {offsets = [0, 0], sizes = [30, 28], strides = [1, 1]} : vector<32x28xbf16> to vector<30x28xbf16>
    %c0_8 = arith.constant 0 : index
    %c0_9 = arith.constant 0 : index
    %c0_10 = arith.constant 0 : index
    %8 = vector.load %arg2[%c0_8, %c0_9, %c0_10] : memref<3x28x832xbf16, #tpu.memory_space<vmem>>, vector<1x28x832xbf16>
    %9 = vector.shape_cast %8 : vector<1x28x832xbf16> to vector<28x832xbf16>
    %cst_11 = arith.constant dense<0.000000e+00> : vector<30x832xf32>
    %10 = tpu.matmul %7, %9, %cst_11 {dimension_numbers = #tpu.dot_dimension_numbers<[1], [0], [0], [1], [0, 0, 1, 1], [], []>} : vector<30x28xbf16>, vector<28x832xbf16>, vector<30x832xf32> -> vector<30x832xf32>
    %11 = vector.extract_strided_slice %6 {offsets = [1, 0], sizes = [30, 28], strides = [1, 1]} : vector<32x28xbf16> to vector<30x28xbf16>
    %c1 = arith.constant 1 : index
    %c0_12 = arith.constant 0 : index
    %c0_13 = arith.constant 0 : index
    %12 = vector.load %arg2[%c1, %c0_12, %c0_13] : memref<3x28x832xbf16, #tpu.memory_space<vmem>>, vector<1x28x832xbf16>
    %13 = vector.shape_cast %12 : vector<1x28x832xbf16> to vector<28x832xbf16>
    %cst_14 = arith.constant dense<0.000000e+00> : vector<30x832xf32>
    %14 = tpu.matmul %11, %13, %cst_14 {dimension_numbers = #tpu.dot_dimension_numbers<[1], [0], [0], [1], [0, 0, 1, 1], [], []>} : vector<30x28xbf16>, vector<28x832xbf16>, vector<30x832xf32> -> vector<30x832xf32>
    %15 = arith.addf %10, %14 : vector<30x832xf32>
    %16 = vector.extract_strided_slice %6 {offsets = [2, 0], sizes = [30, 28], strides = [1, 1]} : vector<32x28xbf16> to vector<30x28xbf16>
    %c2 = arith.constant 2 : index
    %c0_15 = arith.constant 0 : index
    %c0_16 = arith.constant 0 : index
    %17 = vector.load %arg2[%c2, %c0_15, %c0_16] : memref<3x28x832xbf16, #tpu.memory_space<vmem>>, vector<1x28x832xbf16>
    %18 = vector.shape_cast %17 : vector<1x28x832xbf16> to vector<28x832xbf16>
    %cst_17 = arith.constant dense<0.000000e+00> : vector<30x832xf32>
    %19 = tpu.matmul %16, %18, %cst_17 {dimension_numbers = #tpu.dot_dimension_numbers<[1], [0], [0], [1], [0, 0, 1, 1], [], []>} : vector<30x28xbf16>, vector<28x832xbf16>, vector<30x832xf32> -> vector<30x832xf32>
    %20 = arith.addf %15, %19 : vector<30x832xf32>
    %c0_18 = arith.constant 0 : index
    %c0_19 = arith.constant 0 : index
    %21 = vector.load %arg3[%c0_18, %c0_19] : memref<1x832xf32, #tpu.memory_space<vmem>>, vector<1x832xf32>
    %22 = vector.broadcast %21 : vector<1x832xf32> to vector<30x832xf32>
    %23 = arith.addf %20, %22 : vector<30x832xf32>
    %cst_20 = arith.constant 0.000000e+00 : f32
    %24 = vector.broadcast %cst_20 : f32 to vector<30x832xf32>
    %25 = arith.maximumf %23, %24 : vector<30x832xf32>
    %26 = vector.extract_strided_slice %25 {offsets = [0, 0], sizes = [30, 416], strides = [1, 1]} : vector<30x832xf32> to vector<30x416xf32>
    %27 = vector.extract_strided_slice %25 {offsets = [0, 416], sizes = [30, 416], strides = [1, 1]} : vector<30x832xf32> to vector<30x416xf32>
    %28 = arith.maximumf %26, %27 : vector<30x416xf32>
    %29 = vector.extract_strided_slice %28 {offsets = [0, 0], sizes = [29, 416], strides = [1, 1]} : vector<30x416xf32> to vector<29x416xf32>
    %30 = vector.extract_strided_slice %28 {offsets = [1, 0], sizes = [29, 416], strides = [1, 1]} : vector<30x416xf32> to vector<29x416xf32>
    %31 = arith.maximumf %29, %30 : vector<29x416xf32>
    %32 = arith.truncf %31 : vector<29x416xf32> to vector<29x416xbf16>
    %c0_21 = arith.constant 0 : index
    %c0_22 = arith.constant 0 : index
    %33 = vector.load %arg6[%c0_21, %c0_22] : memref<13x29xbf16, #tpu.memory_space<vmem>>, vector<13x29xbf16>
    %cst_23 = arith.constant dense<0.000000e+00> : vector<13x416xf32>
    %34 = tpu.matmul %33, %32, %cst_23 {dimension_numbers = #tpu.dot_dimension_numbers<[1], [0], [0], [1], [0, 0, 1, 1], [], []>} : vector<13x29xbf16>, vector<29x416xbf16>, vector<13x416xf32> -> vector<13x416xf32>
    %35 = arith.truncf %34 : vector<13x416xf32> to vector<13x416xbf16>
    %36 = vector.extract_strided_slice %35 {offsets = [0, 0], sizes = [11, 416], strides = [1, 1]} : vector<13x416xbf16> to vector<11x416xbf16>
    %c0_24 = arith.constant 0 : index
    %c0_25 = arith.constant 0 : index
    %c0_26 = arith.constant 0 : index
    %37 = vector.load %arg4[%c0_24, %c0_25, %c0_26] : memref<3x416x704xbf16, #tpu.memory_space<vmem>>, vector<1x416x704xbf16>
    %38 = vector.shape_cast %37 : vector<1x416x704xbf16> to vector<416x704xbf16>
    %cst_27 = arith.constant dense<0.000000e+00> : vector<11x704xf32>
    %39 = tpu.matmul %36, %38, %cst_27 {dimension_numbers = #tpu.dot_dimension_numbers<[1], [0], [0], [1], [0, 0, 1, 1], [], []>} : vector<11x416xbf16>, vector<416x704xbf16>, vector<11x704xf32> -> vector<11x704xf32>
    %40 = vector.extract_strided_slice %35 {offsets = [1, 0], sizes = [11, 416], strides = [1, 1]} : vector<13x416xbf16> to vector<11x416xbf16>
    %c1_28 = arith.constant 1 : index
    %c0_29 = arith.constant 0 : index
    %c0_30 = arith.constant 0 : index
    %41 = vector.load %arg4[%c1_28, %c0_29, %c0_30] : memref<3x416x704xbf16, #tpu.memory_space<vmem>>, vector<1x416x704xbf16>
    %42 = vector.shape_cast %41 : vector<1x416x704xbf16> to vector<416x704xbf16>
    %cst_31 = arith.constant dense<0.000000e+00> : vector<11x704xf32>
    %43 = tpu.matmul %40, %42, %cst_31 {dimension_numbers = #tpu.dot_dimension_numbers<[1], [0], [0], [1], [0, 0, 1, 1], [], []>} : vector<11x416xbf16>, vector<416x704xbf16>, vector<11x704xf32> -> vector<11x704xf32>
    %44 = arith.addf %39, %43 : vector<11x704xf32>
    %45 = vector.extract_strided_slice %35 {offsets = [2, 0], sizes = [11, 416], strides = [1, 1]} : vector<13x416xbf16> to vector<11x416xbf16>
    %c2_32 = arith.constant 2 : index
    %c0_33 = arith.constant 0 : index
    %c0_34 = arith.constant 0 : index
    %46 = vector.load %arg4[%c2_32, %c0_33, %c0_34] : memref<3x416x704xbf16, #tpu.memory_space<vmem>>, vector<1x416x704xbf16>
    %47 = vector.shape_cast %46 : vector<1x416x704xbf16> to vector<416x704xbf16>
    %cst_35 = arith.constant dense<0.000000e+00> : vector<11x704xf32>
    %48 = tpu.matmul %45, %47, %cst_35 {dimension_numbers = #tpu.dot_dimension_numbers<[1], [0], [0], [1], [0, 0, 1, 1], [], []>} : vector<11x416xbf16>, vector<416x704xbf16>, vector<11x704xf32> -> vector<11x704xf32>
    %49 = arith.addf %44, %48 : vector<11x704xf32>
    %c0_36 = arith.constant 0 : index
    %c0_37 = arith.constant 0 : index
    %50 = vector.load %arg5[%c0_36, %c0_37] : memref<1x704xf32, #tpu.memory_space<vmem>>, vector<1x704xf32>
    %51 = vector.broadcast %50 : vector<1x704xf32> to vector<11x704xf32>
    %52 = arith.addf %49, %51 : vector<11x704xf32>
    %cst_38 = arith.constant 0.000000e+00 : f32
    %53 = vector.broadcast %cst_38 : f32 to vector<11x704xf32>
    %54 = arith.maximumf %52, %53 : vector<11x704xf32>
    %55 = vector.extract_strided_slice %54 {offsets = [0, 0], sizes = [11, 320], strides = [1, 1]} : vector<11x704xf32> to vector<11x320xf32>
    %56 = vector.extract_strided_slice %54 {offsets = [0, 384], sizes = [11, 320], strides = [1, 1]} : vector<11x704xf32> to vector<11x320xf32>
    %57 = arith.maximumf %55, %56 : vector<11x320xf32>
    %58 = vector.extract_strided_slice %57 {offsets = [0, 0], sizes = [10, 320], strides = [1, 1]} : vector<11x320xf32> to vector<10x320xf32>
    %59 = vector.extract_strided_slice %57 {offsets = [1, 0], sizes = [10, 320], strides = [1, 1]} : vector<11x320xf32> to vector<10x320xf32>
    %60 = arith.maximumf %58, %59 : vector<10x320xf32>
    %61 = arith.truncf %60 : vector<10x320xf32> to vector<10x320xbf16>
    %c0_39 = arith.constant 0 : index
    %c0_40 = arith.constant 0 : index
    %62 = vector.load %arg7[%c0_39, %c0_40] : memref<5x10xbf16, #tpu.memory_space<vmem>>, vector<5x10xbf16>
    %cst_41 = arith.constant dense<0.000000e+00> : vector<5x320xf32>
    %63 = tpu.matmul %62, %61, %cst_41 {dimension_numbers = #tpu.dot_dimension_numbers<[1], [0], [0], [1], [0, 0, 1, 1], [], []>} : vector<5x10xbf16>, vector<10x320xbf16>, vector<5x320xf32> -> vector<5x320xf32>
    %64 = arith.truncf %63 : vector<5x320xf32> to vector<5x320xbf16>
    %c0_42 = arith.constant 0 : index
    %c0_43 = arith.constant 0 : index
    %65 = vector.load %arg9[%c0_42, %c0_43] : memref<1x128xf32, #tpu.memory_space<vmem>>, vector<1x128xf32>
    %66 = vector.extract_strided_slice %64 {offsets = [0, 0], sizes = [1, 320], strides = [1, 1]} : vector<5x320xbf16> to vector<1x320xbf16>
    %c0_44 = arith.constant 0 : index
    %c0_45 = arith.constant 0 : index
    %c0_46 = arith.constant 0 : index
    %67 = vector.load %arg8[%c0_44, %c0_45, %c0_46] : memref<5x320x128xbf16, #tpu.memory_space<vmem>>, vector<1x320x128xbf16>
    %68 = vector.shape_cast %67 : vector<1x320x128xbf16> to vector<320x128xbf16>
    %cst_47 = arith.constant dense<0.000000e+00> : vector<1x128xf32>
    %69 = tpu.matmul %66, %68, %cst_47 {dimension_numbers = #tpu.dot_dimension_numbers<[1], [0], [0], [1], [0, 0, 1, 1], [], []>} : vector<1x320xbf16>, vector<320x128xbf16>, vector<1x128xf32> -> vector<1x128xf32>
    %70 = arith.addf %65, %69 : vector<1x128xf32>
    %71 = vector.extract_strided_slice %64 {offsets = [1, 0], sizes = [1, 320], strides = [1, 1]} : vector<5x320xbf16> to vector<1x320xbf16>
    %c1_48 = arith.constant 1 : index
    %c0_49 = arith.constant 0 : index
    %c0_50 = arith.constant 0 : index
    %72 = vector.load %arg8[%c1_48, %c0_49, %c0_50] : memref<5x320x128xbf16, #tpu.memory_space<vmem>>, vector<1x320x128xbf16>
    %73 = vector.shape_cast %72 : vector<1x320x128xbf16> to vector<320x128xbf16>
    %cst_51 = arith.constant dense<0.000000e+00> : vector<1x128xf32>
    %74 = tpu.matmul %71, %73, %cst_51 {dimension_numbers = #tpu.dot_dimension_numbers<[1], [0], [0], [1], [0, 0, 1, 1], [], []>} : vector<1x320xbf16>, vector<320x128xbf16>, vector<1x128xf32> -> vector<1x128xf32>
    %75 = arith.addf %70, %74 : vector<1x128xf32>
    %76 = vector.extract_strided_slice %64 {offsets = [2, 0], sizes = [1, 320], strides = [1, 1]} : vector<5x320xbf16> to vector<1x320xbf16>
    %c2_52 = arith.constant 2 : index
    %c0_53 = arith.constant 0 : index
    %c0_54 = arith.constant 0 : index
    %77 = vector.load %arg8[%c2_52, %c0_53, %c0_54] : memref<5x320x128xbf16, #tpu.memory_space<vmem>>, vector<1x320x128xbf16>
    %78 = vector.shape_cast %77 : vector<1x320x128xbf16> to vector<320x128xbf16>
    %cst_55 = arith.constant dense<0.000000e+00> : vector<1x128xf32>
    %79 = tpu.matmul %76, %78, %cst_55 {dimension_numbers = #tpu.dot_dimension_numbers<[1], [0], [0], [1], [0, 0, 1, 1], [], []>} : vector<1x320xbf16>, vector<320x128xbf16>, vector<1x128xf32> -> vector<1x128xf32>
    %80 = arith.addf %75, %79 : vector<1x128xf32>
    %81 = vector.extract_strided_slice %64 {offsets = [3, 0], sizes = [1, 320], strides = [1, 1]} : vector<5x320xbf16> to vector<1x320xbf16>
    %c3 = arith.constant 3 : index
    %c0_56 = arith.constant 0 : index
    %c0_57 = arith.constant 0 : index
    %82 = vector.load %arg8[%c3, %c0_56, %c0_57] : memref<5x320x128xbf16, #tpu.memory_space<vmem>>, vector<1x320x128xbf16>
    %83 = vector.shape_cast %82 : vector<1x320x128xbf16> to vector<320x128xbf16>
    %cst_58 = arith.constant dense<0.000000e+00> : vector<1x128xf32>
    %84 = tpu.matmul %81, %83, %cst_58 {dimension_numbers = #tpu.dot_dimension_numbers<[1], [0], [0], [1], [0, 0, 1, 1], [], []>} : vector<1x320xbf16>, vector<320x128xbf16>, vector<1x128xf32> -> vector<1x128xf32>
    %85 = arith.addf %80, %84 : vector<1x128xf32>
    %86 = vector.extract_strided_slice %64 {offsets = [4, 0], sizes = [1, 320], strides = [1, 1]} : vector<5x320xbf16> to vector<1x320xbf16>
    %c4 = arith.constant 4 : index
    %c0_59 = arith.constant 0 : index
    %c0_60 = arith.constant 0 : index
    %87 = vector.load %arg8[%c4, %c0_59, %c0_60] : memref<5x320x128xbf16, #tpu.memory_space<vmem>>, vector<1x320x128xbf16>
    %88 = vector.shape_cast %87 : vector<1x320x128xbf16> to vector<320x128xbf16>
    %cst_61 = arith.constant dense<0.000000e+00> : vector<1x128xf32>
    %89 = tpu.matmul %86, %88, %cst_61 {dimension_numbers = #tpu.dot_dimension_numbers<[1], [0], [0], [1], [0, 0, 1, 1], [], []>} : vector<1x320xbf16>, vector<320x128xbf16>, vector<1x128xf32> -> vector<1x128xf32>
    %90 = arith.addf %85, %89 : vector<1x128xf32>
    %cst_62 = arith.constant 0.000000e+00 : f32
    %91 = vector.broadcast %cst_62 : f32 to vector<1x128xf32>
    %92 = arith.maximumf %90, %91 : vector<1x128xf32>
    %93 = arith.truncf %92 : vector<1x128xf32> to vector<1x128xbf16>
    %c0_63 = arith.constant 0 : index
    %c0_64 = arith.constant 0 : index
    %94 = vector.load %arg10[%c0_63, %c0_64] : memref<128x10xbf16, #tpu.memory_space<vmem>>, vector<128x10xbf16>
    %cst_65 = arith.constant dense<0.000000e+00> : vector<1x10xf32>
    %95 = tpu.matmul %93, %94, %cst_65 {dimension_numbers = #tpu.dot_dimension_numbers<[1], [0], [0], [1], [0, 0, 1, 1], [], []>} : vector<1x128xbf16>, vector<128x10xbf16>, vector<1x10xf32> -> vector<1x10xf32>
    %c0_66 = arith.constant 0 : index
    %c0_67 = arith.constant 0 : index
    %96 = vector.load %arg11[%c0_66, %c0_67] : memref<1x10xf32, #tpu.memory_space<vmem>>, vector<1x10xf32>
    %97 = arith.addf %95, %96 : vector<1x10xf32>
    %cst_68 = arith.constant dense<0xFF800000> : vector<1xf32>
    %98 = vector.multi_reduction <maximumf>, %97, %cst_68 [1] : vector<1x10xf32> to vector<1xf32>
    %99 = vector.shape_cast %98 : vector<1xf32> to vector<1x1xf32>
    %100 = vector.broadcast %99 : vector<1x1xf32> to vector<1x10xf32>
    %101 = arith.subf %97, %100 : vector<1x10xf32>
    %102 = math.exp %101 : vector<1x10xf32>
    %cst_69 = arith.constant dense<0.000000e+00> : vector<1xf32>
    %103 = vector.multi_reduction <add>, %102, %cst_69 [1] : vector<1x10xf32> to vector<1xf32>
    %104 = vector.shape_cast %103 : vector<1xf32> to vector<1x1xf32>
    %105 = math.log %104 : vector<1x1xf32>
    %106 = vector.broadcast %99 : vector<1x1xf32> to vector<1x10xf32>
    %107 = arith.subf %97, %106 : vector<1x10xf32>
    %108 = vector.broadcast %105 : vector<1x1xf32> to vector<1x10xf32>
    %109 = arith.subf %107, %108 : vector<1x10xf32>
    %c0_70 = arith.constant 0 : index
    %c0_71 = arith.constant 0 : index
    %c0_72 = arith.constant 0 : index
    %110 = vector.load %arg12[%c0_70, %c0_71, %c0_72] : memref<1x1x10xf32, #tpu.memory_space<vmem>>, vector<1x1x10xf32>
    %111 = vector.shape_cast %110 : vector<1x1x10xf32> to vector<1x10xf32>
    %112 = vector.shape_cast %109 : vector<1x10xf32> to vector<1x1x10xf32>
    tpu.vector_store %arg12[%c0_70, %c0_71, %c0_72], %112 {strides = array<i32>} : memref<1x1x10xf32, #tpu.memory_space<vmem>>, vector<1x1x10xf32>,
    return
  }
  func.func @transform_0(%arg0: i32) -> (i32, i32, i32) {
    %c0_i32 = arith.constant 0 : i32
    %c0_i32_0 = arith.constant 0 : i32
    %c0_i32_1 = arith.constant 0 : i32
    return %arg0, %c0_i32, %c0_i32_0 : i32, i32, i32
  }
  func.func @transform_1(%arg0: i32) -> (i32, i32, i32) {
    %c0_i32 = arith.constant 0 : i32
    %c0_i32_0 = arith.constant 0 : i32
    %c0_i32_1 = arith.constant 0 : i32
    %c0_i32_2 = arith.constant 0 : i32
    return %c0_i32, %c0_i32_0, %c0_i32_1 : i32, i32, i32
  }
  func.func @transform_2(%arg0: i32) -> (i32, i32) {
    %c0_i32 = arith.constant 0 : i32
    %c0_i32_0 = arith.constant 0 : i32
    %c0_i32_1 = arith.constant 0 : i32
    return %c0_i32, %c0_i32_0 : i32, i32
  }
  func.func @transform_3(%arg0: i32) -> (i32, i32, i32) {
    %c0_i32 = arith.constant 0 : i32
    %c0_i32_0 = arith.constant 0 : i32
    %c0_i32_1 = arith.constant 0 : i32
    %c0_i32_2 = arith.constant 0 : i32
    return %c0_i32, %c0_i32_0, %c0_i32_1 : i32, i32, i32
  }
  func.func @transform_4(%arg0: i32) -> (i32, i32) {
    %c0_i32 = arith.constant 0 : i32
    %c0_i32_0 = arith.constant 0 : i32
    %c0_i32_1 = arith.constant 0 : i32
    return %c0_i32, %c0_i32_0 : i32, i32
  }
  func.func @transform_5(%arg0: i32) -> (i32, i32) {
    %c0_i32 = arith.constant 0 : i32
    %c0_i32_0 = arith.constant 0 : i32
    %c0_i32_1 = arith.constant 0 : i32
    return %c0_i32, %c0_i32_0 : i32, i32
  }
  func.func @transform_6(%arg0: i32) -> (i32, i32) {
    %c0_i32 = arith.constant 0 : i32
    %c0_i32_0 = arith.constant 0 : i32
    %c0_i32_1 = arith.constant 0 : i32
    return %c0_i32, %c0_i32_0 : i32, i32
  }
  func.func @transform_7(%arg0: i32) -> (i32, i32, i32) {
    %c0_i32 = arith.constant 0 : i32
    %c0_i32_0 = arith.constant 0 : i32
    %c0_i32_1 = arith.constant 0 : i32
    %c0_i32_2 = arith.constant 0 : i32
    return %c0_i32, %c0_i32_0, %c0_i32_1 : i32, i32, i32
  }
  func.func @transform_8(%arg0: i32) -> (i32, i32) {
    %c0_i32 = arith.constant 0 : i32
    %c0_i32_0 = arith.constant 0 : i32
    %c0_i32_1 = arith.constant 0 : i32
    return %c0_i32, %c0_i32_0 : i32, i32
  }
  func.func @transform_9(%arg0: i32) -> (i32, i32) {
    %c0_i32 = arith.constant 0 : i32
    %c0_i32_0 = arith.constant 0 : i32
    %c0_i32_1 = arith.constant 0 : i32
    return %c0_i32, %c0_i32_0 : i32, i32
  }
  func.func @transform_10(%arg0: i32) -> (i32, i32) {
    %c0_i32 = arith.constant 0 : i32
    %c0_i32_0 = arith.constant 0 : i32
    %c0_i32_1 = arith.constant 0 : i32
    return %c0_i32, %c0_i32_0 : i32, i32
  }
  func.func @transform_11(%arg0: i32) -> (i32, i32, i32) {
    %c0_i32 = arith.constant 0 : i32
    %c0_i32_0 = arith.constant 0 : i32
    %c0_i32_1 = arith.constant 0 : i32
    return %arg0, %c0_i32, %c0_i32_0 : i32, i32, i32
  }
}

</mosaic_0001>

<llo_original>
// kernel: mnist_convnet_forward.1
$region0: #{mnist_convnet_forward.1}
  #allocation0 [shape = 'u32[]', space=smem, size = 0x4, offset = 0x4, fixed_abs, tag = 'smem constant byte address 0x4 - core index']
  #allocation1 [shape = 'u32[144,128]{1,0:T(1,128)}', space=vmem, size = 0x12000, scoped, tag = 'internal scratch']
  #allocation2 [shape = 'bf16[32,28]{1,0:T(16,128)(2,1)}', space=vmem, size = 0x2000, scoped, tag = 'scratch operand']
  %s0 = inlined_call_operand.vmem [shape: f32[2,28,28], index: 0, kind: input, shape index: {}]
  %s1 = inlined_call_operand.hbm [shape: bf16[3,28,832], index: 1, kind: input, shape index: {}]
  %s2 = inlined_call_operand.hbm [shape: f32[1,832], index: 2, kind: input, shape index: {}]
  %s3 = inlined_call_operand.hbm [shape: bf16[3,416,704], index: 3, kind: input, shape index: {}]
  %s4 = inlined_call_operand.hbm [shape: f32[1,704], index: 4, kind: input, shape index: {}]
  %s5 = inlined_call_operand.hbm [shape: bf16[13,29], index: 5, kind: input, shape index: {}]
  %s6 = inlined_call_operand.hbm [shape: bf16[5,10], index: 6, kind: input, shape index: {}]
  %s7 = inlined_call_operand.hbm [shape: bf16[5,320,128], index: 7, kind: input, shape index: {}]
  %s8 = inlined_call_operand.hbm [shape: f32[1,128], index: 8, kind: input, shape index: {}]
  %s9 = inlined_call_operand.vmem [shape: bf16[128,10], index: 9, kind: input, shape index: {}]
  %s10 = inlined_call_operand.hbm [shape: f32[1,10], index: 10, kind: input, shape index: {}]
  %s11 = inlined_call_operand.hbm [shape: f32[2,1,10], index: 11, kind: output, shape index: {}]
  %s12 = sld [smem:[#allocation0]]
  $region113: #{mnist_convnet_forward.1} parent=0
    _
  %s14 = ssub.s32 1, %s12
  %s15 = scalar_select 0, %s14, %s12
  $region1: #{mnist_convnet_forward.1} parent=0
    #allocation3 [shape = 'u8[172032]{0}', space=vmem, size = 0x2a000, scoped, tag = 'input window, operand 1, single buffered']
    #allocation4 [shape = 's32[2]{0}', space=sflag, size = 0x8, scoped, tag = 'scoped memory for mnist_convnet_forward.1']
    #allocation5 [shape = 's32[2]{0}', space=sflag, size = 0x8, scoped, tag = 'scoped memory for mnist_convnet_forward.1']
    #allocation6 [shape = 'u8[3584]{0}', space=vmem, size = 0x1000, scoped, tag = 'input window, operand 2, single buffered']
    #allocation7 [shape = 's32[1]{0}', space=sflag, size = 0x4, scoped, tag = 'scoped memory for mnist_convnet_forward.1']
    #allocation8 [shape = 'u8[1916928]{0}', space=vmem, size = 0x1d4000, scoped, tag = 'input window, operand 3, single buffered']
    #allocation9 [shape = 'u8[3072]{0}', space=vmem, size = 0xc00, scoped, tag = 'input window, operand 4, single buffered']
    #allocation10 [shape = 's32[1]{0}', space=sflag, size = 0x4, scoped, tag = 'scoped memory for mnist_convnet_forward.1']
    #allocation11 [shape = 'u8[4096]{0}', space=vmem, size = 0x1000, scoped, tag = 'input window, operand 5, single buffered']
    #allocation12 [shape = 'u8[2048]{0}', space=vmem, size = 0x800, scoped, tag = 'input window, operand 6, single buffered']
    #allocation13 [shape = 's32[1]{0}', space=sflag, size = 0x4, scoped, tag = 'scoped memory for mnist_convnet_forward.1']
    #allocation14 [shape = 'u8[409600]{0}', space=vmem, size = 0x64000, scoped, tag = 'input window, operand 7, single buffered']
    #allocation15 [shape = 'u8[512]{0}', space=vmem, size = 0x400, scoped, tag = 'input window, operand 8, single buffered']
    #allocation16 [shape = 's32[1]{0}', space=sflag, size = 0x4, scoped, tag = 'scoped memory for mnist_convnet_forward.1']
    #allocation17 [shape = 'u8[512]{0}', space=vmem, size = 0x400, scoped, tag = 'input window, operand 10, single buffered']
    #allocation18 [shape = 'u8[1024]{0}', space=vmem, size = 0x400, scoped, tag = 'output window, operand 0']
    %16 = vsyncpa [#allocation4], 0
    %17 = vsyncpa [#allocation7], 0
    %18 = vsyncpa [#allocation10], 0
    %19 = vsyncpa [#allocation13], 0
    %20 = vsyncpa [#allocation16], 0
    %21 = vsyncpa [#allocation5], 0
    %s22 = scalar_lea.sflag [#allocation5], 1
    %23 = vsyncpa %s22, 0
    loop: start=0, step=1, limit=4
    $region2: #{mnist_convnet_forward.1} parent=1 // loop_pre_header
      _
    $region3: #{mnist_convnet_forward.1} parent=1 // loop_header
      %s25 = sphi 0, %s29
      %p26 = scmp.ge.s32.totalorder %s25, 4
      %s35 = sphi 0, %s37
      %s38 = sphi 0, %s35
      %s39 = sphi 0, %s38
      %s55 = sphi 0, %s39
      %s59 = sphi 0, %s59
      %s61 = sphi 0, %s59
      %s62 = sphi 0, %s61
      %s76 = sphi 0, %s62
      %s80 = sphi 0, %s80
      %s82 = sphi 0, %s80
      %s83 = sphi 0, %s82
      %s97 = sphi 0, %s83
      %s101 = sphi 0, %s101
      %s103 = sphi 0, %s101
      %s104 = sphi 0, %s103
      %s118 = sphi 0, %s104
      %s122 = sphi 0, %s122
      %s124 = sphi 0, %s122
      %s125 = sphi 0, %s124
      %s139 = sphi 0, %s125
      %s143 = sphi 0, %s143
      %s145 = sphi 0, %s143
      %s146 = sphi 0, %s145
      %s160 = sphi 0, %s146
      %s164 = sphi 0, %s164
      %s166 = sphi 0, %s164
      %s167 = sphi 0, %s166
      %s181 = sphi 0, %s167
      %s185 = sphi 0, %s185
      %s187 = sphi 0, %s185
      %s188 = sphi 0, %s187
      %s202 = sphi 0, %s188
      %s206 = sphi 0, %s206
      %s208 = sphi 0, %s206
      %s209 = sphi 0, %s208
      %s223 = sphi 0, %s209
      %s227 = sphi 0, %s227
      %s229 = sphi 0, %s227
      %s230 = sphi 0, %s229
      %s244 = sphi 0, %s230
      %s248 = sphi 0, %s248
      %s250 = sphi 0, %s248
      %s251 = sphi 0, %s250
      %s265 = sphi 0, %s251
      %s271 = sphi 0, %s273
      %s274 = sphi 0, %s271
      %s275 = sphi 0, %s274
      %s291 = sphi 0, %s275
    $region4: #{mnist_convnet_forward.1} parent=1 // loop_header_branch
      %28 = sbr.rel (%p26) target = $region8
    $region5: #{mnist_convnet_forward.1} parent=1 // loop_body
      %s30 = ssub.s32 %s25, 1
      %s31 = ssub.s32 %s25, 2
      %s32 = sadd.s32 %s25, 1
      %s33 = ssub.s32 %s25, %s32
      %p34 = scmp.eq.s32.totalorder %s33, 0
      %s36 = sadd.s32 %s35, 1
      %s37 = scalar_select %p34, %s35, %s36
      %p40 = pneg %p34
      %p41 = scmp.eq.s32.totalorder %s25, 1
      %p42 = por %p40, %p41
      %p43 = scmp.ne.s32.totalorder %s35, %s38
      %p44 = scmp.eq.s32.totalorder %s25, 0
      %p45 = por %p43, %p44
      %p46 = scmp.ne.s32.totalorder %s35, %s38
      %p47 = scmp.eq.s32.totalorder %s30, 1
      %p48 = por %p46, %p47
      %p49 = scmp.ne.s32.totalorder %s38, %s39
      %p50 = scmp.eq.s32.totalorder %s30, 0
      %p51 = por %p49, %p50
      %p52 = scmp.ne.s32.totalorder %s38, %s39
      %p53 = scmp.eq.s32.totalorder %s31, 1
      %p54 = por %p52, %p53
      %p56 = scmp.ne.s32.totalorder %s39, %s55
      %p57 = scmp.eq.s32.totalorder %s31, 0
      %p58 = por %p56, %p57
      %s60 = sadd.s32 %s59, 1
      %p63 = scmp.eq.s32.totalorder %s25, 1
      %p64 = scmp.ne.s32.totalorder %s59, %s61
      %p65 = scmp.eq.s32.totalorder %s25, 0
      %p66 = por %p64, %p65
      %p67 = scmp.ne.s32.totalorder %s59, %s61
      %p68 = scmp.eq.s32.totalorder %s30, 1
      %p69 = por %p67, %p68
      %p70 = scmp.ne.s32.totalorder %s61, %s62
      %p71 = scmp.eq.s32.totalorder %s30, 0
      %p72 = por %p70, %p71
      %p73 = scmp.ne.s32.totalorder %s61, %s62
      %p74 = scmp.eq.s32.totalorder %s31, 1
      %p75 = por %p73, %p74
      %p77 = scmp.ne.s32.totalorder %s62, %s76
      %p78 = scmp.eq.s32.totalorder %s31, 0
      %p79 = por %p77, %p78
      %s81 = sadd.s32 %s80, 1
      %p84 = scmp.eq.s32.totalorder %s25, 1
      %p85 = scmp.ne.s32.totalorder %s80, %s82
      %p86 = scmp.eq.s32.totalorder %s25, 0
      %p87 = por %p85, %p86
      %p88 = scmp.ne.s32.totalorder %s80, %s82
      %p89 = scmp.eq.s32.totalorder %s30, 1
      %p90 = por %p88, %p89
      %p91 = scmp.ne.s32.totalorder %s82, %s83
      %p92 = scmp.eq.s32.totalorder %s30, 0
      %p93 = por %p91, %p92
      %p94 = scmp.ne.s32.totalorder %s82, %s83
      %p95 = scmp.eq.s32.totalorder %s31, 1
      %p96 = por %p94, %p95
      %p98 = scmp.ne.s32.totalorder %s83, %s97
      %p99 = scmp.eq.s32.totalorder %s31, 0
      %p100 = por %p98, %p99
      %s102 = sadd.s32 %s101, 1
      %p105 = scmp.eq.s32.totalorder %s25, 1
      %p106 = scmp.ne.s32.totalorder %s101, %s103
      %p107 = scmp.eq.s32.totalorder %s25, 0
      %p108 = por %p106, %p107
      %p109 = scmp.ne.s32.totalorder %s101, %s103
      %p110 = scmp.eq.s32.totalorder %s30, 1
      %p111 = por %p109, %p110
      %p112 = scmp.ne.s32.totalorder %s103, %s104
      %p113 = scmp.eq.s32.totalorder %s30, 0
      %p114 = por %p112, %p113
      %p115 = scmp.ne.s32.totalorder %s103, %s104
      %p116 = scmp.eq.s32.totalorder %s31, 1
      %p117 = por %p115, %p116
      %p119 = scmp.ne.s32.totalorder %s104, %s118
      %p120 = scmp.eq.s32.totalorder %s31, 0
      %p121 = por %p119, %p120
      %s123 = sadd.s32 %s122, 1
      %p126 = scmp.eq.s32.totalorder %s25, 1
      %p127 = scmp.ne.s32.totalorder %s122, %s124
      %p128 = scmp.eq.s32.totalorder %s25, 0
      %p129 = por %p127, %p128
      %p130 = scmp.ne.s32.totalorder %s122, %s124
      %p131 = scmp.eq.s32.totalorder %s30, 1
      %p132 = por %p130, %p131
      %p133 = scmp.ne.s32.totalorder %s124, %s125
      %p134 = scmp.eq.s32.totalorder %s30, 0
      %p135 = por %p133, %p134
      %p136 = scmp.ne.s32.totalorder %s124, %s125
      %p137 = scmp.eq.s32.totalorder %s31, 1
      %p138 = por %p136, %p137
      %p140 = scmp.ne.s32.totalorder %s125, %s139
      %p141 = scmp.eq.s32.totalorder %s31, 0
      %p142 = por %p140, %p141
      %s144 = sadd.s32 %s143, 1
      %p147 = scmp.eq.s32.totalorder %s25, 1
      %p148 = scmp.ne.s32.totalorder %s143, %s145
      %p149 = scmp.eq.s32.totalorder %s25, 0
      %p150 = por %p148, %p149
      %p151 = scmp.ne.s32.totalorder %s143, %s145
      %p152 = scmp.eq.s32.totalorder %s30, 1
      %p153 = por %p151, %p152
      %p154 = scmp.ne.s32.totalorder %s145, %s146
      %p155 = scmp.eq.s32.totalorder %s30, 0
      %p156 = por %p154, %p155
      %p157 = scmp.ne.s32.totalorder %s145, %s146
      %p158 = scmp.eq.s32.totalorder %s31, 1
      %p159 = por %p157, %p158
      %p161 = scmp.ne.s32.totalorder %s146, %s160
      %p162 = scmp.eq.s32.totalorder %s31, 0
      %p163 = por %p161, %p162
      %s165 = sadd.s32 %s164, 1
      %p168 = scmp.eq.s32.totalorder %s25, 1
      %p169 = scmp.ne.s32.totalorder %s164, %s166
      %p170 = scmp.eq.s32.totalorder %s25, 0
      %p171 = por %p169, %p170
      %p172 = scmp.ne.s32.totalorder %s164, %s166
      %p173 = scmp.eq.s32.totalorder %s30, 1
      %p174 = por %p172, %p173
      %p175 = scmp.ne.s32.totalorder %s166, %s167
      %p176 = scmp.eq.s32.totalorder %s30, 0
      %p177 = por %p175, %p176
      %p178 = scmp.ne.s32.totalorder %s166, %s167
      %p179 = scmp.eq.s32.totalorder %s31, 1
      %p180 = por %p178, %p179
      %p182 = scmp.ne.s32.totalorder %s167, %s181
      %p183 = scmp.eq.s32.totalorder %s31, 0
      %p184 = por %p182, %p183
      %s186 = sadd.s32 %s185, 1
      %p189 = scmp.eq.s32.totalorder %s25, 1
      %p190 = scmp.ne.s32.totalorder %s185, %s187
      %p191 = scmp.eq.s32.totalorder %s25, 0
      %p192 = por %p190, %p191
      %p193 = scmp.ne.s32.totalorder %s185, %s187
      %p194 = scmp.eq.s32.totalorder %s30, 1
      %p195 = por %p193, %p194
      %p196 = scmp.ne.s32.totalorder %s187, %s188
      %p197 = scmp.eq.s32.totalorder %s30, 0
      %p198 = por %p196, %p197
      %p199 = scmp.ne.s32.totalorder %s187, %s188
      %p200 = scmp.eq.s32.totalorder %s31, 1
      %p201 = por %p199, %p200
      %p203 = scmp.ne.s32.totalorder %s188, %s202
      %p204 = scmp.eq.s32.totalorder %s31, 0
      %p205 = por %p203, %p204
      %s207 = sadd.s32 %s206, 1
      %p210 = scmp.eq.s32.totalorder %s25, 1
      %p211 = scmp.ne.s32.totalorder %s206, %s208
      %p212 = scmp.eq.s32.totalorder %s25, 0
      %p213 = por %p211, %p212
      %p214 = scmp.ne.s32.totalorder %s206, %s208
      %p215 = scmp.eq.s32.totalorder %s30, 1
      %p216 = por %p214, %p215
      %p217 = scmp.ne.s32.totalorder %s208, %s209
      %p218 = scmp.eq.s32.totalorder %s30, 0
      %p219 = por %p217, %p218
      %p220 = scmp.ne.s32.totalorder %s208, %s209
      %p221 = scmp.eq.s32.totalorder %s31, 1
      %p222 = por %p220, %p221
      %p224 = scmp.ne.s32.totalorder %s209, %s223
      %p225 = scmp.eq.s32.totalorder %s31, 0
      %p226 = por %p224, %p225
      %s228 = sadd.s32 %s227, 1
      %p231 = scmp.eq.s32.totalorder %s25, 1
      %p232 = scmp.ne.s32.totalorder %s227, %s229
      %p233 = scmp.eq.s32.totalorder %s25, 0
      %p234 = por %p232, %p233
      %p235 = scmp.ne.s32.totalorder %s227, %s229
      %p236 = scmp.eq.s32.totalorder %s30, 1
      %p237 = por %p235, %p236
      %p238 = scmp.ne.s32.totalorder %s229, %s230
      %p239 = scmp.eq.s32.totalorder %s30, 0
      %p240 = por %p238, %p239
      %p241 = scmp.ne.s32.totalorder %s229, %s230
      %p242 = scmp.eq.s32.totalorder %s31, 1
      %p243 = por %p241, %p242
      %p245 = scmp.ne.s32.totalorder %s230, %s244
      %p246 = scmp.eq.s32.totalorder %s31, 0
      %p247 = por %p245, %p246
      %s249 = sadd.s32 %s248, 1
      %p252 = scmp.eq.s32.totalorder %s25, 1
      %p253 = scmp.ne.s32.totalorder %s248, %s250
      %p254 = scmp.eq.s32.totalorder %s25, 0
      %p255 = por %p253, %p254
      %p256 = scmp.ne.s32.totalorder %s248, %s250
      %p257 = scmp.eq.s32.totalorder %s30, 1
      %p258 = por %p256, %p257
      %p259 = scmp.ne.s32.totalorder %s250, %s251
      %p260 = scmp.eq.s32.totalorder %s30, 0
      %p261 = por %p259, %p260
      %p262 = scmp.ne.s32.totalorder %s250, %s251
      %p263 = scmp.eq.s32.totalorder %s31, 1
      %p264 = por %p262, %p263
      %p266 = scmp.ne.s32.totalorder %s251, %s265
      %p267 = scmp.eq.s32.totalorder %s31, 0
      %p268 = por %p266, %p267
      %s269 = ssub.s32 %s25, %s32
      %p270 = scmp.eq.s32.totalorder %s269, 0
      %s272 = sadd.s32 %s271, 1
      %s273 = scalar_select %p270, %s271, %s272
      %p276 = pneg %p270
      %p277 = scmp.eq.s32.totalorder %s25, 1
      %p278 = por %p276, %p277
      %p279 = scmp.ne.s32.totalorder %s271, %s274
      %p280 = scmp.eq.s32.totalorder %s25, 0
      %p281 = por %p279, %p280
      %p282 = scmp.ne.s32.totalorder %s271, %s274
      %p283 = scmp.eq.s32.totalorder %s30, 1
      %p284 = por %p282, %p283
      %p285 = scmp.ne.s32.totalorder %s274, %s275
      %p286 = scmp.eq.s32.totalorder %s30, 0
      %p287 = por %p285, %p286
      %p288 = scmp.ne.s32.totalorder %s274, %s275
      %p289 = scmp.eq.s32.totalorder %s31, 1
      %p290 = por %p288, %p289
      %p292 = scmp.ne.s32.totalorder %s275, %s291
      %p293 = scmp.eq.s32.totalorder %s31, 0
      %p294 = por %p292, %p293
      %p295 = scmp.le.s32.totalorder 1, %s25
      %p296 = scmp.lt.s32.totalorder %s25, 3
      %p297 = pnand %p295, %p296
      %p298 = pneg %p297
      // Predicated region
      $region9: #{mnist_convnet_forward.1} parent=5 // pred_check
        _
      $region10: #{mnist_convnet_forward.1} parent=5 // pred_check_branch
        %300 = sbr.rel (%p297) target = $region12
      $region11: #{mnist_convnet_forward.1} parent=5 // pred_region
        %s301 = ssub.s32 %s25, 1
        // Predicated region
        $region13: #{mnist_convnet_forward.1} parent=11 // pred_check
          %p302 = pneg %p72
        $region14: #{mnist_convnet_forward.1} parent=11 // pred_check_branch
          %304 = sbr.rel (%p302) target = $region16
        $region15: #{mnist_convnet_forward.1} parent=11 // pred_region
          %s306 = ssub.s32 5376, 5376
          %307 = vsyncadd [#allocation4], %s306
          %s308 = sshll.u32 [#allocation3], 4
          %s309 = int_to_ptr.vmem [resolvable:$true] %s308
          %314 = dma.hbm_to_vmem [thread:$0]  %s1, 5376, %s309, [#allocation4], 448, 448, 28
        $region16: #{mnist_convnet_forward.1} parent=11 // pred_fallthru
          _
        // Predicated region
        $region17: #{mnist_convnet_forward.1} parent=11 // pred_check
          %p315 = pneg %p93
        $region18: #{mnist_convnet_forward.1} parent=11 // pred_check_branch
          %317 = sbr.rel (%p315) target = $region20
        $region19: #{mnist_convnet_forward.1} parent=11 // pred_region
          %s319 = ssub.s32 112, 112
          %320 = vsyncadd [#allocation7], %s319
          %s322 = sshll.u32 [#allocation6], 4
          %s323 = int_to_ptr.vmem [resolvable:$true] %s322
          %325 = dma.hbm_to_vmem [thread:$0]  %s2, 112, %s323, [#allocation7]
        $region20: #{mnist_convnet_forward.1} parent=11 // pred_fallthru
          _
        // Predicated region
        $region21: #{mnist_convnet_forward.1} parent=11 // pred_check
          %p326 = pneg %p114
        $region22: #{mnist_convnet_forward.1} parent=11 // pred_check_branch
          %328 = sbr.rel (%p326) target = $region24
        $region23: #{mnist_convnet_forward.1} parent=11 // pred_region
          %s330 = ssub.s32 59904, 59904
          %331 = vsyncadd [#allocation7], %s330
          %s332 = sshll.u32 [#allocation8], 4
          %s333 = int_to_ptr.vmem [resolvable:$true] %s332
          %338 = dma.hbm_to_vmem [thread:$0]  %s3, 59904, %s333, [#allocation7], 384, 384, 24
        $region24: #{mnist_convnet_forward.1} parent=11 // pred_fallthru
          _
        // Predicated region
        $region25: #{mnist_convnet_forward.1} parent=11 // pred_check
          %p339 = pneg %p135
        $region26: #{mnist_convnet_forward.1} parent=11 // pred_check_branch
          %341 = sbr.rel (%p339) target = $region28
        $region27: #{mnist_convnet_forward.1} parent=11 // pred_region
          %s343 = ssub.s32 96, 96
          %344 = vsyncadd [#allocation10], %s343
          %s346 = sshll.u32 [#allocation9], 4
          %s347 = int_to_ptr.vmem [resolvable:$true] %s346
          %349 = dma.hbm_to_vmem [thread:$0]  %s4, 96, %s347, [#allocation10]
        $region28: #{mnist_convnet_forward.1} parent=11 // pred_fallthru
          _
        // Predicated region
        $region29: #{mnist_convnet_forward.1} parent=11 // pred_check
          %p350 = pneg %p156
        $region30: #{mnist_convnet_forward.1} parent=11 // pred_check_branch
          %352 = sbr.rel (%p350) target = $region32
        $region31: #{mnist_convnet_forward.1} parent=11 // pred_region
          %s354 = ssub.s32 128, 128
          %355 = vsyncadd [#allocation10], %s354
          %s356 = sshll.u32 [#allocation11], 4
          %s357 = int_to_ptr.vmem [resolvable:$true] %s356
          %362 = dma.hbm_to_vmem [thread:$0]  %s5, 128, %s357, [#allocation10], 64, 64, 4
        $region32: #{mnist_convnet_forward.1} parent=11 // pred_fallthru
          _
        // Predicated region
        $region33: #{mnist_convnet_forward.1} parent=11 // pred_check
          %p363 = pneg %p177
        $region34: #{mnist_convnet_forward.1} parent=11 // pred_check_branch
          %365 = sbr.rel (%p363) target = $region36
        $region35: #{mnist_convnet_forward.1} parent=11 // pred_region
          %s367 = ssub.s32 64, 64
          %368 = vsyncadd [#allocation13], %s367
          %s370 = sshll.u32 [#allocation12], 4
          %s371 = int_to_ptr.vmem [resolvable:$true] %s370
          %373 = dma.hbm_to_vmem [thread:$0]  %s6, 64, %s371, [#allocation13]
        $region36: #{mnist_convnet_forward.1} parent=11 // pred_fallthru
          _
        // Predicated region
        $region37: #{mnist_convnet_forward.1} parent=11 // pred_check
          %p374 = pneg %p198
        $region38: #{mnist_convnet_forward.1} parent=11 // pred_check_branch
          %376 = sbr.rel (%p374) target = $region40
        $region39: #{mnist_convnet_forward.1} parent=11 // pred_region
          %s378 = ssub.s32 12800, 12800
          %379 = vsyncadd [#allocation13], %s378
          %s380 = sshll.u32 [#allocation14], 4
          %s381 = int_to_ptr.vmem [resolvable:$true] %s380
          %386 = dma.hbm_to_vmem [thread:$0]  %s7, 12800, %s381, [#allocation13], 64, 64, 4
        $region40: #{mnist_convnet_forward.1} parent=11 // pred_fallthru
          _
        // Predicated region
        $region41: #{mnist_convnet_forward.1} parent=11 // pred_check
          %p387 = pneg %p219
        $region42: #{mnist_convnet_forward.1} parent=11 // pred_check_branch
          %389 = sbr.rel (%p387) target = $region44
        $region43: #{mnist_convnet_forward.1} parent=11 // pred_region
          %s391 = ssub.s32 16, 16
          %392 = vsyncadd [#allocation16], %s391
          %s394 = sshll.u32 [#allocation15], 4
          %s395 = int_to_ptr.vmem [resolvable:$true] %s394
          %397 = dma.hbm_to_vmem [thread:$0]  %s8, 16, %s395, [#allocation16]
        $region44: #{mnist_convnet_forward.1} parent=11 // pred_fallthru
          _
        // Predicated region
        $region45: #{mnist_convnet_forward.1} parent=11 // pred_check
          %p398 = pneg %p240
        $region46: #{mnist_convnet_forward.1} parent=11 // pred_check_branch
          %400 = sbr.rel (%p398) target = $region48
        $region47: #{mnist_convnet_forward.1} parent=11 // pred_region
          _
        $region48: #{mnist_convnet_forward.1} parent=11 // pred_fallthru
          _
        // Predicated region
        $region49: #{mnist_convnet_forward.1} parent=11 // pred_check
          %p401 = pneg %p261
        $region50: #{mnist_convnet_forward.1} parent=11 // pred_check_branch
          %403 = sbr.rel (%p401) target = $region52
        $region51: #{mnist_convnet_forward.1} parent=11 // pred_region
          %s405 = ssub.s32 16, 16
          %406 = vsyncadd [#allocation16], %s405
          %s408 = sshll.u32 [#allocation17], 4
          %s409 = int_to_ptr.vmem [resolvable:$true] %s408
          %411 = dma.hbm_to_vmem [thread:$0]  %s10, 16, %s409, [#allocation16]
        $region52: #{mnist_convnet_forward.1} parent=11 // pred_fallthru
          _
      $region12: #{mnist_convnet_forward.1} parent=5 // pred_fallthru
        _
      %p412 = scmp.lt.s32.totalorder %s25, 2
      // Predicated region
      $region53: #{mnist_convnet_forward.1} parent=5 // pred_check
        %p413 = pneg %p412
      $region54: #{mnist_convnet_forward.1} parent=5 // pred_check_branch
        %415 = sbr.rel (%p413) target = $region56
      $region55: #{mnist_convnet_forward.1} parent=5 // pred_region
        // Predicated region
        $region57: #{mnist_convnet_forward.1} parent=55 // pred_check
          %p416 = pneg %p45
        $region58: #{mnist_convnet_forward.1} parent=55 // pred_check_branch
          %418 = sbr.rel (%p416) target = $region60
        $region59: #{mnist_convnet_forward.1} parent=55 // pred_region
          %p419 = scmp.lt.s32.totalorder %s25, 1
          %s420 = scalar_select %p419, %s25, 1
          %s421 = smul.addr %s420, 4
          %s422 = smul.addr %s421, 8
          %s423 = scalar_lea.vmem %s0, %s422
        $region60: #{mnist_convnet_forward.1} parent=55 // pred_fallthru
          _
      $region56: #{mnist_convnet_forward.1} parent=5 // pred_fallthru
        _
      %p424 = scmp.le.s32.totalorder 1, %s25
      %p425 = scmp.lt.s32.totalorder %s25, 3
      %p426 = pnand %p424, %p425
      %p427 = pneg %p426
      // Predicated region
      $region61: #{mnist_convnet_forward.1} parent=5 // pred_check
        _
      $region62: #{mnist_convnet_forward.1} parent=5 // pred_check_branch
        %429 = sbr.rel (%p426) target = $region64
      $region63: #{mnist_convnet_forward.1} parent=5 // pred_region
        %s430 = ssub.s32 %s25, 1
        // Predicated region
        $region65: #{mnist_convnet_forward.1} parent=63 // pred_check
          %p431 = pneg %p72
        $region66: #{mnist_convnet_forward.1} parent=63 // pred_check_branch
          %433 = sbr.rel (%p431) target = $region68
        $region67: #{mnist_convnet_forward.1} parent=63 // pred_region
          %434 = dma.done [#allocation4], 5376
        $region68: #{mnist_convnet_forward.1} parent=63 // pred_fallthru
          _
        // Predicated region
        $region69: #{mnist_convnet_forward.1} parent=63 // pred_check
          %p435 = pneg %p93
        $region70: #{mnist_convnet_forward.1} parent=63 // pred_check_branch
          %437 = sbr.rel (%p435) target = $region72
        $region71: #{mnist_convnet_forward.1} parent=63 // pred_region
          %438 = dma.done [#allocation7], 112
        $region72: #{mnist_convnet_forward.1} parent=63 // pred_fallthru
          _
        // Predicated region
        $region73: #{mnist_convnet_forward.1} parent=63 // pred_check
          %p439 = pneg %p114
        $region74: #{mnist_convnet_forward.1} parent=63 // pred_check_branch
          %441 = sbr.rel (%p439) target = $region76
        $region75: #{mnist_convnet_forward.1} parent=63 // pred_region
          %442 = dma.done [#allocation7], 59904
        $region76: #{mnist_convnet_forward.1} parent=63 // pred_fallthru
          _
        // Predicated region
        $region77: #{mnist_convnet_forward.1} parent=63 // pred_check
          %p443 = pneg %p135
        $region78: #{mnist_convnet_forward.1} parent=63 // pred_check_branch
          %445 = sbr.rel (%p443) target = $region80
        $region79: #{mnist_convnet_forward.1} parent=63 // pred_region
          %446 = dma.done [#allocation10], 96
        $region80: #{mnist_convnet_forward.1} parent=63 // pred_fallthru
          _
        // Predicated region
        $region81: #{mnist_convnet_forward.1} parent=63 // pred_check
          %p447 = pneg %p156
        $region82: #{mnist_convnet_forward.1} parent=63 // pred_check_branch
          %449 = sbr.rel (%p447) target = $region84
        $region83: #{mnist_convnet_forward.1} parent=63 // pred_region
          %450 = dma.done [#allocation10], 128
        $region84: #{mnist_convnet_forward.1} parent=63 // pred_fallthru
          _
        // Predicated region
        $region85: #{mnist_convnet_forward.1} parent=63 // pred_check
          %p451 = pneg %p177
        $region86: #{mnist_convnet_forward.1} parent=63 // pred_check_branch
          %453 = sbr.rel (%p451) target = $region88
        $region87: #{mnist_convnet_forward.1} parent=63 // pred_region
          %454 = dma.done [#allocation13], 64
        $region88: #{mnist_convnet_forward.1} parent=63 // pred_fallthru
          _
        // Predicated region
        $region89: #{mnist_convnet_forward.1} parent=63 // pred_check
          %p455 = pneg %p198
        $region90: #{mnist_convnet_forward.1} parent=63 // pred_check_branch
          %457 = sbr.rel (%p455) target = $region92
        $region91: #{mnist_convnet_forward.1} parent=63 // pred_region
          %458 = dma.done [#allocation13], 12800
        $region92: #{mnist_convnet_forward.1} parent=63 // pred_fallthru
          _
        // Predicated region
        $region93: #{mnist_convnet_forward.1} parent=63 // pred_check
          %p459 = pneg %p219
        $region94: #{mnist_convnet_forward.1} parent=63 // pred_check_branch
          %461 = sbr.rel (%p459) target = $region96
        $region95: #{mnist_convnet_forward.1} parent=63 // pred_region
          %462 = dma.done [#allocation16], 16
        $region96: #{mnist_convnet_forward.1} parent=63 // pred_fallthru
          _
        // Predicated region
        $region97: #{mnist_convnet_forward.1} parent=63 // pred_check
          %p463 = pneg %p261
        $region98: #{mnist_convnet_forward.1} parent=63 // pred_check_branch
          %465 = sbr.rel (%p463) target = $region100
        $region99: #{mnist_convnet_forward.1} parent=63 // pred_region
          %466 = dma.done [#allocation16], 16
        $region100: #{mnist_convnet_forward.1} parent=63 // pred_fallthru
          _
        %p467 = scmp.lt.s32.totalorder %s30, 1
        %s468 = scalar_select %p467, %s30, 1
        %s469 = smul.addr %s468, 4
        %s470 = smul.addr %s469, 8
        %s471 = scalar_lea.vmem %s0, %s470
        %p472 = pneg %p51
        %p473 = pneg %p48
        %p474 = pneg %p72
        %p475 = pneg %p69
        %p476 = pneg %p93
        %p477 = pneg %p90
        %p478 = pneg %p114
        %p479 = pneg %p111
        %p480 = pneg %p135
        %p481 = pneg %p132
        %p482 = pneg %p156
        %p483 = pneg %p153
        %p484 = pneg %p177
        %p485 = pneg %p174
        %p486 = pneg %p198
        %p487 = pneg %p195
        %p488 = pneg %p219
        %p489 = pneg %p216
        %p490 = pneg %p240
        %p491 = pneg %p237
        %p492 = pneg %p261
        %p493 = pneg %p258
        %p494 = pneg %p287
        %p495 = pneg %p284
        %s496 = sand.u32 %s274, 1
        %s497 = scalar_lea.sflag [#allocation5], %s496
        %s498 = sand.u32 %s274, 1
        %s499 = scalar_lea.vmem [#allocation18], %s498
        %p500 = scmp.lt.s32.totalorder %s30, 1
        %s501 = scalar_select %p500, %s30, 1
        %s502 = smul.addr %s501, 4
        %s503 = smul.addr %s502, 8
        %s504 = scalar_lea.vmem %s0, %s503
        %vm506 = vcmask 228352
        %507 = vst.msk [vmem:[#allocation2] sm:$0xff] %vm506, 0
        %508 = vst.msk [vmem:[#allocation2 + $0x8] sm:$0xff] %vm506, 0
        %v509 = vld [vmem:[%s504] sm:$0xff]
        %v510 = vld [vmem:[%s504 + $0x8] sm:$0xff]
        %v511 = vld [vmem:[%s504 + $0x10] sm:$0xff]
        %v512 = vld [vmem:[%s504 + $0x18] sm:$0xf]
        %v513 = vpack.c.bf16 %v510, %v509
        %v514 = vpack.c.bf16 %v512, %v511
        %515 = vst.msk [vmem:[#allocation2] sm:$0xff] %vm506, %v513
        %vm516 = vcmask 226304
        %517 = vst.msk [vmem:[#allocation2 + $0x8] sm:$0x3f] %vm516, %v514
        %v518 = vld [vmem:[#allocation2] sm:$0xff]
        %v519 = vld [vmem:[#allocation2 + $0x8] sm:$0xff]
        %v520 = vld [vmem:[#allocation3] sm:$0xff]
        %v521 = vld [vmem:[#allocation3 + $0x8] sm:$0xff]
        %v522 = vld [vmem:[#allocation3 + $0x10] sm:$0xff]
        %v523 = vld [vmem:[#allocation3 + $0x18] sm:$0xf]
        %v524 = vld [vmem:[#allocation3 + $0x1c] sm:$0xff]
        %v525 = vld [vmem:[#allocation3 + $0x24] sm:$0xff]
        %v526 = vld [vmem:[#allocation3 + $0x2c] sm:$0xff]
        %v527 = vld [vmem:[#allocation3 + $0x34] sm:$0xf]
        %v528 = vld [vmem:[#allocation3 + $0x38] sm:$0xff]
        %v529 = vld [vmem:[#allocation3 + $0x40] sm:$0xff]
        %v530 = vld [vmem:[#allocation3 + $0x48] sm:$0xff]
        %v531 = vld [vmem:[#allocation3 + $0x50] sm:$0xf]
        %v532 = vld [vmem:[#allocation3 + $0x54] sm:$0x33]
        %v533 = vld [vmem:[#allocation3 + $0x5c] sm:$0x33]
        %v534 = vld [vmem:[#allocation3 + $0x64] sm:$0x33]
        %v535 = vld [vmem:[#allocation3 + $0x6c] sm:$0x3]
        %s536 = scalar_lea.vmem [#allocation3], 112
        %v537 = vld [vmem:[%s536] sm:$0xff]
        %v538 = vld [vmem:[%s536 + $0x8] sm:$0xff]
        %v539 = vld [vmem:[%s536 + $0x10] sm:$0xff]
        %v540 = vld [vmem:[%s536 + $0x18] sm:$0xf]
        %v541 = vld [vmem:[%s536 + $0x1c] sm:$0xff]
        %v542 = vld [vmem:[%s536 + $0x24] sm:$0xff]
        %v543 = vld [vmem:[%s536 + $0x2c] sm:$0xff]
        %v544 = vld [vmem:[%s536 + $0x34] sm:$0xf]
        %v545 = vld [vmem:[%s536 + $0x38] sm:$0xff]
        %v546 = vld [vmem:[%s536 + $0x40] sm:$0xff]
        %v547 = vld [vmem:[%s536 + $0x48] sm:$0xff]
        %v548 = vld [vmem:[%s536 + $0x50] sm:$0xf]
        %v549 = vld [vmem:[%s536 + $0x54] sm:$0x33]
        %v550 = vld [vmem:[%s536 + $0x5c] sm:$0x33]
        %v551 = vld [vmem:[%s536 + $0x64] sm:$0x33]
        %v552 = vld [vmem:[%s536 + $0x6c] sm:$0x3]
        %vm553 = vsmask.f32 7424
        %v555 = vshrl.u32 %v518, 16
        %v557 = vshll.u32 %v518, 16
        %v559 = vrot.slane %v557, 1
        %v560 = vor.u32 %v555, %v559
        %v562 = vshll.u32 %v519, 16
        %v564 = vrot.slane %v562, 1
        %v565 = vsel %vm553, %v560, %v564
        %v566 = vshrl.u32 %v519, 16
        %v568 = vor.u32 %v566, %v564
        %v585 = vunpack.c.l.b16 %v537
        %v586 = vunpack.c.h.b16 %v537
        %v587 = vunpack.c.l.b16 %v538
        %v588 = vunpack.c.h.b16 %v538
        %v589 = vunpack.c.l.b16 %v539
        %v590 = vunpack.c.h.b16 %v539
        %v591 = vunpack.c.l.b16 %v540
        %v592 = vunpack.c.l.b16 %v541
        %v593 = vunpack.c.h.b16 %v541
        %v594 = vunpack.c.l.b16 %v542
        %v595 = vunpack.c.h.b16 %v542
        %v596 = vunpack.c.l.b16 %v543
        %v597 = vunpack.c.h.b16 %v543
        %v598 = vunpack.c.l.b16 %v544
        %v599 = vunpack.c.l.b16 %v545
        %v600 = vunpack.c.h.b16 %v545
        %v601 = vunpack.c.l.b16 %v546
        %v602 = vunpack.c.h.b16 %v546
        %v603 = vunpack.c.l.b16 %v547
        %v604 = vunpack.c.h.b16 %v547
        %v605 = vunpack.c.l.b16 %v548
        %v606 = vunpack.c.l.b16 %v549
        %v607 = vunpack.c.h.b16 %v549
        %v608 = vunpack.c.l.b16 %v550
        %v609 = vunpack.c.h.b16 %v550
        %v610 = vunpack.c.l.b16 %v551
        %v611 = vunpack.c.h.b16 %v551
        %v612 = vunpack.c.l.b16 %v552
        %v613 = vpack.c.b16 %v592, %v585
        %v614 = vpack.c.b16 %v593, %v586
        %v615 = vpack.c.b16 %v594, %v587
        %v616 = vpack.c.b16 %v595, %v588
        %v617 = vpack.c.b16 %v596, %v589
        %v618 = vpack.c.b16 %v597, %v590
        %v619 = vpack.c.b16 %v598, %v591
        %v620 = vpack.c.b16 %v606, %v599
        %v621 = vpack.c.b16 %v607, %v600
        %v622 = vpack.c.b16 %v608, %v601
        %v623 = vpack.c.b16 %v609, %v602
        %v624 = vpack.c.b16 %v610, %v603
        %v625 = vpack.c.b16 %v611, %v604
        %v626 = vpack.c.b16 %v612, %v605
        %v635 = vsel %vm506, %v565, 0
        %v638 = vsel %vm506, %v568, 0
        %vm640 = vcmask 1045504
        %v642 = vsel %vm640, %v620, 0
        %v645 = vsel %vm640, %v621, 0
        %v648 = vsel %vm640, %v622, 0
        %v651 = vsel %vm640, %v623, 0
        %v654 = vsel %vm640, %v624, 0
        %v657 = vsel %vm640, %v625, 0
        %v660 = vsel %vm640, %v626, 0
        %662 = vmatprep.subr.bf16.mxu0 %v614
        %663 = vmatpush1.bf16.msra.mxu0 %v613
        %664 = vmatprep.subr.bf16.mxu0 %v645
        %665 = vmatpush1.bf16.msra.mxu0 %v642
        %666 = vmatprep.subr.bf16.mxu0 0
        %667 = vmatpush1.bf16.msra.mxu0 0
        %668 = vmatprep.subr.bf16.mxu0 0
        %669 = vmatpush1.bf16.msra.mxu0 0
        %670 = vmatprep.subr.bf16.mxu0 0
        %671 = vmatpush1.bf16.msra.mxu0 0
        %672 = vmatprep.subr.bf16.mxu0 0
        %673 = vmatpush1.bf16.msra.mxu0 0
        %674 = vmatprep.subr.bf16.mxu0 0
        %675 = vmatpush1.bf16.msra.mxu0 0
        %676 = vmatprep.subr.bf16.mxu0 0
        %677 = vmatpush1.bf16.msra.mxu0 0
        %678 = vmatprep.subr.bf16.mxu0 0
        %679 = vmatpush1.bf16.msra.mxu0 0
        %680 = vmatprep.subr.bf16.mxu0 0
        %681 = vmatpush1.bf16.msra.mxu0 0
        %682 = vmatprep.subr.bf16.mxu0 0
        %683 = vmatpush1.bf16.msra.mxu0 0
        %684 = vmatprep.subr.bf16.mxu0 0
        %685 = vmatpush1.bf16.msra.mxu0 0
        %686 = vmatprep.subr.bf16.mxu0 0
        %687 = vmatpush1.bf16.msra.mxu0 0
        %688 = vmatprep.subr.bf16.mxu0 0
        %689 = vmatpush1.bf16.msra.mxu0 0
        %690 = vmatprep.subr.bf16.mxu0 0
        %691 = vmatpush1.bf16.msra.mxu0 0
        %692 = vmatprep.subr.bf16.mxu0 0
        %693 = vmatpush1.bf16.msra.mxu0 0
        %694 = vmatprep.mubr.bf16.mxu0 0
        %695 = vmatmul.mubr.bf16.gmra.mrb[0].mxu0 %v635
        %v696 = vpop.f32.mrb[0].mxu0
        %v697 = vadd.f32 0.0, %v696
        %v698 = vpop.f32.mrb[0].mxu0
        %v699 = vadd.f32 0.0, %v698
        %v700 = vpop.f32.mrb[0].mxu0
        %v701 = vadd.f32 0.0, %v700
        %v702 = vpop.f32.mrb[0].mxu0
        %v703 = vadd.f32 0.0, %v702
        %704 = vmatprep.mubr.bf16.mxu0 0
        %705 = vmatmul.mubr.bf16.gmra.mrb[0].mxu0 %v638
        %v706 = vpop.f32.mrb[0].mxu0
        %v707 = vadd.f32 0.0, %v706
        %v708 = vpop.f32.mrb[0].mxu0
        %v709 = vadd.f32 0.0, %v708
        %v710 = vpop.f32.mrb[0].mxu0
        %v711 = vadd.f32 0.0, %v710
        %v712 = vpop.f32.mrb[0].mxu0
        %v713 = vadd.f32 0.0, %v712
        %714 = vdwg.mxu0
        %715 = vmatprep.subr.bf16.mxu0 %v616
        %716 = vmatpush1.bf16.msra.mxu0 %v615
        %717 = vmatprep.subr.bf16.mxu0 %v651
        %718 = vmatpush1.bf16.msra.mxu0 %v648
        %719 = vmatprep.subr.bf16.mxu0 0
        %720 = vmatpush1.bf16.msra.mxu0 0
        %721 = vmatprep.subr.bf16.mxu0 0
        %722 = vmatpush1.bf16.msra.mxu0 0
        %723 = vmatprep.subr.bf16.mxu0 0
        %724 = vmatpush1.bf16.msra.mxu0 0
        %725 = vmatprep.subr.bf16.mxu0 0
        %726 = vmatpush1.bf16.msra.mxu0 0
        %727 = vmatprep.subr.bf16.mxu0 0
        %728 = vmatpush1.bf16.msra.mxu0 0
        %729 = vmatprep.subr.bf16.mxu0 0
        %730 = vmatpush1.bf16.msra.mxu0 0
        %731 = vmatprep.subr.bf16.mxu0 0
        %732 = vmatpush1.bf16.msra.mxu0 0
        %733 = vmatprep.subr.bf16.mxu0 0
        %734 = vmatpush1.bf16.msra.mxu0 0
        %735 = vmatprep.subr.bf16.mxu0 0
        %736 = vmatpush1.bf16.msra.mxu0 0
        %737 = vmatprep.subr.bf16.mxu0 0
        %738 = vmatpush1.bf16.msra.mxu0 0
        %739 = vmatprep.subr.bf16.mxu0 0
        %740 = vmatpush1.bf16.msra.mxu0 0
        %741 = vmatprep.subr.bf16.mxu0 0
        %742 = vmatpush1.bf16.msra.mxu0 0
        %743 = vmatprep.subr.bf16.mxu0 0
        %744 = vmatpush1.bf16.msra.mxu0 0
        %745 = vmatprep.subr.bf16.mxu0 0
        %746 = vmatpush1.bf16.msra.mxu0 0
        %747 = vmatprep.mubr.bf16.mxu0 0
        %748 = vmatmul.mubr.bf16.gmra.mrb[0].mxu0 %v635
        %v749 = vpop.f32.mrb[0].mxu0
        %v750 = vadd.f32 0.0, %v749
        %v751 = vpop.f32.mrb[0].mxu0
        %v752 = vadd.f32 0.0, %v751
        %v753 = vpop.f32.mrb[0].mxu0
        %v754 = vadd.f32 0.0, %v753
        %v755 = vpop.f32.mrb[0].mxu0
        %v756 = vadd.f32 0.0, %v755
        %757 = vmatprep.mubr.bf16.mxu0 0
        %758 = vmatmul.mubr.bf16.gmra.mrb[0].mxu0 %v638
        %v759 = vpop.f32.mrb[0].mxu0
        %v760 = vadd.f32 0.0, %v759
        %v761 = vpop.f32.mrb[0].mxu0
        %v762 = vadd.f32 0.0, %v761
        %v763 = vpop.f32.mrb[0].mxu0
        %v764 = vadd.f32 0.0, %v763
        %v765 = vpop.f32.mrb[0].mxu0
        %v766 = vadd.f32 0.0, %v765
        %767 = vdwg.mxu0
        %768 = vmatprep.subr.bf16.mxu0 %v618
        %769 = vmatpush1.bf16.msra.mxu0 %v617
        %770 = vmatprep.subr.bf16.mxu0 %v657
        %771 = vmatpush1.bf16.msra.mxu0 %v654
        %772 = vmatprep.subr.bf16.mxu0 0
        %773 = vmatpush1.bf16.msra.mxu0 0
        %774 = vmatprep.subr.bf16.mxu0 0
        %775 = vmatpush1.bf16.msra.mxu0 0
        %776 = vmatprep.subr.bf16.mxu0 0
        %777 = vmatpush1.bf16.msra.mxu0 0
        %778 = vmatprep.subr.bf16.mxu0 0
        %779 = vmatpush1.bf16.msra.mxu0 0
        %780 = vmatprep.subr.bf16.mxu0 0
        %781 = vmatpush1.bf16.msra.mxu0 0
        %782 = vmatprep.subr.bf16.mxu0 0
        %783 = vmatpush1.bf16.msra.mxu0 0
        %784 = vmatprep.subr.bf16.mxu0 0
        %785 = vmatpush1.bf16.msra.mxu0 0
        %786 = vmatprep.subr.bf16.mxu0 0
        %787 = vmatpush1.bf16.msra.mxu0 0
        %788 = vmatprep.subr.bf16.mxu0 0
        %789 = vmatpush1.bf16.msra.mxu0 0
        %790 = vmatprep.subr.bf16.mxu0 0
        %791 = vmatpush1.bf16.msra.mxu0 0
        %792 = vmatprep.subr.bf16.mxu0 0
        %793 = vmatpush1.bf16.msra.mxu0 0
        %794 = vmatprep.subr.bf16.mxu0 0
        %795 = vmatpush1.bf16.msra.mxu0 0
        %796 = vmatprep.subr.bf16.mxu0 0
        %797 = vmatpush1.bf16.msra.mxu0 0
        %798 = vmatprep.subr.bf16.mxu0 0
        %799 = vmatpush1.bf16.msra.mxu0 0
        %800 = vmatprep.mubr.bf16.mxu0 0
        %801 = vmatmul.mubr.bf16.gmra.mrb[0].mxu0 %v635
        %v802 = vpop.f32.mrb[0].mxu0
        %v803 = vadd.f32 0.0, %v802
        %v804 = vpop.f32.mrb[0].mxu0
        %v805 = vadd.f32 0.0, %v804
        %v806 = vpop.f32.mrb[0].mxu0
        %v807 = vadd.f32 0.0, %v806
        %v808 = vpop.f32.mrb[0].mxu0
        %v809 = vadd.f32 0.0, %v808
        %810 = vmatprep.mubr.bf16.mxu0 0
        %811 = vmatmul.mubr.bf16.gmra.mrb[0].mxu0 %v638
        %v812 = vpop.f32.mrb[0].mxu0
        %v813 = vadd.f32 0.0, %v812
        %v814 = vpop.f32.mrb[0].mxu0
        %v815 = vadd.f32 0.0, %v814
        %v816 = vpop.f32.mrb[0].mxu0
        %v817 = vadd.f32 0.0, %v816
        %v818 = vpop.f32.mrb[0].mxu0
        %v819 = vadd.f32 0.0, %v818
        %820 = vdwg.mxu0
        %821 = vmatprep.subr.bf16.mxu0 0
        %822 = vmatpush1.bf16.msra.mxu0 %v619
        %823 = vmatprep.subr.bf16.mxu0 0
        %824 = vmatpush1.bf16.msra.mxu0 %v660
        %825 = vmatprep.subr.bf16.mxu0 0
        %826 = vmatpush1.bf16.msra.mxu0 0
        %827 = vmatprep.subr.bf16.mxu0 0
        %828 = vmatpush1.bf16.msra.mxu0 0
        %829 = vmatprep.subr.bf16.mxu0 0
        %830 = vmatpush1.bf16.msra.mxu0 0
        %831 = vmatprep.subr.bf16.mxu0 0
        %832 = vmatpush1.bf16.msra.mxu0 0
        %833 = vmatprep.subr.bf16.mxu0 0
        %834 = vmatpush1.bf16.msra.mxu0 0
        %835 = vmatprep.subr.bf16.mxu0 0
        %836 = vmatpush1.bf16.msra.mxu0 0
        %837 = vmatprep.subr.bf16.mxu0 0
        %838 = vmatpush1.bf16.msra.mxu0 0
        %839 = vmatprep.subr.bf16.mxu0 0
        %840 = vmatpush1.bf16.msra.mxu0 0
        %841 = vmatprep.subr.bf16.mxu0 0
        %842 = vmatpush1.bf16.msra.mxu0 0
        %843 = vmatprep.subr.bf16.mxu0 0
        %844 = vmatpush1.bf16.msra.mxu0 0
        %845 = vmatprep.subr.bf16.mxu0 0
        %846 = vmatpush1.bf16.msra.mxu0 0
        %847 = vmatprep.subr.bf16.mxu0 0
        %848 = vmatpush1.bf16.msra.mxu0 0
        %849 = vmatprep.subr.bf16.mxu0 0
        %850 = vmatpush1.bf16.msra.mxu0 0
        %851 = vmatprep.subr.bf16.mxu0 0
        %852 = vmatpush1.bf16.msra.mxu0 0
        %853 = vmatprep.mubr.bf16.mxu0 0
        %854 = vmatmul.mubr.bf16.gmra.mrb[0].mxu0 %v635
        %v855 = vpop.f32.mrb[0].mxu0
        %v856 = vadd.f32 0.0, %v855
        %v857 = vpop.f32.mrb[0].mxu0
        %v858 = vpop.f32.mrb[0].mxu0
        %v859 = vadd.f32 0.0, %v858
        %v860 = vpop.f32.mrb[0].mxu0
        %861 = vmatprep.mubr.bf16.mxu0 0
        %862 = vmatmul.mubr.bf16.gmra.mrb[0].mxu0 %v638
        %v863 = vpop.f32.mrb[0].mxu0
        %v864 = vadd.f32 0.0, %v863
        %v865 = vpop.f32.mrb[0].mxu0
        %v866 = vpop.f32.mrb[0].mxu0
        %v867 = vadd.f32 0.0, %v866
        %v868 = vpop.f32.mrb[0].mxu0
        %869 = vdwg.mxu0
        %v886 = vunpack.c.l.b16 %v520
        %v887 = vunpack.c.h.b16 %v520
        %v888 = vunpack.c.l.b16 %v521
        %v889 = vunpack.c.h.b16 %v521
        %v890 = vunpack.c.l.b16 %v522
        %v891 = vunpack.c.h.b16 %v522
        %v892 = vunpack.c.l.b16 %v523
        %v893 = vunpack.c.l.b16 %v524
        %v894 = vunpack.c.h.b16 %v524
        %v895 = vunpack.c.l.b16 %v525
        %v896 = vunpack.c.h.b16 %v525
        %v897 = vunpack.c.l.b16 %v526
        %v898 = vunpack.c.h.b16 %v526
        %v899 = vunpack.c.l.b16 %v527
        %v900 = vunpack.c.l.b16 %v528
        %v901 = vunpack.c.h.b16 %v528
        %v902 = vunpack.c.l.b16 %v529
        %v903 = vunpack.c.h.b16 %v529
        %v904 = vunpack.c.l.b16 %v530
        %v905 = vunpack.c.h.b16 %v530
        %v906 = vunpack.c.l.b16 %v531
        %v907 = vunpack.c.l.b16 %v532
        %v908 = vunpack.c.h.b16 %v532
        %v909 = vunpack.c.l.b16 %v533
        %v910 = vunpack.c.h.b16 %v533
        %v911 = vunpack.c.l.b16 %v534
        %v912 = vunpack.c.h.b16 %v534
        %v913 = vunpack.c.l.b16 %v535
        %v914 = vpack.c.b16 %v893, %v886
        %v915 = vpack.c.b16 %v894, %v887
        %v916 = vpack.c.b16 %v895, %v888
        %v917 = vpack.c.b16 %v896, %v889
        %v918 = vpack.c.b16 %v897, %v890
        %v919 = vpack.c.b16 %v898, %v891
        %v920 = vpack.c.b16 %v899, %v892
        %v921 = vpack.c.b16 %v907, %v900
        %v922 = vpack.c.b16 %v908, %v901
        %v923 = vpack.c.b16 %v909, %v902
        %v924 = vpack.c.b16 %v910, %v903
        %v925 = vpack.c.b16 %v911, %v904
        %v926 = vpack.c.b16 %v912, %v905
        %v927 = vpack.c.b16 %v913, %v906
        %v935 = vsel %vm506, %v518, 0
        %v937 = vsel %vm506, %v519, 0
        %v940 = vsel %vm640, %v921, 0
        %v943 = vsel %vm640, %v922, 0
        %v946 = vsel %vm640, %v923, 0
        %v949 = vsel %vm640, %v924, 0
        %v952 = vsel %vm640, %v925, 0
        %v955 = vsel %vm640, %v926, 0
        %v958 = vsel %vm640, %v927, 0
        %960 = vmatprep.subr.bf16.mxu0 %v915
        %961 = vmatpush1.bf16.msra.mxu0 %v914
        %962 = vmatprep.subr.bf16.mxu0 %v943
        %963 = vmatpush1.bf16.msra.mxu0 %v940
        %964 = vmatprep.subr.bf16.mxu0 0
        %965 = vmatpush1.bf16.msra.mxu0 0
        %966 = vmatprep.subr.bf16.mxu0 0
        %967 = vmatpush1.bf16.msra.mxu0 0
        %968 = vmatprep.subr.bf16.mxu0 0
        %969 = vmatpush1.bf16.msra.mxu0 0
        %970 = vmatprep.subr.bf16.mxu0 0
        %971 = vmatpush1.bf16.msra.mxu0 0
        %972 = vmatprep.subr.bf16.mxu0 0
        %973 = vmatpush1.bf16.msra.mxu0 0
        %974 = vmatprep.subr.bf16.mxu0 0
        %975 = vmatpush1.bf16.msra.mxu0 0
        %976 = vmatprep.subr.bf16.mxu0 0
        %977 = vmatpush1.bf16.msra.mxu0 0
        %978 = vmatprep.subr.bf16.mxu0 0
        %979 = vmatpush1.bf16.msra.mxu0 0
        %980 = vmatprep.subr.bf16.mxu0 0
        %981 = vmatpush1.bf16.msra.mxu0 0
        %982 = vmatprep.subr.bf16.mxu0 0
        %983 = vmatpush1.bf16.msra.mxu0 0
        %984 = vmatprep.subr.bf16.mxu0 0
        %985 = vmatpush1.bf16.msra.mxu0 0
        %986 = vmatprep.subr.bf16.mxu0 0
        %987 = vmatpush1.bf16.msra.mxu0 0
        %988 = vmatprep.subr.bf16.mxu0 0
        %989 = vmatpush1.bf16.msra.mxu0 0
        %990 = vmatprep.subr.bf16.mxu0 0
        %991 = vmatpush1.bf16.msra.mxu0 0
        %992 = vmatprep.mubr.bf16.mxu0 0
        %993 = vmatmul.mubr.bf16.gmra.mrb[0].mxu0 %v935
        %v994 = vpop.f32.mrb[0].mxu0
        %v995 = vadd.f32 %v697, %v994
        %v996 = vpop.f32.mrb[0].mxu0
        %v997 = vadd.f32 %v699, %v996
        %v998 = vpop.f32.mrb[0].mxu0
        %v999 = vadd.f32 %v701, %v998
        %v1000 = vpop.f32.mrb[0].mxu0
        %v1001 = vadd.f32 %v703, %v1000
        %1002 = vmatprep.mubr.bf16.mxu0 0
        %1003 = vmatmul.mubr.bf16.gmra.mrb[0].mxu0 %v937
        %v1004 = vpop.f32.mrb[0].mxu0
        %v1005 = vadd.f32 %v707, %v1004
        %v1006 = vpop.f32.mrb[0].mxu0
        %v1007 = vadd.f32 %v709, %v1006
        %v1008 = vpop.f32.mrb[0].mxu0
        %v1009 = vadd.f32 %v711, %v1008
        %v1010 = vpop.f32.mrb[0].mxu0
        %v1011 = vadd.f32 %v713, %v1010
        %1012 = vdwg.mxu0
        %1013 = vmatprep.subr.bf16.mxu0 %v917
        %1014 = vmatpush1.bf16.msra.mxu0 %v916
        %1015 = vmatprep.subr.bf16.mxu0 %v949
        %1016 = vmatpush1.bf16.msra.mxu0 %v946
        %1017 = vmatprep.subr.bf16.mxu0 0
        %1018 = vmatpush1.bf16.msra.mxu0 0
        %1019 = vmatprep.subr.bf16.mxu0 0
        %1020 = vmatpush1.bf16.msra.mxu0 0
        %1021 = vmatprep.subr.bf16.mxu0 0
        %1022 = vmatpush1.bf16.msra.mxu0 0
        %1023 = vmatprep.subr.bf16.mxu0 0
        %1024 = vmatpush1.bf16.msra.mxu0 0
        %1025 = vmatprep.subr.bf16.mxu0 0
        %1026 = vmatpush1.bf16.msra.mxu0 0
        %1027 = vmatprep.subr.bf16.mxu0 0
        %1028 = vmatpush1.bf16.msra.mxu0 0
        %1029 = vmatprep.subr.bf16.mxu0 0
        %1030 = vmatpush1.bf16.msra.mxu0 0
        %1031 = vmatprep.subr.bf16.mxu0 0
        %1032 = vmatpush1.bf16.msra.mxu0 0
        %1033 = vmatprep.subr.bf16.mxu0 0
        %1034 = vmatpush1.bf16.msra.mxu0 0
        %1035 = vmatprep.subr.bf16.mxu0 0
        %1036 = vmatpush1.bf16.msra.mxu0 0
        %1037 = vmatprep.subr.bf16.mxu0 0
        %1038 = vmatpush1.bf16.msra.mxu0 0
        %1039 = vmatprep.subr.bf16.mxu0 0
        %1040 = vmatpush1.bf16.msra.mxu0 0
        %1041 = vmatprep.subr.bf16.mxu0 0
        %1042 = vmatpush1.bf16.msra.mxu0 0
        %1043 = vmatprep.subr.bf16.mxu0 0
        %1044 = vmatpush1.bf16.msra.mxu0 0
        %1045 = vmatprep.mubr.bf16.mxu0 0
        %1046 = vmatmul.mubr.bf16.gmra.mrb[0].mxu0 %v935
        %v1047 = vpop.f32.mrb[0].mxu0
        %v1048 = vadd.f32 %v750, %v1047
        %v1049 = vpop.f32.mrb[0].mxu0
        %v1050 = vadd.f32 %v752, %v1049
        %v1051 = vpop.f32.mrb[0].mxu0
        %v1052 = vadd.f32 %v754, %v1051
        %v1053 = vpop.f32.mrb[0].mxu0
        %v1054 = vadd.f32 %v756, %v1053
        %1055 = vmatprep.mubr.bf16.mxu0 0
        %1056 = vmatmul.mubr.bf16.gmra.mrb[0].mxu0 %v937
        %v1057 = vpop.f32.mrb[0].mxu0
        %v1058 = vadd.f32 %v760, %v1057
        %v1059 = vpop.f32.mrb[0].mxu0
        %v1060 = vadd.f32 %v762, %v1059
        %v1061 = vpop.f32.mrb[0].mxu0
        %v1062 = vadd.f32 %v764, %v1061
        %v1063 = vpop.f32.mrb[0].mxu0
        %v1064 = vadd.f32 %v766, %v1063
        %1065 = vdwg.mxu0
        %1066 = vmatprep.subr.bf16.mxu0 %v919
        %1067 = vmatpush1.bf16.msra.mxu0 %v918
        %1068 = vmatprep.subr.bf16.mxu0 %v955
        %1069 = vmatpush1.bf16.msra.mxu0 %v952
        %1070 = vmatprep.subr.bf16.mxu0 0
        %1071 = vmatpush1.bf16.msra.mxu0 0
        %1072 = vmatprep.subr.bf16.mxu0 0
        %1073 = vmatpush1.bf16.msra.mxu0 0
        %1074 = vmatprep.subr.bf16.mxu0 0
        %1075 = vmatpush1.bf16.msra.mxu0 0
        %1076 = vmatprep.subr.bf16.mxu0 0
        %1077 = vmatpush1.bf16.msra.mxu0 0
        %1078 = vmatprep.subr.bf16.mxu0 0
        %1079 = vmatpush1.bf16.msra.mxu0 0
        %1080 = vmatprep.subr.bf16.mxu0 0
        %1081 = vmatpush1.bf16.msra.mxu0 0
        %1082 = vmatprep.subr.bf16.mxu0 0
        %1083 = vmatpush1.bf16.msra.mxu0 0
        %1084 = vmatprep.subr.bf16.mxu0 0
        %1085 = vmatpush1.bf16.msra.mxu0 0
        %1086 = vmatprep.subr.bf16.mxu0 0
        %1087 = vmatpush1.bf16.msra.mxu0 0
        %1088 = vmatprep.subr.bf16.mxu0 0
        %1089 = vmatpush1.bf16.msra.mxu0 0
        %1090 = vmatprep.subr.bf16.mxu0 0
        %1091 = vmatpush1.bf16.msra.mxu0 0
        %1092 = vmatprep.subr.bf16.mxu0 0
        %1093 = vmatpush1.bf16.msra.mxu0 0
        %1094 = vmatprep.subr.bf16.mxu0 0
        %1095 = vmatpush1.bf16.msra.mxu0 0
        %1096 = vmatprep.subr.bf16.mxu0 0
        %1097 = vmatpush1.bf16.msra.mxu0 0
        %1098 = vmatprep.mubr.bf16.mxu0 0
        %1099 = vmatmul.mubr.bf16.gmra.mrb[0].mxu0 %v935
        %v1100 = vpop.f32.mrb[0].mxu0
        %v1101 = vadd.f32 %v803, %v1100
        %v1102 = vpop.f32.mrb[0].mxu0
        %v1103 = vadd.f32 %v805, %v1102
        %v1104 = vpop.f32.mrb[0].mxu0
        %v1105 = vadd.f32 %v807, %v1104
        %v1106 = vpop.f32.mrb[0].mxu0
        %v1107 = vadd.f32 %v809, %v1106
        %1108 = vmatprep.mubr.bf16.mxu0 0
        %1109 = vmatmul.mubr.bf16.gmra.mrb[0].mxu0 %v937
        %v1110 = vpop.f32.mrb[0].mxu0
        %v1111 = vadd.f32 %v813, %v1110
        %v1112 = vpop.f32.mrb[0].mxu0
        %v1113 = vadd.f32 %v815, %v1112
        %v1114 = vpop.f32.mrb[0].mxu0
        %v1115 = vadd.f32 %v817, %v1114
        %v1116 = vpop.f32.mrb[0].mxu0
        %v1117 = vadd.f32 %v819, %v1116
        %1118 = vdwg.mxu0
        %1119 = vmatprep.subr.bf16.mxu0 0
        %1120 = vmatpush1.bf16.msra.mxu0 %v920
        %1121 = vmatprep.subr.bf16.mxu0 0
        %1122 = vmatpush1.bf16.msra.mxu0 %v958
        %1123 = vmatprep.subr.bf16.mxu0 0
        %1124 = vmatpush1.bf16.msra.mxu0 0
        %1125 = vmatprep.subr.bf16.mxu0 0
        %1126 = vmatpush1.bf16.msra.mxu0 0
        %1127 = vmatprep.subr.bf16.mxu0 0
        %1128 = vmatpush1.bf16.msra.mxu0 0
        %1129 = vmatprep.subr.bf16.mxu0 0
        %1130 = vmatpush1.bf16.msra.mxu0 0
        %1131 = vmatprep.subr.bf16.mxu0 0
        %1132 = vmatpush1.bf16.msra.mxu0 0
        %1133 = vmatprep.subr.bf16.mxu0 0
        %1134 = vmatpush1.bf16.msra.mxu0 0
        %1135 = vmatprep.subr.bf16.mxu0 0
        %1136 = vmatpush1.bf16.msra.mxu0 0
        %1137 = vmatprep.subr.bf16.mxu0 0
        %1138 = vmatpush1.bf16.msra.mxu0 0
        %1139 = vmatprep.subr.bf16.mxu0 0
        %1140 = vmatpush1.bf16.msra.mxu0 0
        %1141 = vmatprep.subr.bf16.mxu0 0
        %1142 = vmatpush1.bf16.msra.mxu0 0
        %1143 = vmatprep.subr.bf16.mxu0 0
        %1144 = vmatpush1.bf16.msra.mxu0 0
        %1145 = vmatprep.subr.bf16.mxu0 0
        %1146 = vmatpush1.bf16.msra.mxu0 0
        %1147 = vmatprep.subr.bf16.mxu0 0
        %1148 = vmatpush1.bf16.msra.mxu0 0
        %1149 = vmatprep.subr.bf16.mxu0 0
        %1150 = vmatpush1.bf16.msra.mxu0 0
        %1151 = vmatprep.mubr.bf16.mxu0 0
        %1152 = vmatmul.mubr.bf16.gmra.mrb[0].mxu0 %v935
        %v1153 = vpop.f32.mrb[0].mxu0
        %v1154 = vadd.f32 %v856, %v1153
        %v1155 = vpop.f32.mrb[0].mxu0
        %v1156 = vpop.f32.mrb[0].mxu0
        %v1157 = vadd.f32 %v859, %v1156
        %v1158 = vpop.f32.mrb[0].mxu0
        %1159 = vmatprep.mubr.bf16.mxu0 0
        %1160 = vmatmul.mubr.bf16.gmra.mrb[0].mxu0 %v937
        %v1161 = vpop.f32.mrb[0].mxu0
        %v1162 = vadd.f32 %v864, %v1161
        %v1163 = vpop.f32.mrb[0].mxu0
        %v1164 = vpop.f32.mrb[0].mxu0
        %v1165 = vadd.f32 %v867, %v1164
        %v1166 = vpop.f32.mrb[0].mxu0
        %1167 = vdwg.mxu0
        %s1168 = scalar_lea.vmem [#allocation3], 224
        %v1169 = vld [vmem:[%s1168] sm:$0xff]
        %v1170 = vld [vmem:[%s1168 + $0x8] sm:$0xff]
        %v1171 = vld [vmem:[%s1168 + $0x10] sm:$0xff]
        %v1172 = vld [vmem:[%s1168 + $0x18] sm:$0xf]
        %v1173 = vld [vmem:[%s1168 + $0x1c] sm:$0xff]
        %v1174 = vld [vmem:[%s1168 + $0x24] sm:$0xff]
        %v1175 = vld [vmem:[%s1168 + $0x2c] sm:$0xff]
        %v1176 = vld [vmem:[%s1168 + $0x34] sm:$0xf]
        %v1177 = vld [vmem:[%s1168 + $0x38] sm:$0xff]
        %v1178 = vld [vmem:[%s1168 + $0x40] sm:$0xff]
        %v1179 = vld [vmem:[%s1168 + $0x48] sm:$0xff]
        %v1180 = vld [vmem:[%s1168 + $0x50] sm:$0xf]
        %v1181 = vld [vmem:[%s1168 + $0x54] sm:$0x33]
        %v1182 = vld [vmem:[%s1168 + $0x5c] sm:$0x33]
        %v1183 = vld [vmem:[%s1168 + $0x64] sm:$0x33]
        %v1184 = vld [vmem:[%s1168 + $0x6c] sm:$0x3]
        %vm1187 = vcmask 1046528
        %v1188 = vrot.slane %v518, 1
        %v1189 = vrot.slane %v519, 1
        %v1190 = vsel %vm1187, %v1188, %v1189
        %v1207 = vunpack.c.l.b16 %v1169
        %v1208 = vunpack.c.h.b16 %v1169
        %v1209 = vunpack.c.l.b16 %v1170
        %v1210 = vunpack.c.h.b16 %v1170
        %v1211 = vunpack.c.l.b16 %v1171
        %v1212 = vunpack.c.h.b16 %v1171
        %v1213 = vunpack.c.l.b16 %v1172
        %v1214 = vunpack.c.l.b16 %v1173
        %v1215 = vunpack.c.h.b16 %v1173
        %v1216 = vunpack.c.l.b16 %v1174
        %v1217 = vunpack.c.h.b16 %v1174
        %v1218 = vunpack.c.l.b16 %v1175
        %v1219 = vunpack.c.h.b16 %v1175
        %v1220 = vunpack.c.l.b16 %v1176
        %v1221 = vunpack.c.l.b16 %v1177
        %v1222 = vunpack.c.h.b16 %v1177
        %v1223 = vunpack.c.l.b16 %v1178
        %v1224 = vunpack.c.h.b16 %v1178
        %v1225 = vunpack.c.l.b16 %v1179
        %v1226 = vunpack.c.h.b16 %v1179
        %v1227 = vunpack.c.l.b16 %v1180
        %v1228 = vunpack.c.l.b16 %v1181
        %v1229 = vunpack.c.h.b16 %v1181
        %v1230 = vunpack.c.l.b16 %v1182
        %v1231 = vunpack.c.h.b16 %v1182
        %v1232 = vunpack.c.l.b16 %v1183
        %v1233 = vunpack.c.h.b16 %v1183
        %v1234 = vunpack.c.l.b16 %v1184
        %v1235 = vpack.c.b16 %v1214, %v1207
        %v1236 = vpack.c.b16 %v1215, %v1208
        %v1237 = vpack.c.b16 %v1216, %v1209
        %v1238 = vpack.c.b16 %v1217, %v1210
        %v1239 = vpack.c.b16 %v1218, %v1211
        %v1240 = vpack.c.b16 %v1219, %v1212
        %v1241 = vpack.c.b16 %v1220, %v1213
        %v1242 = vpack.c.b16 %v1228, %v1221
        %v1243 = vpack.c.b16 %v1229, %v1222
        %v1244 = vpack.c.b16 %v1230, %v1223
        %v1245 = vpack.c.b16 %v1231, %v1224
        %v1246 = vpack.c.b16 %v1232, %v1225
        %v1247 = vpack.c.b16 %v1233, %v1226
        %v1248 = vpack.c.b16 %v1234, %v1227
        %v1257 = vsel %vm506, %v1190, 0
        %v1260 = vsel %vm506, %v1189, 0
        %v1263 = vsel %vm640, %v1242, 0
        %v1266 = vsel %vm640, %v1243, 0
        %v1269 = vsel %vm640, %v1244, 0
        %v1272 = vsel %vm640, %v1245, 0
        %v1275 = vsel %vm640, %v1246, 0
        %v1278 = vsel %vm640, %v1247, 0
        %v1281 = vsel %vm640, %v1248, 0
        %1283 = vmatprep.subr.bf16.mxu0 %v1236
        %1284 = vmatpush1.bf16.msra.mxu0 %v1235
        %1285 = vmatprep.subr.bf16.mxu0 %v1266
        %1286 = vmatpush1.bf16.msra.mxu0 %v1263
        %1287 = vmatprep.subr.bf16.mxu0 0
        %1288 = vmatpush1.bf16.msra.mxu0 0
        %1289 = vmatprep.subr.bf16.mxu0 0
        %1290 = vmatpush1.bf16.msra.mxu0 0
        %1291 = vmatprep.subr.bf16.mxu0 0
        %1292 = vmatpush1.bf16.msra.mxu0 0
        %1293 = vmatprep.subr.bf16.mxu0 0
        %1294 = vmatpush1.bf16.msra.mxu0 0
        %1295 = vmatprep.subr.bf16.mxu0 0
        %1296 = vmatpush1.bf16.msra.mxu0 0
        %1297 = vmatprep.subr.bf16.mxu0 0
        %1298 = vmatpush1.bf16.msra.mxu0 0
        %1299 = vmatprep.subr.bf16.mxu0 0
        %1300 = vmatpush1.bf16.msra.mxu0 0
        %1301 = vmatprep.subr.bf16.mxu0 0
        %1302 = vmatpush1.bf16.msra.mxu0 0
        %1303 = vmatprep.subr.bf16.mxu0 0
        %1304 = vmatpush1.bf16.msra.mxu0 0
        %1305 = vmatprep.subr.bf16.mxu0 0
        %1306 = vmatpush1.bf16.msra.mxu0 0
        %1307 = vmatprep.subr.bf16.mxu0 0
        %1308 = vmatpush1.bf16.msra.mxu0 0
        %1309 = vmatprep.subr.bf16.mxu0 0
        %1310 = vmatpush1.bf16.msra.mxu0 0
        %1311 = vmatprep.subr.bf16.mxu0 0
        %1312 = vmatpush1.bf16.msra.mxu0 0
        %1313 = vmatprep.subr.bf16.mxu0 0
        %1314 = vmatpush1.bf16.msra.mxu0 0
        %1315 = vmatprep.mubr.bf16.mxu0 0
        %1316 = vmatmul.mubr.bf16.gmra.mrb[0].mxu0 %v1257
        %v1317 = vpop.f32.mrb[0].mxu0
        %v1318 = vadd.f32 0.0, %v1317
        %v1319 = vpop.f32.mrb[0].mxu0
        %v1320 = vadd.f32 0.0, %v1319
        %v1321 = vpop.f32.mrb[0].mxu0
        %v1322 = vadd.f32 0.0, %v1321
        %v1323 = vpop.f32.mrb[0].mxu0
        %v1324 = vadd.f32 0.0, %v1323
        %1325 = vmatprep.mubr.bf16.mxu0 0
        %1326 = vmatmul.mubr.bf16.gmra.mrb[0].mxu0 %v1260
        %v1327 = vpop.f32.mrb[0].mxu0
        %v1328 = vadd.f32 0.0, %v1327
        %v1329 = vpop.f32.mrb[0].mxu0
        %v1330 = vadd.f32 0.0, %v1329
        %v1331 = vpop.f32.mrb[0].mxu0
        %v1332 = vadd.f32 0.0, %v1331
        %v1333 = vpop.f32.mrb[0].mxu0
        %v1334 = vadd.f32 0.0, %v1333
        %1335 = vdwg.mxu0
        %1336 = vmatprep.subr.bf16.mxu0 %v1238
        %1337 = vmatpush1.bf16.msra.mxu0 %v1237
        %1338 = vmatprep.subr.bf16.mxu0 %v1272
        %1339 = vmatpush1.bf16.msra.mxu0 %v1269
        %1340 = vmatprep.subr.bf16.mxu0 0
        %1341 = vmatpush1.bf16.msra.mxu0 0
        %1342 = vmatprep.subr.bf16.mxu0 0
        %1343 = vmatpush1.bf16.msra.mxu0 0
        %1344 = vmatprep.subr.bf16.mxu0 0
        %1345 = vmatpush1.bf16.msra.mxu0 0
        %1346 = vmatprep.subr.bf16.mxu0 0
        %1347 = vmatpush1.bf16.msra.mxu0 0
        %1348 = vmatprep.subr.bf16.mxu0 0
        %1349 = vmatpush1.bf16.msra.mxu0 0
        %1350 = vmatprep.subr.bf16.mxu0 0
        %1351 = vmatpush1.bf16.msra.mxu0 0
        %1352 = vmatprep.subr.bf16.mxu0 0
        %1353 = vmatpush1.bf16.msra.mxu0 0
        %1354 = vmatprep.subr.bf16.mxu0 0
        %1355 = vmatpush1.bf16.msra.mxu0 0
        %1356 = vmatprep.subr.bf16.mxu0 0
        %1357 = vmatpush1.bf16.msra.mxu0 0
        %1358 = vmatprep.subr.bf16.mxu0 0
        %1359 = vmatpush1.bf16.msra.mxu0 0
        %1360 = vmatprep.subr.bf16.mxu0 0
        %1361 = vmatpush1.bf16.msra.mxu0 0
        %1362 = vmatprep.subr.bf16.mxu0 0
        %1363 = vmatpush1.bf16.msra.mxu0 0
        %1364 = vmatprep.subr.bf16.mxu0 0
        %1365 = vmatpush1.bf16.msra.mxu0 0
        %1366 = vmatprep.subr.bf16.mxu0 0
        %1367 = vmatpush1.bf16.msra.mxu0 0
        %1368 = vmatprep.mubr.bf16.mxu0 0
        %1369 = vmatmul.mubr.bf16.gmra.mrb[0].mxu0 %v1257
        %v1370 = vpop.f32.mrb[0].mxu0
        %v1371 = vadd.f32 0.0, %v1370
        %v1372 = vpop.f32.mrb[0].mxu0
        %v1373 = vadd.f32 0.0, %v1372
        %v1374 = vpop.f32.mrb[0].mxu0
        %v1375 = vadd.f32 0.0, %v1374
        %v1376 = vpop.f32.mrb[0].mxu0
        %v1377 = vadd.f32 0.0, %v1376
        %1378 = vmatprep.mubr.bf16.mxu0 0
        %1379 = vmatmul.mubr.bf16.gmra.mrb[0].mxu0 %v1260
        %v1380 = vpop.f32.mrb[0].mxu0
        %v1381 = vadd.f32 0.0, %v1380
        %v1382 = vpop.f32.mrb[0].mxu0
        %v1383 = vadd.f32 0.0, %v1382
        %v1384 = vpop.f32.mrb[0].mxu0
        %v1385 = vadd.f32 0.0, %v1384
        %v1386 = vpop.f32.mrb[0].mxu0
        %v1387 = vadd.f32 0.0, %v1386
        %1388 = vdwg.mxu0
        %1389 = vmatprep.subr.bf16.mxu0 %v1240
        %1390 = vmatpush1.bf16.msra.mxu0 %v1239
        %1391 = vmatprep.subr.bf16.mxu0 %v1278
        %1392 = vmatpush1.bf16.msra.mxu0 %v1275
        %1393 = vmatprep.subr.bf16.mxu0 0
        %1394 = vmatpush1.bf16.msra.mxu0 0
        %1395 = vmatprep.subr.bf16.mxu0 0
        %1396 = vmatpush1.bf16.msra.mxu0 0
        %1397 = vmatprep.subr.bf16.mxu0 0
        %1398 = vmatpush1.bf16.msra.mxu0 0
        %1399 = vmatprep.subr.bf16.mxu0 0
        %1400 = vmatpush1.bf16.msra.mxu0 0
        %1401 = vmatprep.subr.bf16.mxu0 0
        %1402 = vmatpush1.bf16.msra.mxu0 0
        %1403 = vmatprep.subr.bf16.mxu0 0
        %1404 = vmatpush1.bf16.msra.mxu0 0
        %1405 = vmatprep.subr.bf16.mxu0 0
        %1406 = vmatpush1.bf16.msra.mxu0 0
        %1407 = vmatprep.subr.bf16.mxu0 0
        %1408 = vmatpush1.bf16.msra.mxu0 0
        %1409 = vmatprep.subr.bf16.mxu0 0
        %1410 = vmatpush1.bf16.msra.mxu0 0
        %1411 = vmatprep.subr.bf16.mxu0 0
        %1412 = vmatpush1.bf16.msra.mxu0 0
        %1413 = vmatprep.subr.bf16.mxu0 0
        %1414 = vmatpush1.bf16.msra.mxu0 0
        %1415 = vmatprep.subr.bf16.mxu0 0
        %1416 = vmatpush1.bf16.msra.mxu0 0
        %1417 = vmatprep.subr.bf16.mxu0 0
        %1418 = vmatpush1.bf16.msra.mxu0 0
        %1419 = vmatprep.subr.bf16.mxu0 0
        %1420 = vmatpush1.bf16.msra.mxu0 0
        %1421 = vmatprep.mubr.bf16.mxu0 0
        %1422 = vmatmul.mubr.bf16.gmra.mrb[0].mxu0 %v1257
        %v1423 = vpop.f32.mrb[0].mxu0
        %v1424 = vadd.f32 0.0, %v1423
        %v1425 = vpop.f32.mrb[0].mxu0
        %v1426 = vadd.f32 0.0, %v1425
        %v1427 = vpop.f32.mrb[0].mxu0
        %v1428 = vadd.f32 0.0, %v1427
        %v1429 = vpop.f32.mrb[0].mxu0
        %v1430 = vadd.f32 0.0, %v1429
        %1431 = vmatprep.mubr.bf16.mxu0 0
        %1432 = vmatmul.mubr.bf16.gmra.mrb[0].mxu0 %v1260
        %v1433 = vpop.f32.mrb[0].mxu0
        %v1434 = vadd.f32 0.0, %v1433
        %v1435 = vpop.f32.mrb[0].mxu0
        %v1436 = vadd.f32 0.0, %v1435
        %v1437 = vpop.f32.mrb[0].mxu0
        %v1438 = vadd.f32 0.0, %v1437
        %v1439 = vpop.f32.mrb[0].mxu0
        %v1440 = vadd.f32 0.0, %v1439
        %1441 = vdwg.mxu0
        %1442 = vmatprep.subr.bf16.mxu0 0
        %1443 = vmatpush1.bf16.msra.mxu0 %v1241
        %1444 = vmatprep.subr.bf16.mxu0 0
        %1445 = vmatpush1.bf16.msra.mxu0 %v1281
        %1446 = vmatprep.subr.bf16.mxu0 0
        %1447 = vmatpush1.bf16.msra.mxu0 0
        %1448 = vmatprep.subr.bf16.mxu0 0
        %1449 = vmatpush1.bf16.msra.mxu0 0
        %1450 = vmatprep.subr.bf16.mxu0 0
        %1451 = vmatpush1.bf16.msra.mxu0 0
        %1452 = vmatprep.subr.bf16.mxu0 0
        %1453 = vmatpush1.bf16.msra.mxu0 0
        %1454 = vmatprep.subr.bf16.mxu0 0
        %1455 = vmatpush1.bf16.msra.mxu0 0
        %1456 = vmatprep.subr.bf16.mxu0 0
        %1457 = vmatpush1.bf16.msra.mxu0 0
        %1458 = vmatprep.subr.bf16.mxu0 0
        %1459 = vmatpush1.bf16.msra.mxu0 0
        %1460 = vmatprep.subr.bf16.mxu0 0
        %1461 = vmatpush1.bf16.msra.mxu0 0
        %1462 = vmatprep.subr.bf16.mxu0 0
        %1463 = vmatpush1.bf16.msra.mxu0 0
        %1464 = vmatprep.subr.bf16.mxu0 0
        %1465 = vmatpush1.bf16.msra.mxu0 0
        %1466 = vmatprep.subr.bf16.mxu0 0
        %1467 = vmatpush1.bf16.msra.mxu0 0
        %1468 = vmatprep.subr.bf16.mxu0 0
        %1469 = vmatpush1.bf16.msra.mxu0 0
        %1470 = vmatprep.subr.bf16.mxu0 0
        %1471 = vmatpush1.bf16.msra.mxu0 0
        %1472 = vmatprep.subr.bf16.mxu0 0
        %1473 = vmatpush1.bf16.msra.mxu0 0
        %1474 = vmatprep.mubr.bf16.mxu0 0
        %1475 = vmatmul.mubr.bf16.gmra.mrb[0].mxu0 %v1257
        %v1476 = vpop.f32.mrb[0].mxu0
        %v1477 = vadd.f32 0.0, %v1476
        %v1478 = vpop.f32.mrb[0].mxu0
        %v1479 = vpop.f32.mrb[0].mxu0
        %v1480 = vadd.f32 0.0, %v1479
        %v1481 = vpop.f32.mrb[0].mxu0
        %1482 = vmatprep.mubr.bf16.mxu0 0
        %1483 = vmatmul.mubr.bf16.gmra.mrb[0].mxu0 %v1260
        %v1484 = vpop.f32.mrb[0].mxu0
        %v1485 = vadd.f32 0.0, %v1484
        %v1486 = vpop.f32.mrb[0].mxu0
        %v1487 = vpop.f32.mrb[0].mxu0
        %v1488 = vadd.f32 0.0, %v1487
        %v1489 = vpop.f32.mrb[0].mxu0
        %1490 = vdwg.mxu0
        %v1491 = vadd.f32 %v995, %v1318
        %v1492 = vadd.f32 %v997, %v1320
        %v1493 = vadd.f32 %v1048, %v1371
        %v1494 = vadd.f32 %v1050, %v1373
        %v1495 = vadd.f32 %v1101, %v1424
        %v1496 = vadd.f32 %v1103, %v1426
        %v1497 = vadd.f32 %v1154, %v1477
        %v1498 = vadd.f32 %v999, %v1322
        %v1499 = vadd.f32 %v1001, %v1324
        %v1500 = vadd.f32 %v1052, %v1375
        %v1501 = vadd.f32 %v1054, %v1377
        %v1502 = vadd.f32 %v1105, %v1428
        %v1503 = vadd.f32 %v1107, %v1430
        %v1504 = vadd.f32 %v1157, %v1480
        %v1505 = vadd.f32 %v1005, %v1328
        %v1506 = vadd.f32 %v1007, %v1330
        %v1507 = vadd.f32 %v1058, %v1381
        %v1508 = vadd.f32 %v1060, %v1383
        %v1509 = vadd.f32 %v1111, %v1434
        %v1510 = vadd.f32 %v1113, %v1436
        %v1511 = vadd.f32 %v1162, %v1485
        %v1512 = vadd.f32 %v1009, %v1332
        %v1513 = vadd.f32 %v1011, %v1334
        %v1514 = vadd.f32 %v1062, %v1385
        %v1515 = vadd.f32 %v1064, %v1387
        %v1516 = vadd.f32 %v1115, %v1438
        %v1517 = vadd.f32 %v1117, %v1440
        %v1518 = vadd.f32 %v1165, %v1488
        %v1519 = vld [vmem:[#allocation6] sm:$0x7f]
        %v1521 = vlaneseq
        %v1522 = vshrl.u32 %v1521, 7
        %v1523 = vsub.s32 0, %v1522
        %v1524 = vrot.slane %v1519, %v1523
        %v1525 = vlaneseq
        %v1526 = vshrl.u32 %v1525, 7
        %v1527 = vsub.s32 1, %v1526
        %v1528 = vrot.slane %v1519, %v1527
        %v1529 = vlaneseq
        %v1530 = vshrl.u32 %v1529, 7
        %v1531 = vsub.s32 2, %v1530
        %v1532 = vrot.slane %v1519, %v1531
        %v1533 = vlaneseq
        %v1534 = vshrl.u32 %v1533, 7
        %v1535 = vsub.s32 3, %v1534
        %v1536 = vrot.slane %v1519, %v1535
        %v1537 = vlaneseq
        %v1538 = vshrl.u32 %v1537, 7
        %v1539 = vsub.s32 4, %v1538
        %v1540 = vrot.slane %v1519, %v1539
        %v1541 = vlaneseq
        %v1542 = vshrl.u32 %v1541, 7
        %v1543 = vsub.s32 5, %v1542
        %v1544 = vrot.slane %v1519, %v1543
        %v1545 = vlaneseq
        %v1546 = vshrl.u32 %v1545, 7
        %v1547 = vsub.s32 6, %v1546
        %v1548 = vrot.slane %v1519, %v1547
        %v1556 = vadd.f32 %v1491, %v1524
        %v1557 = vadd.f32 %v1492, %v1528
        %v1558 = vadd.f32 %v1493, %v1532
        %v1559 = vadd.f32 %v1494, %v1536
        %v1560 = vadd.f32 %v1495, %v1540
        %v1561 = vadd.f32 %v1496, %v1544
        %v1562 = vadd.f32 %v1497, %v1548
        %v1563 = vadd.f32 %v1498, %v1524
        %v1564 = vadd.f32 %v1499, %v1528
        %v1565 = vadd.f32 %v1500, %v1532
        %v1566 = vadd.f32 %v1501, %v1536
        %v1567 = vadd.f32 %v1502, %v1540
        %v1568 = vadd.f32 %v1503, %v1544
        %v1569 = vadd.f32 %v1504, %v1548
        %v1570 = vadd.f32 %v1505, %v1524
        %v1571 = vadd.f32 %v1506, %v1528
        %v1572 = vadd.f32 %v1507, %v1532
        %v1573 = vadd.f32 %v1508, %v1536
        %v1574 = vadd.f32 %v1509, %v1540
        %v1575 = vadd.f32 %v1510, %v1544
        %v1576 = vadd.f32 %v1511, %v1548
        %v1577 = vadd.f32 %v1512, %v1524
        %v1578 = vadd.f32 %v1513, %v1528
        %v1579 = vadd.f32 %v1514, %v1532
        %v1580 = vadd.f32 %v1515, %v1536
        %v1581 = vadd.f32 %v1516, %v1540
        %v1582 = vadd.f32 %v1517, %v1544
        %v1583 = vadd.f32 %v1518, %v1548
        %v1584 = vmax.f32 %v1556, 0.0
        %v1585 = vmax.f32 %v1557, 0.0
        %v1586 = vmax.f32 %v1558, 0.0
        %v1587 = vmax.f32 %v1559, 0.0
        %v1588 = vmax.f32 %v1560, 0.0
        %v1589 = vmax.f32 %v1561, 0.0
        %v1590 = vmax.f32 %v1562, 0.0
        %v1591 = vmax.f32 %v1563, 0.0
        %v1592 = vmax.f32 %v1564, 0.0
        %v1593 = vmax.f32 %v1565, 0.0
        %v1594 = vmax.f32 %v1566, 0.0
        %v1595 = vmax.f32 %v1567, 0.0
        %v1596 = vmax.f32 %v1568, 0.0
        %v1597 = vmax.f32 %v1569, 0.0
        %v1598 = vmax.f32 %v1570, 0.0
        %v1599 = vmax.f32 %v1571, 0.0
        %v1600 = vmax.f32 %v1572, 0.0
        %v1601 = vmax.f32 %v1573, 0.0
        %v1602 = vmax.f32 %v1574, 0.0
        %v1603 = vmax.f32 %v1575, 0.0
        %v1604 = vmax.f32 %v1576, 0.0
        %v1605 = vmax.f32 %v1577, 0.0
        %v1606 = vmax.f32 %v1578, 0.0
        %v1607 = vmax.f32 %v1579, 0.0
        %v1608 = vmax.f32 %v1580, 0.0
        %v1609 = vmax.f32 %v1581, 0.0
        %v1610 = vmax.f32 %v1582, 0.0
        %v1611 = vmax.f32 %v1583, 0.0
        %1628 = vrot.lane.b32.xlu0 %v1587, 96
        %v1629 = vpop.permute.xlu0 %1628
        %1630 = vrot.lane.b32.xlu0 %v1588, 96
        %v1631 = vpop.permute.xlu0 %1630
        %1632 = vrot.lane.b32.xlu0 %v1589, 96
        %v1633 = vpop.permute.xlu0 %1632
        %1634 = vrot.lane.b32.xlu0 %v1590, 96
        %v1635 = vpop.permute.xlu0 %1634
        %1636 = vrot.lane.b32.xlu0 %v1594, 96
        %v1637 = vpop.permute.xlu0 %1636
        %1638 = vrot.lane.b32.xlu0 %v1595, 96
        %v1639 = vpop.permute.xlu0 %1638
        %1640 = vrot.lane.b32.xlu0 %v1596, 96
        %v1641 = vpop.permute.xlu0 %1640
        %1642 = vrot.lane.b32.xlu0 %v1597, 96
        %v1643 = vpop.permute.xlu0 %1642
        %1644 = vrot.lane.b32.xlu0 %v1601, 96
        %v1645 = vpop.permute.xlu0 %1644
        %1646 = vrot.lane.b32.xlu0 %v1602, 96
        %v1647 = vpop.permute.xlu0 %1646
        %1648 = vrot.lane.b32.xlu0 %v1603, 96
        %v1649 = vpop.permute.xlu0 %1648
        %1650 = vrot.lane.b32.xlu0 %v1604, 96
        %v1651 = vpop.permute.xlu0 %1650
        %1652 = vrot.lane.b32.xlu0 %v1608, 96
        %v1653 = vpop.permute.xlu0 %1652
        %1654 = vrot.lane.b32.xlu0 %v1609, 96
        %v1655 = vpop.permute.xlu0 %1654
        %1656 = vrot.lane.b32.xlu0 %v1610, 96
        %v1657 = vpop.permute.xlu0 %1656
        %1658 = vrot.lane.b32.xlu0 %v1611, 96
        %v1659 = vpop.permute.xlu0 %1658
        %vm1660 = vcmask 785408
        %v1661 = vsel %vm1660, %v1629, %v1631
        %v1662 = vsel %vm1660, %v1631, %v1633
        %v1663 = vsel %vm1660, %v1633, %v1635
        %v1664 = vsel %vm1660, %v1637, %v1639
        %v1665 = vsel %vm1660, %v1639, %v1641
        %v1666 = vsel %vm1660, %v1641, %v1643
        %v1667 = vsel %vm1660, %v1645, %v1647
        %v1668 = vsel %vm1660, %v1647, %v1649
        %v1669 = vsel %vm1660, %v1649, %v1651
        %v1670 = vsel %vm1660, %v1653, %v1655
        %v1671 = vsel %vm1660, %v1655, %v1657
        %v1672 = vsel %vm1660, %v1657, %v1659
        %v1689 = vmax.f32 %v1584, %v1661
        %v1690 = vmax.f32 %v1585, %v1662
        %v1691 = vmax.f32 %v1586, %v1663
        %v1692 = vmax.f32 %v1587, %v1635
        %v1693 = vmax.f32 %v1591, %v1664
        %v1694 = vmax.f32 %v1592, %v1665
        %v1695 = vmax.f32 %v1593, %v1666
        %v1696 = vmax.f32 %v1594, %v1643
        %v1697 = vmax.f32 %v1598, %v1667
        %v1698 = vmax.f32 %v1599, %v1668
        %v1699 = vmax.f32 %v1600, %v1669
        %v1700 = vmax.f32 %v1601, %v1651
        %v1701 = vmax.f32 %v1605, %v1670
        %v1702 = vmax.f32 %v1606, %v1671
        %v1703 = vmax.f32 %v1607, %v1672
        %v1704 = vmax.f32 %v1608, %v1659
        %vm1721 = vcmask 1046528
        %v1722 = vrot.slane %v1689, 1
        %v1723 = vrot.slane %v1693, 1
        %v1724 = vsel %vm1721, %v1722, %v1723
        %v1725 = vrot.slane %v1690, 1
        %v1726 = vrot.slane %v1694, 1
        %v1727 = vsel %vm1721, %v1725, %v1726
        %v1728 = vrot.slane %v1691, 1
        %v1729 = vrot.slane %v1695, 1
        %v1730 = vsel %vm1721, %v1728, %v1729
        %v1731 = vrot.slane %v1692, 1
        %v1732 = vrot.slane %v1696, 1
        %v1733 = vsel %vm1721, %v1731, %v1732
        %v1734 = vrot.slane %v1697, 1
        %v1735 = vsel %vm1721, %v1723, %v1734
        %v1736 = vrot.slane %v1698, 1
        %v1737 = vsel %vm1721, %v1726, %v1736
        %v1738 = vrot.slane %v1699, 1
        %v1739 = vsel %vm1721, %v1729, %v1738
        %v1740 = vrot.slane %v1700, 1
        %v1741 = vsel %vm1721, %v1732, %v1740
        %v1742 = vrot.slane %v1701, 1
        %v1743 = vsel %vm1721, %v1734, %v1742
        %v1744 = vrot.slane %v1702, 1
        %v1745 = vsel %vm1721, %v1736, %v1744
        %v1746 = vrot.slane %v1703, 1
        %v1747 = vsel %vm1721, %v1738, %v1746
        %v1748 = vrot.slane %v1704, 1
        %v1749 = vsel %vm1721, %v1740, %v1748
        %v1766 = vmax.f32 %v1689, %v1724
        %v1767 = vmax.f32 %v1690, %v1727
        %v1768 = vmax.f32 %v1691, %v1730
        %v1769 = vmax.f32 %v1692, %v1733
        %v1770 = vmax.f32 %v1693, %v1735
        %v1771 = vmax.f32 %v1694, %v1737
        %v1772 = vmax.f32 %v1695, %v1739
        %v1773 = vmax.f32 %v1696, %v1741
        %v1774 = vmax.f32 %v1697, %v1743
        %v1775 = vmax.f32 %v1698, %v1745
        %v1776 = vmax.f32 %v1699, %v1747
        %v1777 = vmax.f32 %v1700, %v1749
        %v1778 = vmax.f32 %v1701, %v1742
        %v1779 = vmax.f32 %v1702, %v1744
        %v1780 = vmax.f32 %v1703, %v1746
        %v1781 = vmax.f32 %v1704, %v1748
        %v1782 = vpack.c.bf16 %v1770, %v1766
        %v1783 = vpack.c.bf16 %v1771, %v1767
        %v1784 = vpack.c.bf16 %v1772, %v1768
        %v1785 = vpack.c.bf16 %v1773, %v1769
        %v1786 = vpack.c.bf16 %v1778, %v1774
        %v1787 = vpack.c.bf16 %v1779, %v1775
        %v1788 = vpack.c.bf16 %v1780, %v1776
        %v1789 = vpack.c.bf16 %v1781, %v1777
        %v1790 = vld [vmem:[#allocation11] sm:$0xf]
        %v1791 = vld [vmem:[#allocation11 + $0x4] sm:$0x7]
        %v1794 = vunpack.c.l.b16 %v1790
        %v1795 = vunpack.c.l.b16 %v1791
        %v1796 = vpack.c.b16 %v1795, %v1794
        %vm1797 = vcmask 236544
        %v1799 = vsel %vm1797, %v1796, 0
        %v1801 = vsel %vm640, 4294967295, 65535
        %v1802 = vsel %vm1721, %v1801, 0
        %v1804 = vand.u32 %v1786, %v1802
        %v1807 = vand.u32 %v1787, %v1802
        %v1810 = vand.u32 %v1788, %v1802
        %v1813 = vand.u32 %v1789, %v1802
        %1815 = vmatprep.subr.bf16.mxu0 %v1783
        %1816 = vmatpush1.bf16.msra.mxu0 %v1782
        %1817 = vmatprep.subr.bf16.mxu0 %v1807
        %1818 = vmatpush1.bf16.msra.mxu0 %v1804
        %1819 = vmatprep.subr.bf16.mxu0 0
        %1820 = vmatpush1.bf16.msra.mxu0 0
        %1821 = vmatprep.subr.bf16.mxu0 0
        %1822 = vmatpush1.bf16.msra.mxu0 0
        %1823 = vmatprep.subr.bf16.mxu0 0
        %1824 = vmatpush1.bf16.msra.mxu0 0
        %1825 = vmatprep.subr.bf16.mxu0 0
        %1826 = vmatpush1.bf16.msra.mxu0 0
        %1827 = vmatprep.subr.bf16.mxu0 0
        %1828 = vmatpush1.bf16.msra.mxu0 0
        %1829 = vmatprep.subr.bf16.mxu0 0
        %1830 = vmatpush1.bf16.msra.mxu0 0
        %1831 = vmatprep.subr.bf16.mxu0 0
        %1832 = vmatpush1.bf16.msra.mxu0 0
        %1833 = vmatprep.subr.bf16.mxu0 0
        %1834 = vmatpush1.bf16.msra.mxu0 0
        %1835 = vmatprep.subr.bf16.mxu0 0
        %1836 = vmatpush1.bf16.msra.mxu0 0
        %1837 = vmatprep.subr.bf16.mxu0 0
        %1838 = vmatpush1.bf16.msra.mxu0 0
        %1839 = vmatprep.subr.bf16.mxu0 0
        %1840 = vmatpush1.bf16.msra.mxu0 0
        %1841 = vmatprep.subr.bf16.mxu0 0
        %1842 = vmatpush1.bf16.msra.mxu0 0
        %1843 = vmatprep.subr.bf16.mxu0 0
        %1844 = vmatpush1.bf16.msra.mxu0 0
        %1845 = vmatprep.subr.bf16.mxu0 0
        %1846 = vmatpush1.bf16.msra.mxu0 0
        %1847 = vmatprep.mubr.bf16.mxu0 0
        %1848 = vmatmul.mubr.bf16.gmra.mrb[0].mxu0 %v1799
        %v1849 = vpop.f32.mrb[0].mxu0
        %v1850 = vadd.f32 0.0, %v1849
        %v1851 = vpop.f32.mrb[0].mxu0
        %v1852 = vadd.f32 0.0, %v1851
        %v1853 = vpop.f32.mrb[0].mxu0
        %v1854 = vadd.f32 0.0, %v1853
        %v1855 = vpop.f32.mrb[0].mxu0
        %v1856 = vadd.f32 0.0, %v1855
        %1857 = vdwg.mxu0
        %1858 = vmatprep.subr.bf16.mxu0 %v1785
        %1859 = vmatpush1.bf16.msra.mxu0 %v1784
        %1860 = vmatprep.subr.bf16.mxu0 %v1813
        %1861 = vmatpush1.bf16.msra.mxu0 %v1810
        %1862 = vmatprep.subr.bf16.mxu0 0
        %1863 = vmatpush1.bf16.msra.mxu0 0
        %1864 = vmatprep.subr.bf16.mxu0 0
        %1865 = vmatpush1.bf16.msra.mxu0 0
        %1866 = vmatprep.subr.bf16.mxu0 0
        %1867 = vmatpush1.bf16.msra.mxu0 0
        %1868 = vmatprep.subr.bf16.mxu0 0
        %1869 = vmatpush1.bf16.msra.mxu0 0
        %1870 = vmatprep.subr.bf16.mxu0 0
        %1871 = vmatpush1.bf16.msra.mxu0 0
        %1872 = vmatprep.subr.bf16.mxu0 0
        %1873 = vmatpush1.bf16.msra.mxu0 0
        %1874 = vmatprep.subr.bf16.mxu0 0
        %1875 = vmatpush1.bf16.msra.mxu0 0
        %1876 = vmatprep.subr.bf16.mxu0 0
        %1877 = vmatpush1.bf16.msra.mxu0 0
        %1878 = vmatprep.subr.bf16.mxu0 0
        %1879 = vmatpush1.bf16.msra.mxu0 0
        %1880 = vmatprep.subr.bf16.mxu0 0
        %1881 = vmatpush1.bf16.msra.mxu0 0
        %1882 = vmatprep.subr.bf16.mxu0 0
        %1883 = vmatpush1.bf16.msra.mxu0 0
        %1884 = vmatprep.subr.bf16.mxu0 0
        %1885 = vmatpush1.bf16.msra.mxu0 0
        %1886 = vmatprep.subr.bf16.mxu0 0
        %1887 = vmatpush1.bf16.msra.mxu0 0
        %1888 = vmatprep.subr.bf16.mxu0 0
        %1889 = vmatpush1.bf16.msra.mxu0 0
        %1890 = vmatprep.mubr.bf16.mxu0 0
        %1891 = vmatmul.mubr.bf16.gmra.mrb[0].mxu0 %v1799
        %v1892 = vpop.f32.mrb[0].mxu0
        %v1893 = vadd.f32 0.0, %v1892
        %v1894 = vpop.f32.mrb[0].mxu0
        %v1895 = vadd.f32 0.0, %v1894
        %v1896 = vpop.f32.mrb[0].mxu0
        %v1897 = vadd.f32 0.0, %v1896
        %v1898 = vpop.f32.mrb[0].mxu0
        %v1899 = vadd.f32 0.0, %v1898
        %1900 = vdwg.mxu0
        %v1901 = vpack.c.bf16 %v1854, %v1850
        %v1902 = vpack.c.bf16 %v1856, %v1852
        %v1903 = vpack.c.bf16 %v1897, %v1893
        %v1904 = vpack.c.bf16 %v1899, %v1895
        %v1905 = vld [vmem:[#allocation8] sm:$0xff]
        %v1906 = vld [vmem:[#allocation8 + $0x8] sm:$0xff]
        %v1907 = vld [vmem:[#allocation8 + $0x10] sm:$0xff]
        %v1908 = vld [vmem:[#allocation8 + $0x18] sm:$0xff]
        %v1909 = vld [vmem:[#allocation8 + $0x20] sm:$0xff]
        %v1910 = vld [vmem:[#allocation8 + $0x28] sm:$0xff]
        %v1911 = vld [vmem:[#allocation8 + $0x30] sm:$0xff]
        %v1912 = vld [vmem:[#allocation8 + $0x38] sm:$0xff]
        %v1913 = vld [vmem:[#allocation8 + $0x40] sm:$0xff]
        %v1914 = vld [vmem:[#allocation8 + $0x48] sm:$0xff]
        %v1915 = vld [vmem:[#allocation8 + $0x50] sm:$0xff]
        %v1916 = vld [vmem:[#allocation8 + $0x58] sm:$0xff]
        %v1917 = vld [vmem:[#allocation8 + $0x60] sm:$0xff]
        %v1918 = vld [vmem:[#allocation8 + $0x68] sm:$0xff]
        %v1919 = vld [vmem:[#allocation8 + $0x70] sm:$0xff]
        %v1920 = vld [vmem:[#allocation8 + $0x78] sm:$0xff]
        %v1921 = vld [vmem:[#allocation8 + $0x80] sm:$0xff]
        %v1922 = vld [vmem:[#allocation8 + $0x88] sm:$0xff]
        %v1923 = vld [vmem:[#allocation8 + $0x90] sm:$0xff]
        %v1924 = vld [vmem:[#allocation8 + $0x98] sm:$0xff]
        %v1925 = vld [vmem:[#allocation8 + $0xa0] sm:$0xff]
        %v1926 = vld [vmem:[#allocation8 + $0xa8] sm:$0xff]
        %v1927 = vld [vmem:[#allocation8 + $0xb0] sm:$0xff]
        %v1928 = vld [vmem:[#allocation8 + $0xb8] sm:$0xff]
        %v1929 = vld [vmem:[#allocation8 + $0xc0] sm:$0xff]
        %v1930 = vld [vmem:[#allocation8 + $0xc8] sm:$0xff]
        %v1931 = vld [vmem:[#allocation8 + $0xd0] sm:$0xff]
        %v1932 = vld [vmem:[#allocation8 + $0xd8] sm:$0xff]
        %v1933 = vld [vmem:[#allocation8 + $0xe0] sm:$0xff]
        %v1934 = vld [vmem:[#allocation8 + $0xe8] sm:$0xff]
        %v1935 = vld [vmem:[#allocation8 + $0xf0] sm:$0xff]
        %v1936 = vld [vmem:[#allocation8 + $0xf8] sm:$0xff]
        %v1937 = vld [vmem:[#allocation8 + $0x100] sm:$0xff]
        %v1938 = vld [vmem:[#allocation8 + $0x108] sm:$0xff]
        %v1939 = vld [vmem:[#allocation8 + $0x110] sm:$0xff]
        %v1940 = vld [vmem:[#allocation8 + $0x118] sm:$0xff]
        %v1941 = vld [vmem:[#allocation8 + $0x120] sm:$0xff]
        %v1942 = vld [vmem:[#allocation8 + $0x128] sm:$0xff]
        %v1943 = vld [vmem:[#allocation8 + $0x130] sm:$0xff]
        %v1944 = vld [vmem:[#allocation8 + $0x138] sm:$0xff]
        %v1945 = vld [vmem:[#allocation8 + $0x140] sm:$0xff]
        %v1946 = vld [vmem:[#allocation8 + $0x148] sm:$0xff]
        %v1947 = vld [vmem:[#allocation8 + $0x150] sm:$0xff]
        %v1948 = vld [vmem:[#allocation8 + $0x158] sm:$0xff]
        %v1949 = vld [vmem:[#allocation8 + $0x160] sm:$0xff]
        %v1950 = vld [vmem:[#allocation8 + $0x168] sm:$0xff]
        %v1951 = vld [vmem:[#allocation8 + $0x170] sm:$0xff]
        %v1952 = vld [vmem:[#allocation8 + $0x178] sm:$0xff]
        %v1953 = vld [vmem:[#allocation8 + $0x180] sm:$0xff]
        %v1954 = vld [vmem:[#allocation8 + $0x188] sm:$0xff]
        %v1955 = vld [vmem:[#allocation8 + $0x190] sm:$0xff]
        %v1956 = vld [vmem:[#allocation8 + $0x198] sm:$0xff]
        %v1957 = vld [vmem:[#allocation8 + $0x1a0] sm:$0xff]
        %v1958 = vld [vmem:[#allocation8 + $0x1a8] sm:$0xff]
        %v1959 = vld [vmem:[#allocation8 + $0x1b0] sm:$0xff]
        %v1960 = vld [vmem:[#allocation8 + $0x1b8] sm:$0xff]
        %v1961 = vld [vmem:[#allocation8 + $0x1c0] sm:$0xff]
        %v1962 = vld [vmem:[#allocation8 + $0x1c8] sm:$0xff]
        %v1963 = vld [vmem:[#allocation8 + $0x1d0] sm:$0xff]
        %v1964 = vld [vmem:[#allocation8 + $0x1d8] sm:$0xff]
        %v1965 = vld [vmem:[#allocation8 + $0x1e0] sm:$0xff]
        %v1966 = vld [vmem:[#allocation8 + $0x1e8] sm:$0xff]
        %v1967 = vld [vmem:[#allocation8 + $0x1f0] sm:$0xff]
        %v1968 = vld [vmem:[#allocation8 + $0x1f8] sm:$0xff]
        %v1969 = vld [vmem:[#allocation8 + $0x200] sm:$0xff]
        %v1970 = vld [vmem:[#allocation8 + $0x208] sm:$0xff]
        %v1971 = vld [vmem:[#allocation8 + $0x210] sm:$0xff]
        %v1972 = vld [vmem:[#allocation8 + $0x218] sm:$0xff]
        %v1973 = vld [vmem:[#allocation8 + $0x220] sm:$0xff]
        %v1974 = vld [vmem:[#allocation8 + $0x228] sm:$0xff]
        %v1975 = vld [vmem:[#allocation8 + $0x230] sm:$0xff]
        %v1976 = vld [vmem:[#allocation8 + $0x238] sm:$0xff]
        %v1977 = vld [vmem:[#allocation8 + $0x240] sm:$0xff]
        %v1978 = vld [vmem:[#allocation8 + $0x248] sm:$0xff]
        %v1979 = vld [vmem:[#allocation8 + $0x250] sm:$0xff]
        %v1980 = vld [vmem:[#allocation8 + $0x258] sm:$0xff]
        %v1981 = vld [vmem:[#allocation8 + $0x260] sm:$0xff]
        %v1982 = vld [vmem:[#allocation8 + $0x268] sm:$0xff]
        %v1983 = vld [vmem:[#allocation8 + $0x270] sm:$0xff]
        %v1984 = vld [vmem:[#allocation8 + $0x278] sm:$0xff]
        %v1985 = vld [vmem:[#allocation8 + $0x280] sm:$0xff]
        %v1986 = vld [vmem:[#allocation8 + $0x288] sm:$0xff]
        %v1987 = vld [vmem:[#allocation8 + $0x290] sm:$0xff]
        %v1988 = vld [vmem:[#allocation8 + $0x298] sm:$0xff]
        %v1989 = vld [vmem:[#allocation8 + $0x2a0] sm:$0xff]
        %v1990 = vld [vmem:[#allocation8 + $0x2a8] sm:$0xff]
        %v1991 = vld [vmem:[#allocation8 + $0x2b0] sm:$0xff]
        %v1992 = vld [vmem:[#allocation8 + $0x2b8] sm:$0xff]
        %v1993 = vld [vmem:[#allocation8 + $0x2c0] sm:$0xff]
        %v1994 = vld [vmem:[#allocation8 + $0x2c8] sm:$0xff]
        %v1995 = vld [vmem:[#allocation8 + $0x2d0] sm:$0xff]
        %v1996 = vld [vmem:[#allocation8 + $0x2d8] sm:$0xff]
        %v1997 = vld [vmem:[#allocation8 + $0x2e0] sm:$0xff]
        %v1998 = vld [vmem:[#allocation8 + $0x2e8] sm:$0xff]
        %v1999 = vld [vmem:[#allocation8 + $0x2f0] sm:$0xff]
        %v2000 = vld [vmem:[#allocation8 + $0x2f8] sm:$0xff]
        %v2001 = vld [vmem:[#allocation8 + $0x300] sm:$0xff]
        %v2002 = vld [vmem:[#allocation8 + $0x308] sm:$0xff]
        %v2003 = vld [vmem:[#allocation8 + $0x310] sm:$0xff]
        %v2004 = vld [vmem:[#allocation8 + $0x318] sm:$0xff]
        %v2005 = vld [vmem:[#allocation8 + $0x320] sm:$0xff]
        %v2006 = vld [vmem:[#allocation8 + $0x328] sm:$0xff]
        %v2007 = vld [vmem:[#allocation8 + $0x330] sm:$0xff]
        %v2008 = vld [vmem:[#allocation8 + $0x338] sm:$0xff]
        %v2009 = vld [vmem:[#allocation8 + $0x340] sm:$0xff]
        %v2010 = vld [vmem:[#allocation8 + $0x348] sm:$0xff]
        %v2011 = vld [vmem:[#allocation8 + $0x350] sm:$0xff]
        %v2012 = vld [vmem:[#allocation8 + $0x358] sm:$0xff]
        %v2013 = vld [vmem:[#allocation8 + $0x360] sm:$0xff]
        %v2014 = vld [vmem:[#allocation8 + $0x368] sm:$0xff]
        %v2015 = vld [vmem:[#allocation8 + $0x370] sm:$0xff]
        %v2016 = vld [vmem:[#allocation8 + $0x378] sm:$0xff]
        %v2017 = vld [vmem:[#allocation8 + $0x380] sm:$0xff]
        %v2018 = vld [vmem:[#allocation8 + $0x388] sm:$0xff]
        %v2019 = vld [vmem:[#allocation8 + $0x390] sm:$0xff]
        %v2020 = vld [vmem:[#allocation8 + $0x398] sm:$0xff]
        %v2021 = vld [vmem:[#allocation8 + $0x3a0] sm:$0xff]
        %v2022 = vld [vmem:[#allocation8 + $0x3a8] sm:$0xff]
        %v2023 = vld [vmem:[#allocation8 + $0x3b0] sm:$0xff]
        %v2024 = vld [vmem:[#allocation8 + $0x3b8] sm:$0xff]
        %v2025 = vld [vmem:[#allocation8 + $0x3c0] sm:$0xff]
        %v2026 = vld [vmem:[#allocation8 + $0x3c8] sm:$0xff]
        %v2027 = vld [vmem:[#allocation8 + $0x3d0] sm:$0xff]
        %v2028 = vld [vmem:[#allocation8 + $0x3d8] sm:$0xff]
        %v2029 = vld [vmem:[#allocation8 + $0x3e0] sm:$0xff]
        %v2030 = vld [vmem:[#allocation8 + $0x3e8] sm:$0xff]
        %v2031 = vld [vmem:[#allocation8 + $0x3f0] sm:$0xff]
        %v2032 = vld [vmem:[#allocation8 + $0x3f8] sm:$0xff]
        %v2033 = vld [vmem:[#allocation8 + $0x400] sm:$0xff]
        %v2034 = vld [vmem:[#allocation8 + $0x408] sm:$0xff]
        %v2035 = vld [vmem:[#allocation8 + $0x410] sm:$0xff]
        %v2036 = vld [vmem:[#allocation8 + $0x418] sm:$0xff]
        %v2037 = vld [vmem:[#allocation8 + $0x420] sm:$0xff]
        %v2038 = vld [vmem:[#allocation8 + $0x428] sm:$0xff]
        %v2039 = vld [vmem:[#allocation8 + $0x430] sm:$0xff]
        %v2040 = vld [vmem:[#allocation8 + $0x438] sm:$0xff]
        %v2041 = vld [vmem:[#allocation8 + $0x440] sm:$0xff]
        %v2042 = vld [vmem:[#allocation8 + $0x448] sm:$0xff]
        %v2043 = vld [vmem:[#allocation8 + $0x450] sm:$0xff]
        %v2044 = vld [vmem:[#allocation8 + $0x458] sm:$0xff]
        %v2045 = vld [vmem:[#allocation8 + $0x460] sm:$0xff]
        %v2046 = vld [vmem:[#allocation8 + $0x468] sm:$0xff]
        %v2047 = vld [vmem:[#allocation8 + $0x470] sm:$0xff]
        %v2048 = vld [vmem:[#allocation8 + $0x478] sm:$0xff]
        %v2049 = vld [vmem:[#allocation8 + $0x480] sm:$0xff]
        %v2050 = vld [vmem:[#allocation8 + $0x488] sm:$0xff]
        %v2051 = vld [vmem:[#allocation8 + $0x490] sm:$0xff]
        %v2052 = vld [vmem:[#allocation8 + $0x498] sm:$0xff]
        %v2053 = vld [vmem:[#allocation8 + $0x4a0] sm:$0xff]
        %v2054 = vld [vmem:[#allocation8 + $0x4a8] sm:$0xff]
        %v2055 = vld [vmem:[#allocation8 + $0x4b0] sm:$0xff]
        %v2056 = vld [vmem:[#allocation8 + $0x4b8] sm:$0xff]
        %v2057 = vld [vmem:[#allocation8 + $0x4c0] sm:$0xff]
        %v2058 = vld [vmem:[#allocation8 + $0x4c8] sm:$0xff]
        %v2059 = vld [vmem:[#allocation8 + $0x4d0] sm:$0xff]
        %v2060 = vld [vmem:[#allocation8 + $0x4d8] sm:$0xff]
        %s2061 = scalar_lea.vmem [#allocation8], 1248
        %v2062 = vld [vmem:[%s2061] sm:$0xff]
        %v2063 = vld [vmem:[%s2061 + $0x8] sm:$0xff]
        %v2064 = vld [vmem:[%s2061 + $0x10] sm:$0xff]
        %v2065 = vld [vmem:[%s2061 + $0x18] sm:$0xff]
        %v2066 = vld [vmem:[%s2061 + $0x20] sm:$0xff]
        %v2067 = vld [vmem:[%s2061 + $0x28] sm:$0xff]
        %v2068 = vld [vmem:[%s2061 + $0x30] sm:$0xff]
        %v2069 = vld [vmem:[%s2061 + $0x38] sm:$0xff]
        %v2070 = vld [vmem:[%s2061 + $0x40] sm:$0xff]
        %v2071 = vld [vmem:[%s2061 + $0x48] sm:$0xff]
        %v2072 = vld [vmem:[%s2061 + $0x50] sm:$0xff]
        %v2073 = vld [vmem:[%s2061 + $0x58] sm:$0xff]
        %v2074 = vld [vmem:[%s2061 + $0x60] sm:$0xff]
        %v2075 = vld [vmem:[%s2061 + $0x68] sm:$0xff]
        %v2076 = vld [vmem:[%s2061 + $0x70] sm:$0xff]
        %v2077 = vld [vmem:[%s2061 + $0x78] sm:$0xff]
        %v2078 = vld [vmem:[%s2061 + $0x80] sm:$0xff]
        %v2079 = vld [vmem:[%s2061 + $0x88] sm:$0xff]
        %v2080 = vld [vmem:[%s2061 + $0x90] sm:$0xff]
        %v2081 = vld [vmem:[%s2061 + $0x98] sm:$0xff]
        %v2082 = vld [vmem:[%s2061 + $0xa0] sm:$0xff]
        %v2083 = vld [vmem:[%s2061 + $0xa8] sm:$0xff]
        %v2084 = vld [vmem:[%s2061 + $0xb0] sm:$0xff]
        %v2085 = vld [vmem:[%s2061 + $0xb8] sm:$0xff]
        %v2086 = vld [vmem:[%s2061 + $0xc0] sm:$0xff]
        %v2087 = vld [vmem:[%s2061 + $0xc8] sm:$0xff]
        %v2088 = vld [vmem:[%s2061 + $0xd0] sm:$0xff]
        %v2089 = vld [vmem:[%s2061 + $0xd8] sm:$0xff]
        %v2090 = vld [vmem:[%s2061 + $0xe0] sm:$0xff]
        %v2091 = vld [vmem:[%s2061 + $0xe8] sm:$0xff]
        %v2092 = vld [vmem:[%s2061 + $0xf0] sm:$0xff]
        %v2093 = vld [vmem:[%s2061 + $0xf8] sm:$0xff]
        %v2094 = vld [vmem:[%s2061 + $0x100] sm:$0xff]
        %v2095 = vld [vmem:[%s2061 + $0x108] sm:$0xff]
        %v2096 = vld [vmem:[%s2061 + $0x110] sm:$0xff]
        %v2097 = vld [vmem:[%s2061 + $0x118] sm:$0xff]
        %v2098 = vld [vmem:[%s2061 + $0x120] sm:$0xff]
        %v2099 = vld [vmem:[%s2061 + $0x128] sm:$0xff]
        %v2100 = vld [vmem:[%s2061 + $0x130] sm:$0xff]
        %v2101 = vld [vmem:[%s2061 + $0x138] sm:$0xff]
        %v2102 = vld [vmem:[%s2061 + $0x140] sm:$0xff]
        %v2103 = vld [vmem:[%s2061 + $0x148] sm:$0xff]
        %v2104 = vld [vmem:[%s2061 + $0x150] sm:$0xff]
        %v2105 = vld [vmem:[%s2061 + $0x158] sm:$0xff]
        %v2106 = vld [vmem:[%s2061 + $0x160] sm:$0xff]
        %v2107 = vld [vmem:[%s2061 + $0x168] sm:$0xff]
        %v2108 = vld [vmem:[%s2061 + $0x170] sm:$0xff]
        %v2109 = vld [vmem:[%s2061 + $0x178] sm:$0xff]
        %v2110 = vld [vmem:[%s2061 + $0x180] sm:$0xff]
        %v2111 = vld [vmem:[%s2061 + $0x188] sm:$0xff]
        %v2112 = vld [vmem:[%s2061 + $0x190] sm:$0xff]
        %v2113 = vld [vmem:[%s2061 + $0x198] sm:$0xff]
        %v2114 = vld [vmem:[%s2061 + $0x1a0] sm:$0xff]
        %v2115 = vld [vmem:[%s2061 + $0x1a8] sm:$0xff]
        %v2116 = vld [vmem:[%s2061 + $0x1b0] sm:$0xff]
        %v2117 = vld [vmem:[%s2061 + $0x1b8] sm:$0xff]
        %v2118 = vld [vmem:[%s2061 + $0x1c0] sm:$0xff]
        %v2119 = vld [vmem:[%s2061 + $0x1c8] sm:$0xff]
        %v2120 = vld [vmem:[%s2061 + $0x1d0] sm:$0xff]
        %v2121 = vld [vmem:[%s2061 + $0x1d8] sm:$0xff]
        %v2122 = vld [vmem:[%s2061 + $0x1e0] sm:$0xff]
        %v2123 = vld [vmem:[%s2061 + $0x1e8] sm:$0xff]
        %v2124 = vld [vmem:[%s2061 + $0x1f0] sm:$0xff]
        %v2125 = vld [vmem:[%s2061 + $0x1f8] sm:$0xff]
        %v2126 = vld [vmem:[%s2061 + $0x200] sm:$0xff]
        %v2127 = vld [vmem:[%s2061 + $0x208] sm:$0xff]
        %v2128 = vld [vmem:[%s2061 + $0x210] sm:$0xff]
        %v2129 = vld [vmem:[%s2061 + $0x218] sm:$0xff]
        %v2130 = vld [vmem:[%s2061 + $0x220] sm:$0xff]
        %v2131 = vld [vmem:[%s2061 + $0x228] sm:$0xff]
        %v2132 = vld [vmem:[%s2061 + $0x230] sm:$0xff]
        %v2133 = vld [vmem:[%s2061 + $0x238] sm:$0xff]
        %v2134 = vld [vmem:[%s2061 + $0x240] sm:$0xff]
        %v2135 = vld [vmem:[%s2061 + $0x248] sm:$0xff]
        %v2136 = vld [vmem:[%s2061 + $0x250] sm:$0xff]
        %v2137 = vld [vmem:[%s2061 + $0x258] sm:$0xff]
        %v2138 = vld [vmem:[%s2061 + $0x260] sm:$0xff]
        %v2139 = vld [vmem:[%s2061 + $0x268] sm:$0xff]
        %v2140 = vld [vmem:[%s2061 + $0x270] sm:$0xff]
        %v2141 = vld [vmem:[%s2061 + $0x278] sm:$0xff]
        %v2142 = vld [vmem:[%s2061 + $0x280] sm:$0xff]
        %v2143 = vld [vmem:[%s2061 + $0x288] sm:$0xff]
        %v2144 = vld [vmem:[%s2061 + $0x290] sm:$0xff]
        %v2145 = vld [vmem:[%s2061 + $0x298] sm:$0xff]
        %v2146 = vld [vmem:[%s2061 + $0x2a0] sm:$0xff]
        %v2147 = vld [vmem:[%s2061 + $0x2a8] sm:$0xff]
        %v2148 = vld [vmem:[%s2061 + $0x2b0] sm:$0xff]
        %v2149 = vld [vmem:[%s2061 + $0x2b8] sm:$0xff]
        %v2150 = vld [vmem:[%s2061 + $0x2c0] sm:$0xff]
        %v2151 = vld [vmem:[%s2061 + $0x2c8] sm:$0xff]
        %v2152 = vld [vmem:[%s2061 + $0x2d0] sm:$0xff]
        %v2153 = vld [vmem:[%s2061 + $0x2d8] sm:$0xff]
        %v2154 = vld [vmem:[%s2061 + $0x2e0] sm:$0xff]
        %v2155 = vld [vmem:[%s2061 + $0x2e8] sm:$0xff]
        %v2156 = vld [vmem:[%s2061 + $0x2f0] sm:$0xff]
        %v2157 = vld [vmem:[%s2061 + $0x2f8] sm:$0xff]
        %v2158 = vld [vmem:[%s2061 + $0x300] sm:$0xff]
        %v2159 = vld [vmem:[%s2061 + $0x308] sm:$0xff]
        %v2160 = vld [vmem:[%s2061 + $0x310] sm:$0xff]
        %v2161 = vld [vmem:[%s2061 + $0x318] sm:$0xff]
        %v2162 = vld [vmem:[%s2061 + $0x320] sm:$0xff]
        %v2163 = vld [vmem:[%s2061 + $0x328] sm:$0xff]
        %v2164 = vld [vmem:[%s2061 + $0x330] sm:$0xff]
        %v2165 = vld [vmem:[%s2061 + $0x338] sm:$0xff]
        %v2166 = vld [vmem:[%s2061 + $0x340] sm:$0xff]
        %v2167 = vld [vmem:[%s2061 + $0x348] sm:$0xff]
        %v2168 = vld [vmem:[%s2061 + $0x350] sm:$0xff]
        %v2169 = vld [vmem:[%s2061 + $0x358] sm:$0xff]
        %v2170 = vld [vmem:[%s2061 + $0x360] sm:$0xff]
        %v2171 = vld [vmem:[%s2061 + $0x368] sm:$0xff]
        %v2172 = vld [vmem:[%s2061 + $0x370] sm:$0xff]
        %v2173 = vld [vmem:[%s2061 + $0x378] sm:$0xff]
        %v2174 = vld [vmem:[%s2061 + $0x380] sm:$0xff]
        %v2175 = vld [vmem:[%s2061 + $0x388] sm:$0xff]
        %v2176 = vld [vmem:[%s2061 + $0x390] sm:$0xff]
        %v2177 = vld [vmem:[%s2061 + $0x398] sm:$0xff]
        %v2178 = vld [vmem:[%s2061 + $0x3a0] sm:$0xff]
        %v2179 = vld [vmem:[%s2061 + $0x3a8] sm:$0xff]
        %v2180 = vld [vmem:[%s2061 + $0x3b0] sm:$0xff]
        %v2181 = vld [vmem:[%s2061 + $0x3b8] sm:$0xff]
        %v2182 = vld [vmem:[%s2061 + $0x3c0] sm:$0xff]
        %v2183 = vld [vmem:[%s2061 + $0x3c8] sm:$0xff]
        %v2184 = vld [vmem:[%s2061 + $0x3d0] sm:$0xff]
        %v2185 = vld [vmem:[%s2061 + $0x3d8] sm:$0xff]
        %v2186 = vld [vmem:[%s2061 + $0x3e0] sm:$0xff]
        %v2187 = vld [vmem:[%s2061 + $0x3e8] sm:$0xff]
        %v2188 = vld [vmem:[%s2061 + $0x3f0] sm:$0xff]
        %v2189 = vld [vmem:[%s2061 + $0x3f8] sm:$0xff]
        %v2190 = vld [vmem:[%s2061 + $0x400] sm:$0xff]
        %v2191 = vld [vmem:[%s2061 + $0x408] sm:$0xff]
        %v2192 = vld [vmem:[%s2061 + $0x410] sm:$0xff]
        %v2193 = vld [vmem:[%s2061 + $0x418] sm:$0xff]
        %v2194 = vld [vmem:[%s2061 + $0x420] sm:$0xff]
        %v2195 = vld [vmem:[%s2061 + $0x428] sm:$0xff]
        %v2196 = vld [vmem:[%s2061 + $0x430] sm:$0xff]
        %v2197 = vld [vmem:[%s2061 + $0x438] sm:$0xff]
        %v2198 = vld [vmem:[%s2061 + $0x440] sm:$0xff]
        %v2199 = vld [vmem:[%s2061 + $0x448] sm:$0xff]
        %v2200 = vld [vmem:[%s2061 + $0x450] sm:$0xff]
        %v2201 = vld [vmem:[%s2061 + $0x458] sm:$0xff]
        %v2202 = vld [vmem:[%s2061 + $0x460] sm:$0xff]
        %v2203 = vld [vmem:[%s2061 + $0x468] sm:$0xff]
        %v2204 = vld [vmem:[%s2061 + $0x470] sm:$0xff]
        %v2205 = vld [vmem:[%s2061 + $0x478] sm:$0xff]
        %v2206 = vld [vmem:[%s2061 + $0x480] sm:$0xff]
        %v2207 = vld [vmem:[%s2061 + $0x488] sm:$0xff]
        %v2208 = vld [vmem:[%s2061 + $0x490] sm:$0xff]
        %v2209 = vld [vmem:[%s2061 + $0x498] sm:$0xff]
        %v2210 = vld [vmem:[%s2061 + $0x4a0] sm:$0xff]
        %v2211 = vld [vmem:[%s2061 + $0x4a8] sm:$0xff]
        %v2212 = vld [vmem:[%s2061 + $0x4b0] sm:$0xff]
        %v2213 = vld [vmem:[%s2061 + $0x4b8] sm:$0xff]
        %v2214 = vld [vmem:[%s2061 + $0x4c0] sm:$0xff]
        %v2215 = vld [vmem:[%s2061 + $0x4c8] sm:$0xff]
        %v2216 = vld [vmem:[%s2061 + $0x4d0] sm:$0xff]
        %v2217 = vld [vmem:[%s2061 + $0x4d8] sm:$0xff]
        %v2219 = vshrl.u32 %v1901, 16
        %v2221 = vshll.u32 %v1901, 16
        %v2223 = vrot.slane %v2221, 1
        %v2224 = vor.u32 %v2219, %v2223
        %v2226 = vshrl.u32 %v1902, 16
        %v2228 = vshll.u32 %v1902, 16
        %v2230 = vrot.slane %v2228, 1
        %v2231 = vor.u32 %v2226, %v2230
        %v2233 = vshrl.u32 %v1903, 16
        %v2235 = vshll.u32 %v1903, 16
        %v2237 = vrot.slane %v2235, 1
        %v2238 = vor.u32 %v2233, %v2237
        %v2240 = vshrl.u32 %v1904, 16
        %v2242 = vshll.u32 %v1904, 16
        %v2244 = vrot.slane %v2242, 1
        %v2245 = vor.u32 %v2240, %v2244
        %v2405 = vunpack.c.l.b16 %v2062
        %v2406 = vunpack.c.h.b16 %v2062
        %v2407 = vunpack.c.l.b16 %v2063
        %v2408 = vunpack.c.h.b16 %v2063
        %v2409 = vunpack.c.l.b16 %v2064
        %v2410 = vunpack.c.h.b16 %v2064
        %v2411 = vunpack.c.l.b16 %v2065
        %v2412 = vunpack.c.h.b16 %v2065
        %v2413 = vunpack.c.l.b16 %v2066
        %v2414 = vunpack.c.h.b16 %v2066
        %v2415 = vunpack.c.l.b16 %v2067
        %v2416 = vunpack.c.h.b16 %v2067
        %v2417 = vunpack.c.l.b16 %v2068
        %v2418 = vunpack.c.h.b16 %v2068
        %v2419 = vunpack.c.l.b16 %v2069
        %v2420 = vunpack.c.h.b16 %v2069
        %v2421 = vunpack.c.l.b16 %v2070
        %v2422 = vunpack.c.h.b16 %v2070
        %v2423 = vunpack.c.l.b16 %v2071
        %v2424 = vunpack.c.h.b16 %v2071
        %v2425 = vunpack.c.l.b16 %v2072
        %v2426 = vunpack.c.h.b16 %v2072
        %v2427 = vunpack.c.l.b16 %v2073
        %v2428 = vunpack.c.h.b16 %v2073
        %v2429 = vunpack.c.l.b16 %v2074
        %v2430 = vunpack.c.h.b16 %v2074
        %v2431 = vunpack.c.l.b16 %v2075
        %v2432 = vunpack.c.h.b16 %v2075
        %v2433 = vunpack.c.l.b16 %v2076
        %v2434 = vunpack.c.h.b16 %v2076
        %v2435 = vunpack.c.l.b16 %v2077
        %v2436 = vunpack.c.h.b16 %v2077
        %v2437 = vunpack.c.l.b16 %v2078
        %v2438 = vunpack.c.h.b16 %v2078
        %v2439 = vunpack.c.l.b16 %v2079
        %v2440 = vunpack.c.h.b16 %v2079
        %v2441 = vunpack.c.l.b16 %v2080
        %v2442 = vunpack.c.h.b16 %v2080
        %v2443 = vunpack.c.l.b16 %v2081
        %v2444 = vunpack.c.h.b16 %v2081
        %v2445 = vunpack.c.l.b16 %v2082
        %v2446 = vunpack.c.h.b16 %v2082
        %v2447 = vunpack.c.l.b16 %v2083
        %v2448 = vunpack.c.h.b16 %v2083
        %v2449 = vunpack.c.l.b16 %v2084
        %v2450 = vunpack.c.h.b16 %v2084
        %v2451 = vunpack.c.l.b16 %v2085
        %v2452 = vunpack.c.h.b16 %v2085
        %v2453 = vunpack.c.l.b16 %v2086
        %v2454 = vunpack.c.h.b16 %v2086
        %v2455 = vunpack.c.l.b16 %v2087
        %v2456 = vunpack.c.h.b16 %v2087
        %v2457 = vunpack.c.l.b16 %v2088
        %v2458 = vunpack.c.h.b16 %v2088
        %v2459 = vunpack.c.l.b16 %v2089
        %v2460 = vunpack.c.h.b16 %v2089
        %v2461 = vunpack.c.l.b16 %v2090
        %v2462 = vunpack.c.h.b16 %v2090
        %v2463 = vunpack.c.l.b16 %v2091
        %v2464 = vunpack.c.h.b16 %v2091
        %v2465 = vunpack.c.l.b16 %v2092
        %v2466 = vunpack.c.h.b16 %v2092
        %v2467 = vunpack.c.l.b16 %v2093
        %v2468 = vunpack.c.h.b16 %v2093
        %v2469 = vunpack.c.l.b16 %v2094
        %v2470 = vunpack.c.h.b16 %v2094
        %v2471 = vunpack.c.l.b16 %v2095
        %v2472 = vunpack.c.h.b16 %v2095
        %v2473 = vunpack.c.l.b16 %v2096
        %v2474 = vunpack.c.h.b16 %v2096
        %v2475 = vunpack.c.l.b16 %v2097
        %v2476 = vunpack.c.h.b16 %v2097
        %v2477 = vunpack.c.l.b16 %v2098
        %v2478 = vunpack.c.h.b16 %v2098
        %v2479 = vunpack.c.l.b16 %v2099
        %v2480 = vunpack.c.h.b16 %v2099
        %v2481 = vunpack.c.l.b16 %v2100
        %v2482 = vunpack.c.h.b16 %v2100
        %v2483 = vunpack.c.l.b16 %v2101
        %v2484 = vunpack.c.h.b16 %v2101
        %v2485 = vunpack.c.l.b16 %v2102
        %v2486 = vunpack.c.h.b16 %v2102
        %v2487 = vunpack.c.l.b16 %v2103
        %v2488 = vunpack.c.h.b16 %v2103
        %v2489 = vunpack.c.l.b16 %v2104
        %v2490 = vunpack.c.h.b16 %v2104
        %v2491 = vunpack.c.l.b16 %v2105
        %v2492 = vunpack.c.h.b16 %v2105
        %v2493 = vunpack.c.l.b16 %v2106
        %v2494 = vunpack.c.h.b16 %v2106
        %v2495 = vunpack.c.l.b16 %v2107
        %v2496 = vunpack.c.h.b16 %v2107
        %v2497 = vunpack.c.l.b16 %v2108
        %v2498 = vunpack.c.h.b16 %v2108
        %v2499 = vunpack.c.l.b16 %v2109
        %v2500 = vunpack.c.h.b16 %v2109
        %v2501 = vunpack.c.l.b16 %v2110
        %v2502 = vunpack.c.h.b16 %v2110
        %v2503 = vunpack.c.l.b16 %v2111
        %v2504 = vunpack.c.h.b16 %v2111
        %v2505 = vunpack.c.l.b16 %v2112
        %v2506 = vunpack.c.h.b16 %v2112
        %v2507 = vunpack.c.l.b16 %v2113
        %v2508 = vunpack.c.h.b16 %v2113
        %v2509 = vunpack.c.l.b16 %v2114
        %v2510 = vunpack.c.h.b16 %v2114
        %v2511 = vunpack.c.l.b16 %v2115
        %v2512 = vunpack.c.h.b16 %v2115
        %v2513 = vunpack.c.l.b16 %v2116
        %v2514 = vunpack.c.h.b16 %v2116
        %v2515 = vunpack.c.l.b16 %v2117
        %v2516 = vunpack.c.h.b16 %v2117
        %v2517 = vunpack.c.l.b16 %v2118
        %v2518 = vunpack.c.h.b16 %v2118
        %v2519 = vunpack.c.l.b16 %v2119
        %v2520 = vunpack.c.h.b16 %v2119
        %v2521 = vunpack.c.l.b16 %v2120
        %v2522 = vunpack.c.h.b16 %v2120
        %v2523 = vunpack.c.l.b16 %v2121
        %v2524 = vunpack.c.h.b16 %v2121
        %v2525 = vunpack.c.l.b16 %v2122
        %v2526 = vunpack.c.h.b16 %v2122
        %v2527 = vunpack.c.l.b16 %v2123
        %v2528 = vunpack.c.h.b16 %v2123
        %v2529 = vunpack.c.l.b16 %v2124
        %v2530 = vunpack.c.h.b16 %v2124
        %v2531 = vunpack.c.l.b16 %v2125
        %v2532 = vunpack.c.h.b16 %v2125
        %v2533 = vunpack.c.l.b16 %v2126
        %v2534 = vunpack.c.h.b16 %v2126
        %v2535 = vunpack.c.l.b16 %v2127
        %v2536 = vunpack.c.h.b16 %v2127
        %v2537 = vunpack.c.l.b16 %v2128
        %v2538 = vunpack.c.h.b16 %v2128
        %v2539 = vunpack.c.l.b16 %v2129
        %v2540 = vunpack.c.h.b16 %v2129
        %v2541 = vunpack.c.l.b16 %v2130
        %v2542 = vunpack.c.h.b16 %v2130
        %v2543 = vunpack.c.l.b16 %v2131
        %v2544 = vunpack.c.h.b16 %v2131
        %v2545 = vunpack.c.l.b16 %v2132
        %v2546 = vunpack.c.h.b16 %v2132
        %v2547 = vunpack.c.l.b16 %v2133
        %v2548 = vunpack.c.h.b16 %v2133
        %v2549 = vunpack.c.l.b16 %v2134
        %v2550 = vunpack.c.h.b16 %v2134
        %v2551 = vunpack.c.l.b16 %v2135
        %v2552 = vunpack.c.h.b16 %v2135
        %v2553 = vunpack.c.l.b16 %v2136
        %v2554 = vunpack.c.h.b16 %v2136
        %v2555 = vunpack.c.l.b16 %v2137
        %v2556 = vunpack.c.h.b16 %v2137
        %v2557 = vunpack.c.l.b16 %v2138
        %v2558 = vunpack.c.h.b16 %v2138
        %v2559 = vunpack.c.l.b16 %v2139
        %v2560 = vunpack.c.h.b16 %v2139
        %v2561 = vunpack.c.l.b16 %v2140
        %v2562 = vunpack.c.h.b16 %v2140
        %v2563 = vunpack.c.l.b16 %v2141
        %v2564 = vunpack.c.h.b16 %v2141
        %v2565 = vunpack.c.l.b16 %v2142
        %v2566 = vunpack.c.h.b16 %v2142
        %v2567 = vunpack.c.l.b16 %v2143
        %v2568 = vunpack.c.h.b16 %v2143
        %v2569 = vunpack.c.l.b16 %v2144
        %v2570 = vunpack.c.h.b16 %v2144
        %v2571 = vunpack.c.l.b16 %v2145
        %v2572 = vunpack.c.h.b16 %v2145
        %v2573 = vunpack.c.l.b16 %v2146
        %v2574 = vunpack.c.h.b16 %v2146
        %v2575 = vunpack.c.l.b16 %v2147
        %v2576 = vunpack.c.h.b16 %v2147
        %v2577 = vunpack.c.l.b16 %v2148
        %v2578 = vunpack.c.h.b16 %v2148
        %v2579 = vunpack.c.l.b16 %v2149
        %v2580 = vunpack.c.h.b16 %v2149
        %v2581 = vunpack.c.l.b16 %v2150
        %v2582 = vunpack.c.h.b16 %v2150
        %v2583 = vunpack.c.l.b16 %v2151
        %v2584 = vunpack.c.h.b16 %v2151
        %v2585 = vunpack.c.l.b16 %v2152
        %v2586 = vunpack.c.h.b16 %v2152
        %v2587 = vunpack.c.l.b16 %v2153
        %v2588 = vunpack.c.h.b16 %v2153
        %v2589 = vunpack.c.l.b16 %v2154
        %v2590 = vunpack.c.h.b16 %v2154
        %v2591 = vunpack.c.l.b16 %v2155
        %v2592 = vunpack.c.h.b16 %v2155
        %v2593 = vunpack.c.l.b16 %v2156
        %v2594 = vunpack.c.h.b16 %v2156
        %v2595 = vunpack.c.l.b16 %v2157
        %v2596 = vunpack.c.h.b16 %v2157
        %v2597 = vunpack.c.l.b16 %v2158
        %v2598 = vunpack.c.h.b16 %v2158
        %v2599 = vunpack.c.l.b16 %v2159
        %v2600 = vunpack.c.h.b16 %v2159
        %v2601 = vunpack.c.l.b16 %v2160
        %v2602 = vunpack.c.h.b16 %v2160
        %v2603 = vunpack.c.l.b16 %v2161
        %v2604 = vunpack.c.h.b16 %v2161
        %v2605 = vunpack.c.l.b16 %v2162
        %v2606 = vunpack.c.h.b16 %v2162
        %v2607 = vunpack.c.l.b16 %v2163
        %v2608 = vunpack.c.h.b16 %v2163
        %v2609 = vunpack.c.l.b16 %v2164
        %v2610 = vunpack.c.h.b16 %v2164
        %v2611 = vunpack.c.l.b16 %v2165
        %v2612 = vunpack.c.h.b16 %v2165
        %v2613 = vunpack.c.l.b16 %v2166
        %v2614 = vunpack.c.h.b16 %v2166
        %v2615 = vunpack.c.l.b16 %v2167
        %v2616 = vunpack.c.h.b16 %v2167
        %v2617 = vunpack.c.l.b16 %v2168
        %v2618 = vunpack.c.h.b16 %v2168
        %v2619 = vunpack.c.l.b16 %v2169
        %v2620 = vunpack.c.h.b16 %v2169
        %v2621 = vunpack.c.l.b16 %v2170
        %v2622 = vunpack.c.h.b16 %v2170
        %v2623 = vunpack.c.l.b16 %v2171
        %v2624 = vunpack.c.h.b16 %v2171
        %v2625 = vunpack.c.l.b16 %v2172
        %v2626 = vunpack.c.h.b16 %v2172
        %v2627 = vunpack.c.l.b16 %v2173
        %v2628 = vunpack.c.h.b16 %v2173
        %v2629 = vunpack.c.l.b16 %v2174
        %v2630 = vunpack.c.h.b16 %v2174
        %v2631 = vunpack.c.l.b16 %v2175
        %v2632 = vunpack.c.h.b16 %v2175
        %v2633 = vunpack.c.l.b16 %v2176
        %v2634 = vunpack.c.h.b16 %v2176
        %v2635 = vunpack.c.l.b16 %v2177
        %v2636 = vunpack.c.h.b16 %v2177
        %v2637 = vunpack.c.l.b16 %v2178
        %v2638 = vunpack.c.h.b16 %v2178
        %v2639 = vunpack.c.l.b16 %v2179
        %v2640 = vunpack.c.h.b16 %v2179
        %v2641 = vunpack.c.l.b16 %v2180
        %v2642 = vunpack.c.h.b16 %v2180
        %v2643 = vunpack.c.l.b16 %v2181
        %v2644 = vunpack.c.h.b16 %v2181
        %v2645 = vunpack.c.l.b16 %v2182
        %v2646 = vunpack.c.h.b16 %v2182
        %v2647 = vunpack.c.l.b16 %v2183
        %v2648 = vunpack.c.h.b16 %v2183
        %v2649 = vunpack.c.l.b16 %v2184
        %v2650 = vunpack.c.h.b16 %v2184
        %v2651 = vunpack.c.l.b16 %v2185
        %v2652 = vunpack.c.h.b16 %v2185
        %v2653 = vunpack.c.l.b16 %v2186
        %v2654 = vunpack.c.h.b16 %v2186
        %v2655 = vunpack.c.l.b16 %v2187
        %v2656 = vunpack.c.h.b16 %v2187
        %v2657 = vunpack.c.l.b16 %v2188
        %v2658 = vunpack.c.h.b16 %v2188
        %v2659 = vunpack.c.l.b16 %v2189
        %v2660 = vunpack.c.h.b16 %v2189
        %v2661 = vunpack.c.l.b16 %v2190
        %v2662 = vunpack.c.h.b16 %v2190
        %v2663 = vunpack.c.l.b16 %v2191
        %v2664 = vunpack.c.h.b16 %v2191
        %v2665 = vunpack.c.l.b16 %v2192
        %v2666 = vunpack.c.h.b16 %v2192
        %v2667 = vunpack.c.l.b16 %v2193
        %v2668 = vunpack.c.h.b16 %v2193
        %v2669 = vunpack.c.l.b16 %v2194
        %v2670 = vunpack.c.h.b16 %v2194
        %v2671 = vunpack.c.l.b16 %v2195
        %v2672 = vunpack.c.h.b16 %v2195
        %v2673 = vunpack.c.l.b16 %v2196
        %v2674 = vunpack.c.h.b16 %v2196
        %v2675 = vunpack.c.l.b16 %v2197
        %v2676 = vunpack.c.h.b16 %v2197
        %v2677 = vunpack.c.l.b16 %v2198
        %v2678 = vunpack.c.h.b16 %v2198
        %v2679 = vunpack.c.l.b16 %v2199
        %v2680 = vunpack.c.h.b16 %v2199
        %v2681 = vunpack.c.l.b16 %v2200
        %v2682 = vunpack.c.h.b16 %v2200
        %v2683 = vunpack.c.l.b16 %v2201
        %v2684 = vunpack.c.h.b16 %v2201
        %v2685 = vunpack.c.l.b16 %v2202
        %v2686 = vunpack.c.h.b16 %v2202
        %v2687 = vunpack.c.l.b16 %v2203
        %v2688 = vunpack.c.h.b16 %v2203
        %v2689 = vunpack.c.l.b16 %v2204
        %v2690 = vunpack.c.h.b16 %v2204
        %v2691 = vunpack.c.l.b16 %v2205
        %v2692 = vunpack.c.h.b16 %v2205
        %v2693 = vunpack.c.l.b16 %v2206
        %v2694 = vunpack.c.h.b16 %v2206
        %v2695 = vunpack.c.l.b16 %v2207
        %v2696 = vunpack.c.h.b16 %v2207
        %v2697 = vunpack.c.l.b16 %v2208
        %v2698 = vunpack.c.h.b16 %v2208
        %v2699 = vunpack.c.l.b16 %v2209
        %v2700 = vunpack.c.h.b16 %v2209
        %v2701 = vunpack.c.l.b16 %v2210
        %v2702 = vunpack.c.h.b16 %v2210
        %v2703 = vunpack.c.l.b16 %v2211
        %v2704 = vunpack.c.h.b16 %v2211
        %v2705 = vunpack.c.l.b16 %v2212
        %v2706 = vunpack.c.h.b16 %v2212
        %v2707 = vunpack.c.l.b16 %v2213
        %v2708 = vunpack.c.h.b16 %v2213
        %v2709 = vunpack.c.l.b16 %v2214
        %v2710 = vunpack.c.h.b16 %v2214
        %v2711 = vunpack.c.l.b16 %v2215
        %v2712 = vunpack.c.h.b16 %v2215
        %v2713 = vunpack.c.l.b16 %v2216
        %v2714 = vunpack.c.h.b16 %v2216
        %v2715 = vunpack.c.l.b16 %v2217
        %v2716 = vunpack.c.h.b16 %v2217
        %v2717 = vpack.c.b16 %v2411, %v2405
        %v2718 = vpack.c.b16 %v2412, %v2406
        %v2719 = vpack.c.b16 %v2413, %v2407
        %v2720 = vpack.c.b16 %v2414, %v2408
        %v2721 = vpack.c.b16 %v2415, %v2409
        %v2722 = vpack.c.b16 %v2416, %v2410
        %v2723 = vpack.c.b16 %v2423, %v2417
        %v2724 = vpack.c.b16 %v2424, %v2418
        %v2725 = vpack.c.b16 %v2425, %v2419
        %v2726 = vpack.c.b16 %v2426, %v2420
        %v2727 = vpack.c.b16 %v2427, %v2421
        %v2728 = vpack.c.b16 %v2428, %v2422
        %v2729 = vpack.c.b16 %v2435, %v2429
        %v2730 = vpack.c.b16 %v2436, %v2430
        %v2731 = vpack.c.b16 %v2437, %v2431
        %v2732 = vpack.c.b16 %v2438, %v2432
        %v2733 = vpack.c.b16 %v2439, %v2433
        %v2734 = vpack.c.b16 %v2440, %v2434
        %v2735 = vpack.c.b16 %v2447, %v2441
        %v2736 = vpack.c.b16 %v2448, %v2442
        %v2737 = vpack.c.b16 %v2449, %v2443
        %v2738 = vpack.c.b16 %v2450, %v2444
        %v2739 = vpack.c.b16 %v2451, %v2445
        %v2740 = vpack.c.b16 %v2452, %v2446
        %v2741 = vpack.c.b16 %v2459, %v2453
        %v2742 = vpack.c.b16 %v2460, %v2454
        %v2743 = vpack.c.b16 %v2461, %v2455
        %v2744 = vpack.c.b16 %v2462, %v2456
        %v2745 = vpack.c.b16 %v2463, %v2457
        %v2746 = vpack.c.b16 %v2464, %v2458
        %v2747 = vpack.c.b16 %v2471, %v2465
        %v2748 = vpack.c.b16 %v2472, %v2466
        %v2749 = vpack.c.b16 %v2473, %v2467
        %v2750 = vpack.c.b16 %v2474, %v2468
        %v2751 = vpack.c.b16 %v2475, %v2469
        %v2752 = vpack.c.b16 %v2476, %v2470
        %v2753 = vpack.c.b16 %v2483, %v2477
        %v2754 = vpack.c.b16 %v2484, %v2478
        %v2755 = vpack.c.b16 %v2485, %v2479
        %v2756 = vpack.c.b16 %v2486, %v2480
        %v2757 = vpack.c.b16 %v2487, %v2481
        %v2758 = vpack.c.b16 %v2488, %v2482
        %v2759 = vpack.c.b16 %v2495, %v2489
        %v2760 = vpack.c.b16 %v2496, %v2490
        %v2761 = vpack.c.b16 %v2497, %v2491
        %v2762 = vpack.c.b16 %v2498, %v2492
        %v2763 = vpack.c.b16 %v2499, %v2493
        %v2764 = vpack.c.b16 %v2500, %v2494
        %v2765 = vpack.c.b16 %v2507, %v2501
        %v2766 = vpack.c.b16 %v2508, %v2502
        %v2767 = vpack.c.b16 %v2509, %v2503
        %v2768 = vpack.c.b16 %v2510, %v2504
        %v2769 = vpack.c.b16 %v2511, %v2505
        %v2770 = vpack.c.b16 %v2512, %v2506
        %v2771 = vpack.c.b16 %v2519, %v2513
        %v2772 = vpack.c.b16 %v2520, %v2514
        %v2773 = vpack.c.b16 %v2521, %v2515
        %v2774 = vpack.c.b16 %v2522, %v2516
        %v2775 = vpack.c.b16 %v2523, %v2517
        %v2776 = vpack.c.b16 %v2524, %v2518
        %v2777 = vpack.c.b16 %v2531, %v2525
        %v2778 = vpack.c.b16 %v2532, %v2526
        %v2779 = vpack.c.b16 %v2533, %v2527
        %v2780 = vpack.c.b16 %v2534, %v2528
        %v2781 = vpack.c.b16 %v2535, %v2529
        %v2782 = vpack.c.b16 %v2536, %v2530
        %v2783 = vpack.c.b16 %v2543, %v2537
        %v2784 = vpack.c.b16 %v2544, %v2538
        %v2785 = vpack.c.b16 %v2545, %v2539
        %v2786 = vpack.c.b16 %v2546, %v2540
        %v2787 = vpack.c.b16 %v2547, %v2541
        %v2788 = vpack.c.b16 %v2548, %v2542
        %v2789 = vpack.c.b16 %v2555, %v2549
        %v2790 = vpack.c.b16 %v2556, %v2550
        %v2791 = vpack.c.b16 %v2557, %v2551
        %v2792 = vpack.c.b16 %v2558, %v2552
        %v2793 = vpack.c.b16 %v2559, %v2553
        %v2794 = vpack.c.b16 %v2560, %v2554
        %v2795 = vpack.c.b16 %v2567, %v2561
        %v2796 = vpack.c.b16 %v2568, %v2562
        %v2797 = vpack.c.b16 %v2569, %v2563
        %v2798 = vpack.c.b16 %v2570, %v2564
        %v2799 = vpack.c.b16 %v2571, %v2565
        %v2800 = vpack.c.b16 %v2572, %v2566
        %v2801 = vpack.c.b16 %v2579, %v2573
        %v2802 = vpack.c.b16 %v2580, %v2574
        %v2803 = vpack.c.b16 %v2581, %v2575
        %v2804 = vpack.c.b16 %v2582, %v2576
        %v2805 = vpack.c.b16 %v2583, %v2577
        %v2806 = vpack.c.b16 %v2584, %v2578
        %v2807 = vpack.c.b16 %v2591, %v2585
        %v2808 = vpack.c.b16 %v2592, %v2586
        %v2809 = vpack.c.b16 %v2593, %v2587
        %v2810 = vpack.c.b16 %v2594, %v2588
        %v2811 = vpack.c.b16 %v2595, %v2589
        %v2812 = vpack.c.b16 %v2596, %v2590
        %v2813 = vpack.c.b16 %v2603, %v2597
        %v2814 = vpack.c.b16 %v2604, %v2598
        %v2815 = vpack.c.b16 %v2605, %v2599
        %v2816 = vpack.c.b16 %v2606, %v2600
        %v2817 = vpack.c.b16 %v2607, %v2601
        %v2818 = vpack.c.b16 %v2608, %v2602
        %v2819 = vpack.c.b16 %v2615, %v2609
        %v2820 = vpack.c.b16 %v2616, %v2610
        %v2821 = vpack.c.b16 %v2617, %v2611
        %v2822 = vpack.c.b16 %v2618, %v2612
        %v2823 = vpack.c.b16 %v2619, %v2613
        %v2824 = vpack.c.b16 %v2620, %v2614
        %v2825 = vpack.c.b16 %v2627, %v2621
        %v2826 = vpack.c.b16 %v2628, %v2622
        %v2827 = vpack.c.b16 %v2629, %v2623
        %v2828 = vpack.c.b16 %v2630, %v2624
        %v2829 = vpack.c.b16 %v2631, %v2625
        %v2830 = vpack.c.b16 %v2632, %v2626
        %v2831 = vpack.c.b16 %v2639, %v2633
        %v2832 = vpack.c.b16 %v2640, %v2634
        %v2833 = vpack.c.b16 %v2641, %v2635
        %v2834 = vpack.c.b16 %v2642, %v2636
        %v2835 = vpack.c.b16 %v2643, %v2637
        %v2836 = vpack.c.b16 %v2644, %v2638
        %v2837 = vpack.c.b16 %v2651, %v2645
        %v2838 = vpack.c.b16 %v2652, %v2646
        %v2839 = vpack.c.b16 %v2653, %v2647
        %v2840 = vpack.c.b16 %v2654, %v2648
        %v2841 = vpack.c.b16 %v2655, %v2649
        %v2842 = vpack.c.b16 %v2656, %v2650
        %v2843 = vpack.c.b16 %v2663, %v2657
        %v2844 = vpack.c.b16 %v2664, %v2658
        %v2845 = vpack.c.b16 %v2665, %v2659
        %v2846 = vpack.c.b16 %v2666, %v2660
        %v2847 = vpack.c.b16 %v2667, %v2661
        %v2848 = vpack.c.b16 %v2668, %v2662
        %v2849 = vpack.c.b16 %v2675, %v2669
        %v2850 = vpack.c.b16 %v2676, %v2670
        %v2851 = vpack.c.b16 %v2677, %v2671
        %v2852 = vpack.c.b16 %v2678, %v2672
        %v2853 = vpack.c.b16 %v2679, %v2673
        %v2854 = vpack.c.b16 %v2680, %v2674
        %v2855 = vpack.c.b16 %v2687, %v2681
        %v2856 = vpack.c.b16 %v2688, %v2682
        %v2857 = vpack.c.b16 %v2689, %v2683
        %v2858 = vpack.c.b16 %v2690, %v2684
        %v2859 = vpack.c.b16 %v2691, %v2685
        %v2860 = vpack.c.b16 %v2692, %v2686
        %v2861 = vpack.c.b16 %v2699, %v2693
        %v2862 = vpack.c.b16 %v2700, %v2694
        %v2863 = vpack.c.b16 %v2701, %v2695
        %v2864 = vpack.c.b16 %v2702, %v2696
        %v2865 = vpack.c.b16 %v2703, %v2697
        %v2866 = vpack.c.b16 %v2704, %v2698
        %v2867 = vpack.c.b16 %v2711, %v2705
        %v2868 = vpack.c.b16 %v2712, %v2706
        %v2869 = vpack.c.b16 %v2713, %v2707
        %v2870 = vpack.c.b16 %v2714, %v2708
        %v2871 = vpack.c.b16 %v2715, %v2709
        %v2872 = vpack.c.b16 %v2716, %v2710
        %vm3029 = vcmask 261120
        %v3031 = vsel %vm3029, %v2245, 0
        %3033 = vmatprep.subr.bf16.mxu0 %v2718
        %3034 = vmatpush1.bf16.msra.mxu0 %v2717
        %3035 = vmatprep.subr.bf16.mxu0 %v2724
        %3036 = vmatpush1.bf16.msra.mxu0 %v2723
        %3037 = vmatprep.subr.bf16.mxu0 %v2730
        %3038 = vmatpush1.bf16.msra.mxu0 %v2729
        %3039 = vmatprep.subr.bf16.mxu0 %v2736
        %3040 = vmatpush1.bf16.msra.mxu0 %v2735
        %3041 = vmatprep.subr.bf16.mxu0 %v2742
        %3042 = vmatpush1.bf16.msra.mxu0 %v2741
        %3043 = vmatprep.subr.bf16.mxu0 %v2748
        %3044 = vmatpush1.bf16.msra.mxu0 %v2747
        %3045 = vmatprep.subr.bf16.mxu0 %v2754
        %3046 = vmatpush1.bf16.msra.mxu0 %v2753
        %3047 = vmatprep.subr.bf16.mxu0 %v2760
        %3048 = vmatpush1.bf16.msra.mxu0 %v2759
        %3049 = vmatprep.subr.bf16.mxu0 %v2766
        %3050 = vmatpush1.bf16.msra.mxu0 %v2765
        %3051 = vmatprep.subr.bf16.mxu0 %v2772
        %3052 = vmatpush1.bf16.msra.mxu0 %v2771
        %3053 = vmatprep.subr.bf16.mxu0 %v2778
        %3054 = vmatpush1.bf16.msra.mxu0 %v2777
        %3055 = vmatprep.subr.bf16.mxu0 %v2784
        %3056 = vmatpush1.bf16.msra.mxu0 %v2783
        %3057 = vmatprep.subr.bf16.mxu0 %v2790
        %3058 = vmatpush1.bf16.msra.mxu0 %v2789
        %3059 = vmatprep.subr.bf16.mxu0 %v2796
        %3060 = vmatpush1.bf16.msra.mxu0 %v2795
        %3061 = vmatprep.subr.bf16.mxu0 %v2802
        %3062 = vmatpush1.bf16.msra.mxu0 %v2801
        %3063 = vmatprep.subr.bf16.mxu0 %v2808
        %3064 = vmatpush1.bf16.msra.mxu0 %v2807
        %3065 = vmatprep.mubr.bf16.mxu0 %v2231
        %3066 = vmatmul.mubr.bf16.gmra.mrb[0].mxu0 %v2224
        %v3067 = vpop.f32.mrb[0].mxu0
        %v3068 = vadd.f32 0.0, %v3067
        %v3069 = vpop.f32.mrb[0].mxu0
        %v3070 = vadd.f32 0.0, %v3069
        %v3071 = vpop.f32.mrb[0].mxu0
        %v3072 = vadd.f32 0.0, %v3071
        %v3073 = vpop.f32.mrb[0].mxu0
        %v3074 = vadd.f32 0.0, %v3073
        %3075 = vdwg.mxu0
        %3076 = vmatprep.subr.bf16.mxu0 %v2814
        %3077 = vmatpush1.bf16.msra.mxu0 %v2813
        %3078 = vmatprep.subr.bf16.mxu0 %v2820
        %3079 = vmatpush1.bf16.msra.mxu0 %v2819
        %3080 = vmatprep.subr.bf16.mxu0 %v2826
        %3081 = vmatpush1.bf16.msra.mxu0 %v2825
        %3082 = vmatprep.subr.bf16.mxu0 %v2832
        %3083 = vmatpush1.bf16.msra.mxu0 %v2831
        %3084 = vmatprep.subr.bf16.mxu0 %v2838
        %3085 = vmatpush1.bf16.msra.mxu0 %v2837
        %3086 = vmatprep.subr.bf16.mxu0 %v2844
        %3087 = vmatpush1.bf16.msra.mxu0 %v2843
        %3088 = vmatprep.subr.bf16.mxu0 %v2850
        %3089 = vmatpush1.bf16.msra.mxu0 %v2849
        %3090 = vmatprep.subr.bf16.mxu0 %v2856
        %3091 = vmatpush1.bf16.msra.mxu0 %v2855
        %3092 = vmatprep.subr.bf16.mxu0 %v2862
        %3093 = vmatpush1.bf16.msra.mxu0 %v2861
        %3094 = vmatprep.subr.bf16.mxu0 %v2868
        %3095 = vmatpush1.bf16.msra.mxu0 %v2867
        %3096 = vmatprep.subr.bf16.mxu0 0
        %3097 = vmatpush1.bf16.msra.mxu0 0
        %3098 = vmatprep.subr.bf16.mxu0 0
        %3099 = vmatpush1.bf16.msra.mxu0 0
        %3100 = vmatprep.subr.bf16.mxu0 0
        %3101 = vmatpush1.bf16.msra.mxu0 0
        %3102 = vmatprep.subr.bf16.mxu0 0
        %3103 = vmatpush1.bf16.msra.mxu0 0
        %3104 = vmatprep.subr.bf16.mxu0 0
        %3105 = vmatpush1.bf16.msra.mxu0 0
        %3106 = vmatprep.subr.bf16.mxu0 0
        %3107 = vmatpush1.bf16.msra.mxu0 0
        %3108 = vmatprep.mubr.bf16.mxu0 %v3031
        %3109 = vmatmul.mubr.bf16.gmra.mrb[0].mxu0 %v2238
        %v3110 = vpop.f32.mrb[0].mxu0
        %v3111 = vadd.f32 %v3068, %v3110
        %v3112 = vpop.f32.mrb[0].mxu0
        %v3113 = vadd.f32 %v3070, %v3112
        %v3114 = vpop.f32.mrb[0].mxu0
        %v3115 = vadd.f32 %v3072, %v3114
        %v3116 = vpop.f32.mrb[0].mxu0
        %v3117 = vadd.f32 %v3074, %v3116
        %3118 = vdwg.mxu0
        %3119 = vmatprep.subr.bf16.mxu0 %v2720
        %3120 = vmatpush1.bf16.msra.mxu0 %v2719
        %3121 = vmatprep.subr.bf16.mxu0 %v2726
        %3122 = vmatpush1.bf16.msra.mxu0 %v2725
        %3123 = vmatprep.subr.bf16.mxu0 %v2732
        %3124 = vmatpush1.bf16.msra.mxu0 %v2731
        %3125 = vmatprep.subr.bf16.mxu0 %v2738
        %3126 = vmatpush1.bf16.msra.mxu0 %v2737
        %3127 = vmatprep.subr.bf16.mxu0 %v2744
        %3128 = vmatpush1.bf16.msra.mxu0 %v2743
        %3129 = vmatprep.subr.bf16.mxu0 %v2750
        %3130 = vmatpush1.bf16.msra.mxu0 %v2749
        %3131 = vmatprep.subr.bf16.mxu0 %v2756
        %3132 = vmatpush1.bf16.msra.mxu0 %v2755
        %3133 = vmatprep.subr.bf16.mxu0 %v2762
        %3134 = vmatpush1.bf16.msra.mxu0 %v2761
        %3135 = vmatprep.subr.bf16.mxu0 %v2768
        %3136 = vmatpush1.bf16.msra.mxu0 %v2767
        %3137 = vmatprep.subr.bf16.mxu0 %v2774
        %3138 = vmatpush1.bf16.msra.mxu0 %v2773
        %3139 = vmatprep.subr.bf16.mxu0 %v2780
        %3140 = vmatpush1.bf16.msra.mxu0 %v2779
        %3141 = vmatprep.subr.bf16.mxu0 %v2786
        %3142 = vmatpush1.bf16.msra.mxu0 %v2785
        %3143 = vmatprep.subr.bf16.mxu0 %v2792
        %3144 = vmatpush1.bf16.msra.mxu0 %v2791
        %3145 = vmatprep.subr.bf16.mxu0 %v2798
        %3146 = vmatpush1.bf16.msra.mxu0 %v2797
        %3147 = vmatprep.subr.bf16.mxu0 %v2804
        %3148 = vmatpush1.bf16.msra.mxu0 %v2803
        %3149 = vmatprep.subr.bf16.mxu0 %v2810
        %3150 = vmatpush1.bf16.msra.mxu0 %v2809
        %3151 = vmatprep.mubr.bf16.mxu0 %v2231
        %3152 = vmatmul.mubr.bf16.gmra.mrb[0].mxu0 %v2224
        %v3153 = vpop.f32.mrb[0].mxu0
        %v3154 = vadd.f32 0.0, %v3153
        %v3155 = vpop.f32.mrb[0].mxu0
        %v3156 = vadd.f32 0.0, %v3155
        %v3157 = vpop.f32.mrb[0].mxu0
        %v3158 = vadd.f32 0.0, %v3157
        %v3159 = vpop.f32.mrb[0].mxu0
        %v3160 = vadd.f32 0.0, %v3159
        %3161 = vdwg.mxu0
        %3162 = vmatprep.subr.bf16.mxu0 %v2816
        %3163 = vmatpush1.bf16.msra.mxu0 %v2815
        %3164 = vmatprep.subr.bf16.mxu0 %v2822
        %3165 = vmatpush1.bf16.msra.mxu0 %v2821
        %3166 = vmatprep.subr.bf16.mxu0 %v2828
        %3167 = vmatpush1.bf16.msra.mxu0 %v2827
        %3168 = vmatprep.subr.bf16.mxu0 %v2834
        %3169 = vmatpush1.bf16.msra.mxu0 %v2833
        %3170 = vmatprep.subr.bf16.mxu0 %v2840
        %3171 = vmatpush1.bf16.msra.mxu0 %v2839
        %3172 = vmatprep.subr.bf16.mxu0 %v2846
        %3173 = vmatpush1.bf16.msra.mxu0 %v2845
        %3174 = vmatprep.subr.bf16.mxu0 %v2852
        %3175 = vmatpush1.bf16.msra.mxu0 %v2851
        %3176 = vmatprep.subr.bf16.mxu0 %v2858
        %3177 = vmatpush1.bf16.msra.mxu0 %v2857
        %3178 = vmatprep.subr.bf16.mxu0 %v2864
        %3179 = vmatpush1.bf16.msra.mxu0 %v2863
        %3180 = vmatprep.subr.bf16.mxu0 %v2870
        %3181 = vmatpush1.bf16.msra.mxu0 %v2869
        %3182 = vmatprep.subr.bf16.mxu0 0
        %3183 = vmatpush1.bf16.msra.mxu0 0
        %3184 = vmatprep.subr.bf16.mxu0 0
        %3185 = vmatpush1.bf16.msra.mxu0 0
        %3186 = vmatprep.subr.bf16.mxu0 0
        %3187 = vmatpush1.bf16.msra.mxu0 0
        %3188 = vmatprep.subr.bf16.mxu0 0
        %3189 = vmatpush1.bf16.msra.mxu0 0
        %3190 = vmatprep.subr.bf16.mxu0 0
        %3191 = vmatpush1.bf16.msra.mxu0 0
        %3192 = vmatprep.subr.bf16.mxu0 0
        %3193 = vmatpush1.bf16.msra.mxu0 0
        %3194 = vmatprep.mubr.bf16.mxu0 %v3031
        %3195 = vmatmul.mubr.bf16.gmra.mrb[0].mxu0 %v2238
        %v3196 = vpop.f32.mrb[0].mxu0
        %v3197 = vadd.f32 %v3154, %v3196
        %v3198 = vpop.f32.mrb[0].mxu0
        %v3199 = vadd.f32 %v3156, %v3198
        %v3200 = vpop.f32.mrb[0].mxu0
        %v3201 = vadd.f32 %v3158, %v3200
        %v3202 = vpop.f32.mrb[0].mxu0
        %v3203 = vadd.f32 %v3160, %v3202
        %3204 = vdwg.mxu0
        %3205 = vmatprep.subr.bf16.mxu0 %v2722
        %3206 = vmatpush1.bf16.msra.mxu0 %v2721
        %3207 = vmatprep.subr.bf16.mxu0 %v2728
        %3208 = vmatpush1.bf16.msra.mxu0 %v2727
        %3209 = vmatprep.subr.bf16.mxu0 %v2734
        %3210 = vmatpush1.bf16.msra.mxu0 %v2733
        %3211 = vmatprep.subr.bf16.mxu0 %v2740
        %3212 = vmatpush1.bf16.msra.mxu0 %v2739
        %3213 = vmatprep.subr.bf16.mxu0 %v2746
        %3214 = vmatpush1.bf16.msra.mxu0 %v2745
        %3215 = vmatprep.subr.bf16.mxu0 %v2752
        %3216 = vmatpush1.bf16.msra.mxu0 %v2751
        %3217 = vmatprep.subr.bf16.mxu0 %v2758
        %3218 = vmatpush1.bf16.msra.mxu0 %v2757
        %3219 = vmatprep.subr.bf16.mxu0 %v2764
        %3220 = vmatpush1.bf16.msra.mxu0 %v2763
        %3221 = vmatprep.subr.bf16.mxu0 %v2770
        %3222 = vmatpush1.bf16.msra.mxu0 %v2769
        %3223 = vmatprep.subr.bf16.mxu0 %v2776
        %3224 = vmatpush1.bf16.msra.mxu0 %v2775
        %3225 = vmatprep.subr.bf16.mxu0 %v2782
        %3226 = vmatpush1.bf16.msra.mxu0 %v2781
        %3227 = vmatprep.subr.bf16.mxu0 %v2788
        %3228 = vmatpush1.bf16.msra.mxu0 %v2787
        %3229 = vmatprep.subr.bf16.mxu0 %v2794
        %3230 = vmatpush1.bf16.msra.mxu0 %v2793
        %3231 = vmatprep.subr.bf16.mxu0 %v2800
        %3232 = vmatpush1.bf16.msra.mxu0 %v2799
        %3233 = vmatprep.subr.bf16.mxu0 %v2806
        %3234 = vmatpush1.bf16.msra.mxu0 %v2805
        %3235 = vmatprep.subr.bf16.mxu0 %v2812
        %3236 = vmatpush1.bf16.msra.mxu0 %v2811
        %3237 = vmatprep.mubr.bf16.mxu0 %v2231
        %3238 = vmatmul.mubr.bf16.gmra.mrb[0].mxu0 %v2224
        %v3239 = vpop.f32.mrb[0].mxu0
        %v3240 = vadd.f32 0.0, %v3239
        %v3241 = vpop.f32.mrb[0].mxu0
        %v3242 = vadd.f32 0.0, %v3241
        %v3243 = vpop.f32.mrb[0].mxu0
        %v3244 = vadd.f32 0.0, %v3243
        %v3245 = vpop.f32.mrb[0].mxu0
        %v3246 = vadd.f32 0.0, %v3245
        %3247 = vdwg.mxu0
        %3248 = vmatprep.subr.bf16.mxu0 %v2818
        %3249 = vmatpush1.bf16.msra.mxu0 %v2817
        %3250 = vmatprep.subr.bf16.mxu0 %v2824
        %3251 = vmatpush1.bf16.msra.mxu0 %v2823
        %3252 = vmatprep.subr.bf16.mxu0 %v2830
        %3253 = vmatpush1.bf16.msra.mxu0 %v2829
        %3254 = vmatprep.subr.bf16.mxu0 %v2836
        %3255 = vmatpush1.bf16.msra.mxu0 %v2835
        %3256 = vmatprep.subr.bf16.mxu0 %v2842
        %3257 = vmatpush1.bf16.msra.mxu0 %v2841
        %3258 = vmatprep.subr.bf16.mxu0 %v2848
        %3259 = vmatpush1.bf16.msra.mxu0 %v2847
        %3260 = vmatprep.subr.bf16.mxu0 %v2854
        %3261 = vmatpush1.bf16.msra.mxu0 %v2853
        %3262 = vmatprep.subr.bf16.mxu0 %v2860
        %3263 = vmatpush1.bf16.msra.mxu0 %v2859
        %3264 = vmatprep.subr.bf16.mxu0 %v2866
        %3265 = vmatpush1.bf16.msra.mxu0 %v2865
        %3266 = vmatprep.subr.bf16.mxu0 %v2872
        %3267 = vmatpush1.bf16.msra.mxu0 %v2871
        %3268 = vmatprep.subr.bf16.mxu0 0
        %3269 = vmatpush1.bf16.msra.mxu0 0
        %3270 = vmatprep.subr.bf16.mxu0 0
        %3271 = vmatpush1.bf16.msra.mxu0 0
        %3272 = vmatprep.subr.bf16.mxu0 0
        %3273 = vmatpush1.bf16.msra.mxu0 0
        %3274 = vmatprep.subr.bf16.mxu0 0
        %3275 = vmatpush1.bf16.msra.mxu0 0
        %3276 = vmatprep.subr.bf16.mxu0 0
        %3277 = vmatpush1.bf16.msra.mxu0 0
        %3278 = vmatprep.subr.bf16.mxu0 0
        %3279 = vmatpush1.bf16.msra.mxu0 0
        %3280 = vmatprep.mubr.bf16.mxu0 %v3031
        %3281 = vmatmul.mubr.bf16.gmra.mrb[0].mxu0 %v2238
        %v3282 = vpop.f32.mrb[0].mxu0
        %v3283 = vadd.f32 %v3240, %v3282
        %v3284 = vpop.f32.mrb[0].mxu0
        %v3285 = vadd.f32 %v3242, %v3284
        %v3286 = vpop.f32.mrb[0].mxu0
        %v3287 = vadd.f32 %v3244, %v3286
        %v3288 = vpop.f32.mrb[0].mxu0
        %v3289 = vadd.f32 %v3246, %v3288
        %3290 = vdwg.mxu0
        %v3447 = vunpack.c.l.b16 %v1905
        %v3448 = vunpack.c.h.b16 %v1905
        %v3449 = vunpack.c.l.b16 %v1906
        %v3450 = vunpack.c.h.b16 %v1906
        %v3451 = vunpack.c.l.b16 %v1907
        %v3452 = vunpack.c.h.b16 %v1907
        %v3453 = vunpack.c.l.b16 %v1908
        %v3454 = vunpack.c.h.b16 %v1908
        %v3455 = vunpack.c.l.b16 %v1909
        %v3456 = vunpack.c.h.b16 %v1909
        %v3457 = vunpack.c.l.b16 %v1910
        %v3458 = vunpack.c.h.b16 %v1910
        %v3459 = vunpack.c.l.b16 %v1911
        %v3460 = vunpack.c.h.b16 %v1911
        %v3461 = vunpack.c.l.b16 %v1912
        %v3462 = vunpack.c.h.b16 %v1912
        %v3463 = vunpack.c.l.b16 %v1913
        %v3464 = vunpack.c.h.b16 %v1913
        %v3465 = vunpack.c.l.b16 %v1914
        %v3466 = vunpack.c.h.b16 %v1914
        %v3467 = vunpack.c.l.b16 %v1915
        %v3468 = vunpack.c.h.b16 %v1915
        %v3469 = vunpack.c.l.b16 %v1916
        %v3470 = vunpack.c.h.b16 %v1916
        %v3471 = vunpack.c.l.b16 %v1917
        %v3472 = vunpack.c.h.b16 %v1917
        %v3473 = vunpack.c.l.b16 %v1918
        %v3474 = vunpack.c.h.b16 %v1918
        %v3475 = vunpack.c.l.b16 %v1919
        %v3476 = vunpack.c.h.b16 %v1919
        %v3477 = vunpack.c.l.b16 %v1920
        %v3478 = vunpack.c.h.b16 %v1920
        %v3479 = vunpack.c.l.b16 %v1921
        %v3480 = vunpack.c.h.b16 %v1921
        %v3481 = vunpack.c.l.b16 %v1922
        %v3482 = vunpack.c.h.b16 %v1922
        %v3483 = vunpack.c.l.b16 %v1923
        %v3484 = vunpack.c.h.b16 %v1923
        %v3485 = vunpack.c.l.b16 %v1924
        %v3486 = vunpack.c.h.b16 %v1924
        %v3487 = vunpack.c.l.b16 %v1925
        %v3488 = vunpack.c.h.b16 %v1925
        %v3489 = vunpack.c.l.b16 %v1926
        %v3490 = vunpack.c.h.b16 %v1926
        %v3491 = vunpack.c.l.b16 %v1927
        %v3492 = vunpack.c.h.b16 %v1927
        %v3493 = vunpack.c.l.b16 %v1928
        %v3494 = vunpack.c.h.b16 %v1928
        %v3495 = vunpack.c.l.b16 %v1929
        %v3496 = vunpack.c.h.b16 %v1929
        %v3497 = vunpack.c.l.b16 %v1930
        %v3498 = vunpack.c.h.b16 %v1930
        %v3499 = vunpack.c.l.b16 %v1931
        %v3500 = vunpack.c.h.b16 %v1931
        %v3501 = vunpack.c.l.b16 %v1932
        %v3502 = vunpack.c.h.b16 %v1932
        %v3503 = vunpack.c.l.b16 %v1933
        %v3504 = vunpack.c.h.b16 %v1933
        %v3505 = vunpack.c.l.b16 %v1934
        %v3506 = vunpack.c.h.b16 %v1934
        %v3507 = vunpack.c.l.b16 %v1935
        %v3508 = vunpack.c.h.b16 %v1935
        %v3509 = vunpack.c.l.b16 %v1936
        %v3510 = vunpack.c.h.b16 %v1936
        %v3511 = vunpack.c.l.b16 %v1937
        %v3512 = vunpack.c.h.b16 %v1937
        %v3513 = vunpack.c.l.b16 %v1938
        %v3514 = vunpack.c.h.b16 %v1938
        %v3515 = vunpack.c.l.b16 %v1939
        %v3516 = vunpack.c.h.b16 %v1939
        %v3517 = vunpack.c.l.b16 %v1940
        %v3518 = vunpack.c.h.b16 %v1940
        %v3519 = vunpack.c.l.b16 %v1941
        %v3520 = vunpack.c.h.b16 %v1941
        %v3521 = vunpack.c.l.b16 %v1942
        %v3522 = vunpack.c.h.b16 %v1942
        %v3523 = vunpack.c.l.b16 %v1943
        %v3524 = vunpack.c.h.b16 %v1943
        %v3525 = vunpack.c.l.b16 %v1944
        %v3526 = vunpack.c.h.b16 %v1944
        %v3527 = vunpack.c.l.b16 %v1945
        %v3528 = vunpack.c.h.b16 %v1945
        %v3529 = vunpack.c.l.b16 %v1946
        %v3530 = vunpack.c.h.b16 %v1946
        %v3531 = vunpack.c.l.b16 %v1947
        %v3532 = vunpack.c.h.b16 %v1947
        %v3533 = vunpack.c.l.b16 %v1948
        %v3534 = vunpack.c.h.b16 %v1948
        %v3535 = vunpack.c.l.b16 %v1949
        %v3536 = vunpack.c.h.b16 %v1949
        %v3537 = vunpack.c.l.b16 %v1950
        %v3538 = vunpack.c.h.b16 %v1950
        %v3539 = vunpack.c.l.b16 %v1951
        %v3540 = vunpack.c.h.b16 %v1951
        %v3541 = vunpack.c.l.b16 %v1952
        %v3542 = vunpack.c.h.b16 %v1952
        %v3543 = vunpack.c.l.b16 %v1953
        %v3544 = vunpack.c.h.b16 %v1953
        %v3545 = vunpack.c.l.b16 %v1954
        %v3546 = vunpack.c.h.b16 %v1954
        %v3547 = vunpack.c.l.b16 %v1955
        %v3548 = vunpack.c.h.b16 %v1955
        %v3549 = vunpack.c.l.b16 %v1956
        %v3550 = vunpack.c.h.b16 %v1956
        %v3551 = vunpack.c.l.b16 %v1957
        %v3552 = vunpack.c.h.b16 %v1957
        %v3553 = vunpack.c.l.b16 %v1958
        %v3554 = vunpack.c.h.b16 %v1958
        %v3555 = vunpack.c.l.b16 %v1959
        %v3556 = vunpack.c.h.b16 %v1959
        %v3557 = vunpack.c.l.b16 %v1960
        %v3558 = vunpack.c.h.b16 %v1960
        %v3559 = vunpack.c.l.b16 %v1961
        %v3560 = vunpack.c.h.b16 %v1961
        %v3561 = vunpack.c.l.b16 %v1962
        %v3562 = vunpack.c.h.b16 %v1962
        %v3563 = vunpack.c.l.b16 %v1963
        %v3564 = vunpack.c.h.b16 %v1963
        %v3565 = vunpack.c.l.b16 %v1964
        %v3566 = vunpack.c.h.b16 %v1964
        %v3567 = vunpack.c.l.b16 %v1965
        %v3568 = vunpack.c.h.b16 %v1965
        %v3569 = vunpack.c.l.b16 %v1966
        %v3570 = vunpack.c.h.b16 %v1966
        %v3571 = vunpack.c.l.b16 %v1967
        %v3572 = vunpack.c.h.b16 %v1967
        %v3573 = vunpack.c.l.b16 %v1968
        %v3574 = vunpack.c.h.b16 %v1968
        %v3575 = vunpack.c.l.b16 %v1969
        %v3576 = vunpack.c.h.b16 %v1969
        %v3577 = vunpack.c.l.b16 %v1970
        %v3578 = vunpack.c.h.b16 %v1970
        %v3579 = vunpack.c.l.b16 %v1971
        %v3580 = vunpack.c.h.b16 %v1971
        %v3581 = vunpack.c.l.b16 %v1972
        %v3582 = vunpack.c.h.b16 %v1972
        %v3583 = vunpack.c.l.b16 %v1973
        %v3584 = vunpack.c.h.b16 %v1973
        %v3585 = vunpack.c.l.b16 %v1974
        %v3586 = vunpack.c.h.b16 %v1974
        %v3587 = vunpack.c.l.b16 %v1975
        %v3588 = vunpack.c.h.b16 %v1975
        %v3589 = vunpack.c.l.b16 %v1976
        %v3590 = vunpack.c.h.b16 %v1976
        %v3591 = vunpack.c.l.b16 %v1977
        %v3592 = vunpack.c.h.b16 %v1977
        %v3593 = vunpack.c.l.b16 %v1978
        %v3594 = vunpack.c.h.b16 %v1978
        %v3595 = vunpack.c.l.b16 %v1979
        %v3596 = vunpack.c.h.b16 %v1979
        %v3597 = vunpack.c.l.b16 %v1980
        %v3598 = vunpack.c.h.b16 %v1980
        %v3599 = vunpack.c.l.b16 %v1981
        %v3600 = vunpack.c.h.b16 %v1981
        %v3601 = vunpack.c.l.b16 %v1982
        %v3602 = vunpack.c.h.b16 %v1982
        %v3603 = vunpack.c.l.b16 %v1983
        %v3604 = vunpack.c.h.b16 %v1983
        %v3605 = vunpack.c.l.b16 %v1984
        %v3606 = vunpack.c.h.b16 %v1984
        %v3607 = vunpack.c.l.b16 %v1985
        %v3608 = vunpack.c.h.b16 %v1985
        %v3609 = vunpack.c.l.b16 %v1986
        %v3610 = vunpack.c.h.b16 %v1986
        %v3611 = vunpack.c.l.b16 %v1987
        %v3612 = vunpack.c.h.b16 %v1987
        %v3613 = vunpack.c.l.b16 %v1988
        %v3614 = vunpack.c.h.b16 %v1988
        %v3615 = vunpack.c.l.b16 %v1989
        %v3616 = vunpack.c.h.b16 %v1989
        %v3617 = vunpack.c.l.b16 %v1990
        %v3618 = vunpack.c.h.b16 %v1990
        %v3619 = vunpack.c.l.b16 %v1991
        %v3620 = vunpack.c.h.b16 %v1991
        %v3621 = vunpack.c.l.b16 %v1992
        %v3622 = vunpack.c.h.b16 %v1992
        %v3623 = vunpack.c.l.b16 %v1993
        %v3624 = vunpack.c.h.b16 %v1993
        %v3625 = vunpack.c.l.b16 %v1994
        %v3626 = vunpack.c.h.b16 %v1994
        %v3627 = vunpack.c.l.b16 %v1995
        %v3628 = vunpack.c.h.b16 %v1995
        %v3629 = vunpack.c.l.b16 %v1996
        %v3630 = vunpack.c.h.b16 %v1996
        %v3631 = vunpack.c.l.b16 %v1997
        %v3632 = vunpack.c.h.b16 %v1997
        %v3633 = vunpack.c.l.b16 %v1998
        %v3634 = vunpack.c.h.b16 %v1998
        %v3635 = vunpack.c.l.b16 %v1999
        %v3636 = vunpack.c.h.b16 %v1999
        %v3637 = vunpack.c.l.b16 %v2000
        %v3638 = vunpack.c.h.b16 %v2000
        %v3639 = vunpack.c.l.b16 %v2001
        %v3640 = vunpack.c.h.b16 %v2001
        %v3641 = vunpack.c.l.b16 %v2002
        %v3642 = vunpack.c.h.b16 %v2002
        %v3643 = vunpack.c.l.b16 %v2003
        %v3644 = vunpack.c.h.b16 %v2003
        %v3645 = vunpack.c.l.b16 %v2004
        %v3646 = vunpack.c.h.b16 %v2004
        %v3647 = vunpack.c.l.b16 %v2005
        %v3648 = vunpack.c.h.b16 %v2005
        %v3649 = vunpack.c.l.b16 %v2006
        %v3650 = vunpack.c.h.b16 %v2006
        %v3651 = vunpack.c.l.b16 %v2007
        %v3652 = vunpack.c.h.b16 %v2007
        %v3653 = vunpack.c.l.b16 %v2008
        %v3654 = vunpack.c.h.b16 %v2008
        %v3655 = vunpack.c.l.b16 %v2009
        %v3656 = vunpack.c.h.b16 %v2009
        %v3657 = vunpack.c.l.b16 %v2010
        %v3658 = vunpack.c.h.b16 %v2010
        %v3659 = vunpack.c.l.b16 %v2011
        %v3660 = vunpack.c.h.b16 %v2011
        %v3661 = vunpack.c.l.b16 %v2012
        %v3662 = vunpack.c.h.b16 %v2012
        %v3663 = vunpack.c.l.b16 %v2013
        %v3664 = vunpack.c.h.b16 %v2013
        %v3665 = vunpack.c.l.b16 %v2014
        %v3666 = vunpack.c.h.b16 %v2014
        %v3667 = vunpack.c.l.b16 %v2015
        %v3668 = vunpack.c.h.b16 %v2015
        %v3669 = vunpack.c.l.b16 %v2016
        %v3670 = vunpack.c.h.b16 %v2016
        %v3671 = vunpack.c.l.b16 %v2017
        %v3672 = vunpack.c.h.b16 %v2017
        %v3673 = vunpack.c.l.b16 %v2018
        %v3674 = vunpack.c.h.b16 %v2018
        %v3675 = vunpack.c.l.b16 %v2019
        %v3676 = vunpack.c.h.b16 %v2019
        %v3677 = vunpack.c.l.b16 %v2020
        %v3678 = vunpack.c.h.b16 %v2020
        %v3679 = vunpack.c.l.b16 %v2021
        %v3680 = vunpack.c.h.b16 %v2021
        %v3681 = vunpack.c.l.b16 %v2022
        %v3682 = vunpack.c.h.b16 %v2022
        %v3683 = vunpack.c.l.b16 %v2023
        %v3684 = vunpack.c.h.b16 %v2023
        %v3685 = vunpack.c.l.b16 %v2024
        %v3686 = vunpack.c.h.b16 %v2024
        %v3687 = vunpack.c.l.b16 %v2025
        %v3688 = vunpack.c.h.b16 %v2025
        %v3689 = vunpack.c.l.b16 %v2026
        %v3690 = vunpack.c.h.b16 %v2026
        %v3691 = vunpack.c.l.b16 %v2027
        %v3692 = vunpack.c.h.b16 %v2027
        %v3693 = vunpack.c.l.b16 %v2028
        %v3694 = vunpack.c.h.b16 %v2028
        %v3695 = vunpack.c.l.b16 %v2029
        %v3696 = vunpack.c.h.b16 %v2029
        %v3697 = vunpack.c.l.b16 %v2030
        %v3698 = vunpack.c.h.b16 %v2030
        %v3699 = vunpack.c.l.b16 %v2031
        %v3700 = vunpack.c.h.b16 %v2031
        %v3701 = vunpack.c.l.b16 %v2032
        %v3702 = vunpack.c.h.b16 %v2032
        %v3703 = vunpack.c.l.b16 %v2033
        %v3704 = vunpack.c.h.b16 %v2033
        %v3705 = vunpack.c.l.b16 %v2034
        %v3706 = vunpack.c.h.b16 %v2034
        %v3707 = vunpack.c.l.b16 %v2035
        %v3708 = vunpack.c.h.b16 %v2035
        %v3709 = vunpack.c.l.b16 %v2036
        %v3710 = vunpack.c.h.b16 %v2036
        %v3711 = vunpack.c.l.b16 %v2037
        %v3712 = vunpack.c.h.b16 %v2037
        %v3713 = vunpack.c.l.b16 %v2038
        %v3714 = vunpack.c.h.b16 %v2038
        %v3715 = vunpack.c.l.b16 %v2039
        %v3716 = vunpack.c.h.b16 %v2039
        %v3717 = vunpack.c.l.b16 %v2040
        %v3718 = vunpack.c.h.b16 %v2040
        %v3719 = vunpack.c.l.b16 %v2041
        %v3720 = vunpack.c.h.b16 %v2041
        %v3721 = vunpack.c.l.b16 %v2042
        %v3722 = vunpack.c.h.b16 %v2042
        %v3723 = vunpack.c.l.b16 %v2043
        %v3724 = vunpack.c.h.b16 %v2043
        %v3725 = vunpack.c.l.b16 %v2044
        %v3726 = vunpack.c.h.b16 %v2044
        %v3727 = vunpack.c.l.b16 %v2045
        %v3728 = vunpack.c.h.b16 %v2045
        %v3729 = vunpack.c.l.b16 %v2046
        %v3730 = vunpack.c.h.b16 %v2046
        %v3731 = vunpack.c.l.b16 %v2047
        %v3732 = vunpack.c.h.b16 %v2047
        %v3733 = vunpack.c.l.b16 %v2048
        %v3734 = vunpack.c.h.b16 %v2048
        %v3735 = vunpack.c.l.b16 %v2049
        %v3736 = vunpack.c.h.b16 %v2049
        %v3737 = vunpack.c.l.b16 %v2050
        %v3738 = vunpack.c.h.b16 %v2050
        %v3739 = vunpack.c.l.b16 %v2051
        %v3740 = vunpack.c.h.b16 %v2051
        %v3741 = vunpack.c.l.b16 %v2052
        %v3742 = vunpack.c.h.b16 %v2052
        %v3743 = vunpack.c.l.b16 %v2053
        %v3744 = vunpack.c.h.b16 %v2053
        %v3745 = vunpack.c.l.b16 %v2054
        %v3746 = vunpack.c.h.b16 %v2054
        %v3747 = vunpack.c.l.b16 %v2055
        %v3748 = vunpack.c.h.b16 %v2055
        %v3749 = vunpack.c.l.b16 %v2056
        %v3750 = vunpack.c.h.b16 %v2056
        %v3751 = vunpack.c.l.b16 %v2057
        %v3752 = vunpack.c.h.b16 %v2057
        %v3753 = vunpack.c.l.b16 %v2058
        %v3754 = vunpack.c.h.b16 %v2058
        %v3755 = vunpack.c.l.b16 %v2059
        %v3756 = vunpack.c.h.b16 %v2059
        %v3757 = vunpack.c.l.b16 %v2060
        %v3758 = vunpack.c.h.b16 %v2060
        %v3759 = vpack.c.b16 %v3453, %v3447
        %v3760 = vpack.c.b16 %v3454, %v3448
        %v3761 = vpack.c.b16 %v3455, %v3449
        %v3762 = vpack.c.b16 %v3456, %v3450
        %v3763 = vpack.c.b16 %v3457, %v3451
        %v3764 = vpack.c.b16 %v3458, %v3452
        %v3765 = vpack.c.b16 %v3465, %v3459
        %v3766 = vpack.c.b16 %v3466, %v3460
        %v3767 = vpack.c.b16 %v3467, %v3461
        %v3768 = vpack.c.b16 %v3468, %v3462
        %v3769 = vpack.c.b16 %v3469, %v3463
        %v3770 = vpack.c.b16 %v3470, %v3464
        %v3771 = vpack.c.b16 %v3477, %v3471
        %v3772 = vpack.c.b16 %v3478, %v3472
        %v3773 = vpack.c.b16 %v3479, %v3473
        %v3774 = vpack.c.b16 %v3480, %v3474
        %v3775 = vpack.c.b16 %v3481, %v3475
        %v3776 = vpack.c.b16 %v3482, %v3476
        %v3777 = vpack.c.b16 %v3489, %v3483
        %v3778 = vpack.c.b16 %v3490, %v3484
        %v3779 = vpack.c.b16 %v3491, %v3485
        %v3780 = vpack.c.b16 %v3492, %v3486
        %v3781 = vpack.c.b16 %v3493, %v3487
        %v3782 = vpack.c.b16 %v3494, %v3488
        %v3783 = vpack.c.b16 %v3501, %v3495
        %v3784 = vpack.c.b16 %v3502, %v3496
        %v3785 = vpack.c.b16 %v3503, %v3497
        %v3786 = vpack.c.b16 %v3504, %v3498
        %v3787 = vpack.c.b16 %v3505, %v3499
        %v3788 = vpack.c.b16 %v3506, %v3500
        %v3789 = vpack.c.b16 %v3513, %v3507
        %v3790 = vpack.c.b16 %v3514, %v3508
        %v3791 = vpack.c.b16 %v3515, %v3509
        %v3792 = vpack.c.b16 %v3516, %v3510
        %v3793 = vpack.c.b16 %v3517, %v3511
        %v3794 = vpack.c.b16 %v3518, %v3512
        %v3795 = vpack.c.b16 %v3525, %v3519
        %v3796 = vpack.c.b16 %v3526, %v3520
        %v3797 = vpack.c.b16 %v3527, %v3521
        %v3798 = vpack.c.b16 %v3528, %v3522
        %v3799 = vpack.c.b16 %v3529, %v3523
        %v3800 = vpack.c.b16 %v3530, %v3524
        %v3801 = vpack.c.b16 %v3537, %v3531
        %v3802 = vpack.c.b16 %v3538, %v3532
        %v3803 = vpack.c.b16 %v3539, %v3533
        %v3804 = vpack.c.b16 %v3540, %v3534
        %v3805 = vpack.c.b16 %v3541, %v3535
        %v3806 = vpack.c.b16 %v3542, %v3536
        %v3807 = vpack.c.b16 %v3549, %v3543
        %v3808 = vpack.c.b16 %v3550, %v3544
        %v3809 = vpack.c.b16 %v3551, %v3545
        %v3810 = vpack.c.b16 %v3552, %v3546
        %v3811 = vpack.c.b16 %v3553, %v3547
        %v3812 = vpack.c.b16 %v3554, %v3548
        %v3813 = vpack.c.b16 %v3561, %v3555
        %v3814 = vpack.c.b16 %v3562, %v3556
        %v3815 = vpack.c.b16 %v3563, %v3557
        %v3816 = vpack.c.b16 %v3564, %v3558
        %v3817 = vpack.c.b16 %v3565, %v3559
        %v3818 = vpack.c.b16 %v3566, %v3560
        %v3819 = vpack.c.b16 %v3573, %v3567
        %v3820 = vpack.c.b16 %v3574, %v3568
        %v3821 = vpack.c.b16 %v3575, %v3569
        %v3822 = vpack.c.b16 %v3576, %v3570
        %v3823 = vpack.c.b16 %v3577, %v3571
        %v3824 = vpack.c.b16 %v3578, %v3572
        %v3825 = vpack.c.b16 %v3585, %v3579
        %v3826 = vpack.c.b16 %v3586, %v3580
        %v3827 = vpack.c.b16 %v3587, %v3581
        %v3828 = vpack.c.b16 %v3588, %v3582
        %v3829 = vpack.c.b16 %v3589, %v3583
        %v3830 = vpack.c.b16 %v3590, %v3584
        %v3831 = vpack.c.b16 %v3597, %v3591
        %v3832 = vpack.c.b16 %v3598, %v3592
        %v3833 = vpack.c.b16 %v3599, %v3593
        %v3834 = vpack.c.b16 %v3600, %v3594
        %v3835 = vpack.c.b16 %v3601, %v3595
        %v3836 = vpack.c.b16 %v3602, %v3596
        %v3837 = vpack.c.b16 %v3609, %v3603
        %v3838 = vpack.c.b16 %v3610, %v3604
        %v3839 = vpack.c.b16 %v3611, %v3605
        %v3840 = vpack.c.b16 %v3612, %v3606
        %v3841 = vpack.c.b16 %v3613, %v3607
        %v3842 = vpack.c.b16 %v3614, %v3608
        %v3843 = vpack.c.b16 %v3621, %v3615
        %v3844 = vpack.c.b16 %v3622, %v3616
        %v3845 = vpack.c.b16 %v3623, %v3617
        %v3846 = vpack.c.b16 %v3624, %v3618
        %v3847 = vpack.c.b16 %v3625, %v3619
        %v3848 = vpack.c.b16 %v3626, %v3620
        %v3849 = vpack.c.b16 %v3633, %v3627
        %v3850 = vpack.c.b16 %v3634, %v3628
        %v3851 = vpack.c.b16 %v3635, %v3629
        %v3852 = vpack.c.b16 %v3636, %v3630
        %v3853 = vpack.c.b16 %v3637, %v3631
        %v3854 = vpack.c.b16 %v3638, %v3632
        %v3855 = vpack.c.b16 %v3645, %v3639
        %v3856 = vpack.c.b16 %v3646, %v3640
        %v3857 = vpack.c.b16 %v3647, %v3641
        %v3858 = vpack.c.b16 %v3648, %v3642
        %v3859 = vpack.c.b16 %v3649, %v3643
        %v3860 = vpack.c.b16 %v3650, %v3644
        %v3861 = vpack.c.b16 %v3657, %v3651
        %v3862 = vpack.c.b16 %v3658, %v3652
        %v3863 = vpack.c.b16 %v3659, %v3653
        %v3864 = vpack.c.b16 %v3660, %v3654
        %v3865 = vpack.c.b16 %v3661, %v3655
        %v3866 = vpack.c.b16 %v3662, %v3656
        %v3867 = vpack.c.b16 %v3669, %v3663
        %v3868 = vpack.c.b16 %v3670, %v3664
        %v3869 = vpack.c.b16 %v3671, %v3665
        %v3870 = vpack.c.b16 %v3672, %v3666
        %v3871 = vpack.c.b16 %v3673, %v3667
        %v3872 = vpack.c.b16 %v3674, %v3668
        %v3873 = vpack.c.b16 %v3681, %v3675
        %v3874 = vpack.c.b16 %v3682, %v3676
        %v3875 = vpack.c.b16 %v3683, %v3677
        %v3876 = vpack.c.b16 %v3684, %v3678
        %v3877 = vpack.c.b16 %v3685, %v3679
        %v3878 = vpack.c.b16 %v3686, %v3680
        %v3879 = vpack.c.b16 %v3693, %v3687
        %v3880 = vpack.c.b16 %v3694, %v3688
        %v3881 = vpack.c.b16 %v3695, %v3689
        %v3882 = vpack.c.b16 %v3696, %v3690
        %v3883 = vpack.c.b16 %v3697, %v3691
        %v3884 = vpack.c.b16 %v3698, %v3692
        %v3885 = vpack.c.b16 %v3705, %v3699
        %v3886 = vpack.c.b16 %v3706, %v3700
        %v3887 = vpack.c.b16 %v3707, %v3701
        %v3888 = vpack.c.b16 %v3708, %v3702
        %v3889 = vpack.c.b16 %v3709, %v3703
        %v3890 = vpack.c.b16 %v3710, %v3704
        %v3891 = vpack.c.b16 %v3717, %v3711
        %v3892 = vpack.c.b16 %v3718, %v3712
        %v3893 = vpack.c.b16 %v3719, %v3713
        %v3894 = vpack.c.b16 %v3720, %v3714
        %v3895 = vpack.c.b16 %v3721, %v3715
        %v3896 = vpack.c.b16 %v3722, %v3716
        %v3897 = vpack.c.b16 %v3729, %v3723
        %v3898 = vpack.c.b16 %v3730, %v3724
        %v3899 = vpack.c.b16 %v3731, %v3725
        %v3900 = vpack.c.b16 %v3732, %v3726
        %v3901 = vpack.c.b16 %v3733, %v3727
        %v3902 = vpack.c.b16 %v3734, %v3728
        %v3903 = vpack.c.b16 %v3741, %v3735
        %v3904 = vpack.c.b16 %v3742, %v3736
        %v3905 = vpack.c.b16 %v3743, %v3737
        %v3906 = vpack.c.b16 %v3744, %v3738
        %v3907 = vpack.c.b16 %v3745, %v3739
        %v3908 = vpack.c.b16 %v3746, %v3740
        %v3909 = vpack.c.b16 %v3753, %v3747
        %v3910 = vpack.c.b16 %v3754, %v3748
        %v3911 = vpack.c.b16 %v3755, %v3749
        %v3912 = vpack.c.b16 %v3756, %v3750
        %v3913 = vpack.c.b16 %v3757, %v3751
        %v3914 = vpack.c.b16 %v3758, %v3752
        %v4071 = vsel %vm3029, %v1904, 0
        %4073 = vmatprep.subr.bf16.mxu0 %v3760
        %4074 = vmatpush1.bf16.msra.mxu0 %v3759
        %4075 = vmatprep.subr.bf16.mxu0 %v3766
        %4076 = vmatpush1.bf16.msra.mxu0 %v3765
        %4077 = vmatprep.subr.bf16.mxu0 %v3772
        %4078 = vmatpush1.bf16.msra.mxu0 %v3771
        %4079 = vmatprep.subr.bf16.mxu0 %v3778
        %4080 = vmatpush1.bf16.msra.mxu0 %v3777
        %4081 = vmatprep.subr.bf16.mxu0 %v3784
        %4082 = vmatpush1.bf16.msra.mxu0 %v3783
        %4083 = vmatprep.subr.bf16.mxu0 %v3790
        %4084 = vmatpush1.bf16.msra.mxu0 %v3789
        %4085 = vmatprep.subr.bf16.mxu0 %v3796
        %4086 = vmatpush1.bf16.msra.mxu0 %v3795
        %4087 = vmatprep.subr.bf16.mxu0 %v3802
        %4088 = vmatpush1.bf16.msra.mxu0 %v3801
        %4089 = vmatprep.subr.bf16.mxu0 %v3808
        %4090 = vmatpush1.bf16.msra.mxu0 %v3807
        %4091 = vmatprep.subr.bf16.mxu0 %v3814
        %4092 = vmatpush1.bf16.msra.mxu0 %v3813
        %4093 = vmatprep.subr.bf16.mxu0 %v3820
        %4094 = vmatpush1.bf16.msra.mxu0 %v3819
        %4095 = vmatprep.subr.bf16.mxu0 %v3826
        %4096 = vmatpush1.bf16.msra.mxu0 %v3825
        %4097 = vmatprep.subr.bf16.mxu0 %v3832
        %4098 = vmatpush1.bf16.msra.mxu0 %v3831
        %4099 = vmatprep.subr.bf16.mxu0 %v3838
        %4100 = vmatpush1.bf16.msra.mxu0 %v3837
        %4101 = vmatprep.subr.bf16.mxu0 %v3844
        %4102 = vmatpush1.bf16.msra.mxu0 %v3843
        %4103 = vmatprep.subr.bf16.mxu0 %v3850
        %4104 = vmatpush1.bf16.msra.mxu0 %v3849
        %4105 = vmatprep.mubr.bf16.mxu0 %v1902
        %4106 = vmatmul.mubr.bf16.gmra.mrb[0].mxu0 %v1901
        %v4107 = vpop.f32.mrb[0].mxu0
        %v4108 = vadd.f32 %v3111, %v4107
        %v4109 = vpop.f32.mrb[0].mxu0
        %v4110 = vadd.f32 %v3113, %v4109
        %v4111 = vpop.f32.mrb[0].mxu0
        %v4112 = vadd.f32 %v3115, %v4111
        %v4113 = vpop.f32.mrb[0].mxu0
        %v4114 = vadd.f32 %v3117, %v4113
        %4115 = vdwg.mxu0
        %4116 = vmatprep.subr.bf16.mxu0 %v3856
        %4117 = vmatpush1.bf16.msra.mxu0 %v3855
        %4118 = vmatprep.subr.bf16.mxu0 %v3862
        %4119 = vmatpush1.bf16.msra.mxu0 %v3861
        %4120 = vmatprep.subr.bf16.mxu0 %v3868
        %4121 = vmatpush1.bf16.msra.mxu0 %v3867
        %4122 = vmatprep.subr.bf16.mxu0 %v3874
        %4123 = vmatpush1.bf16.msra.mxu0 %v3873
        %4124 = vmatprep.subr.bf16.mxu0 %v3880
        %4125 = vmatpush1.bf16.msra.mxu0 %v3879
        %4126 = vmatprep.subr.bf16.mxu0 %v3886
        %4127 = vmatpush1.bf16.msra.mxu0 %v3885
        %4128 = vmatprep.subr.bf16.mxu0 %v3892
        %4129 = vmatpush1.bf16.msra.mxu0 %v3891
        %4130 = vmatprep.subr.bf16.mxu0 %v3898
        %4131 = vmatpush1.bf16.msra.mxu0 %v3897
        %4132 = vmatprep.subr.bf16.mxu0 %v3904
        %4133 = vmatpush1.bf16.msra.mxu0 %v3903
        %4134 = vmatprep.subr.bf16.mxu0 %v3910
        %4135 = vmatpush1.bf16.msra.mxu0 %v3909
        %4136 = vmatprep.subr.bf16.mxu0 0
        %4137 = vmatpush1.bf16.msra.mxu0 0
        %4138 = vmatprep.subr.bf16.mxu0 0
        %4139 = vmatpush1.bf16.msra.mxu0 0
        %4140 = vmatprep.subr.bf16.mxu0 0
        %4141 = vmatpush1.bf16.msra.mxu0 0
        %4142 = vmatprep.subr.bf16.mxu0 0
        %4143 = vmatpush1.bf16.msra.mxu0 0
        %4144 = vmatprep.subr.bf16.mxu0 0
        %4145 = vmatpush1.bf16.msra.mxu0 0
        %4146 = vmatprep.subr.bf16.mxu0 0
        %4147 = vmatpush1.bf16.msra.mxu0 0
        %4148 = vmatprep.mubr.bf16.mxu0 %v4071
        %4149 = vmatmul.mubr.bf16.gmra.mrb[0].mxu0 %v1903
        %v4150 = vpop.f32.mrb[0].mxu0
        %v4151 = vadd.f32 %v4108, %v4150
        %v4152 = vpop.f32.mrb[0].mxu0
        %v4153 = vadd.f32 %v4110, %v4152
        %v4154 = vpop.f32.mrb[0].mxu0
        %v4155 = vadd.f32 %v4112, %v4154
        %v4156 = vpop.f32.mrb[0].mxu0
        %v4157 = vadd.f32 %v4114, %v4156
        %4158 = vdwg.mxu0
        %4159 = vmatprep.subr.bf16.mxu0 %v3762
        %4160 = vmatpush1.bf16.msra.mxu0 %v3761
        %4161 = vmatprep.subr.bf16.mxu0 %v3768
        %4162 = vmatpush1.bf16.msra.mxu0 %v3767
        %4163 = vmatprep.subr.bf16.mxu0 %v3774
        %4164 = vmatpush1.bf16.msra.mxu0 %v3773
        %4165 = vmatprep.subr.bf16.mxu0 %v3780
        %4166 = vmatpush1.bf16.msra.mxu0 %v3779
        %4167 = vmatprep.subr.bf16.mxu0 %v3786
        %4168 = vmatpush1.bf16.msra.mxu0 %v3785
        %4169 = vmatprep.subr.bf16.mxu0 %v3792
        %4170 = vmatpush1.bf16.msra.mxu0 %v3791
        %4171 = vmatprep.subr.bf16.mxu0 %v3798
        %4172 = vmatpush1.bf16.msra.mxu0 %v3797
        %4173 = vmatprep.subr.bf16.mxu0 %v3804
        %4174 = vmatpush1.bf16.msra.mxu0 %v3803
        %4175 = vmatprep.subr.bf16.mxu0 %v3810
        %4176 = vmatpush1.bf16.msra.mxu0 %v3809
        %4177 = vmatprep.subr.bf16.mxu0 %v3816
        %4178 = vmatpush1.bf16.msra.mxu0 %v3815
        %4179 = vmatprep.subr.bf16.mxu0 %v3822
        %4180 = vmatpush1.bf16.msra.mxu0 %v3821
        %4181 = vmatprep.subr.bf16.mxu0 %v3828
        %4182 = vmatpush1.bf16.msra.mxu0 %v3827
        %4183 = vmatprep.subr.bf16.mxu0 %v3834
        %4184 = vmatpush1.bf16.msra.mxu0 %v3833
        %4185 = vmatprep.subr.bf16.mxu0 %v3840
        %4186 = vmatpush1.bf16.msra.mxu0 %v3839
        %4187 = vmatprep.subr.bf16.mxu0 %v3846
        %4188 = vmatpush1.bf16.msra.mxu0 %v3845
        %4189 = vmatprep.subr.bf16.mxu0 %v3852
        %4190 = vmatpush1.bf16.msra.mxu0 %v3851
        %4191 = vmatprep.mubr.bf16.mxu0 %v1902
        %4192 = vmatmul.mubr.bf16.gmra.mrb[0].mxu0 %v1901
        %v4193 = vpop.f32.mrb[0].mxu0
        %v4194 = vadd.f32 %v3197, %v4193
        %v4195 = vpop.f32.mrb[0].mxu0
        %v4196 = vadd.f32 %v3199, %v4195
        %v4197 = vpop.f32.mrb[0].mxu0
        %v4198 = vadd.f32 %v3201, %v4197
        %v4199 = vpop.f32.mrb[0].mxu0
        %v4200 = vadd.f32 %v3203, %v4199
        %4201 = vdwg.mxu0
        %4202 = vmatprep.subr.bf16.mxu0 %v3858
        %4203 = vmatpush1.bf16.msra.mxu0 %v3857
        %4204 = vmatprep.subr.bf16.mxu0 %v3864
        %4205 = vmatpush1.bf16.msra.mxu0 %v3863
        %4206 = vmatprep.subr.bf16.mxu0 %v3870
        %4207 = vmatpush1.bf16.msra.mxu0 %v3869
        %4208 = vmatprep.subr.bf16.mxu0 %v3876
        %4209 = vmatpush1.bf16.msra.mxu0 %v3875
        %4210 = vmatprep.subr.bf16.mxu0 %v3882
        %4211 = vmatpush1.bf16.msra.mxu0 %v3881
        %4212 = vmatprep.subr.bf16.mxu0 %v3888
        %4213 = vmatpush1.bf16.msra.mxu0 %v3887
        %4214 = vmatprep.subr.bf16.mxu0 %v3894
        %4215 = vmatpush1.bf16.msra.mxu0 %v3893
        %4216 = vmatprep.subr.bf16.mxu0 %v3900
        %4217 = vmatpush1.bf16.msra.mxu0 %v3899
        %4218 = vmatprep.subr.bf16.mxu0 %v3906
        %4219 = vmatpush1.bf16.msra.mxu0 %v3905
        %4220 = vmatprep.subr.bf16.mxu0 %v3912
        %4221 = vmatpush1.bf16.msra.mxu0 %v3911
        %4222 = vmatprep.subr.bf16.mxu0 0
        %4223 = vmatpush1.bf16.msra.mxu0 0
        %4224 = vmatprep.subr.bf16.mxu0 0
        %4225 = vmatpush1.bf16.msra.mxu0 0
        %4226 = vmatprep.subr.bf16.mxu0 0
        %4227 = vmatpush1.bf16.msra.mxu0 0
        %4228 = vmatprep.subr.bf16.mxu0 0
        %4229 = vmatpush1.bf16.msra.mxu0 0
        %4230 = vmatprep.subr.bf16.mxu0 0
        %4231 = vmatpush1.bf16.msra.mxu0 0
        %4232 = vmatprep.subr.bf16.mxu0 0
        %4233 = vmatpush1.bf16.msra.mxu0 0
        %4234 = vmatprep.mubr.bf16.mxu0 %v4071
        %4235 = vmatmul.mubr.bf16.gmra.mrb[0].mxu0 %v1903
        %v4236 = vpop.f32.mrb[0].mxu0
        %v4237 = vadd.f32 %v4194, %v4236
        %v4238 = vpop.f32.mrb[0].mxu0
        %v4239 = vadd.f32 %v4196, %v4238
        %v4240 = vpop.f32.mrb[0].mxu0
        %v4241 = vadd.f32 %v4198, %v4240
        %v4242 = vpop.f32.mrb[0].mxu0
        %v4243 = vadd.f32 %v4200, %v4242
        %4244 = vdwg.mxu0
        %4245 = vmatprep.subr.bf16.mxu0 %v3764
        %4246 = vmatpush1.bf16.msra.mxu0 %v3763
        %4247 = vmatprep.subr.bf16.mxu0 %v3770
        %4248 = vmatpush1.bf16.msra.mxu0 %v3769
        %4249 = vmatprep.subr.bf16.mxu0 %v3776
        %4250 = vmatpush1.bf16.msra.mxu0 %v3775
        %4251 = vmatprep.subr.bf16.mxu0 %v3782
        %4252 = vmatpush1.bf16.msra.mxu0 %v3781
        %4253 = vmatprep.subr.bf16.mxu0 %v3788
        %4254 = vmatpush1.bf16.msra.mxu0 %v3787
        %4255 = vmatprep.subr.bf16.mxu0 %v3794
        %4256 = vmatpush1.bf16.msra.mxu0 %v3793
        %4257 = vmatprep.subr.bf16.mxu0 %v3800
        %4258 = vmatpush1.bf16.msra.mxu0 %v3799
        %4259 = vmatprep.subr.bf16.mxu0 %v3806
        %4260 = vmatpush1.bf16.msra.mxu0 %v3805
        %4261 = vmatprep.subr.bf16.mxu0 %v3812
        %4262 = vmatpush1.bf16.msra.mxu0 %v3811
        %4263 = vmatprep.subr.bf16.mxu0 %v3818
        %4264 = vmatpush1.bf16.msra.mxu0 %v3817
        %4265 = vmatprep.subr.bf16.mxu0 %v3824
        %4266 = vmatpush1.bf16.msra.mxu0 %v3823
        %4267 = vmatprep.subr.bf16.mxu0 %v3830
        %4268 = vmatpush1.bf16.msra.mxu0 %v3829
        %4269 = vmatprep.subr.bf16.mxu0 %v3836
        %4270 = vmatpush1.bf16.msra.mxu0 %v3835
        %4271 = vmatprep.subr.bf16.mxu0 %v3842
        %4272 = vmatpush1.bf16.msra.mxu0 %v3841
        %4273 = vmatprep.subr.bf16.mxu0 %v3848
        %4274 = vmatpush1.bf16.msra.mxu0 %v3847
        %4275 = vmatprep.subr.bf16.mxu0 %v3854
        %4276 = vmatpush1.bf16.msra.mxu0 %v3853
        %4277 = vmatprep.mubr.bf16.mxu0 %v1902
        %4278 = vmatmul.mubr.bf16.gmra.mrb[0].mxu0 %v1901
        %v4279 = vpop.f32.mrb[0].mxu0
        %v4280 = vadd.f32 %v3283, %v4279
        %v4281 = vpop.f32.mrb[0].mxu0
        %v4282 = vadd.f32 %v3285, %v4281
        %v4283 = vpop.f32.mrb[0].mxu0
        %v4284 = vadd.f32 %v3287, %v4283
        %v4285 = vpop.f32.mrb[0].mxu0
        %v4286 = vadd.f32 %v3289, %v4285
        %4287 = vdwg.mxu0
        %4288 = vmatprep.subr.bf16.mxu0 %v3860
        %4289 = vmatpush1.bf16.msra.mxu0 %v3859
        %4290 = vmatprep.subr.bf16.mxu0 %v3866
        %4291 = vmatpush1.bf16.msra.mxu0 %v3865
        %4292 = vmatprep.subr.bf16.mxu0 %v3872
        %4293 = vmatpush1.bf16.msra.mxu0 %v3871
        %4294 = vmatprep.subr.bf16.mxu0 %v3878
        %4295 = vmatpush1.bf16.msra.mxu0 %v3877
        %4296 = vmatprep.subr.bf16.mxu0 %v3884
        %4297 = vmatpush1.bf16.msra.mxu0 %v3883
        %4298 = vmatprep.subr.bf16.mxu0 %v3890
        %4299 = vmatpush1.bf16.msra.mxu0 %v3889
        %4300 = vmatprep.subr.bf16.mxu0 %v3896
        %4301 = vmatpush1.bf16.msra.mxu0 %v3895
        %4302 = vmatprep.subr.bf16.mxu0 %v3902
        %4303 = vmatpush1.bf16.msra.mxu0 %v3901
        %4304 = vmatprep.subr.bf16.mxu0 %v3908
        %4305 = vmatpush1.bf16.msra.mxu0 %v3907
        %4306 = vmatprep.subr.bf16.mxu0 %v3914
        %4307 = vmatpush1.bf16.msra.mxu0 %v3913
        %4308 = vmatprep.subr.bf16.mxu0 0
        %4309 = vmatpush1.bf16.msra.mxu0 0
        %4310 = vmatprep.subr.bf16.mxu0 0
        %4311 = vmatpush1.bf16.msra.mxu0 0
        %4312 = vmatprep.subr.bf16.mxu0 0
        %4313 = vmatpush1.bf16.msra.mxu0 0
        %4314 = vmatprep.subr.bf16.mxu0 0
        %4315 = vmatpush1.bf16.msra.mxu0 0
        %4316 = vmatprep.subr.bf16.mxu0 0
        %4317 = vmatpush1.bf16.msra.mxu0 0
        %4318 = vmatprep.subr.bf16.mxu0 0
        %4319 = vmatpush1.bf16.msra.mxu0 0
        %4320 = vmatprep.mubr.bf16.mxu0 %v4071
        %4321 = vmatmul.mubr.bf16.gmra.mrb[0].mxu0 %v1903
        %v4322 = vpop.f32.mrb[0].mxu0
        %v4323 = vadd.f32 %v4280, %v4322
        %v4324 = vpop.f32.mrb[0].mxu0
        %v4325 = vadd.f32 %v4282, %v4324
        %v4326 = vpop.f32.mrb[0].mxu0
        %v4327 = vadd.f32 %v4284, %v4326
        %v4328 = vpop.f32.mrb[0].mxu0
        %v4329 = vadd.f32 %v4286, %v4328
        %4330 = vdwg.mxu0
        %s4331 = scalar_lea.vmem [#allocation8], 2496
        %v4332 = vld [vmem:[%s4331] sm:$0xff]
        %v4333 = vld [vmem:[%s4331 + $0x8] sm:$0xff]
        %v4334 = vld [vmem:[%s4331 + $0x10] sm:$0xff]
        %v4335 = vld [vmem:[%s4331 + $0x18] sm:$0xff]
        %v4336 = vld [vmem:[%s4331 + $0x20] sm:$0xff]
        %v4337 = vld [vmem:[%s4331 + $0x28] sm:$0xff]
        %v4338 = vld [vmem:[%s4331 + $0x30] sm:$0xff]
        %v4339 = vld [vmem:[%s4331 + $0x38] sm:$0xff]
        %v4340 = vld [vmem:[%s4331 + $0x40] sm:$0xff]
        %v4341 = vld [vmem:[%s4331 + $0x48] sm:$0xff]
        %v4342 = vld [vmem:[%s4331 + $0x50] sm:$0xff]
        %v4343 = vld [vmem:[%s4331 + $0x58] sm:$0xff]
        %v4344 = vld [vmem:[%s4331 + $0x60] sm:$0xff]
        %v4345 = vld [vmem:[%s4331 + $0x68] sm:$0xff]
        %v4346 = vld [vmem:[%s4331 + $0x70] sm:$0xff]
        %v4347 = vld [vmem:[%s4331 + $0x78] sm:$0xff]
        %v4348 = vld [vmem:[%s4331 + $0x80] sm:$0xff]
        %v4349 = vld [vmem:[%s4331 + $0x88] sm:$0xff]
        %v4350 = vld [vmem:[%s4331 + $0x90] sm:$0xff]
        %v4351 = vld [vmem:[%s4331 + $0x98] sm:$0xff]
        %v4352 = vld [vmem:[%s4331 + $0xa0] sm:$0xff]
        %v4353 = vld [vmem:[%s4331 + $0xa8] sm:$0xff]
        %v4354 = vld [vmem:[%s4331 + $0xb0] sm:$0xff]
        %v4355 = vld [vmem:[%s4331 + $0xb8] sm:$0xff]
        %v4356 = vld [vmem:[%s4331 + $0xc0] sm:$0xff]
        %v4357 = vld [vmem:[%s4331 + $0xc8] sm:$0xff]
        %v4358 = vld [vmem:[%s4331 + $0xd0] sm:$0xff]
        %v4359 = vld [vmem:[%s4331 + $0xd8] sm:$0xff]
        %v4360 = vld [vmem:[%s4331 + $0xe0] sm:$0xff]
        %v4361 = vld [vmem:[%s4331 + $0xe8] sm:$0xff]
        %v4362 = vld [vmem:[%s4331 + $0xf0] sm:$0xff]
        %v4363 = vld [vmem:[%s4331 + $0xf8] sm:$0xff]
        %v4364 = vld [vmem:[%s4331 + $0x100] sm:$0xff]
        %v4365 = vld [vmem:[%s4331 + $0x108] sm:$0xff]
        %v4366 = vld [vmem:[%s4331 + $0x110] sm:$0xff]
        %v4367 = vld [vmem:[%s4331 + $0x118] sm:$0xff]
        %v4368 = vld [vmem:[%s4331 + $0x120] sm:$0xff]
        %v4369 = vld [vmem:[%s4331 + $0x128] sm:$0xff]
        %v4370 = vld [vmem:[%s4331 + $0x130] sm:$0xff]
        %v4371 = vld [vmem:[%s4331 + $0x138] sm:$0xff]
        %v4372 = vld [vmem:[%s4331 + $0x140] sm:$0xff]
        %v4373 = vld [vmem:[%s4331 + $0x148] sm:$0xff]
        %v4374 = vld [vmem:[%s4331 + $0x150] sm:$0xff]
        %v4375 = vld [vmem:[%s4331 + $0x158] sm:$0xff]
        %v4376 = vld [vmem:[%s4331 + $0x160] sm:$0xff]
        %v4377 = vld [vmem:[%s4331 + $0x168] sm:$0xff]
        %v4378 = vld [vmem:[%s4331 + $0x170] sm:$0xff]
        %v4379 = vld [vmem:[%s4331 + $0x178] sm:$0xff]
        %v4380 = vld [vmem:[%s4331 + $0x180] sm:$0xff]
        %v4381 = vld [vmem:[%s4331 + $0x188] sm:$0xff]
        %v4382 = vld [vmem:[%s4331 + $0x190] sm:$0xff]
        %v4383 = vld [vmem:[%s4331 + $0x198] sm:$0xff]
        %v4384 = vld [vmem:[%s4331 + $0x1a0] sm:$0xff]
        %v4385 = vld [vmem:[%s4331 + $0x1a8] sm:$0xff]
        %v4386 = vld [vmem:[%s4331 + $0x1b0] sm:$0xff]
        %v4387 = vld [vmem:[%s4331 + $0x1b8] sm:$0xff]
        %v4388 = vld [vmem:[%s4331 + $0x1c0] sm:$0xff]
        %v4389 = vld [vmem:[%s4331 + $0x1c8] sm:$0xff]
        %v4390 = vld [vmem:[%s4331 + $0x1d0] sm:$0xff]
        %v4391 = vld [vmem:[%s4331 + $0x1d8] sm:$0xff]
        %v4392 = vld [vmem:[%s4331 + $0x1e0] sm:$0xff]
        %v4393 = vld [vmem:[%s4331 + $0x1e8] sm:$0xff]
        %v4394 = vld [vmem:[%s4331 + $0x1f0] sm:$0xff]
        %v4395 = vld [vmem:[%s4331 + $0x1f8] sm:$0xff]
        %v4396 = vld [vmem:[%s4331 + $0x200] sm:$0xff]
        %v4397 = vld [vmem:[%s4331 + $0x208] sm:$0xff]
        %v4398 = vld [vmem:[%s4331 + $0x210] sm:$0xff]
        %v4399 = vld [vmem:[%s4331 + $0x218] sm:$0xff]
        %v4400 = vld [vmem:[%s4331 + $0x220] sm:$0xff]
        %v4401 = vld [vmem:[%s4331 + $0x228] sm:$0xff]
        %v4402 = vld [vmem:[%s4331 + $0x230] sm:$0xff]
        %v4403 = vld [vmem:[%s4331 + $0x238] sm:$0xff]
        %v4404 = vld [vmem:[%s4331 + $0x240] sm:$0xff]
        %v4405 = vld [vmem:[%s4331 + $0x248] sm:$0xff]
        %v4406 = vld [vmem:[%s4331 + $0x250] sm:$0xff]
        %v4407 = vld [vmem:[%s4331 + $0x258] sm:$0xff]
        %v4408 = vld [vmem:[%s4331 + $0x260] sm:$0xff]
        %v4409 = vld [vmem:[%s4331 + $0x268] sm:$0xff]
        %v4410 = vld [vmem:[%s4331 + $0x270] sm:$0xff]
        %v4411 = vld [vmem:[%s4331 + $0x278] sm:$0xff]
        %v4412 = vld [vmem:[%s4331 + $0x280] sm:$0xff]
        %v4413 = vld [vmem:[%s4331 + $0x288] sm:$0xff]
        %v4414 = vld [vmem:[%s4331 + $0x290] sm:$0xff]
        %v4415 = vld [vmem:[%s4331 + $0x298] sm:$0xff]
        %v4416 = vld [vmem:[%s4331 + $0x2a0] sm:$0xff]
        %v4417 = vld [vmem:[%s4331 + $0x2a8] sm:$0xff]
        %v4418 = vld [vmem:[%s4331 + $0x2b0] sm:$0xff]
        %v4419 = vld [vmem:[%s4331 + $0x2b8] sm:$0xff]
        %v4420 = vld [vmem:[%s4331 + $0x2c0] sm:$0xff]
        %v4421 = vld [vmem:[%s4331 + $0x2c8] sm:$0xff]
        %v4422 = vld [vmem:[%s4331 + $0x2d0] sm:$0xff]
        %v4423 = vld [vmem:[%s4331 + $0x2d8] sm:$0xff]
        %v4424 = vld [vmem:[%s4331 + $0x2e0] sm:$0xff]
        %v4425 = vld [vmem:[%s4331 + $0x2e8] sm:$0xff]
        %v4426 = vld [vmem:[%s4331 + $0x2f0] sm:$0xff]
        %v4427 = vld [vmem:[%s4331 + $0x2f8] sm:$0xff]
        %v4428 = vld [vmem:[%s4331 + $0x300] sm:$0xff]
        %v4429 = vld [vmem:[%s4331 + $0x308] sm:$0xff]
        %v4430 = vld [vmem:[%s4331 + $0x310] sm:$0xff]
        %v4431 = vld [vmem:[%s4331 + $0x318] sm:$0xff]
        %v4432 = vld [vmem:[%s4331 + $0x320] sm:$0xff]
        %v4433 = vld [vmem:[%s4331 + $0x328] sm:$0xff]
        %v4434 = vld [vmem:[%s4331 + $0x330] sm:$0xff]
        %v4435 = vld [vmem:[%s4331 + $0x338] sm:$0xff]
        %v4436 = vld [vmem:[%s4331 + $0x340] sm:$0xff]
        %v4437 = vld [vmem:[%s4331 + $0x348] sm:$0xff]
        %v4438 = vld [vmem:[%s4331 + $0x350] sm:$0xff]
        %v4439 = vld [vmem:[%s4331 + $0x358] sm:$0xff]
        %v4440 = vld [vmem:[%s4331 + $0x360] sm:$0xff]
        %v4441 = vld [vmem:[%s4331 + $0x368] sm:$0xff]
        %v4442 = vld [vmem:[%s4331 + $0x370] sm:$0xff]
        %v4443 = vld [vmem:[%s4331 + $0x378] sm:$0xff]
        %v4444 = vld [vmem:[%s4331 + $0x380] sm:$0xff]
        %v4445 = vld [vmem:[%s4331 + $0x388] sm:$0xff]
        %v4446 = vld [vmem:[%s4331 + $0x390] sm:$0xff]
        %v4447 = vld [vmem:[%s4331 + $0x398] sm:$0xff]
        %v4448 = vld [vmem:[%s4331 + $0x3a0] sm:$0xff]
        %v4449 = vld [vmem:[%s4331 + $0x3a8] sm:$0xff]
        %v4450 = vld [vmem:[%s4331 + $0x3b0] sm:$0xff]
        %v4451 = vld [vmem:[%s4331 + $0x3b8] sm:$0xff]
        %v4452 = vld [vmem:[%s4331 + $0x3c0] sm:$0xff]
        %v4453 = vld [vmem:[%s4331 + $0x3c8] sm:$0xff]
        %v4454 = vld [vmem:[%s4331 + $0x3d0] sm:$0xff]
        %v4455 = vld [vmem:[%s4331 + $0x3d8] sm:$0xff]
        %v4456 = vld [vmem:[%s4331 + $0x3e0] sm:$0xff]
        %v4457 = vld [vmem:[%s4331 + $0x3e8] sm:$0xff]
        %v4458 = vld [vmem:[%s4331 + $0x3f0] sm:$0xff]
        %v4459 = vld [vmem:[%s4331 + $0x3f8] sm:$0xff]
        %v4460 = vld [vmem:[%s4331 + $0x400] sm:$0xff]
        %v4461 = vld [vmem:[%s4331 + $0x408] sm:$0xff]
        %v4462 = vld [vmem:[%s4331 + $0x410] sm:$0xff]
        %v4463 = vld [vmem:[%s4331 + $0x418] sm:$0xff]
        %v4464 = vld [vmem:[%s4331 + $0x420] sm:$0xff]
        %v4465 = vld [vmem:[%s4331 + $0x428] sm:$0xff]
        %v4466 = vld [vmem:[%s4331 + $0x430] sm:$0xff]
        %v4467 = vld [vmem:[%s4331 + $0x438] sm:$0xff]
        %v4468 = vld [vmem:[%s4331 + $0x440] sm:$0xff]
        %v4469 = vld [vmem:[%s4331 + $0x448] sm:$0xff]
        %v4470 = vld [vmem:[%s4331 + $0x450] sm:$0xff]
        %v4471 = vld [vmem:[%s4331 + $0x458] sm:$0xff]
        %v4472 = vld [vmem:[%s4331 + $0x460] sm:$0xff]
        %v4473 = vld [vmem:[%s4331 + $0x468] sm:$0xff]
        %v4474 = vld [vmem:[%s4331 + $0x470] sm:$0xff]
        %v4475 = vld [vmem:[%s4331 + $0x478] sm:$0xff]
        %v4476 = vld [vmem:[%s4331 + $0x480] sm:$0xff]
        %v4477 = vld [vmem:[%s4331 + $0x488] sm:$0xff]
        %v4478 = vld [vmem:[%s4331 + $0x490] sm:$0xff]
        %v4479 = vld [vmem:[%s4331 + $0x498] sm:$0xff]
        %v4480 = vld [vmem:[%s4331 + $0x4a0] sm:$0xff]
        %v4481 = vld [vmem:[%s4331 + $0x4a8] sm:$0xff]
        %v4482 = vld [vmem:[%s4331 + $0x4b0] sm:$0xff]
        %v4483 = vld [vmem:[%s4331 + $0x4b8] sm:$0xff]
        %v4484 = vld [vmem:[%s4331 + $0x4c0] sm:$0xff]
        %v4485 = vld [vmem:[%s4331 + $0x4c8] sm:$0xff]
        %v4486 = vld [vmem:[%s4331 + $0x4d0] sm:$0xff]
        %v4487 = vld [vmem:[%s4331 + $0x4d8] sm:$0xff]
        %v4492 = vrot.slane %v1901, 1
        %v4493 = vrot.slane %v1902, 1
        %v4494 = vrot.slane %v1903, 1
        %v4495 = vrot.slane %v1904, 1
        %v4655 = vunpack.c.l.b16 %v4332
        %v4656 = vunpack.c.h.b16 %v4332
        %v4657 = vunpack.c.l.b16 %v4333
        %v4658 = vunpack.c.h.b16 %v4333
        %v4659 = vunpack.c.l.b16 %v4334
        %v4660 = vunpack.c.h.b16 %v4334
        %v4661 = vunpack.c.l.b16 %v4335
        %v4662 = vunpack.c.h.b16 %v4335
        %v4663 = vunpack.c.l.b16 %v4336
        %v4664 = vunpack.c.h.b16 %v4336
        %v4665 = vunpack.c.l.b16 %v4337
        %v4666 = vunpack.c.h.b16 %v4337
        %v4667 = vunpack.c.l.b16 %v4338
        %v4668 = vunpack.c.h.b16 %v4338
        %v4669 = vunpack.c.l.b16 %v4339
        %v4670 = vunpack.c.h.b16 %v4339
        %v4671 = vunpack.c.l.b16 %v4340
        %v4672 = vunpack.c.h.b16 %v4340
        %v4673 = vunpack.c.l.b16 %v4341
        %v4674 = vunpack.c.h.b16 %v4341
        %v4675 = vunpack.c.l.b16 %v4342
        %v4676 = vunpack.c.h.b16 %v4342
        %v4677 = vunpack.c.l.b16 %v4343
        %v4678 = vunpack.c.h.b16 %v4343
        %v4679 = vunpack.c.l.b16 %v4344
        %v4680 = vunpack.c.h.b16 %v4344
        %v4681 = vunpack.c.l.b16 %v4345
        %v4682 = vunpack.c.h.b16 %v4345
        %v4683 = vunpack.c.l.b16 %v4346
        %v4684 = vunpack.c.h.b16 %v4346
        %v4685 = vunpack.c.l.b16 %v4347
        %v4686 = vunpack.c.h.b16 %v4347
        %v4687 = vunpack.c.l.b16 %v4348
        %v4688 = vunpack.c.h.b16 %v4348
        %v4689 = vunpack.c.l.b16 %v4349
        %v4690 = vunpack.c.h.b16 %v4349
        %v4691 = vunpack.c.l.b16 %v4350
        %v4692 = vunpack.c.h.b16 %v4350
        %v4693 = vunpack.c.l.b16 %v4351
        %v4694 = vunpack.c.h.b16 %v4351
        %v4695 = vunpack.c.l.b16 %v4352
        %v4696 = vunpack.c.h.b16 %v4352
        %v4697 = vunpack.c.l.b16 %v4353
        %v4698 = vunpack.c.h.b16 %v4353
        %v4699 = vunpack.c.l.b16 %v4354
        %v4700 = vunpack.c.h.b16 %v4354
        %v4701 = vunpack.c.l.b16 %v4355
        %v4702 = vunpack.c.h.b16 %v4355
        %v4703 = vunpack.c.l.b16 %v4356
        %v4704 = vunpack.c.h.b16 %v4356
        %v4705 = vunpack.c.l.b16 %v4357
        %v4706 = vunpack.c.h.b16 %v4357
        %v4707 = vunpack.c.l.b16 %v4358
        %v4708 = vunpack.c.h.b16 %v4358
        %v4709 = vunpack.c.l.b16 %v4359
        %v4710 = vunpack.c.h.b16 %v4359
        %v4711 = vunpack.c.l.b16 %v4360
        %v4712 = vunpack.c.h.b16 %v4360
        %v4713 = vunpack.c.l.b16 %v4361
        %v4714 = vunpack.c.h.b16 %v4361
        %v4715 = vunpack.c.l.b16 %v4362
        %v4716 = vunpack.c.h.b16 %v4362
        %v4717 = vunpack.c.l.b16 %v4363
        %v4718 = vunpack.c.h.b16 %v4363
        %v4719 = vunpack.c.l.b16 %v4364
        %v4720 = vunpack.c.h.b16 %v4364
        %v4721 = vunpack.c.l.b16 %v4365
        %v4722 = vunpack.c.h.b16 %v4365
        %v4723 = vunpack.c.l.b16 %v4366
        %v4724 = vunpack.c.h.b16 %v4366
        %v4725 = vunpack.c.l.b16 %v4367
        %v4726 = vunpack.c.h.b16 %v4367
        %v4727 = vunpack.c.l.b16 %v4368
        %v4728 = vunpack.c.h.b16 %v4368
        %v4729 = vunpack.c.l.b16 %v4369
        %v4730 = vunpack.c.h.b16 %v4369
        %v4731 = vunpack.c.l.b16 %v4370
        %v4732 = vunpack.c.h.b16 %v4370
        %v4733 = vunpack.c.l.b16 %v4371
        %v4734 = vunpack.c.h.b16 %v4371
        %v4735 = vunpack.c.l.b16 %v4372
        %v4736 = vunpack.c.h.b16 %v4372
        %v4737 = vunpack.c.l.b16 %v4373
        %v4738 = vunpack.c.h.b16 %v4373
        %v4739 = vunpack.c.l.b16 %v4374
        %v4740 = vunpack.c.h.b16 %v4374
        %v4741 = vunpack.c.l.b16 %v4375
        %v4742 = vunpack.c.h.b16 %v4375
        %v4743 = vunpack.c.l.b16 %v4376
        %v4744 = vunpack.c.h.b16 %v4376
        %v4745 = vunpack.c.l.b16 %v4377
        %v4746 = vunpack.c.h.b16 %v4377
        %v4747 = vunpack.c.l.b16 %v4378
        %v4748 = vunpack.c.h.b16 %v4378
        %v4749 = vunpack.c.l.b16 %v4379
        %v4750 = vunpack.c.h.b16 %v4379
        %v4751 = vunpack.c.l.b16 %v4380
        %v4752 = vunpack.c.h.b16 %v4380
        %v4753 = vunpack.c.l.b16 %v4381
        %v4754 = vunpack.c.h.b16 %v4381
        %v4755 = vunpack.c.l.b16 %v4382
        %v4756 = vunpack.c.h.b16 %v4382
        %v4757 = vunpack.c.l.b16 %v4383
        %v4758 = vunpack.c.h.b16 %v4383
        %v4759 = vunpack.c.l.b16 %v4384
        %v4760 = vunpack.c.h.b16 %v4384
        %v4761 = vunpack.c.l.b16 %v4385
        %v4762 = vunpack.c.h.b16 %v4385
        %v4763 = vunpack.c.l.b16 %v4386
        %v4764 = vunpack.c.h.b16 %v4386
        %v4765 = vunpack.c.l.b16 %v4387
        %v4766 = vunpack.c.h.b16 %v4387
        %v4767 = vunpack.c.l.b16 %v4388
        %v4768 = vunpack.c.h.b16 %v4388
        %v4769 = vunpack.c.l.b16 %v4389
        %v4770 = vunpack.c.h.b16 %v4389
        %v4771 = vunpack.c.l.b16 %v4390
        %v4772 = vunpack.c.h.b16 %v4390
        %v4773 = vunpack.c.l.b16 %v4391
        %v4774 = vunpack.c.h.b16 %v4391
        %v4775 = vunpack.c.l.b16 %v4392
        %v4776 = vunpack.c.h.b16 %v4392
        %v4777 = vunpack.c.l.b16 %v4393
        %v4778 = vunpack.c.h.b16 %v4393
        %v4779 = vunpack.c.l.b16 %v4394
        %v4780 = vunpack.c.h.b16 %v4394
        %v4781 = vunpack.c.l.b16 %v4395
        %v4782 = vunpack.c.h.b16 %v4395
        %v4783 = vunpack.c.l.b16 %v4396
        %v4784 = vunpack.c.h.b16 %v4396
        %v4785 = vunpack.c.l.b16 %v4397
        %v4786 = vunpack.c.h.b16 %v4397
        %v4787 = vunpack.c.l.b16 %v4398
        %v4788 = vunpack.c.h.b16 %v4398
        %v4789 = vunpack.c.l.b16 %v4399
        %v4790 = vunpack.c.h.b16 %v4399
        %v4791 = vunpack.c.l.b16 %v4400
        %v4792 = vunpack.c.h.b16 %v4400
        %v4793 = vunpack.c.l.b16 %v4401
        %v4794 = vunpack.c.h.b16 %v4401
        %v4795 = vunpack.c.l.b16 %v4402
        %v4796 = vunpack.c.h.b16 %v4402
        %v4797 = vunpack.c.l.b16 %v4403
        %v4798 = vunpack.c.h.b16 %v4403
        %v4799 = vunpack.c.l.b16 %v4404
        %v4800 = vunpack.c.h.b16 %v4404
        %v4801 = vunpack.c.l.b16 %v4405
        %v4802 = vunpack.c.h.b16 %v4405
        %v4803 = vunpack.c.l.b16 %v4406
        %v4804 = vunpack.c.h.b16 %v4406
        %v4805 = vunpack.c.l.b16 %v4407
        %v4806 = vunpack.c.h.b16 %v4407
        %v4807 = vunpack.c.l.b16 %v4408
        %v4808 = vunpack.c.h.b16 %v4408
        %v4809 = vunpack.c.l.b16 %v4409
        %v4810 = vunpack.c.h.b16 %v4409
        %v4811 = vunpack.c.l.b16 %v4410
        %v4812 = vunpack.c.h.b16 %v4410
        %v4813 = vunpack.c.l.b16 %v4411
        %v4814 = vunpack.c.h.b16 %v4411
        %v4815 = vunpack.c.l.b16 %v4412
        %v4816 = vunpack.c.h.b16 %v4412
        %v4817 = vunpack.c.l.b16 %v4413
        %v4818 = vunpack.c.h.b16 %v4413
        %v4819 = vunpack.c.l.b16 %v4414
        %v4820 = vunpack.c.h.b16 %v4414
        %v4821 = vunpack.c.l.b16 %v4415
        %v4822 = vunpack.c.h.b16 %v4415
        %v4823 = vunpack.c.l.b16 %v4416
        %v4824 = vunpack.c.h.b16 %v4416
        %v4825 = vunpack.c.l.b16 %v4417
        %v4826 = vunpack.c.h.b16 %v4417
        %v4827 = vunpack.c.l.b16 %v4418
        %v4828 = vunpack.c.h.b16 %v4418
        %v4829 = vunpack.c.l.b16 %v4419
        %v4830 = vunpack.c.h.b16 %v4419
        %v4831 = vunpack.c.l.b16 %v4420
        %v4832 = vunpack.c.h.b16 %v4420
        %v4833 = vunpack.c.l.b16 %v4421
        %v4834 = vunpack.c.h.b16 %v4421
        %v4835 = vunpack.c.l.b16 %v4422
        %v4836 = vunpack.c.h.b16 %v4422
        %v4837 = vunpack.c.l.b16 %v4423
        %v4838 = vunpack.c.h.b16 %v4423
        %v4839 = vunpack.c.l.b16 %v4424
        %v4840 = vunpack.c.h.b16 %v4424
        %v4841 = vunpack.c.l.b16 %v4425
        %v4842 = vunpack.c.h.b16 %v4425
        %v4843 = vunpack.c.l.b16 %v4426
        %v4844 = vunpack.c.h.b16 %v4426
        %v4845 = vunpack.c.l.b16 %v4427
        %v4846 = vunpack.c.h.b16 %v4427
        %v4847 = vunpack.c.l.b16 %v4428
        %v4848 = vunpack.c.h.b16 %v4428
        %v4849 = vunpack.c.l.b16 %v4429
        %v4850 = vunpack.c.h.b16 %v4429
        %v4851 = vunpack.c.l.b16 %v4430
        %v4852 = vunpack.c.h.b16 %v4430
        %v4853 = vunpack.c.l.b16 %v4431
        %v4854 = vunpack.c.h.b16 %v4431
        %v4855 = vunpack.c.l.b16 %v4432
        %v4856 = vunpack.c.h.b16 %v4432
        %v4857 = vunpack.c.l.b16 %v4433
        %v4858 = vunpack.c.h.b16 %v4433
        %v4859 = vunpack.c.l.b16 %v4434
        %v4860 = vunpack.c.h.b16 %v4434
        %v4861 = vunpack.c.l.b16 %v4435
        %v4862 = vunpack.c.h.b16 %v4435
        %v4863 = vunpack.c.l.b16 %v4436
        %v4864 = vunpack.c.h.b16 %v4436
        %v4865 = vunpack.c.l.b16 %v4437
        %v4866 = vunpack.c.h.b16 %v4437
        %v4867 = vunpack.c.l.b16 %v4438
        %v4868 = vunpack.c.h.b16 %v4438
        %v4869 = vunpack.c.l.b16 %v4439
        %v4870 = vunpack.c.h.b16 %v4439
        %v4871 = vunpack.c.l.b16 %v4440
        %v4872 = vunpack.c.h.b16 %v4440
        %v4873 = vunpack.c.l.b16 %v4441
        %v4874 = vunpack.c.h.b16 %v4441
        %v4875 = vunpack.c.l.b16 %v4442
        %v4876 = vunpack.c.h.b16 %v4442
        %v4877 = vunpack.c.l.b16 %v4443
        %v4878 = vunpack.c.h.b16 %v4443
        %v4879 = vunpack.c.l.b16 %v4444
        %v4880 = vunpack.c.h.b16 %v4444
        %v4881 = vunpack.c.l.b16 %v4445
        %v4882 = vunpack.c.h.b16 %v4445
        %v4883 = vunpack.c.l.b16 %v4446
        %v4884 = vunpack.c.h.b16 %v4446
        %v4885 = vunpack.c.l.b16 %v4447
        %v4886 = vunpack.c.h.b16 %v4447
        %v4887 = vunpack.c.l.b16 %v4448
        %v4888 = vunpack.c.h.b16 %v4448
        %v4889 = vunpack.c.l.b16 %v4449
        %v4890 = vunpack.c.h.b16 %v4449
        %v4891 = vunpack.c.l.b16 %v4450
        %v4892 = vunpack.c.h.b16 %v4450
        %v4893 = vunpack.c.l.b16 %v4451
        %v4894 = vunpack.c.h.b16 %v4451
        %v4895 = vunpack.c.l.b16 %v4452
        %v4896 = vunpack.c.h.b16 %v4452
        %v4897 = vunpack.c.l.b16 %v4453
        %v4898 = vunpack.c.h.b16 %v4453
        %v4899 = vunpack.c.l.b16 %v4454
        %v4900 = vunpack.c.h.b16 %v4454
        %v4901 = vunpack.c.l.b16 %v4455
        %v4902 = vunpack.c.h.b16 %v4455
        %v4903 = vunpack.c.l.b16 %v4456
        %v4904 = vunpack.c.h.b16 %v4456
        %v4905 = vunpack.c.l.b16 %v4457
        %v4906 = vunpack.c.h.b16 %v4457
        %v4907 = vunpack.c.l.b16 %v4458
        %v4908 = vunpack.c.h.b16 %v4458
        %v4909 = vunpack.c.l.b16 %v4459
        %v4910 = vunpack.c.h.b16 %v4459
        %v4911 = vunpack.c.l.b16 %v4460
        %v4912 = vunpack.c.h.b16 %v4460
        %v4913 = vunpack.c.l.b16 %v4461
        %v4914 = vunpack.c.h.b16 %v4461
        %v4915 = vunpack.c.l.b16 %v4462
        %v4916 = vunpack.c.h.b16 %v4462
        %v4917 = vunpack.c.l.b16 %v4463
        %v4918 = vunpack.c.h.b16 %v4463
        %v4919 = vunpack.c.l.b16 %v4464
        %v4920 = vunpack.c.h.b16 %v4464
        %v4921 = vunpack.c.l.b16 %v4465
        %v4922 = vunpack.c.h.b16 %v4465
        %v4923 = vunpack.c.l.b16 %v4466
        %v4924 = vunpack.c.h.b16 %v4466
        %v4925 = vunpack.c.l.b16 %v4467
        %v4926 = vunpack.c.h.b16 %v4467
        %v4927 = vunpack.c.l.b16 %v4468
        %v4928 = vunpack.c.h.b16 %v4468
        %v4929 = vunpack.c.l.b16 %v4469
        %v4930 = vunpack.c.h.b16 %v4469
        %v4931 = vunpack.c.l.b16 %v4470
        %v4932 = vunpack.c.h.b16 %v4470
        %v4933 = vunpack.c.l.b16 %v4471
        %v4934 = vunpack.c.h.b16 %v4471
        %v4935 = vunpack.c.l.b16 %v4472
        %v4936 = vunpack.c.h.b16 %v4472
        %v4937 = vunpack.c.l.b16 %v4473
        %v4938 = vunpack.c.h.b16 %v4473
        %v4939 = vunpack.c.l.b16 %v4474
        %v4940 = vunpack.c.h.b16 %v4474
        %v4941 = vunpack.c.l.b16 %v4475
        %v4942 = vunpack.c.h.b16 %v4475
        %v4943 = vunpack.c.l.b16 %v4476
        %v4944 = vunpack.c.h.b16 %v4476
        %v4945 = vunpack.c.l.b16 %v4477
        %v4946 = vunpack.c.h.b16 %v4477
        %v4947 = vunpack.c.l.b16 %v4478
        %v4948 = vunpack.c.h.b16 %v4478
        %v4949 = vunpack.c.l.b16 %v4479
        %v4950 = vunpack.c.h.b16 %v4479
        %v4951 = vunpack.c.l.b16 %v4480
        %v4952 = vunpack.c.h.b16 %v4480
        %v4953 = vunpack.c.l.b16 %v4481
        %v4954 = vunpack.c.h.b16 %v4481
        %v4955 = vunpack.c.l.b16 %v4482
        %v4956 = vunpack.c.h.b16 %v4482
        %v4957 = vunpack.c.l.b16 %v4483
        %v4958 = vunpack.c.h.b16 %v4483
        %v4959 = vunpack.c.l.b16 %v4484
        %v4960 = vunpack.c.h.b16 %v4484
        %v4961 = vunpack.c.l.b16 %v4485
        %v4962 = vunpack.c.h.b16 %v4485
        %v4963 = vunpack.c.l.b16 %v4486
        %v4964 = vunpack.c.h.b16 %v4486
        %v4965 = vunpack.c.l.b16 %v4487
        %v4966 = vunpack.c.h.b16 %v4487
        %v4967 = vpack.c.b16 %v4661, %v4655
        %v4968 = vpack.c.b16 %v4662, %v4656
        %v4969 = vpack.c.b16 %v4663, %v4657
        %v4970 = vpack.c.b16 %v4664, %v4658
        %v4971 = vpack.c.b16 %v4665, %v4659
        %v4972 = vpack.c.b16 %v4666, %v4660
        %v4973 = vpack.c.b16 %v4673, %v4667
        %v4974 = vpack.c.b16 %v4674, %v4668
        %v4975 = vpack.c.b16 %v4675, %v4669
        %v4976 = vpack.c.b16 %v4676, %v4670
        %v4977 = vpack.c.b16 %v4677, %v4671
        %v4978 = vpack.c.b16 %v4678, %v4672
        %v4979 = vpack.c.b16 %v4685, %v4679
        %v4980 = vpack.c.b16 %v4686, %v4680
        %v4981 = vpack.c.b16 %v4687, %v4681
        %v4982 = vpack.c.b16 %v4688, %v4682
        %v4983 = vpack.c.b16 %v4689, %v4683
        %v4984 = vpack.c.b16 %v4690, %v4684
        %v4985 = vpack.c.b16 %v4697, %v4691
        %v4986 = vpack.c.b16 %v4698, %v4692
        %v4987 = vpack.c.b16 %v4699, %v4693
        %v4988 = vpack.c.b16 %v4700, %v4694
        %v4989 = vpack.c.b16 %v4701, %v4695
        %v4990 = vpack.c.b16 %v4702, %v4696
        %v4991 = vpack.c.b16 %v4709, %v4703
        %v4992 = vpack.c.b16 %v4710, %v4704
        %v4993 = vpack.c.b16 %v4711, %v4705
        %v4994 = vpack.c.b16 %v4712, %v4706
        %v4995 = vpack.c.b16 %v4713, %v4707
        %v4996 = vpack.c.b16 %v4714, %v4708
        %v4997 = vpack.c.b16 %v4721, %v4715
        %v4998 = vpack.c.b16 %v4722, %v4716
        %v4999 = vpack.c.b16 %v4723, %v4717
        %v5000 = vpack.c.b16 %v4724, %v4718
        %v5001 = vpack.c.b16 %v4725, %v4719
        %v5002 = vpack.c.b16 %v4726, %v4720
        %v5003 = vpack.c.b16 %v4733, %v4727
        %v5004 = vpack.c.b16 %v4734, %v4728
        %v5005 = vpack.c.b16 %v4735, %v4729
        %v5006 = vpack.c.b16 %v4736, %v4730
        %v5007 = vpack.c.b16 %v4737, %v4731
        %v5008 = vpack.c.b16 %v4738, %v4732
        %v5009 = vpack.c.b16 %v4745, %v4739
        %v5010 = vpack.c.b16 %v4746, %v4740
        %v5011 = vpack.c.b16 %v4747, %v4741
        %v5012 = vpack.c.b16 %v4748, %v4742
        %v5013 = vpack.c.b16 %v4749, %v4743
        %v5014 = vpack.c.b16 %v4750, %v4744
        %v5015 = vpack.c.b16 %v4757, %v4751
        %v5016 = vpack.c.b16 %v4758, %v4752
        %v5017 = vpack.c.b16 %v4759, %v4753
        %v5018 = vpack.c.b16 %v4760, %v4754
        %v5019 = vpack.c.b16 %v4761, %v4755
        %v5020 = vpack.c.b16 %v4762, %v4756
        %v5021 = vpack.c.b16 %v4769, %v4763
        %v5022 = vpack.c.b16 %v4770, %v4764
        %v5023 = vpack.c.b16 %v4771, %v4765
        %v5024 = vpack.c.b16 %v4772, %v4766
        %v5025 = vpack.c.b16 %v4773, %v4767
        %v5026 = vpack.c.b16 %v4774, %v4768
        %v5027 = vpack.c.b16 %v4781, %v4775
        %v5028 = vpack.c.b16 %v4782, %v4776
        %v5029 = vpack.c.b16 %v4783, %v4777
        %v5030 = vpack.c.b16 %v4784, %v4778
        %v5031 = vpack.c.b16 %v4785, %v4779
        %v5032 = vpack.c.b16 %v4786, %v4780
        %v5033 = vpack.c.b16 %v4793, %v4787
        %v5034 = vpack.c.b16 %v4794, %v4788
        %v5035 = vpack.c.b16 %v4795, %v4789
        %v5036 = vpack.c.b16 %v4796, %v4790
        %v5037 = vpack.c.b16 %v4797, %v4791
        %v5038 = vpack.c.b16 %v4798, %v4792
        %v5039 = vpack.c.b16 %v4805, %v4799
        %v5040 = vpack.c.b16 %v4806, %v4800
        %v5041 = vpack.c.b16 %v4807, %v4801
        %v5042 = vpack.c.b16 %v4808, %v4802
        %v5043 = vpack.c.b16 %v4809, %v4803
        %v5044 = vpack.c.b16 %v4810, %v4804
        %v5045 = vpack.c.b16 %v4817, %v4811
        %v5046 = vpack.c.b16 %v4818, %v4812
        %v5047 = vpack.c.b16 %v4819, %v4813
        %v5048 = vpack.c.b16 %v4820, %v4814
        %v5049 = vpack.c.b16 %v4821, %v4815
        %v5050 = vpack.c.b16 %v4822, %v4816
        %v5051 = vpack.c.b16 %v4829, %v4823
        %v5052 = vpack.c.b16 %v4830, %v4824
        %v5053 = vpack.c.b16 %v4831, %v4825
        %v5054 = vpack.c.b16 %v4832, %v4826
        %v5055 = vpack.c.b16 %v4833, %v4827
        %v5056 = vpack.c.b16 %v4834, %v4828
        %v5057 = vpack.c.b16 %v4841, %v4835
        %v5058 = vpack.c.b16 %v4842, %v4836
        %v5059 = vpack.c.b16 %v4843, %v4837
        %v5060 = vpack.c.b16 %v4844, %v4838
        %v5061 = vpack.c.b16 %v4845, %v4839
        %v5062 = vpack.c.b16 %v4846, %v4840
        %v5063 = vpack.c.b16 %v4853, %v4847
        %v5064 = vpack.c.b16 %v4854, %v4848
        %v5065 = vpack.c.b16 %v4855, %v4849
        %v5066 = vpack.c.b16 %v4856, %v4850
        %v5067 = vpack.c.b16 %v4857, %v4851
        %v5068 = vpack.c.b16 %v4858, %v4852
        %v5069 = vpack.c.b16 %v4865, %v4859
        %v5070 = vpack.c.b16 %v4866, %v4860
        %v5071 = vpack.c.b16 %v4867, %v4861
        %v5072 = vpack.c.b16 %v4868, %v4862
        %v5073 = vpack.c.b16 %v4869, %v4863
        %v5074 = vpack.c.b16 %v4870, %v4864
        %v5075 = vpack.c.b16 %v4877, %v4871
        %v5076 = vpack.c.b16 %v4878, %v4872
        %v5077 = vpack.c.b16 %v4879, %v4873
        %v5078 = vpack.c.b16 %v4880, %v4874
        %v5079 = vpack.c.b16 %v4881, %v4875
        %v5080 = vpack.c.b16 %v4882, %v4876
        %v5081 = vpack.c.b16 %v4889, %v4883
        %v5082 = vpack.c.b16 %v4890, %v4884
        %v5083 = vpack.c.b16 %v4891, %v4885
        %v5084 = vpack.c.b16 %v4892, %v4886
        %v5085 = vpack.c.b16 %v4893, %v4887
        %v5086 = vpack.c.b16 %v4894, %v4888
        %v5087 = vpack.c.b16 %v4901, %v4895
        %v5088 = vpack.c.b16 %v4902, %v4896
        %v5089 = vpack.c.b16 %v4903, %v4897
        %v5090 = vpack.c.b16 %v4904, %v4898
        %v5091 = vpack.c.b16 %v4905, %v4899
        %v5092 = vpack.c.b16 %v4906, %v4900
        %v5093 = vpack.c.b16 %v4913, %v4907
        %v5094 = vpack.c.b16 %v4914, %v4908
        %v5095 = vpack.c.b16 %v4915, %v4909
        %v5096 = vpack.c.b16 %v4916, %v4910
        %v5097 = vpack.c.b16 %v4917, %v4911
        %v5098 = vpack.c.b16 %v4918, %v4912
        %v5099 = vpack.c.b16 %v4925, %v4919
        %v5100 = vpack.c.b16 %v4926, %v4920
        %v5101 = vpack.c.b16 %v4927, %v4921
        %v5102 = vpack.c.b16 %v4928, %v4922
        %v5103 = vpack.c.b16 %v4929, %v4923
        %v5104 = vpack.c.b16 %v4930, %v4924
        %v5105 = vpack.c.b16 %v4937, %v4931
        %v5106 = vpack.c.b16 %v4938, %v4932
        %v5107 = vpack.c.b16 %v4939, %v4933
        %v5108 = vpack.c.b16 %v4940, %v4934
        %v5109 = vpack.c.b16 %v4941, %v4935
        %v5110 = vpack.c.b16 %v4942, %v4936
        %v5111 = vpack.c.b16 %v4949, %v4943
        %v5112 = vpack.c.b16 %v4950, %v4944
        %v5113 = vpack.c.b16 %v4951, %v4945
        %v5114 = vpack.c.b16 %v4952, %v4946
        %v5115 = vpack.c.b16 %v4953, %v4947
        %v5116 = vpack.c.b16 %v4954, %v4948
        %v5117 = vpack.c.b16 %v4961, %v4955
        %v5118 = vpack.c.b16 %v4962, %v4956
        %v5119 = vpack.c.b16 %v4963, %v4957
        %v5120 = vpack.c.b16 %v4964, %v4958
        %v5121 = vpack.c.b16 %v4965, %v4959
        %v5122 = vpack.c.b16 %v4966, %v4960
        %v5280 = vsel %vm3029, %v4495, 0
        %5282 = vmatprep.subr.bf16.mxu0 %v4968
        %5283 = vmatpush1.bf16.msra.mxu0 %v4967
        %5284 = vmatprep.subr.bf16.mxu0 %v4974
        %5285 = vmatpush1.bf16.msra.mxu0 %v4973
        %5286 = vmatprep.subr.bf16.mxu0 %v4980
        %5287 = vmatpush1.bf16.msra.mxu0 %v4979
        %5288 = vmatprep.subr.bf16.mxu0 %v4986
        %5289 = vmatpush1.bf16.msra.mxu0 %v4985
        %5290 = vmatprep.subr.bf16.mxu0 %v4992
        %5291 = vmatpush1.bf16.msra.mxu0 %v4991
        %5292 = vmatprep.subr.bf16.mxu0 %v4998
        %5293 = vmatpush1.bf16.msra.mxu0 %v4997
        %5294 = vmatprep.subr.bf16.mxu0 %v5004
        %5295 = vmatpush1.bf16.msra.mxu0 %v5003
        %5296 = vmatprep.subr.bf16.mxu0 %v5010
        %5297 = vmatpush1.bf16.msra.mxu0 %v5009
        %5298 = vmatprep.subr.bf16.mxu0 %v5016
        %5299 = vmatpush1.bf16.msra.mxu0 %v5015
        %5300 = vmatprep.subr.bf16.mxu0 %v5022
        %5301 = vmatpush1.bf16.msra.mxu0 %v5021
        %5302 = vmatprep.subr.bf16.mxu0 %v5028
        %5303 = vmatpush1.bf16.msra.mxu0 %v5027
        %5304 = vmatprep.subr.bf16.mxu0 %v5034
        %5305 = vmatpush1.bf16.msra.mxu0 %v5033
        %5306 = vmatprep.subr.bf16.mxu0 %v5040
        %5307 = vmatpush1.bf16.msra.mxu0 %v5039
        %5308 = vmatprep.subr.bf16.mxu0 %v5046
        %5309 = vmatpush1.bf16.msra.mxu0 %v5045
        %5310 = vmatprep.subr.bf16.mxu0 %v5052
        %5311 = vmatpush1.bf16.msra.mxu0 %v5051
        %5312 = vmatprep.subr.bf16.mxu0 %v5058
        %5313 = vmatpush1.bf16.msra.mxu0 %v5057
        %5314 = vmatprep.mubr.bf16.mxu0 %v4493
        %5315 = vmatmul.mubr.bf16.gmra.mrb[0].mxu0 %v4492
        %v5316 = vpop.f32.mrb[0].mxu0
        %v5317 = vadd.f32 0.0, %v5316
        %v5318 = vpop.f32.mrb[0].mxu0
        %v5319 = vadd.f32 0.0, %v5318
        %v5320 = vpop.f32.mrb[0].mxu0
        %v5321 = vadd.f32 0.0, %v5320
        %v5322 = vpop.f32.mrb[0].mxu0
        %v5323 = vadd.f32 0.0, %v5322
        %5324 = vdwg.mxu0
        %5325 = vmatprep.subr.bf16.mxu0 %v5064
        %5326 = vmatpush1.bf16.msra.mxu0 %v5063
        %5327 = vmatprep.subr.bf16.mxu0 %v5070
        %5328 = vmatpush1.bf16.msra.mxu0 %v5069
        %5329 = vmatprep.subr.bf16.mxu0 %v5076
        %5330 = vmatpush1.bf16.msra.mxu0 %v5075
        %5331 = vmatprep.subr.bf16.mxu0 %v5082
        %5332 = vmatpush1.bf16.msra.mxu0 %v5081
        %5333 = vmatprep.subr.bf16.mxu0 %v5088
        %5334 = vmatpush1.bf16.msra.mxu0 %v5087
        %5335 = vmatprep.subr.bf16.mxu0 %v5094
        %5336 = vmatpush1.bf16.msra.mxu0 %v5093
        %5337 = vmatprep.subr.bf16.mxu0 %v5100
        %5338 = vmatpush1.bf16.msra.mxu0 %v5099
        %5339 = vmatprep.subr.bf16.mxu0 %v5106
        %5340 = vmatpush1.bf16.msra.mxu0 %v5105
        %5341 = vmatprep.subr.bf16.mxu0 %v5112
        %5342 = vmatpush1.bf16.msra.mxu0 %v5111
        %5343 = vmatprep.subr.bf16.mxu0 %v5118
        %5344 = vmatpush1.bf16.msra.mxu0 %v5117
        %5345 = vmatprep.subr.bf16.mxu0 0
        %5346 = vmatpush1.bf16.msra.mxu0 0
        %5347 = vmatprep.subr.bf16.mxu0 0
        %5348 = vmatpush1.bf16.msra.mxu0 0
        %5349 = vmatprep.subr.bf16.mxu0 0
        %5350 = vmatpush1.bf16.msra.mxu0 0
        %5351 = vmatprep.subr.bf16.mxu0 0
        %5352 = vmatpush1.bf16.msra.mxu0 0
        %5353 = vmatprep.subr.bf16.mxu0 0
        %5354 = vmatpush1.bf16.msra.mxu0 0
        %5355 = vmatprep.subr.bf16.mxu0 0
        %5356 = vmatpush1.bf16.msra.mxu0 0
        %5357 = vmatprep.mubr.bf16.mxu0 %v5280
        %5358 = vmatmul.mubr.bf16.gmra.mrb[0].mxu0 %v4494
        %v5359 = vpop.f32.mrb[0].mxu0
        %v5360 = vadd.f32 %v5317, %v5359
        %v5361 = vpop.f32.mrb[0].mxu0
        %v5362 = vadd.f32 %v5319, %v5361
        %v5363 = vpop.f32.mrb[0].mxu0
        %v5364 = vadd.f32 %v5321, %v5363
        %v5365 = vpop.f32.mrb[0].mxu0
        %v5366 = vadd.f32 %v5323, %v5365
        %5367 = vdwg.mxu0
        %5368 = vmatprep.subr.bf16.mxu0 %v4970
        %5369 = vmatpush1.bf16.msra.mxu0 %v4969
        %5370 = vmatprep.subr.bf16.mxu0 %v4976
        %5371 = vmatpush1.bf16.msra.mxu0 %v4975
        %5372 = vmatprep.subr.bf16.mxu0 %v4982
        %5373 = vmatpush1.bf16.msra.mxu0 %v4981
        %5374 = vmatprep.subr.bf16.mxu0 %v4988
        %5375 = vmatpush1.bf16.msra.mxu0 %v4987
        %5376 = vmatprep.subr.bf16.mxu0 %v4994
        %5377 = vmatpush1.bf16.msra.mxu0 %v4993
        %5378 = vmatprep.subr.bf16.mxu0 %v5000
        %5379 = vmatpush1.bf16.msra.mxu0 %v4999
        %5380 = vmatprep.subr.bf16.mxu0 %v5006
        %5381 = vmatpush1.bf16.msra.mxu0 %v5005
        %5382 = vmatprep.subr.bf16.mxu0 %v5012
        %5383 = vmatpush1.bf16.msra.mxu0 %v5011
        %5384 = vmatprep.subr.bf16.mxu0 %v5018
        %5385 = vmatpush1.bf16.msra.mxu0 %v5017
        %5386 = vmatprep.subr.bf16.mxu0 %v5024
        %5387 = vmatpush1.bf16.msra.mxu0 %v5023
        %5388 = vmatprep.subr.bf16.mxu0 %v5030
        %5389 = vmatpush1.bf16.msra.mxu0 %v5029
        %5390 = vmatprep.subr.bf16.mxu0 %v5036
        %5391 = vmatpush1.bf16.msra.mxu0 %v5035
        %5392 = vmatprep.subr.bf16.mxu0 %v5042
        %5393 = vmatpush1.bf16.msra.mxu0 %v5041
        %5394 = vmatprep.subr.bf16.mxu0 %v5048
        %5395 = vmatpush1.bf16.msra.mxu0 %v5047
        %5396 = vmatprep.subr.bf16.mxu0 %v5054
        %5397 = vmatpush1.bf16.msra.mxu0 %v5053
        %5398 = vmatprep.subr.bf16.mxu0 %v5060
        %5399 = vmatpush1.bf16.msra.mxu0 %v5059
        %5400 = vmatprep.mubr.bf16.mxu0 %v4493
        %5401 = vmatmul.mubr.bf16.gmra.mrb[0].mxu0 %v4492
        %v5402 = vpop.f32.mrb[0].mxu0
        %v5403 = vadd.f32 0.0, %v5402
        %v5404 = vpop.f32.mrb[0].mxu0
        %v5405 = vadd.f32 0.0, %v5404
        %v5406 = vpop.f32.mrb[0].mxu0
        %v5407 = vadd.f32 0.0, %v5406
        %v5408 = vpop.f32.mrb[0].mxu0
        %v5409 = vadd.f32 0.0, %v5408
        %5410 = vdwg.mxu0
        %5411 = vmatprep.subr.bf16.mxu0 %v5066
        %5412 = vmatpush1.bf16.msra.mxu0 %v5065
        %5413 = vmatprep.subr.bf16.mxu0 %v5072
        %5414 = vmatpush1.bf16.msra.mxu0 %v5071
        %5415 = vmatprep.subr.bf16.mxu0 %v5078
        %5416 = vmatpush1.bf16.msra.mxu0 %v5077
        %5417 = vmatprep.subr.bf16.mxu0 %v5084
        %5418 = vmatpush1.bf16.msra.mxu0 %v5083
        %5419 = vmatprep.subr.bf16.mxu0 %v5090
        %5420 = vmatpush1.bf16.msra.mxu0 %v5089
        %5421 = vmatprep.subr.bf16.mxu0 %v5096
        %5422 = vmatpush1.bf16.msra.mxu0 %v5095
        %5423 = vmatprep.subr.bf16.mxu0 %v5102
        %5424 = vmatpush1.bf16.msra.mxu0 %v5101
        %5425 = vmatprep.subr.bf16.mxu0 %v5108
        %5426 = vmatpush1.bf16.msra.mxu0 %v5107
        %5427 = vmatprep.subr.bf16.mxu0 %v5114
        %5428 = vmatpush1.bf16.msra.mxu0 %v5113
        %5429 = vmatprep.subr.bf16.mxu0 %v5120
        %5430 = vmatpush1.bf16.msra.mxu0 %v5119
        %5431 = vmatprep.subr.bf16.mxu0 0
        %5432 = vmatpush1.bf16.msra.mxu0 0
        %5433 = vmatprep.subr.bf16.mxu0 0
        %5434 = vmatpush1.bf16.msra.mxu0 0
        %5435 = vmatprep.subr.bf16.mxu0 0
        %5436 = vmatpush1.bf16.msra.mxu0 0
        %5437 = vmatprep.subr.bf16.mxu0 0
        %5438 = vmatpush1.bf16.msra.mxu0 0
        %5439 = vmatprep.subr.bf16.mxu0 0
        %5440 = vmatpush1.bf16.msra.mxu0 0
        %5441 = vmatprep.subr.bf16.mxu0 0
        %5442 = vmatpush1.bf16.msra.mxu0 0
        %5443 = vmatprep.mubr.bf16.mxu0 %v5280
        %5444 = vmatmul.mubr.bf16.gmra.mrb[0].mxu0 %v4494
        %v5445 = vpop.f32.mrb[0].mxu0
        %v5446 = vadd.f32 %v5403, %v5445
        %v5447 = vpop.f32.mrb[0].mxu0
        %v5448 = vadd.f32 %v5405, %v5447
        %v5449 = vpop.f32.mrb[0].mxu0
        %v5450 = vadd.f32 %v5407, %v5449
        %v5451 = vpop.f32.mrb[0].mxu0
        %v5452 = vadd.f32 %v5409, %v5451
        %5453 = vdwg.mxu0
        %5454 = vmatprep.subr.bf16.mxu0 %v4972
        %5455 = vmatpush1.bf16.msra.mxu0 %v4971
        %5456 = vmatprep.subr.bf16.mxu0 %v4978
        %5457 = vmatpush1.bf16.msra.mxu0 %v4977
        %5458 = vmatprep.subr.bf16.mxu0 %v4984
        %5459 = vmatpush1.bf16.msra.mxu0 %v4983
        %5460 = vmatprep.subr.bf16.mxu0 %v4990
        %5461 = vmatpush1.bf16.msra.mxu0 %v4989
        %5462 = vmatprep.subr.bf16.mxu0 %v4996
        %5463 = vmatpush1.bf16.msra.mxu0 %v4995
        %5464 = vmatprep.subr.bf16.mxu0 %v5002
        %5465 = vmatpush1.bf16.msra.mxu0 %v5001
        %5466 = vmatprep.subr.bf16.mxu0 %v5008
        %5467 = vmatpush1.bf16.msra.mxu0 %v5007
        %5468 = vmatprep.subr.bf16.mxu0 %v5014
        %5469 = vmatpush1.bf16.msra.mxu0 %v5013
        %5470 = vmatprep.subr.bf16.mxu0 %v5020
        %5471 = vmatpush1.bf16.msra.mxu0 %v5019
        %5472 = vmatprep.subr.bf16.mxu0 %v5026
        %5473 = vmatpush1.bf16.msra.mxu0 %v5025
        %5474 = vmatprep.subr.bf16.mxu0 %v5032
        %5475 = vmatpush1.bf16.msra.mxu0 %v5031
        %5476 = vmatprep.subr.bf16.mxu0 %v5038
        %5477 = vmatpush1.bf16.msra.mxu0 %v5037
        %5478 = vmatprep.subr.bf16.mxu0 %v5044
        %5479 = vmatpush1.bf16.msra.mxu0 %v5043
        %5480 = vmatprep.subr.bf16.mxu0 %v5050
        %5481 = vmatpush1.bf16.msra.mxu0 %v5049
        %5482 = vmatprep.subr.bf16.mxu0 %v5056
        %5483 = vmatpush1.bf16.msra.mxu0 %v5055
        %5484 = vmatprep.subr.bf16.mxu0 %v5062
        %5485 = vmatpush1.bf16.msra.mxu0 %v5061
        %5486 = vmatprep.mubr.bf16.mxu0 %v4493
        %5487 = vmatmul.mubr.bf16.gmra.mrb[0].mxu0 %v4492
        %v5488 = vpop.f32.mrb[0].mxu0
        %v5489 = vadd.f32 0.0, %v5488
        %v5490 = vpop.f32.mrb[0].mxu0
        %v5491 = vadd.f32 0.0, %v5490
        %v5492 = vpop.f32.mrb[0].mxu0
        %v5493 = vadd.f32 0.0, %v5492
        %v5494 = vpop.f32.mrb[0].mxu0
        %v5495 = vadd.f32 0.0, %v5494
        %5496 = vdwg.mxu0
        %5497 = vmatprep.subr.bf16.mxu0 %v5068
        %5498 = vmatpush1.bf16.msra.mxu0 %v5067
        %5499 = vmatprep.subr.bf16.mxu0 %v5074
        %5500 = vmatpush1.bf16.msra.mxu0 %v5073
        %5501 = vmatprep.subr.bf16.mxu0 %v5080
        %5502 = vmatpush1.bf16.msra.mxu0 %v5079
        %5503 = vmatprep.subr.bf16.mxu0 %v5086
        %5504 = vmatpush1.bf16.msra.mxu0 %v5085
        %5505 = vmatprep.subr.bf16.mxu0 %v5092
        %5506 = vmatpush1.bf16.msra.mxu0 %v5091
        %5507 = vmatprep.subr.bf16.mxu0 %v5098
        %5508 = vmatpush1.bf16.msra.mxu0 %v5097
        %5509 = vmatprep.subr.bf16.mxu0 %v5104
        %5510 = vmatpush1.bf16.msra.mxu0 %v5103
        %5511 = vmatprep.subr.bf16.mxu0 %v5110
        %5512 = vmatpush1.bf16.msra.mxu0 %v5109
        %5513 = vmatprep.subr.bf16.mxu0 %v5116
        %5514 = vmatpush1.bf16.msra.mxu0 %v5115
        %5515 = vmatprep.subr.bf16.mxu0 %v5122
        %5516 = vmatpush1.bf16.msra.mxu0 %v5121
        %5517 = vmatprep.subr.bf16.mxu0 0
        %5518 = vmatpush1.bf16.msra.mxu0 0
        %5519 = vmatprep.subr.bf16.mxu0 0
        %5520 = vmatpush1.bf16.msra.mxu0 0
        %5521 = vmatprep.subr.bf16.mxu0 0
        %5522 = vmatpush1.bf16.msra.mxu0 0
        %5523 = vmatprep.subr.bf16.mxu0 0
        %5524 = vmatpush1.bf16.msra.mxu0 0
        %5525 = vmatprep.subr.bf16.mxu0 0
        %5526 = vmatpush1.bf16.msra.mxu0 0
        %5527 = vmatprep.subr.bf16.mxu0 0
        %5528 = vmatpush1.bf16.msra.mxu0 0
        %5529 = vmatprep.mubr.bf16.mxu0 %v5280
        %5530 = vmatmul.mubr.bf16.gmra.mrb[0].mxu0 %v4494
        %v5531 = vpop.f32.mrb[0].mxu0
        %v5532 = vadd.f32 %v5489, %v5531
        %v5533 = vpop.f32.mrb[0].mxu0
        %v5534 = vadd.f32 %v5491, %v5533
        %v5535 = vpop.f32.mrb[0].mxu0
        %v5536 = vadd.f32 %v5493, %v5535
        %v5537 = vpop.f32.mrb[0].mxu0
        %v5538 = vadd.f32 %v5495, %v5537
        %5539 = vdwg.mxu0
        %v5540 = vadd.f32 %v4151, %v5360
        %v5541 = vadd.f32 %v4153, %v5362
        %v5542 = vadd.f32 %v4237, %v5446
        %v5543 = vadd.f32 %v4239, %v5448
        %v5544 = vadd.f32 %v4323, %v5532
        %v5545 = vadd.f32 %v4325, %v5534
        %v5546 = vadd.f32 %v4155, %v5364
        %v5547 = vadd.f32 %v4157, %v5366
        %v5548 = vadd.f32 %v4241, %v5450
        %v5549 = vadd.f32 %v4243, %v5452
        %v5550 = vadd.f32 %v4327, %v5536
        %v5551 = vadd.f32 %v4329, %v5538
        %v5552 = vld [vmem:[#allocation9] sm:$0x3f]
        %v5554 = vlaneseq
        %v5555 = vshrl.u32 %v5554, 7
        %v5556 = vsub.s32 0, %v5555
        %v5557 = vrot.slane %v5552, %v5556
        %v5558 = vlaneseq
        %v5559 = vshrl.u32 %v5558, 7
        %v5560 = vsub.s32 1, %v5559
        %v5561 = vrot.slane %v5552, %v5560
        %v5562 = vlaneseq
        %v5563 = vshrl.u32 %v5562, 7
        %v5564 = vsub.s32 2, %v5563
        %v5565 = vrot.slane %v5552, %v5564
        %v5566 = vlaneseq
        %v5567 = vshrl.u32 %v5566, 7
        %v5568 = vsub.s32 3, %v5567
        %v5569 = vrot.slane %v5552, %v5568
        %v5570 = vlaneseq
        %v5571 = vshrl.u32 %v5570, 7
        %v5572 = vsub.s32 4, %v5571
        %v5573 = vrot.slane %v5552, %v5572
        %v5574 = vlaneseq
        %v5575 = vshrl.u32 %v5574, 7
        %v5576 = vsub.s32 5, %v5575
        %v5577 = vrot.slane %v5552, %v5576
        %v5584 = vadd.f32 %v5540, %v5557
        %v5585 = vadd.f32 %v5541, %v5561
        %v5586 = vadd.f32 %v5542, %v5565
        %v5587 = vadd.f32 %v5543, %v5569
        %v5588 = vadd.f32 %v5544, %v5573
        %v5589 = vadd.f32 %v5545, %v5577
        %v5590 = vadd.f32 %v5546, %v5557
        %v5591 = vadd.f32 %v5547, %v5561
        %v5592 = vadd.f32 %v5548, %v5565
        %v5593 = vadd.f32 %v5549, %v5569
        %v5594 = vadd.f32 %v5550, %v5573
        %v5595 = vadd.f32 %v5551, %v5577
        %v5596 = vmax.f32 %v5584, 0.0
        %v5597 = vmax.f32 %v5585, 0.0
        %v5598 = vmax.f32 %v5586, 0.0
        %v5599 = vmax.f32 %v5587, 0.0
        %v5600 = vmax.f32 %v5588, 0.0
        %v5601 = vmax.f32 %v5589, 0.0
        %v5602 = vmax.f32 %v5590, 0.0
        %v5603 = vmax.f32 %v5591, 0.0
        %v5604 = vmax.f32 %v5592, 0.0
        %v5605 = vmax.f32 %v5593, 0.0
        %v5606 = vmax.f32 %v5594, 0.0
        %v5607 = vmax.f32 %v5595, 0.0
        %v5608 = vmax.f32 %v5596, %v5599
        %v5609 = vmax.f32 %v5597, %v5600
        %v5610 = vmax.f32 %v5598, %v5601
        %v5611 = vmax.f32 %v5602, %v5605
        %v5612 = vmax.f32 %v5603, %v5606
        %v5613 = vmax.f32 %v5604, %v5607
        %v5620 = vrot.slane %v5608, 1
        %v5621 = vrot.slane %v5611, 1
        %v5622 = vsel %vm1721, %v5620, %v5621
        %v5623 = vrot.slane %v5609, 1
        %v5624 = vrot.slane %v5612, 1
        %v5625 = vsel %vm1721, %v5623, %v5624
        %v5626 = vrot.slane %v5610, 1
        %v5627 = vrot.slane %v5613, 1
        %v5628 = vsel %vm1721, %v5626, %v5627
        %v5635 = vmax.f32 %v5608, %v5622
        %v5636 = vmax.f32 %v5609, %v5625
        %v5637 = vmax.f32 %v5610, %v5628
        %v5638 = vmax.f32 %v5611, %v5621
        %v5639 = vmax.f32 %v5612, %v5624
        %v5640 = vmax.f32 %v5613, %v5627
        %v5641 = vpack.c.bf16 %v5638, %v5635
        %v5642 = vpack.c.bf16 %v5639, %v5636
        %v5643 = vpack.c.bf16 %v5640, %v5637
        %v5644 = vld [vmem:[#allocation12] sm:$0x7]
        %vm5645 = vcmask 80896
        %v5647 = vsel %vm5645, %v5644, 0
        %vm5649 = vcmask 1044480
        %v5651 = vsel %vm5649, %v5641, 0
        %v5654 = vsel %vm5649, %v5642, 0
        %v5657 = vsel %vm5649, %v5643, 0
        %5659 = vmatprep.subr.bf16.mxu0 %v5654
        %5660 = vmatpush1.bf16.msra.mxu0 %v5651
        %5661 = vmatprep.subr.bf16.mxu0 0
        %5662 = vmatpush1.bf16.msra.mxu0 0
        %5663 = vmatprep.subr.bf16.mxu0 0
        %5664 = vmatpush1.bf16.msra.mxu0 0
        %5665 = vmatprep.subr.bf16.mxu0 0
        %5666 = vmatpush1.bf16.msra.mxu0 0
        %5667 = vmatprep.subr.bf16.mxu0 0
        %5668 = vmatpush1.bf16.msra.mxu0 0
        %5669 = vmatprep.subr.bf16.mxu0 0
        %5670 = vmatpush1.bf16.msra.mxu0 0
        %5671 = vmatprep.subr.bf16.mxu0 0
        %5672 = vmatpush1.bf16.msra.mxu0 0
        %5673 = vmatprep.subr.bf16.mxu0 0
        %5674 = vmatpush1.bf16.msra.mxu0 0
        %5675 = vmatprep.subr.bf16.mxu0 0
        %5676 = vmatpush1.bf16.msra.mxu0 0
        %5677 = vmatprep.subr.bf16.mxu0 0
        %5678 = vmatpush1.bf16.msra.mxu0 0
        %5679 = vmatprep.subr.bf16.mxu0 0
        %5680 = vmatpush1.bf16.msra.mxu0 0
        %5681 = vmatprep.subr.bf16.mxu0 0
        %5682 = vmatpush1.bf16.msra.mxu0 0
        %5683 = vmatprep.subr.bf16.mxu0 0
        %5684 = vmatpush1.bf16.msra.mxu0 0
        %5685 = vmatprep.subr.bf16.mxu0 0
        %5686 = vmatpush1.bf16.msra.mxu0 0
        %5687 = vmatprep.subr.bf16.mxu0 0
        %5688 = vmatpush1.bf16.msra.mxu0 0
        %5689 = vmatprep.subr.bf16.mxu0 0
        %5690 = vmatpush1.bf16.msra.mxu0 0
        %5691 = vmatprep.mubr.bf16.mxu0 0
        %5692 = vmatmul.mubr.bf16.gmra.mrb[0].mxu0 %v5647
        %v5693 = vpop.f32.mrb[0].mxu0
        %v5694 = vadd.f32 0.0, %v5693
        %v5695 = vpop.f32.mrb[0].mxu0
        %v5696 = vadd.f32 0.0, %v5695
        %v5697 = vpop.f32.mrb[0].mxu0
        %v5698 = vpop.f32.mrb[0].mxu0
        %5699 = vdwg.mxu0
        %5700 = vmatprep.subr.bf16.mxu0 0
        %5701 = vmatpush1.bf16.msra.mxu0 %v5657
        %5702 = vmatprep.subr.bf16.mxu0 0
        %5703 = vmatpush1.bf16.msra.mxu0 0
        %5704 = vmatprep.subr.bf16.mxu0 0
        %5705 = vmatpush1.bf16.msra.mxu0 0
        %5706 = vmatprep.subr.bf16.mxu0 0
        %5707 = vmatpush1.bf16.msra.mxu0 0
        %5708 = vmatprep.subr.bf16.mxu0 0
        %5709 = vmatpush1.bf16.msra.mxu0 0
        %5710 = vmatprep.subr.bf16.mxu0 0
        %5711 = vmatpush1.bf16.msra.mxu0 0
        %5712 = vmatprep.subr.bf16.mxu0 0
        %5713 = vmatpush1.bf16.msra.mxu0 0
        %5714 = vmatprep.subr.bf16.mxu0 0
        %5715 = vmatpush1.bf16.msra.mxu0 0
        %5716 = vmatprep.subr.bf16.mxu0 0
        %5717 = vmatpush1.bf16.msra.mxu0 0
        %5718 = vmatprep.subr.bf16.mxu0 0
        %5719 = vmatpush1.bf16.msra.mxu0 0
        %5720 = vmatprep.subr.bf16.mxu0 0
        %5721 = vmatpush1.bf16.msra.mxu0 0
        %5722 = vmatprep.subr.bf16.mxu0 0
        %5723 = vmatpush1.bf16.msra.mxu0 0
        %5724 = vmatprep.subr.bf16.mxu0 0
        %5725 = vmatpush1.bf16.msra.mxu0 0
        %5726 = vmatprep.subr.bf16.mxu0 0
        %5727 = vmatpush1.bf16.msra.mxu0 0
        %5728 = vmatprep.subr.bf16.mxu0 0
        %5729 = vmatpush1.bf16.msra.mxu0 0
        %5730 = vmatprep.subr.bf16.mxu0 0
        %5731 = vmatpush1.bf16.msra.mxu0 0
        %5732 = vmatprep.mubr.bf16.mxu0 0
        %5733 = vmatmul.mubr.bf16.gmra.mrb[0].mxu0 %v5647
        %v5734 = vpop.f32.mrb[0].mxu0
        %v5735 = vadd.f32 0.0, %v5734
        %v5736 = vpop.f32.mrb[0].mxu0
        %v5737 = vpop.f32.mrb[0].mxu0
        %v5738 = vpop.f32.mrb[0].mxu0
        %5739 = vdwg.mxu0
        %v5740 = vpack.c.bf16 %v5694, %v5694
        %v5741 = vpack.c.bf16 %v5696, %v5696
        %v5742 = vpack.c.bf16 %v5735, %v5735
        %v5743 = vld [vmem:[#allocation15] sm:$0x1]
        %v5744 = vld [vmem:[#allocation14] sm:$0xf]
        %v5745 = vld [vmem:[#allocation14 + $0x4] sm:$0xf]
        %v5746 = vld [vmem:[#allocation14 + $0x8] sm:$0xf]
        %v5747 = vld [vmem:[#allocation14 + $0xc] sm:$0xf]
        %v5748 = vld [vmem:[#allocation14 + $0x10] sm:$0xf]
        %v5749 = vld [vmem:[#allocation14 + $0x14] sm:$0xf]
        %v5750 = vld [vmem:[#allocation14 + $0x18] sm:$0xf]
        %v5751 = vld [vmem:[#allocation14 + $0x1c] sm:$0xf]
        %v5752 = vld [vmem:[#allocation14 + $0x20] sm:$0xf]
        %v5753 = vld [vmem:[#allocation14 + $0x24] sm:$0xf]
        %v5754 = vld [vmem:[#allocation14 + $0x28] sm:$0xf]
        %v5755 = vld [vmem:[#allocation14 + $0x2c] sm:$0xf]
        %v5756 = vld [vmem:[#allocation14 + $0x30] sm:$0xf]
        %v5757 = vld [vmem:[#allocation14 + $0x34] sm:$0xf]
        %v5758 = vld [vmem:[#allocation14 + $0x38] sm:$0xf]
        %v5759 = vld [vmem:[#allocation14 + $0x3c] sm:$0xf]
        %v5760 = vld [vmem:[#allocation14 + $0x40] sm:$0xf]
        %v5761 = vld [vmem:[#allocation14 + $0x44] sm:$0xf]
        %v5762 = vld [vmem:[#allocation14 + $0x48] sm:$0xf]
        %v5763 = vld [vmem:[#allocation14 + $0x4c] sm:$0xf]
        %v5764 = vld [vmem:[#allocation14 + $0x50] sm:$0xf]
        %v5765 = vld [vmem:[#allocation14 + $0x54] sm:$0xf]
        %v5766 = vld [vmem:[#allocation14 + $0x58] sm:$0xf]
        %v5767 = vld [vmem:[#allocation14 + $0x5c] sm:$0xf]
        %v5768 = vld [vmem:[#allocation14 + $0x60] sm:$0xf]
        %v5769 = vld [vmem:[#allocation14 + $0x64] sm:$0xf]
        %v5770 = vld [vmem:[#allocation14 + $0x68] sm:$0xf]
        %v5771 = vld [vmem:[#allocation14 + $0x6c] sm:$0xf]
        %v5772 = vld [vmem:[#allocation14 + $0x70] sm:$0xf]
        %v5773 = vld [vmem:[#allocation14 + $0x74] sm:$0xf]
        %v5774 = vld [vmem:[#allocation14 + $0x78] sm:$0xf]
        %v5775 = vld [vmem:[#allocation14 + $0x7c] sm:$0xf]
        %v5776 = vld [vmem:[#allocation14 + $0x80] sm:$0xf]
        %v5777 = vld [vmem:[#allocation14 + $0x84] sm:$0xf]
        %v5778 = vld [vmem:[#allocation14 + $0x88] sm:$0xf]
        %v5779 = vld [vmem:[#allocation14 + $0x8c] sm:$0xf]
        %v5780 = vld [vmem:[#allocation14 + $0x90] sm:$0xf]
        %v5781 = vld [vmem:[#allocation14 + $0x94] sm:$0xf]
        %v5782 = vld [vmem:[#allocation14 + $0x98] sm:$0xf]
        %v5783 = vld [vmem:[#allocation14 + $0x9c] sm:$0xf]
        %v5824 = vunpack.c.l.b16 %v5744
        %v5825 = vunpack.c.l.b16 %v5745
        %v5826 = vunpack.c.l.b16 %v5746
        %v5827 = vunpack.c.l.b16 %v5747
        %v5828 = vunpack.c.l.b16 %v5748
        %v5829 = vunpack.c.l.b16 %v5749
        %v5830 = vunpack.c.l.b16 %v5750
        %v5831 = vunpack.c.l.b16 %v5751
        %v5832 = vunpack.c.l.b16 %v5752
        %v5833 = vunpack.c.l.b16 %v5753
        %v5834 = vunpack.c.l.b16 %v5754
        %v5835 = vunpack.c.l.b16 %v5755
        %v5836 = vunpack.c.l.b16 %v5756
        %v5837 = vunpack.c.l.b16 %v5757
        %v5838 = vunpack.c.l.b16 %v5758
        %v5839 = vunpack.c.l.b16 %v5759
        %v5840 = vunpack.c.l.b16 %v5760
        %v5841 = vunpack.c.l.b16 %v5761
        %v5842 = vunpack.c.l.b16 %v5762
        %v5843 = vunpack.c.l.b16 %v5763
        %v5844 = vunpack.c.l.b16 %v5764
        %v5845 = vunpack.c.l.b16 %v5765
        %v5846 = vunpack.c.l.b16 %v5766
        %v5847 = vunpack.c.l.b16 %v5767
        %v5848 = vunpack.c.l.b16 %v5768
        %v5849 = vunpack.c.l.b16 %v5769
        %v5850 = vunpack.c.l.b16 %v5770
        %v5851 = vunpack.c.l.b16 %v5771
        %v5852 = vunpack.c.l.b16 %v5772
        %v5853 = vunpack.c.l.b16 %v5773
        %v5854 = vunpack.c.l.b16 %v5774
        %v5855 = vunpack.c.l.b16 %v5775
        %v5856 = vunpack.c.l.b16 %v5776
        %v5857 = vunpack.c.l.b16 %v5777
        %v5858 = vunpack.c.l.b16 %v5778
        %v5859 = vunpack.c.l.b16 %v5779
        %v5860 = vunpack.c.l.b16 %v5780
        %v5861 = vunpack.c.l.b16 %v5781
        %v5862 = vunpack.c.l.b16 %v5782
        %v5863 = vunpack.c.l.b16 %v5783
        %v5864 = vpack.c.b16 %v5825, %v5824
        %v5865 = vpack.c.b16 %v5827, %v5826
        %v5866 = vpack.c.b16 %v5829, %v5828
        %v5867 = vpack.c.b16 %v5831, %v5830
        %v5868 = vpack.c.b16 %v5833, %v5832
        %v5869 = vpack.c.b16 %v5835, %v5834
        %v5870 = vpack.c.b16 %v5837, %v5836
        %v5871 = vpack.c.b16 %v5839, %v5838
        %v5872 = vpack.c.b16 %v5841, %v5840
        %v5873 = vpack.c.b16 %v5843, %v5842
        %v5874 = vpack.c.b16 %v5845, %v5844
        %v5875 = vpack.c.b16 %v5847, %v5846
        %v5876 = vpack.c.b16 %v5849, %v5848
        %v5877 = vpack.c.b16 %v5851, %v5850
        %v5878 = vpack.c.b16 %v5853, %v5852
        %v5879 = vpack.c.b16 %v5855, %v5854
        %v5880 = vpack.c.b16 %v5857, %v5856
        %v5881 = vpack.c.b16 %v5859, %v5858
        %v5882 = vpack.c.b16 %v5861, %v5860
        %v5883 = vpack.c.b16 %v5863, %v5862
        %vm5904 = vcmask 523264
        %v5906 = vsel %vm5904, %v5742, 0
        %5908 = vmatprep.subr.bf16.mxu0 0
        %5909 = vmatpush1.bf16.msra.mxu0 %v5864
        %5910 = vmatprep.subr.bf16.mxu0 0
        %5911 = vmatpush1.bf16.msra.mxu0 %v5865
        %5912 = vmatprep.subr.bf16.mxu0 0
        %5913 = vmatpush1.bf16.msra.mxu0 %v5866
        %5914 = vmatprep.subr.bf16.mxu0 0
        %5915 = vmatpush1.bf16.msra.mxu0 %v5867
        %5916 = vmatprep.subr.bf16.mxu0 0
        %5917 = vmatpush1.bf16.msra.mxu0 %v5868
        %5918 = vmatprep.subr.bf16.mxu0 0
        %5919 = vmatpush1.bf16.msra.mxu0 %v5869
        %5920 = vmatprep.subr.bf16.mxu0 0
        %5921 = vmatpush1.bf16.msra.mxu0 %v5870
        %5922 = vmatprep.subr.bf16.mxu0 0
        %5923 = vmatpush1.bf16.msra.mxu0 %v5871
        %5924 = vmatprep.subr.bf16.mxu0 0
        %5925 = vmatpush1.bf16.msra.mxu0 %v5872
        %5926 = vmatprep.subr.bf16.mxu0 0
        %5927 = vmatpush1.bf16.msra.mxu0 %v5873
        %5928 = vmatprep.subr.bf16.mxu0 0
        %5929 = vmatpush1.bf16.msra.mxu0 %v5874
        %5930 = vmatprep.subr.bf16.mxu0 0
        %5931 = vmatpush1.bf16.msra.mxu0 %v5875
        %5932 = vmatprep.subr.bf16.mxu0 0
        %5933 = vmatpush1.bf16.msra.mxu0 %v5876
        %5934 = vmatprep.subr.bf16.mxu0 0
        %5935 = vmatpush1.bf16.msra.mxu0 %v5877
        %5936 = vmatprep.subr.bf16.mxu0 0
        %5937 = vmatpush1.bf16.msra.mxu0 %v5878
        %5938 = vmatprep.subr.bf16.mxu0 0
        %5939 = vmatpush1.bf16.msra.mxu0 %v5879
        %5940 = vmatprep.mubr.bf16.mxu0 %v5741
        %5941 = vmatmul.mubr.bf16.gmra.mrb[0].mxu0 %v5740
        %v5942 = vpop.f32.mrb[0].mxu0
        %v5943 = vadd.f32 0.0, %v5942
        %v5944 = vpop.f32.mrb[0].mxu0
        %v5945 = vpop.f32.mrb[0].mxu0
        %v5946 = vpop.f32.mrb[0].mxu0
        %5947 = vdwg.mxu0
        %5948 = vmatprep.subr.bf16.mxu0 0
        %5949 = vmatpush1.bf16.msra.mxu0 %v5880
        %5950 = vmatprep.subr.bf16.mxu0 0
        %5951 = vmatpush1.bf16.msra.mxu0 %v5881
        %5952 = vmatprep.subr.bf16.mxu0 0
        %5953 = vmatpush1.bf16.msra.mxu0 %v5882
        %5954 = vmatprep.subr.bf16.mxu0 0
        %5955 = vmatpush1.bf16.msra.mxu0 %v5883
        %5956 = vmatprep.subr.bf16.mxu0 0
        %5957 = vmatpush1.bf16.msra.mxu0 0
        %5958 = vmatprep.subr.bf16.mxu0 0
        %5959 = vmatpush1.bf16.msra.mxu0 0
        %5960 = vmatprep.subr.bf16.mxu0 0
        %5961 = vmatpush1.bf16.msra.mxu0 0
        %5962 = vmatprep.subr.bf16.mxu0 0
        %5963 = vmatpush1.bf16.msra.mxu0 0
        %5964 = vmatprep.subr.bf16.mxu0 0
        %5965 = vmatpush1.bf16.msra.mxu0 0
        %5966 = vmatprep.subr.bf16.mxu0 0
        %5967 = vmatpush1.bf16.msra.mxu0 0
        %5968 = vmatprep.subr.bf16.mxu0 0
        %5969 = vmatpush1.bf16.msra.mxu0 0
        %5970 = vmatprep.subr.bf16.mxu0 0
        %5971 = vmatpush1.bf16.msra.mxu0 0
        %5972 = vmatprep.subr.bf16.mxu0 0
        %5973 = vmatpush1.bf16.msra.mxu0 0
        %5974 = vmatprep.subr.bf16.mxu0 0
        %5975 = vmatpush1.bf16.msra.mxu0 0
        %5976 = vmatprep.subr.bf16.mxu0 0
        %5977 = vmatpush1.bf16.msra.mxu0 0
        %5978 = vmatprep.subr.bf16.mxu0 0
        %5979 = vmatpush1.bf16.msra.mxu0 0
        %5980 = vmatprep.mubr.bf16.mxu0 0
        %5981 = vmatmul.mubr.bf16.gmra.mrb[0].mxu0 %v5906
        %v5982 = vpop.f32.mrb[0].mxu0
        %v5983 = vadd.f32 %v5943, %v5982
        %v5984 = vpop.f32.mrb[0].mxu0
        %v5985 = vpop.f32.mrb[0].mxu0
        %v5986 = vpop.f32.mrb[0].mxu0
        %5987 = vdwg.mxu0
        %v5988 = vadd.f32 %v5743, %v5983
        %s5989 = scalar_lea.vmem [#allocation14], 160
        %v5990 = vld [vmem:[%s5989] sm:$0xf]
        %v5991 = vld [vmem:[%s5989 + $0x4] sm:$0xf]
        %v5992 = vld [vmem:[%s5989 + $0x8] sm:$0xf]
        %v5993 = vld [vmem:[%s5989 + $0xc] sm:$0xf]
        %v5994 = vld [vmem:[%s5989 + $0x10] sm:$0xf]
        %v5995 = vld [vmem:[%s5989 + $0x14] sm:$0xf]
        %v5996 = vld [vmem:[%s5989 + $0x18] sm:$0xf]
        %v5997 = vld [vmem:[%s5989 + $0x1c] sm:$0xf]
        %v5998 = vld [vmem:[%s5989 + $0x20] sm:$0xf]
        %v5999 = vld [vmem:[%s5989 + $0x24] sm:$0xf]
        %v6000 = vld [vmem:[%s5989 + $0x28] sm:$0xf]
        %v6001 = vld [vmem:[%s5989 + $0x2c] sm:$0xf]
        %v6002 = vld [vmem:[%s5989 + $0x30] sm:$0xf]
        %v6003 = vld [vmem:[%s5989 + $0x34] sm:$0xf]
        %v6004 = vld [vmem:[%s5989 + $0x38] sm:$0xf]
        %v6005 = vld [vmem:[%s5989 + $0x3c] sm:$0xf]
        %v6006 = vld [vmem:[%s5989 + $0x40] sm:$0xf]
        %v6007 = vld [vmem:[%s5989 + $0x44] sm:$0xf]
        %v6008 = vld [vmem:[%s5989 + $0x48] sm:$0xf]
        %v6009 = vld [vmem:[%s5989 + $0x4c] sm:$0xf]
        %v6010 = vld [vmem:[%s5989 + $0x50] sm:$0xf]
        %v6011 = vld [vmem:[%s5989 + $0x54] sm:$0xf]
        %v6012 = vld [vmem:[%s5989 + $0x58] sm:$0xf]
        %v6013 = vld [vmem:[%s5989 + $0x5c] sm:$0xf]
        %v6014 = vld [vmem:[%s5989 + $0x60] sm:$0xf]
        %v6015 = vld [vmem:[%s5989 + $0x64] sm:$0xf]
        %v6016 = vld [vmem:[%s5989 + $0x68] sm:$0xf]
        %v6017 = vld [vmem:[%s5989 + $0x6c] sm:$0xf]
        %v6018 = vld [vmem:[%s5989 + $0x70] sm:$0xf]
        %v6019 = vld [vmem:[%s5989 + $0x74] sm:$0xf]
        %v6020 = vld [vmem:[%s5989 + $0x78] sm:$0xf]
        %v6021 = vld [vmem:[%s5989 + $0x7c] sm:$0xf]
        %v6022 = vld [vmem:[%s5989 + $0x80] sm:$0xf]
        %v6023 = vld [vmem:[%s5989 + $0x84] sm:$0xf]
        %v6024 = vld [vmem:[%s5989 + $0x88] sm:$0xf]
        %v6025 = vld [vmem:[%s5989 + $0x8c] sm:$0xf]
        %v6026 = vld [vmem:[%s5989 + $0x90] sm:$0xf]
        %v6027 = vld [vmem:[%s5989 + $0x94] sm:$0xf]
        %v6028 = vld [vmem:[%s5989 + $0x98] sm:$0xf]
        %v6029 = vld [vmem:[%s5989 + $0x9c] sm:$0xf]
        %v6031 = vshrl.u32 %v5740, 16
        %v6034 = vshrl.u32 %v5741, 16
        %v6036 = vshrl.u32 %v5742, 16
        %v6080 = vunpack.c.l.b16 %v5990
        %v6081 = vunpack.c.l.b16 %v5991
        %v6082 = vunpack.c.l.b16 %v5992
        %v6083 = vunpack.c.l.b16 %v5993
        %v6084 = vunpack.c.l.b16 %v5994
        %v6085 = vunpack.c.l.b16 %v5995
        %v6086 = vunpack.c.l.b16 %v5996
        %v6087 = vunpack.c.l.b16 %v5997
        %v6088 = vunpack.c.l.b16 %v5998
        %v6089 = vunpack.c.l.b16 %v5999
        %v6090 = vunpack.c.l.b16 %v6000
        %v6091 = vunpack.c.l.b16 %v6001
        %v6092 = vunpack.c.l.b16 %v6002
        %v6093 = vunpack.c.l.b16 %v6003
        %v6094 = vunpack.c.l.b16 %v6004
        %v6095 = vunpack.c.l.b16 %v6005
        %v6096 = vunpack.c.l.b16 %v6006
        %v6097 = vunpack.c.l.b16 %v6007
        %v6098 = vunpack.c.l.b16 %v6008
        %v6099 = vunpack.c.l.b16 %v6009
        %v6100 = vunpack.c.l.b16 %v6010
        %v6101 = vunpack.c.l.b16 %v6011
        %v6102 = vunpack.c.l.b16 %v6012
        %v6103 = vunpack.c.l.b16 %v6013
        %v6104 = vunpack.c.l.b16 %v6014
        %v6105 = vunpack.c.l.b16 %v6015
        %v6106 = vunpack.c.l.b16 %v6016
        %v6107 = vunpack.c.l.b16 %v6017
        %v6108 = vunpack.c.l.b16 %v6018
        %v6109 = vunpack.c.l.b16 %v6019
        %v6110 = vunpack.c.l.b16 %v6020
        %v6111 = vunpack.c.l.b16 %v6021
        %v6112 = vunpack.c.l.b16 %v6022
        %v6113 = vunpack.c.l.b16 %v6023
        %v6114 = vunpack.c.l.b16 %v6024
        %v6115 = vunpack.c.l.b16 %v6025
        %v6116 = vunpack.c.l.b16 %v6026
        %v6117 = vunpack.c.l.b16 %v6027
        %v6118 = vunpack.c.l.b16 %v6028
        %v6119 = vunpack.c.l.b16 %v6029
        %v6120 = vpack.c.b16 %v6081, %v6080
        %v6121 = vpack.c.b16 %v6083, %v6082
        %v6122 = vpack.c.b16 %v6085, %v6084
        %v6123 = vpack.c.b16 %v6087, %v6086
        %v6124 = vpack.c.b16 %v6089, %v6088
        %v6125 = vpack.c.b16 %v6091, %v6090
        %v6126 = vpack.c.b16 %v6093, %v6092
        %v6127 = vpack.c.b16 %v6095, %v6094
        %v6128 = vpack.c.b16 %v6097, %v6096
        %v6129 = vpack.c.b16 %v6099, %v6098
        %v6130 = vpack.c.b16 %v6101, %v6100
        %v6131 = vpack.c.b16 %v6103, %v6102
        %v6132 = vpack.c.b16 %v6105, %v6104
        %v6133 = vpack.c.b16 %v6107, %v6106
        %v6134 = vpack.c.b16 %v6109, %v6108
        %v6135 = vpack.c.b16 %v6111, %v6110
        %v6136 = vpack.c.b16 %v6113, %v6112
        %v6137 = vpack.c.b16 %v6115, %v6114
        %v6138 = vpack.c.b16 %v6117, %v6116
        %v6139 = vpack.c.b16 %v6119, %v6118
        %v6161 = vsel %vm5904, %v6036, 0
        %6163 = vmatprep.subr.bf16.mxu0 0
        %6164 = vmatpush1.bf16.msra.mxu0 %v6120
        %6165 = vmatprep.subr.bf16.mxu0 0
        %6166 = vmatpush1.bf16.msra.mxu0 %v6121
        %6167 = vmatprep.subr.bf16.mxu0 0
        %6168 = vmatpush1.bf16.msra.mxu0 %v6122
        %6169 = vmatprep.subr.bf16.mxu0 0
        %6170 = vmatpush1.bf16.msra.mxu0 %v6123
        %6171 = vmatprep.subr.bf16.mxu0 0
        %6172 = vmatpush1.bf16.msra.mxu0 %v6124
        %6173 = vmatprep.subr.bf16.mxu0 0
        %6174 = vmatpush1.bf16.msra.mxu0 %v6125
        %6175 = vmatprep.subr.bf16.mxu0 0
        %6176 = vmatpush1.bf16.msra.mxu0 %v6126
        %6177 = vmatprep.subr.bf16.mxu0 0
        %6178 = vmatpush1.bf16.msra.mxu0 %v6127
        %6179 = vmatprep.subr.bf16.mxu0 0
        %6180 = vmatpush1.bf16.msra.mxu0 %v6128
        %6181 = vmatprep.subr.bf16.mxu0 0
        %6182 = vmatpush1.bf16.msra.mxu0 %v6129
        %6183 = vmatprep.subr.bf16.mxu0 0
        %6184 = vmatpush1.bf16.msra.mxu0 %v6130
        %6185 = vmatprep.subr.bf16.mxu0 0
        %6186 = vmatpush1.bf16.msra.mxu0 %v6131
        %6187 = vmatprep.subr.bf16.mxu0 0
        %6188 = vmatpush1.bf16.msra.mxu0 %v6132
        %6189 = vmatprep.subr.bf16.mxu0 0
        %6190 = vmatpush1.bf16.msra.mxu0 %v6133
        %6191 = vmatprep.subr.bf16.mxu0 0
        %6192 = vmatpush1.bf16.msra.mxu0 %v6134
        %6193 = vmatprep.subr.bf16.mxu0 0
        %6194 = vmatpush1.bf16.msra.mxu0 %v6135
        %6195 = vmatprep.mubr.bf16.mxu0 %v6034
        %6196 = vmatmul.mubr.bf16.gmra.mrb[0].mxu0 %v6031
        %v6197 = vpop.f32.mrb[0].mxu0
        %v6198 = vadd.f32 0.0, %v6197
        %v6199 = vpop.f32.mrb[0].mxu0
        %v6200 = vpop.f32.mrb[0].mxu0
        %v6201 = vpop.f32.mrb[0].mxu0
        %6202 = vdwg.mxu0
        %6203 = vmatprep.subr.bf16.mxu0 0
        %6204 = vmatpush1.bf16.msra.mxu0 %v6136
        %6205 = vmatprep.subr.bf16.mxu0 0
        %6206 = vmatpush1.bf16.msra.mxu0 %v6137
        %6207 = vmatprep.subr.bf16.mxu0 0
        %6208 = vmatpush1.bf16.msra.mxu0 %v6138
        %6209 = vmatprep.subr.bf16.mxu0 0
        %6210 = vmatpush1.bf16.msra.mxu0 %v6139
        %6211 = vmatprep.subr.bf16.mxu0 0
        %6212 = vmatpush1.bf16.msra.mxu0 0
        %6213 = vmatprep.subr.bf16.mxu0 0
        %6214 = vmatpush1.bf16.msra.mxu0 0
        %6215 = vmatprep.subr.bf16.mxu0 0
        %6216 = vmatpush1.bf16.msra.mxu0 0
        %6217 = vmatprep.subr.bf16.mxu0 0
        %6218 = vmatpush1.bf16.msra.mxu0 0
        %6219 = vmatprep.subr.bf16.mxu0 0
        %6220 = vmatpush1.bf16.msra.mxu0 0
        %6221 = vmatprep.subr.bf16.mxu0 0
        %6222 = vmatpush1.bf16.msra.mxu0 0
        %6223 = vmatprep.subr.bf16.mxu0 0
        %6224 = vmatpush1.bf16.msra.mxu0 0
        %6225 = vmatprep.subr.bf16.mxu0 0
        %6226 = vmatpush1.bf16.msra.mxu0 0
        %6227 = vmatprep.subr.bf16.mxu0 0
        %6228 = vmatpush1.bf16.msra.mxu0 0
        %6229 = vmatprep.subr.bf16.mxu0 0
        %6230 = vmatpush1.bf16.msra.mxu0 0
        %6231 = vmatprep.subr.bf16.mxu0 0
        %6232 = vmatpush1.bf16.msra.mxu0 0
        %6233 = vmatprep.subr.bf16.mxu0 0
        %6234 = vmatpush1.bf16.msra.mxu0 0
        %6235 = vmatprep.mubr.bf16.mxu0 0
        %6236 = vmatmul.mubr.bf16.gmra.mrb[0].mxu0 %v6161
        %v6237 = vpop.f32.mrb[0].mxu0
        %v6238 = vadd.f32 %v6198, %v6237
        %v6239 = vpop.f32.mrb[0].mxu0
        %v6240 = vpop.f32.mrb[0].mxu0
        %v6241 = vpop.f32.mrb[0].mxu0
        %6242 = vdwg.mxu0
        %v6243 = vadd.f32 %v5988, %v6238
        %s6244 = scalar_lea.vmem [#allocation14], 320
        %v6245 = vld [vmem:[%s6244] sm:$0xf]
        %v6246 = vld [vmem:[%s6244 + $0x4] sm:$0xf]
        %v6247 = vld [vmem:[%s6244 + $0x8] sm:$0xf]
        %v6248 = vld [vmem:[%s6244 + $0xc] sm:$0xf]
        %v6249 = vld [vmem:[%s6244 + $0x10] sm:$0xf]
        %v6250 = vld [vmem:[%s6244 + $0x14] sm:$0xf]
        %v6251 = vld [vmem:[%s6244 + $0x18] sm:$0xf]
        %v6252 = vld [vmem:[%s6244 + $0x1c] sm:$0xf]
        %v6253 = vld [vmem:[%s6244 + $0x20] sm:$0xf]
        %v6254 = vld [vmem:[%s6244 + $0x24] sm:$0xf]
        %v6255 = vld [vmem:[%s6244 + $0x28] sm:$0xf]
        %v6256 = vld [vmem:[%s6244 + $0x2c] sm:$0xf]
        %v6257 = vld [vmem:[%s6244 + $0x30] sm:$0xf]
        %v6258 = vld [vmem:[%s6244 + $0x34] sm:$0xf]
        %v6259 = vld [vmem:[%s6244 + $0x38] sm:$0xf]
        %v6260 = vld [vmem:[%s6244 + $0x3c] sm:$0xf]
        %v6261 = vld [vmem:[%s6244 + $0x40] sm:$0xf]
        %v6262 = vld [vmem:[%s6244 + $0x44] sm:$0xf]
        %v6263 = vld [vmem:[%s6244 + $0x48] sm:$0xf]
        %v6264 = vld [vmem:[%s6244 + $0x4c] sm:$0xf]
        %v6265 = vld [vmem:[%s6244 + $0x50] sm:$0xf]
        %v6266 = vld [vmem:[%s6244 + $0x54] sm:$0xf]
        %v6267 = vld [vmem:[%s6244 + $0x58] sm:$0xf]
        %v6268 = vld [vmem:[%s6244 + $0x5c] sm:$0xf]
        %v6269 = vld [vmem:[%s6244 + $0x60] sm:$0xf]
        %v6270 = vld [vmem:[%s6244 + $0x64] sm:$0xf]
        %v6271 = vld [vmem:[%s6244 + $0x68] sm:$0xf]
        %v6272 = vld [vmem:[%s6244 + $0x6c] sm:$0xf]
        %v6273 = vld [vmem:[%s6244 + $0x70] sm:$0xf]
        %v6274 = vld [vmem:[%s6244 + $0x74] sm:$0xf]
        %v6275 = vld [vmem:[%s6244 + $0x78] sm:$0xf]
        %v6276 = vld [vmem:[%s6244 + $0x7c] sm:$0xf]
        %v6277 = vld [vmem:[%s6244 + $0x80] sm:$0xf]
        %v6278 = vld [vmem:[%s6244 + $0x84] sm:$0xf]
        %v6279 = vld [vmem:[%s6244 + $0x88] sm:$0xf]
        %v6280 = vld [vmem:[%s6244 + $0x8c] sm:$0xf]
        %v6281 = vld [vmem:[%s6244 + $0x90] sm:$0xf]
        %v6282 = vld [vmem:[%s6244 + $0x94] sm:$0xf]
        %v6283 = vld [vmem:[%s6244 + $0x98] sm:$0xf]
        %v6284 = vld [vmem:[%s6244 + $0x9c] sm:$0xf]
        %v6288 = vrot.slane %v5740, 1
        %v6289 = vrot.slane %v5741, 1
        %v6290 = vrot.slane %v5742, 1
        %v6333 = vunpack.c.l.b16 %v6245
        %v6334 = vunpack.c.l.b16 %v6246
        %v6335 = vunpack.c.l.b16 %v6247
        %v6336 = vunpack.c.l.b16 %v6248
        %v6337 = vunpack.c.l.b16 %v6249
        %v6338 = vunpack.c.l.b16 %v6250
        %v6339 = vunpack.c.l.b16 %v6251
        %v6340 = vunpack.c.l.b16 %v6252
        %v6341 = vunpack.c.l.b16 %v6253
        %v6342 = vunpack.c.l.b16 %v6254
        %v6343 = vunpack.c.l.b16 %v6255
        %v6344 = vunpack.c.l.b16 %v6256
        %v6345 = vunpack.c.l.b16 %v6257
        %v6346 = vunpack.c.l.b16 %v6258
        %v6347 = vunpack.c.l.b16 %v6259
        %v6348 = vunpack.c.l.b16 %v6260
        %v6349 = vunpack.c.l.b16 %v6261
        %v6350 = vunpack.c.l.b16 %v6262
        %v6351 = vunpack.c.l.b16 %v6263
        %v6352 = vunpack.c.l.b16 %v6264
        %v6353 = vunpack.c.l.b16 %v6265
        %v6354 = vunpack.c.l.b16 %v6266
        %v6355 = vunpack.c.l.b16 %v6267
        %v6356 = vunpack.c.l.b16 %v6268
        %v6357 = vunpack.c.l.b16 %v6269
        %v6358 = vunpack.c.l.b16 %v6270
        %v6359 = vunpack.c.l.b16 %v6271
        %v6360 = vunpack.c.l.b16 %v6272
        %v6361 = vunpack.c.l.b16 %v6273
        %v6362 = vunpack.c.l.b16 %v6274
        %v6363 = vunpack.c.l.b16 %v6275
        %v6364 = vunpack.c.l.b16 %v6276
        %v6365 = vunpack.c.l.b16 %v6277
        %v6366 = vunpack.c.l.b16 %v6278
        %v6367 = vunpack.c.l.b16 %v6279
        %v6368 = vunpack.c.l.b16 %v6280
        %v6369 = vunpack.c.l.b16 %v6281
        %v6370 = vunpack.c.l.b16 %v6282
        %v6371 = vunpack.c.l.b16 %v6283
        %v6372 = vunpack.c.l.b16 %v6284
        %v6373 = vpack.c.b16 %v6334, %v6333
        %v6374 = vpack.c.b16 %v6336, %v6335
        %v6375 = vpack.c.b16 %v6338, %v6337
        %v6376 = vpack.c.b16 %v6340, %v6339
        %v6377 = vpack.c.b16 %v6342, %v6341
        %v6378 = vpack.c.b16 %v6344, %v6343
        %v6379 = vpack.c.b16 %v6346, %v6345
        %v6380 = vpack.c.b16 %v6348, %v6347
        %v6381 = vpack.c.b16 %v6350, %v6349
        %v6382 = vpack.c.b16 %v6352, %v6351
        %v6383 = vpack.c.b16 %v6354, %v6353
        %v6384 = vpack.c.b16 %v6356, %v6355
        %v6385 = vpack.c.b16 %v6358, %v6357
        %v6386 = vpack.c.b16 %v6360, %v6359
        %v6387 = vpack.c.b16 %v6362, %v6361
        %v6388 = vpack.c.b16 %v6364, %v6363
        %v6389 = vpack.c.b16 %v6366, %v6365
        %v6390 = vpack.c.b16 %v6368, %v6367
        %v6391 = vpack.c.b16 %v6370, %v6369
        %v6392 = vpack.c.b16 %v6372, %v6371
        %v6414 = vsel %vm5904, %v6290, 0
        %6416 = vmatprep.subr.bf16.mxu0 0
        %6417 = vmatpush1.bf16.msra.mxu0 %v6373
        %6418 = vmatprep.subr.bf16.mxu0 0
        %6419 = vmatpush1.bf16.msra.mxu0 %v6374
        %6420 = vmatprep.subr.bf16.mxu0 0
        %6421 = vmatpush1.bf16.msra.mxu0 %v6375
        %6422 = vmatprep.subr.bf16.mxu0 0
        %6423 = vmatpush1.bf16.msra.mxu0 %v6376
        %6424 = vmatprep.subr.bf16.mxu0 0
        %6425 = vmatpush1.bf16.msra.mxu0 %v6377
        %6426 = vmatprep.subr.bf16.mxu0 0
        %6427 = vmatpush1.bf16.msra.mxu0 %v6378
        %6428 = vmatprep.subr.bf16.mxu0 0
        %6429 = vmatpush1.bf16.msra.mxu0 %v6379
        %6430 = vmatprep.subr.bf16.mxu0 0
        %6431 = vmatpush1.bf16.msra.mxu0 %v6380
        %6432 = vmatprep.subr.bf16.mxu0 0
        %6433 = vmatpush1.bf16.msra.mxu0 %v6381
        %6434 = vmatprep.subr.bf16.mxu0 0
        %6435 = vmatpush1.bf16.msra.mxu0 %v6382
        %6436 = vmatprep.subr.bf16.mxu0 0
        %6437 = vmatpush1.bf16.msra.mxu0 %v6383
        %6438 = vmatprep.subr.bf16.mxu0 0
        %6439 = vmatpush1.bf16.msra.mxu0 %v6384
        %6440 = vmatprep.subr.bf16.mxu0 0
        %6441 = vmatpush1.bf16.msra.mxu0 %v6385
        %6442 = vmatprep.subr.bf16.mxu0 0
        %6443 = vmatpush1.bf16.msra.mxu0 %v6386
        %6444 = vmatprep.subr.bf16.mxu0 0
        %6445 = vmatpush1.bf16.msra.mxu0 %v6387
        %6446 = vmatprep.subr.bf16.mxu0 0
        %6447 = vmatpush1.bf16.msra.mxu0 %v6388
        %6448 = vmatprep.mubr.bf16.mxu0 %v6289
        %6449 = vmatmul.mubr.bf16.gmra.mrb[0].mxu0 %v6288
        %v6450 = vpop.f32.mrb[0].mxu0
        %v6451 = vadd.f32 0.0, %v6450
        %v6452 = vpop.f32.mrb[0].mxu0
        %v6453 = vpop.f32.mrb[0].mxu0
        %v6454 = vpop.f32.mrb[0].mxu0
        %6455 = vdwg.mxu0
        %6456 = vmatprep.subr.bf16.mxu0 0
        %6457 = vmatpush1.bf16.msra.mxu0 %v6389
        %6458 = vmatprep.subr.bf16.mxu0 0
        %6459 = vmatpush1.bf16.msra.mxu0 %v6390
        %6460 = vmatprep.subr.bf16.mxu0 0
        %6461 = vmatpush1.bf16.msra.mxu0 %v6391
        %6462 = vmatprep.subr.bf16.mxu0 0
        %6463 = vmatpush1.bf16.msra.mxu0 %v6392
        %6464 = vmatprep.subr.bf16.mxu0 0
        %6465 = vmatpush1.bf16.msra.mxu0 0
        %6466 = vmatprep.subr.bf16.mxu0 0
        %6467 = vmatpush1.bf16.msra.mxu0 0
        %6468 = vmatprep.subr.bf16.mxu0 0
        %6469 = vmatpush1.bf16.msra.mxu0 0
        %6470 = vmatprep.subr.bf16.mxu0 0
        %6471 = vmatpush1.bf16.msra.mxu0 0
        %6472 = vmatprep.subr.bf16.mxu0 0
        %6473 = vmatpush1.bf16.msra.mxu0 0
        %6474 = vmatprep.subr.bf16.mxu0 0
        %6475 = vmatpush1.bf16.msra.mxu0 0
        %6476 = vmatprep.subr.bf16.mxu0 0
        %6477 = vmatpush1.bf16.msra.mxu0 0
        %6478 = vmatprep.subr.bf16.mxu0 0
        %6479 = vmatpush1.bf16.msra.mxu0 0
        %6480 = vmatprep.subr.bf16.mxu0 0
        %6481 = vmatpush1.bf16.msra.mxu0 0
        %6482 = vmatprep.subr.bf16.mxu0 0
        %6483 = vmatpush1.bf16.msra.mxu0 0
        %6484 = vmatprep.subr.bf16.mxu0 0
        %6485 = vmatpush1.bf16.msra.mxu0 0
        %6486 = vmatprep.subr.bf16.mxu0 0
        %6487 = vmatpush1.bf16.msra.mxu0 0
        %6488 = vmatprep.mubr.bf16.mxu0 0
        %6489 = vmatmul.mubr.bf16.gmra.mrb[0].mxu0 %v6414
        %v6490 = vpop.f32.mrb[0].mxu0
        %v6491 = vadd.f32 %v6451, %v6490
        %v6492 = vpop.f32.mrb[0].mxu0
        %v6493 = vpop.f32.mrb[0].mxu0
        %v6494 = vpop.f32.mrb[0].mxu0
        %6495 = vdwg.mxu0
        %v6496 = vadd.f32 %v6243, %v6491
        %s6497 = scalar_lea.vmem [#allocation14], 480
        %v6498 = vld [vmem:[%s6497] sm:$0xf]
        %v6499 = vld [vmem:[%s6497 + $0x4] sm:$0xf]
        %v6500 = vld [vmem:[%s6497 + $0x8] sm:$0xf]
        %v6501 = vld [vmem:[%s6497 + $0xc] sm:$0xf]
        %v6502 = vld [vmem:[%s6497 + $0x10] sm:$0xf]
        %v6503 = vld [vmem:[%s6497 + $0x14] sm:$0xf]
        %v6504 = vld [vmem:[%s6497 + $0x18] sm:$0xf]
        %v6505 = vld [vmem:[%s6497 + $0x1c] sm:$0xf]
        %v6506 = vld [vmem:[%s6497 + $0x20] sm:$0xf]
        %v6507 = vld [vmem:[%s6497 + $0x24] sm:$0xf]
        %v6508 = vld [vmem:[%s6497 + $0x28] sm:$0xf]
        %v6509 = vld [vmem:[%s6497 + $0x2c] sm:$0xf]
        %v6510 = vld [vmem:[%s6497 + $0x30] sm:$0xf]
        %v6511 = vld [vmem:[%s6497 + $0x34] sm:$0xf]
        %v6512 = vld [vmem:[%s6497 + $0x38] sm:$0xf]
        %v6513 = vld [vmem:[%s6497 + $0x3c] sm:$0xf]
        %v6514 = vld [vmem:[%s6497 + $0x40] sm:$0xf]
        %v6515 = vld [vmem:[%s6497 + $0x44] sm:$0xf]
        %v6516 = vld [vmem:[%s6497 + $0x48] sm:$0xf]
        %v6517 = vld [vmem:[%s6497 + $0x4c] sm:$0xf]
        %v6518 = vld [vmem:[%s6497 + $0x50] sm:$0xf]
        %v6519 = vld [vmem:[%s6497 + $0x54] sm:$0xf]
        %v6520 = vld [vmem:[%s6497 + $0x58] sm:$0xf]
        %v6521 = vld [vmem:[%s6497 + $0x5c] sm:$0xf]
        %v6522 = vld [vmem:[%s6497 + $0x60] sm:$0xf]
        %v6523 = vld [vmem:[%s6497 + $0x64] sm:$0xf]
        %v6524 = vld [vmem:[%s6497 + $0x68] sm:$0xf]
        %v6525 = vld [vmem:[%s6497 + $0x6c] sm:$0xf]
        %v6526 = vld [vmem:[%s6497 + $0x70] sm:$0xf]
        %v6527 = vld [vmem:[%s6497 + $0x74] sm:$0xf]
        %v6528 = vld [vmem:[%s6497 + $0x78] sm:$0xf]
        %v6529 = vld [vmem:[%s6497 + $0x7c] sm:$0xf]
        %v6530 = vld [vmem:[%s6497 + $0x80] sm:$0xf]
        %v6531 = vld [vmem:[%s6497 + $0x84] sm:$0xf]
        %v6532 = vld [vmem:[%s6497 + $0x88] sm:$0xf]
        %v6533 = vld [vmem:[%s6497 + $0x8c] sm:$0xf]
        %v6534 = vld [vmem:[%s6497 + $0x90] sm:$0xf]
        %v6535 = vld [vmem:[%s6497 + $0x94] sm:$0xf]
        %v6536 = vld [vmem:[%s6497 + $0x98] sm:$0xf]
        %v6537 = vld [vmem:[%s6497 + $0x9c] sm:$0xf]
        %v6538 = vrot.slane %v6031, 1
        %v6539 = vrot.slane %v6034, 1
        %v6540 = vrot.slane %v6036, 1
        %v6583 = vunpack.c.l.b16 %v6498
        %v6584 = vunpack.c.l.b16 %v6499
        %v6585 = vunpack.c.l.b16 %v6500
        %v6586 = vunpack.c.l.b16 %v6501
        %v6587 = vunpack.c.l.b16 %v6502
        %v6588 = vunpack.c.l.b16 %v6503
        %v6589 = vunpack.c.l.b16 %v6504
        %v6590 = vunpack.c.l.b16 %v6505
        %v6591 = vunpack.c.l.b16 %v6506
        %v6592 = vunpack.c.l.b16 %v6507
        %v6593 = vunpack.c.l.b16 %v6508
        %v6594 = vunpack.c.l.b16 %v6509
        %v6595 = vunpack.c.l.b16 %v6510
        %v6596 = vunpack.c.l.b16 %v6511
        %v6597 = vunpack.c.l.b16 %v6512
        %v6598 = vunpack.c.l.b16 %v6513
        %v6599 = vunpack.c.l.b16 %v6514
        %v6600 = vunpack.c.l.b16 %v6515
        %v6601 = vunpack.c.l.b16 %v6516
        %v6602 = vunpack.c.l.b16 %v6517
        %v6603 = vunpack.c.l.b16 %v6518
        %v6604 = vunpack.c.l.b16 %v6519
        %v6605 = vunpack.c.l.b16 %v6520
        %v6606 = vunpack.c.l.b16 %v6521
        %v6607 = vunpack.c.l.b16 %v6522
        %v6608 = vunpack.c.l.b16 %v6523
        %v6609 = vunpack.c.l.b16 %v6524
        %v6610 = vunpack.c.l.b16 %v6525
        %v6611 = vunpack.c.l.b16 %v6526
        %v6612 = vunpack.c.l.b16 %v6527
        %v6613 = vunpack.c.l.b16 %v6528
        %v6614 = vunpack.c.l.b16 %v6529
        %v6615 = vunpack.c.l.b16 %v6530
        %v6616 = vunpack.c.l.b16 %v6531
        %v6617 = vunpack.c.l.b16 %v6532
        %v6618 = vunpack.c.l.b16 %v6533
        %v6619 = vunpack.c.l.b16 %v6534
        %v6620 = vunpack.c.l.b16 %v6535
        %v6621 = vunpack.c.l.b16 %v6536
        %v6622 = vunpack.c.l.b16 %v6537
        %v6623 = vpack.c.b16 %v6584, %v6583
        %v6624 = vpack.c.b16 %v6586, %v6585
        %v6625 = vpack.c.b16 %v6588, %v6587
        %v6626 = vpack.c.b16 %v6590, %v6589
        %v6627 = vpack.c.b16 %v6592, %v6591
        %v6628 = vpack.c.b16 %v6594, %v6593
        %v6629 = vpack.c.b16 %v6596, %v6595
        %v6630 = vpack.c.b16 %v6598, %v6597
        %v6631 = vpack.c.b16 %v6600, %v6599
        %v6632 = vpack.c.b16 %v6602, %v6601
        %v6633 = vpack.c.b16 %v6604, %v6603
        %v6634 = vpack.c.b16 %v6606, %v6605
        %v6635 = vpack.c.b16 %v6608, %v6607
        %v6636 = vpack.c.b16 %v6610, %v6609
        %v6637 = vpack.c.b16 %v6612, %v6611
        %v6638 = vpack.c.b16 %v6614, %v6613
        %v6639 = vpack.c.b16 %v6616, %v6615
        %v6640 = vpack.c.b16 %v6618, %v6617
        %v6641 = vpack.c.b16 %v6620, %v6619
        %v6642 = vpack.c.b16 %v6622, %v6621
        %v6664 = vsel %vm5904, %v6540, 0
        %6666 = vmatprep.subr.bf16.mxu0 0
        %6667 = vmatpush1.bf16.msra.mxu0 %v6623
        %6668 = vmatprep.subr.bf16.mxu0 0
        %6669 = vmatpush1.bf16.msra.mxu0 %v6624
        %6670 = vmatprep.subr.bf16.mxu0 0
        %6671 = vmatpush1.bf16.msra.mxu0 %v6625
        %6672 = vmatprep.subr.bf16.mxu0 0
        %6673 = vmatpush1.bf16.msra.mxu0 %v6626
        %6674 = vmatprep.subr.bf16.mxu0 0
        %6675 = vmatpush1.bf16.msra.mxu0 %v6627
        %6676 = vmatprep.subr.bf16.mxu0 0
        %6677 = vmatpush1.bf16.msra.mxu0 %v6628
        %6678 = vmatprep.subr.bf16.mxu0 0
        %6679 = vmatpush1.bf16.msra.mxu0 %v6629
        %6680 = vmatprep.subr.bf16.mxu0 0
        %6681 = vmatpush1.bf16.msra.mxu0 %v6630
        %6682 = vmatprep.subr.bf16.mxu0 0
        %6683 = vmatpush1.bf16.msra.mxu0 %v6631
        %6684 = vmatprep.subr.bf16.mxu0 0
        %6685 = vmatpush1.bf16.msra.mxu0 %v6632
        %6686 = vmatprep.subr.bf16.mxu0 0
        %6687 = vmatpush1.bf16.msra.mxu0 %v6633
        %6688 = vmatprep.subr.bf16.mxu0 0
        %6689 = vmatpush1.bf16.msra.mxu0 %v6634
        %6690 = vmatprep.subr.bf16.mxu0 0
        %6691 = vmatpush1.bf16.msra.mxu0 %v6635
        %6692 = vmatprep.subr.bf16.mxu0 0
        %6693 = vmatpush1.bf16.msra.mxu0 %v6636
        %6694 = vmatprep.subr.bf16.mxu0 0
        %6695 = vmatpush1.bf16.msra.mxu0 %v6637
        %6696 = vmatprep.subr.bf16.mxu0 0
        %6697 = vmatpush1.bf16.msra.mxu0 %v6638
        %6698 = vmatprep.mubr.bf16.mxu0 %v6539
        %6699 = vmatmul.mubr.bf16.gmra.mrb[0].mxu0 %v6538
        %v6700 = vpop.f32.mrb[0].mxu0
        %v6701 = vadd.f32 0.0, %v6700
        %v6702 = vpop.f32.mrb[0].mxu0
        %v6703 = vpop.f32.mrb[0].mxu0
        %v6704 = vpop.f32.mrb[0].mxu0
        %6705 = vdwg.mxu0
        %6706 = vmatprep.subr.bf16.mxu0 0
        %6707 = vmatpush1.bf16.msra.mxu0 %v6639
        %6708 = vmatprep.subr.bf16.mxu0 0
        %6709 = vmatpush1.bf16.msra.mxu0 %v6640
        %6710 = vmatprep.subr.bf16.mxu0 0
        %6711 = vmatpush1.bf16.msra.mxu0 %v6641
        %6712 = vmatprep.subr.bf16.mxu0 0
        %6713 = vmatpush1.bf16.msra.mxu0 %v6642
        %6714 = vmatprep.subr.bf16.mxu0 0
        %6715 = vmatpush1.bf16.msra.mxu0 0
        %6716 = vmatprep.subr.bf16.mxu0 0
        %6717 = vmatpush1.bf16.msra.mxu0 0
        %6718 = vmatprep.subr.bf16.mxu0 0
        %6719 = vmatpush1.bf16.msra.mxu0 0
        %6720 = vmatprep.subr.bf16.mxu0 0
        %6721 = vmatpush1.bf16.msra.mxu0 0
        %6722 = vmatprep.subr.bf16.mxu0 0
        %6723 = vmatpush1.bf16.msra.mxu0 0
        %6724 = vmatprep.subr.bf16.mxu0 0
        %6725 = vmatpush1.bf16.msra.mxu0 0
        %6726 = vmatprep.subr.bf16.mxu0 0
        %6727 = vmatpush1.bf16.msra.mxu0 0
        %6728 = vmatprep.subr.bf16.mxu0 0
        %6729 = vmatpush1.bf16.msra.mxu0 0
        %6730 = vmatprep.subr.bf16.mxu0 0
        %6731 = vmatpush1.bf16.msra.mxu0 0
        %6732 = vmatprep.subr.bf16.mxu0 0
        %6733 = vmatpush1.bf16.msra.mxu0 0
        %6734 = vmatprep.subr.bf16.mxu0 0
        %6735 = vmatpush1.bf16.msra.mxu0 0
        %6736 = vmatprep.subr.bf16.mxu0 0
        %6737 = vmatpush1.bf16.msra.mxu0 0
        %6738 = vmatprep.mubr.bf16.mxu0 0
        %6739 = vmatmul.mubr.bf16.gmra.mrb[0].mxu0 %v6664
        %v6740 = vpop.f32.mrb[0].mxu0
        %v6741 = vadd.f32 %v6701, %v6740
        %v6742 = vpop.f32.mrb[0].mxu0
        %v6743 = vpop.f32.mrb[0].mxu0
        %v6744 = vpop.f32.mrb[0].mxu0
        %6745 = vdwg.mxu0
        %v6746 = vadd.f32 %v6496, %v6741
        %s6747 = scalar_lea.vmem [#allocation14], 640
        %v6748 = vld [vmem:[%s6747] sm:$0xf]
        %v6749 = vld [vmem:[%s6747 + $0x4] sm:$0xf]
        %v6750 = vld [vmem:[%s6747 + $0x8] sm:$0xf]
        %v6751 = vld [vmem:[%s6747 + $0xc] sm:$0xf]
        %v6752 = vld [vmem:[%s6747 + $0x10] sm:$0xf]
        %v6753 = vld [vmem:[%s6747 + $0x14] sm:$0xf]
        %v6754 = vld [vmem:[%s6747 + $0x18] sm:$0xf]
        %v6755 = vld [vmem:[%s6747 + $0x1c] sm:$0xf]
        %v6756 = vld [vmem:[%s6747 + $0x20] sm:$0xf]
        %v6757 = vld [vmem:[%s6747 + $0x24] sm:$0xf]
        %v6758 = vld [vmem:[%s6747 + $0x28] sm:$0xf]
        %v6759 = vld [vmem:[%s6747 + $0x2c] sm:$0xf]
        %v6760 = vld [vmem:[%s6747 + $0x30] sm:$0xf]
        %v6761 = vld [vmem:[%s6747 + $0x34] sm:$0xf]
        %v6762 = vld [vmem:[%s6747 + $0x38] sm:$0xf]
        %v6763 = vld [vmem:[%s6747 + $0x3c] sm:$0xf]
        %v6764 = vld [vmem:[%s6747 + $0x40] sm:$0xf]
        %v6765 = vld [vmem:[%s6747 + $0x44] sm:$0xf]
        %v6766 = vld [vmem:[%s6747 + $0x48] sm:$0xf]
        %v6767 = vld [vmem:[%s6747 + $0x4c] sm:$0xf]
        %v6768 = vld [vmem:[%s6747 + $0x50] sm:$0xf]
        %v6769 = vld [vmem:[%s6747 + $0x54] sm:$0xf]
        %v6770 = vld [vmem:[%s6747 + $0x58] sm:$0xf]
        %v6771 = vld [vmem:[%s6747 + $0x5c] sm:$0xf]
        %v6772 = vld [vmem:[%s6747 + $0x60] sm:$0xf]
        %v6773 = vld [vmem:[%s6747 + $0x64] sm:$0xf]
        %v6774 = vld [vmem:[%s6747 + $0x68] sm:$0xf]
        %v6775 = vld [vmem:[%s6747 + $0x6c] sm:$0xf]
        %v6776 = vld [vmem:[%s6747 + $0x70] sm:$0xf]
        %v6777 = vld [vmem:[%s6747 + $0x74] sm:$0xf]
        %v6778 = vld [vmem:[%s6747 + $0x78] sm:$0xf]
        %v6779 = vld [vmem:[%s6747 + $0x7c] sm:$0xf]
        %v6780 = vld [vmem:[%s6747 + $0x80] sm:$0xf]
        %v6781 = vld [vmem:[%s6747 + $0x84] sm:$0xf]
        %v6782 = vld [vmem:[%s6747 + $0x88] sm:$0xf]
        %v6783 = vld [vmem:[%s6747 + $0x8c] sm:$0xf]
        %v6784 = vld [vmem:[%s6747 + $0x90] sm:$0xf]
        %v6785 = vld [vmem:[%s6747 + $0x94] sm:$0xf]
        %v6786 = vld [vmem:[%s6747 + $0x98] sm:$0xf]
        %v6787 = vld [vmem:[%s6747 + $0x9c] sm:$0xf]
        %v6788 = vrot.slane %v5740, 2
        %v6789 = vrot.slane %v5741, 2
        %v6790 = vrot.slane %v5742, 2
        %v6833 = vunpack.c.l.b16 %v6748
        %v6834 = vunpack.c.l.b16 %v6749
        %v6835 = vunpack.c.l.b16 %v6750
        %v6836 = vunpack.c.l.b16 %v6751
        %v6837 = vunpack.c.l.b16 %v6752
        %v6838 = vunpack.c.l.b16 %v6753
        %v6839 = vunpack.c.l.b16 %v6754
        %v6840 = vunpack.c.l.b16 %v6755
        %v6841 = vunpack.c.l.b16 %v6756
        %v6842 = vunpack.c.l.b16 %v6757
        %v6843 = vunpack.c.l.b16 %v6758
        %v6844 = vunpack.c.l.b16 %v6759
        %v6845 = vunpack.c.l.b16 %v6760
        %v6846 = vunpack.c.l.b16 %v6761
        %v6847 = vunpack.c.l.b16 %v6762
        %v6848 = vunpack.c.l.b16 %v6763
        %v6849 = vunpack.c.l.b16 %v6764
        %v6850 = vunpack.c.l.b16 %v6765
        %v6851 = vunpack.c.l.b16 %v6766
        %v6852 = vunpack.c.l.b16 %v6767
        %v6853 = vunpack.c.l.b16 %v6768
        %v6854 = vunpack.c.l.b16 %v6769
        %v6855 = vunpack.c.l.b16 %v6770
        %v6856 = vunpack.c.l.b16 %v6771
        %v6857 = vunpack.c.l.b16 %v6772
        %v6858 = vunpack.c.l.b16 %v6773
        %v6859 = vunpack.c.l.b16 %v6774
        %v6860 = vunpack.c.l.b16 %v6775
        %v6861 = vunpack.c.l.b16 %v6776
        %v6862 = vunpack.c.l.b16 %v6777
        %v6863 = vunpack.c.l.b16 %v6778
        %v6864 = vunpack.c.l.b16 %v6779
        %v6865 = vunpack.c.l.b16 %v6780
        %v6866 = vunpack.c.l.b16 %v6781
        %v6867 = vunpack.c.l.b16 %v6782
        %v6868 = vunpack.c.l.b16 %v6783
        %v6869 = vunpack.c.l.b16 %v6784
        %v6870 = vunpack.c.l.b16 %v6785
        %v6871 = vunpack.c.l.b16 %v6786
        %v6872 = vunpack.c.l.b16 %v6787
        %v6873 = vpack.c.b16 %v6834, %v6833
        %v6874 = vpack.c.b16 %v6836, %v6835
        %v6875 = vpack.c.b16 %v6838, %v6837
        %v6876 = vpack.c.b16 %v6840, %v6839
        %v6877 = vpack.c.b16 %v6842, %v6841
        %v6878 = vpack.c.b16 %v6844, %v6843
        %v6879 = vpack.c.b16 %v6846, %v6845
        %v6880 = vpack.c.b16 %v6848, %v6847
        %v6881 = vpack.c.b16 %v6850, %v6849
        %v6882 = vpack.c.b16 %v6852, %v6851
        %v6883 = vpack.c.b16 %v6854, %v6853
        %v6884 = vpack.c.b16 %v6856, %v6855
        %v6885 = vpack.c.b16 %v6858, %v6857
        %v6886 = vpack.c.b16 %v6860, %v6859
        %v6887 = vpack.c.b16 %v6862, %v6861
        %v6888 = vpack.c.b16 %v6864, %v6863
        %v6889 = vpack.c.b16 %v6866, %v6865
        %v6890 = vpack.c.b16 %v6868, %v6867
        %v6891 = vpack.c.b16 %v6870, %v6869
        %v6892 = vpack.c.b16 %v6872, %v6871
        %v6914 = vsel %vm5904, %v6790, 0
        %6916 = vmatprep.subr.bf16.mxu0 0
        %6917 = vmatpush1.bf16.msra.mxu0 %v6873
        %6918 = vmatprep.subr.bf16.mxu0 0
        %6919 = vmatpush1.bf16.msra.mxu0 %v6874
        %6920 = vmatprep.subr.bf16.mxu0 0
        %6921 = vmatpush1.bf16.msra.mxu0 %v6875
        %6922 = vmatprep.subr.bf16.mxu0 0
        %6923 = vmatpush1.bf16.msra.mxu0 %v6876
        %6924 = vmatprep.subr.bf16.mxu0 0
        %6925 = vmatpush1.bf16.msra.mxu0 %v6877
        %6926 = vmatprep.subr.bf16.mxu0 0
        %6927 = vmatpush1.bf16.msra.mxu0 %v6878
        %6928 = vmatprep.subr.bf16.mxu0 0
        %6929 = vmatpush1.bf16.msra.mxu0 %v6879
        %6930 = vmatprep.subr.bf16.mxu0 0
        %6931 = vmatpush1.bf16.msra.mxu0 %v6880
        %6932 = vmatprep.subr.bf16.mxu0 0
        %6933 = vmatpush1.bf16.msra.mxu0 %v6881
        %6934 = vmatprep.subr.bf16.mxu0 0
        %6935 = vmatpush1.bf16.msra.mxu0 %v6882
        %6936 = vmatprep.subr.bf16.mxu0 0
        %6937 = vmatpush1.bf16.msra.mxu0 %v6883
        %6938 = vmatprep.subr.bf16.mxu0 0
        %6939 = vmatpush1.bf16.msra.mxu0 %v6884
        %6940 = vmatprep.subr.bf16.mxu0 0
        %6941 = vmatpush1.bf16.msra.mxu0 %v6885
        %6942 = vmatprep.subr.bf16.mxu0 0
        %6943 = vmatpush1.bf16.msra.mxu0 %v6886
        %6944 = vmatprep.subr.bf16.mxu0 0
        %6945 = vmatpush1.bf16.msra.mxu0 %v6887
        %6946 = vmatprep.subr.bf16.mxu0 0
        %6947 = vmatpush1.bf16.msra.mxu0 %v6888
        %6948 = vmatprep.mubr.bf16.mxu0 %v6789
        %6949 = vmatmul.mubr.bf16.gmra.mrb[0].mxu0 %v6788
        %v6950 = vpop.f32.mrb[0].mxu0
        %v6951 = vadd.f32 0.0, %v6950
        %v6952 = vpop.f32.mrb[0].mxu0
        %v6953 = vpop.f32.mrb[0].mxu0
        %v6954 = vpop.f32.mrb[0].mxu0
        %6955 = vdwg.mxu0
        %6956 = vmatprep.subr.bf16.mxu0 0
        %6957 = vmatpush1.bf16.msra.mxu0 %v6889
        %6958 = vmatprep.subr.bf16.mxu0 0
        %6959 = vmatpush1.bf16.msra.mxu0 %v6890
        %6960 = vmatprep.subr.bf16.mxu0 0
        %6961 = vmatpush1.bf16.msra.mxu0 %v6891
        %6962 = vmatprep.subr.bf16.mxu0 0
        %6963 = vmatpush1.bf16.msra.mxu0 %v6892
        %6964 = vmatprep.subr.bf16.mxu0 0
        %6965 = vmatpush1.bf16.msra.mxu0 0
        %6966 = vmatprep.subr.bf16.mxu0 0
        %6967 = vmatpush1.bf16.msra.mxu0 0
        %6968 = vmatprep.subr.bf16.mxu0 0
        %6969 = vmatpush1.bf16.msra.mxu0 0
        %6970 = vmatprep.subr.bf16.mxu0 0
        %6971 = vmatpush1.bf16.msra.mxu0 0
        %6972 = vmatprep.subr.bf16.mxu0 0
        %6973 = vmatpush1.bf16.msra.mxu0 0
        %6974 = vmatprep.subr.bf16.mxu0 0
        %6975 = vmatpush1.bf16.msra.mxu0 0
        %6976 = vmatprep.subr.bf16.mxu0 0
        %6977 = vmatpush1.bf16.msra.mxu0 0
        %6978 = vmatprep.subr.bf16.mxu0 0
        %6979 = vmatpush1.bf16.msra.mxu0 0
        %6980 = vmatprep.subr.bf16.mxu0 0
        %6981 = vmatpush1.bf16.msra.mxu0 0
        %6982 = vmatprep.subr.bf16.mxu0 0
        %6983 = vmatpush1.bf16.msra.mxu0 0
        %6984 = vmatprep.subr.bf16.mxu0 0
        %6985 = vmatpush1.bf16.msra.mxu0 0
        %6986 = vmatprep.subr.bf16.mxu0 0
        %6987 = vmatpush1.bf16.msra.mxu0 0
        %6988 = vmatprep.mubr.bf16.mxu0 0
        %6989 = vmatmul.mubr.bf16.gmra.mrb[0].mxu0 %v6914
        %v6990 = vpop.f32.mrb[0].mxu0
        %v6991 = vadd.f32 %v6951, %v6990
        %v6992 = vpop.f32.mrb[0].mxu0
        %v6993 = vpop.f32.mrb[0].mxu0
        %v6994 = vpop.f32.mrb[0].mxu0
        %6995 = vdwg.mxu0
        %v6996 = vadd.f32 %v6746, %v6991
        %v6997 = vmax.f32 %v6996, 0.0
        %v6998 = vpack.c.bf16 %v6997, %v6997
        %v6999 = vld [vmem:[%s9] sm:$0xf]
        %v7000 = vld [vmem:[%s9 + $0x4] sm:$0xf]
        %v7001 = vld [vmem:[%s9 + $0x8] sm:$0xf]
        %v7002 = vld [vmem:[%s9 + $0xc] sm:$0xf]
        %v7003 = vld [vmem:[%s9 + $0x10] sm:$0xf]
        %v7004 = vld [vmem:[%s9 + $0x14] sm:$0xf]
        %v7005 = vld [vmem:[%s9 + $0x18] sm:$0xf]
        %v7006 = vld [vmem:[%s9 + $0x1c] sm:$0xf]
        %v7007 = vld [vmem:[%s9 + $0x20] sm:$0xf]
        %v7008 = vld [vmem:[%s9 + $0x24] sm:$0xf]
        %v7009 = vld [vmem:[%s9 + $0x28] sm:$0xf]
        %v7010 = vld [vmem:[%s9 + $0x2c] sm:$0xf]
        %v7011 = vld [vmem:[%s9 + $0x30] sm:$0xf]
        %v7012 = vld [vmem:[%s9 + $0x34] sm:$0xf]
        %v7013 = vld [vmem:[%s9 + $0x38] sm:$0xf]
        %v7014 = vld [vmem:[%s9 + $0x3c] sm:$0xf]
        %v7015 = vld [vmem:[#allocation17] sm:$0x1]
        %v7032 = vunpack.c.l.b16 %v6999
        %v7033 = vunpack.c.l.b16 %v7000
        %v7034 = vunpack.c.l.b16 %v7001
        %v7035 = vunpack.c.l.b16 %v7002
        %v7036 = vunpack.c.l.b16 %v7003
        %v7037 = vunpack.c.l.b16 %v7004
        %v7038 = vunpack.c.l.b16 %v7005
        %v7039 = vunpack.c.l.b16 %v7006
        %v7040 = vunpack.c.l.b16 %v7007
        %v7041 = vunpack.c.l.b16 %v7008
        %v7042 = vunpack.c.l.b16 %v7009
        %v7043 = vunpack.c.l.b16 %v7010
        %v7044 = vunpack.c.l.b16 %v7011
        %v7045 = vunpack.c.l.b16 %v7012
        %v7046 = vunpack.c.l.b16 %v7013
        %v7047 = vunpack.c.l.b16 %v7014
        %v7048 = vpack.c.b16 %v7033, %v7032
        %v7049 = vpack.c.b16 %v7035, %v7034
        %v7050 = vpack.c.b16 %v7037, %v7036
        %v7051 = vpack.c.b16 %v7039, %v7038
        %v7052 = vpack.c.b16 %v7041, %v7040
        %v7053 = vpack.c.b16 %v7043, %v7042
        %v7054 = vpack.c.b16 %v7045, %v7044
        %v7055 = vpack.c.b16 %v7047, %v7046
        %7064 = vmatprep.subr.bf16.mxu0 0
        %7065 = vmatpush1.bf16.msra.mxu0 %v7048
        %7066 = vmatprep.subr.bf16.mxu0 0
        %7067 = vmatpush1.bf16.msra.mxu0 %v7049
        %7068 = vmatprep.subr.bf16.mxu0 0
        %7069 = vmatpush1.bf16.msra.mxu0 %v7050
        %7070 = vmatprep.subr.bf16.mxu0 0
        %7071 = vmatpush1.bf16.msra.mxu0 %v7051
        %7072 = vmatprep.subr.bf16.mxu0 0
        %7073 = vmatpush1.bf16.msra.mxu0 %v7052
        %7074 = vmatprep.subr.bf16.mxu0 0
        %7075 = vmatpush1.bf16.msra.mxu0 %v7053
        %7076 = vmatprep.subr.bf16.mxu0 0
        %7077 = vmatpush1.bf16.msra.mxu0 %v7054
        %7078 = vmatprep.subr.bf16.mxu0 0
        %7079 = vmatpush1.bf16.msra.mxu0 %v7055
        %7080 = vmatprep.subr.bf16.mxu0 0
        %7081 = vmatpush1.bf16.msra.mxu0 0
        %7082 = vmatprep.subr.bf16.mxu0 0
        %7083 = vmatpush1.bf16.msra.mxu0 0
        %7084 = vmatprep.subr.bf16.mxu0 0
        %7085 = vmatpush1.bf16.msra.mxu0 0
        %7086 = vmatprep.subr.bf16.mxu0 0
        %7087 = vmatpush1.bf16.msra.mxu0 0
        %7088 = vmatprep.subr.bf16.mxu0 0
        %7089 = vmatpush1.bf16.msra.mxu0 0
        %7090 = vmatprep.subr.bf16.mxu0 0
        %7091 = vmatpush1.bf16.msra.mxu0 0
        %7092 = vmatprep.subr.bf16.mxu0 0
        %7093 = vmatpush1.bf16.msra.mxu0 0
        %7094 = vmatprep.subr.bf16.mxu0 0
        %7095 = vmatpush1.bf16.msra.mxu0 0
        %7096 = vmatprep.mubr.bf16.mxu0 0
        %7097 = vmatmul.mubr.bf16.gmra.mrb[0].mxu0 %v6998
        %v7098 = vpop.f32.mrb[0].mxu0
        %v7099 = vadd.f32 %v7015, %v7098
        %v7100 = vpop.f32.mrb[0].mxu0
        %v7101 = vpop.f32.mrb[0].mxu0
        %v7102 = vpop.f32.mrb[0].mxu0
        %7103 = vdwg.mxu0
        %vm7104 = vcmask 73728
        %v7105 = vsel %vm7104, %v7099, -inf
        %7106 = vmax.xlane.f32.xlu0 %v7105
        %v7107 = vpop.xlane.xlu0 %7106
        %v7108 = vsub.f32 %v7099, %v7107
        %v7109 = vmul.f32 %v7108, 1.442695
        %v7110 = vpow.pop %v7109
        %v7111 = vsel %vm7104, %v7110, 0.0
        %7112 = vadd.xlane.f32.xlu0 %v7111
        %v7113 = vpop.xlane.xlu0 %7112
        %v7114 = vlog2.pop %v7113
        %v7115 = vmul.f32 %v7114, 0.6931472
        %v7116 = vsub.f32 %v7108, %v7115
        %7117 = vst.msk [vmem:[%s499] sm:$0x1] %vm7104, %v7116
        %s7118 = sand.u32 %s274, 1
        %s7119 = scalar_lea.sflag [#allocation5], %s7118
        %s7120 = sand.u32 %s274, 1
        %s7121 = scalar_lea.vmem [#allocation18], %s7120
        // Predicated region
        $region101: #{mnist_convnet_forward.1} parent=63 // pred_check
          %p7122 = pneg %p284
        $region102: #{mnist_convnet_forward.1} parent=63 // pred_check_branch
          %7124 = sbr.rel (%p7122) target = $region104
        $region103: #{mnist_convnet_forward.1} parent=63 // pred_region
          %s7126 = ssub.s32 16, 16
          %7127 = vsyncadd %s7119, %s7126
          %s7128 = smul.addr %s30, 16
          %s7129 = scalar_lea.hbm %s11, %s7128
          %s7131 = sshll.u32 %s7121, 4
          %s7132 = int_to_ptr.vmem [resolvable:$true] %s7131
          %7134 = dma.vmem_to_hbm [thread:$0]  %s7132, 16, %s7129, %s7119
        $region104: #{mnist_convnet_forward.1} parent=63 // pred_fallthru
          _
      $region64: #{mnist_convnet_forward.1} parent=5 // pred_fallthru
        _
      %p7135 = scmp.le.s32.totalorder 2, %s25
      // Predicated region
      $region105: #{mnist_convnet_forward.1} parent=5 // pred_check
        %p7136 = pneg %p7135
      $region106: #{mnist_convnet_forward.1} parent=5 // pred_check_branch
        %7138 = sbr.rel (%p7136) target = $region108
      $region107: #{mnist_convnet_forward.1} parent=5 // pred_region
        %s7139 = ssub.s32 %s25, 2
        // Predicated region
        $region109: #{mnist_convnet_forward.1} parent=107 // pred_check
          %p7140 = pneg %p290
        $region110: #{mnist_convnet_forward.1} parent=107 // pred_check_branch
          %7142 = sbr.rel (%p7140) target = $region112
        $region111: #{mnist_convnet_forward.1} parent=107 // pred_region
          %s7143 = sand.u32 %s275, 1
          %s7144 = scalar_lea.sflag [#allocation5], %s7143
          %s7145 = sand.u32 %s275, 1
          %s7146 = scalar_lea.vmem [#allocation18], %s7145
          %7147 = dma.done %s7144, 16
        $region112: #{mnist_convnet_forward.1} parent=107 // pred_fallthru
          _
      $region108: #{mnist_convnet_forward.1} parent=5 // pred_fallthru
        _
    $region6: #{mnist_convnet_forward.1} parent=1 // loop_footer
      %s29 = sadd.s32 1, %s25
    $region7: #{mnist_convnet_forward.1} parent=1 // loop_footer_branch
      %24 = sbr.rel target = $region3
    $region8: #{mnist_convnet_forward.1} parent=1 // loop_exit
      _
    %7148 = vsyncpa [#allocation4], 1
    %s7149 = scalar_lea.sflag [#allocation4], 1
    %7150 = vsyncpa %s7149, 1
    %7151 = vsyncpa [#allocation7], 1
    %7152 = vsyncpa [#allocation10], 1
    %7153 = vsyncpa [#allocation13], 1
    %7154 = vsyncpa [#allocation16], 1
    %7155 = vsyncpa [#allocation5], 1
    %s7156 = scalar_lea.sflag [#allocation5], 1
    %7157 = vsyncpa %s7156, 1

</llo_original>
